<compile_context>
chip_gen: v6e
topology: v6e:2x2x1
jax: 0.10.0
libtpu: 0.0.40
codegen_flags: <defaults>
</compile_context>

<pallas_src>
import math

import jax
import jax.numpy as jnp
import numpy as np
from jax.experimental import pallas as pl
from jax.experimental.pallas import tpu as pltpu

BT = 8  # samples per grid step


# ---------------------------------------------------------------------------
# Constant matrices (numpy, built once at parameter-packing time)
# ---------------------------------------------------------------------------
def _pool2x2_matrix(h, w):
    """AvgPool2d(kernel=2, stride=2) as an (H*W, Ho*Wo) matrix."""
    ho, wo = h // 2, w // 2
    p = np.zeros((h * w, ho * wo), np.float32)
    for ih in range(h):
        for iw in range(w):
            p[ih * w + iw, (ih // 2) * wo + (iw // 2)] = 0.25
    return p


def _pool3x3_s1_p1_matrix(n):
    """AvgPool2d(kernel=3, stride=1, padding=1, count_include_pad=True)."""
    p = np.zeros((n * n, n * n), np.float32)
    for oh in range(n):
        for ow in range(n):
            for dh in (-1, 0, 1):
                for dw in (-1, 0, 1):
                    ih, iw = oh + dh, ow + dw
                    if 0 <= ih < n and 0 <= iw < n:
                        p[ih * n + iw, oh * n + ow] += 1.0 / 9.0
    return p


def _conv2_gather_cat():
    """Concatenated 14x14 -> 10x10 spatial 0/1 selection: (196, 25*128).

    Column k*128 + (oh*10+ow) selects input lane (oh+kh)*14 + (ow+kw),
    k = kh*5 + kw.  Lanes >= 100 within each 128-slab are zero columns.
    """
    g = np.zeros((25, 14 * 14, 128), np.float32)
    for kh in range(5):
        for kw in range(5):
            k = kh * 5 + kw
            for oh in range(10):
                for ow in range(10):
                    g[k, (oh + kh) * 14 + (ow + kw), oh * 10 + ow] = 1.0
    return np.transpose(g, (1, 0, 2)).reshape(196, 25 * 128)


# ---------------------------------------------------------------------------
# Parameters (mirrors the PyTorch module's __init__: kaiming_uniform_, bias=0)
# ---------------------------------------------------------------------------
def _kaiming_uniform(key, shape, fan_in):
    bound = math.sqrt(2.0) * math.sqrt(3.0 / fan_in)   # nonlinearity='relu'
    return jax.random.uniform(key, shape, jnp.float32, minval=-bound, maxval=bound)


def init_params(key):
    ks = jax.random.split(key, 5)
    return dict(
        w1=_kaiming_uniform(ks[0], (6, 3, 5, 5), 3 * 5 * 5),
        b1=jnp.zeros((6,), jnp.float32),
        w2=_kaiming_uniform(ks[1], (16, 6, 5, 5), 6 * 5 * 5),
        b2=jnp.zeros((16,), jnp.float32),
        fc1w=_kaiming_uniform(ks[2], (120, 16 * 5 * 5), 16 * 5 * 5),
        fc1b=jnp.zeros((120,), jnp.float32),
        fc2w=_kaiming_uniform(ks[3], (84, 120), 120),
        fc2b=jnp.zeros((84,), jnp.float32),
        fc3w=_kaiming_uniform(ks[4], (10, 84), 84),
        fc3b=jnp.zeros((10,), jnp.float32),
    )


def pack_weights(p, bt=BT):
    """Pre-pack / pad / fold / kron all weights into kernel layouts."""
    f32, bf16 = jnp.float32, jnp.bfloat16
    eye = jnp.eye(bt, dtype=f32)
    # conv1: (co<=8, ci*25+k <=80) zero-padded, then kron with I_bt.
    w1p = jnp.zeros((8, 80), f32).at[:6, :75].set(p["w1"].reshape(6, 75))
    w1k = jnp.kron(w1p, eye).astype(bf16)                               # (8bt,80bt)
    b1blk = jnp.repeat(jnp.zeros((8,), f32).at[:6].set(p["b1"]), bt)[:, None]
    # pool1 (2x2/2 on 28x28 -> 14x14) shared spatial matrix (0.25 exact in bf16).
    pool1 = jnp.asarray(_pool2x2_matrix(28, 28), bf16)                  # (784,196)
    # conv2: one concatenated spatial gather + per-offset kron channel mixes.
    g2cat = jnp.asarray(_conv2_gather_cat(), bf16)                      # (196,3200)
    w2s = jnp.zeros((25, 16, 8), f32).at[:, :, :6].set(
        jnp.transpose(p["w2"].reshape(16, 6, 25), (2, 0, 1)))           # [k,co,ci]
    w2k = jnp.stack([jnp.kron(w2s[k], eye) for k in range(25)]).astype(bf16)
    b2blk = jnp.repeat(p["b2"].astype(f32), bt)[:, None]                # (16bt,1)
    # pool2 ∘ pool3 ∘ flatten ∘ fc1 folded into per-channel (128,128) weights.
    p23 = jnp.asarray(_pool2x2_matrix(10, 10) @ _pool3x3_s1_p1_matrix(5))  # (100,25)
    p23p = jnp.zeros((128, 25), f32).at[:100, :].set(p23)   # rows >=100 stay zero!
    fc1_blocks = p["fc1w"].T.reshape(16, 25, 120)                       # [c,r,j]
    wf1 = jnp.einsum("sr,crj->csj", p23p, fc1_blocks)                   # (16,128,120)
    wf1 = jnp.zeros((16, 128, 128), f32).at[:, :, :120].set(wf1)
    bf1 = jnp.zeros((1, 128), f32).at[0, :120].set(p["fc1b"])
    # fc2 / fc3 zero-padded to 128x128 (lane-dense), kept f32.
    w2fc = jnp.zeros((128, 128), f32).at[:120, :84].set(p["fc2w"].T)
    b2fc = jnp.zeros((1, 128), f32).at[0, :84].set(p["fc2b"])
    w3fc = jnp.zeros((128, 128), f32).at[:84, :10].set(p["fc3w"].T)
    b3fc = jnp.zeros((1, 128), f32).at[0, :10].set(p["fc3b"])
    return (w1k, b1blk, pool1, g2cat, w2k, b2blk, wf1, bf1, w2fc, b2fc, w3fc, b3fc)


# ---------------------------------------------------------------------------
# The single fused Pallas kernel (one grid step == BT samples)
# ---------------------------------------------------------------------------
def _lenet5c_kernel(cols_ref, w1k_ref, b1_ref, p1_ref, g2_ref, w2k_ref, b2_ref,
                    wf1_ref, bf1_ref, w2fc_ref, b2fc_ref, w3fc_ref, b3fc_ref,
                    out_ref):
    f32, bf16 = jnp.float32, jnp.bfloat16
    bt = out_ref.shape[0]
    cols = cols_ref[0]                                      # (80*bt, 784) bf16

    # conv1 + ReLU.  Rows are channel-major, batch-minor (co*bt + b).
    h1 = jnp.dot(w1k_ref[...], cols, preferred_element_type=f32) + b1_ref[...]
    h1 = jnp.maximum(h1, 0.0)                               # (8*bt, 784)

    # avg_pool1 (2x2/2) as one shared spatial matmul -> (8*bt, 196).
    pooled = jnp.dot(h1.astype(bf16), p1_ref[...], preferred_element_type=f32)

    # conv2: ONE concatenated gather matmul, then 25 kron channel-mix matmuls.
    patches = jnp.dot(pooled.astype(bf16), g2_ref[...],
                      preferred_element_type=f32).astype(bf16)   # (8*bt, 3200)
    h2 = jnp.zeros((16 * bt, 128), f32)
    for k in range(25):
        h2 = h2 + jnp.dot(w2k_ref[k], patches[:, k * 128:(k + 1) * 128],
                          preferred_element_type=f32)
    h2 = jnp.maximum(h2 + b2_ref[...], 0.0)     # (16*bt, 128); lanes>=100 inert

    # avg_pool2 ∘ avg_pool3 ∘ flatten ∘ fc1, folded; 16 matmuls with M = bt.
    a1 = jnp.zeros((bt, 128), f32)
    for c in range(16):
        a1 = a1 + jnp.dot(h2[c * bt:(c + 1) * bt, :], wf1_ref[c],
                          preferred_element_type=f32)
    a1 = jnp.maximum(a1 + bf1_ref[...], 0.0)                # (bt,128); 120 valid

    # fc2 + ReLU, fc3 (128x128 zero-padded, lane-dense).
    a2 = jnp.maximum(
        jnp.dot(a1, w2fc_ref[...], preferred_element_type=f32) + b2fc_ref[...], 0.0)
    out_ref[...] = (jnp.dot(a2, w3fc_ref[...], preferred_element_type=f32)
                    + b3fc_ref[...])                        # (bt,128); 10 valid


def lenet5c_forward(x, packed, bt=BT):
    """x: (B, 3, 32, 32) float32 NCHW -> logits (B, 10)."""
    b = x.shape[0]
    # im2col for conv1; column order (ci, kh, kw) matches w1.reshape(6, 75).
    # TODO(synk): im2col could move in-kernel via pltpu.roll lane shifts of the
    # raw (8,1024) image to cut per-sample HBM traffic further (review item 5).
    patches = jnp.stack([x[:, :, kh:kh + 28, kw:kw + 28]
                         for kh in range(5) for kw in range(5)], axis=2)
    cols = patches.reshape(b, 75, 784)
    cols = jnp.pad(cols, ((0, 0), (0, 5), (0, 0)))                  # (B, 80, 784)
    pad_b = (-b) % bt
    if pad_b:
        cols = jnp.pad(cols, ((0, pad_b), (0, 0), (0, 0)))
    nb = cols.shape[0] // bt
    # Per grid block: feature-major, batch-minor rows -> (nb, 80*bt, 784) bf16.
    cols = cols.reshape(nb, bt, 80, 784).transpose(0, 2, 1, 3)
    cols = cols.reshape(nb, 80 * bt, 784).astype(jnp.bfloat16)

    (w1k, b1blk, pool1, g2cat, w2k, b2blk,
     wf1, bf1, w2fc, b2fc, w3fc, b3fc) = packed

    out = pl.pallas_call(
        _lenet5c_kernel,
        out_shape=jax.ShapeDtypeStruct((nb * bt, 128), jnp.float32),
        grid=(nb,),
        in_specs=[
            pl.BlockSpec((1, 80 * bt, 784), lambda i: (i, 0, 0)),      # im2col block
            pl.BlockSpec((8 * bt, 80 * bt), lambda i: (0, 0)),         # conv1 kron W
            pl.BlockSpec((8 * bt, 1), lambda i: (0, 0)),               # conv1 bias
            pl.BlockSpec((784, 196), lambda i: (0, 0)),                # pool1 matrix
            pl.BlockSpec((196, 3200), lambda i: (0, 0)),               # conv2 gathers
            pl.BlockSpec((25, 16 * bt, 8 * bt), lambda i: (0, 0, 0)),  # conv2 kron W
            pl.BlockSpec((16 * bt, 1), lambda i: (0, 0)),              # conv2 bias
            pl.BlockSpec((16, 128, 128), lambda i: (0, 0, 0)),         # pool23∘fc1
            pl.BlockSpec((1, 128), lambda i: (0, 0)),                  # fc1 bias
            pl.BlockSpec((128, 128), lambda i: (0, 0)),                # fc2 weight
            pl.BlockSpec((1, 128), lambda i: (0, 0)),                  # fc2 bias
            pl.BlockSpec((128, 128), lambda i: (0, 0)),                # fc3 weight
            pl.BlockSpec((1, 128), lambda i: (0, 0)),                  # fc3 bias
        ],
        out_specs=pl.BlockSpec((bt, 128), lambda i: (i, 0)),
        compiler_params=pltpu.CompilerParams(
            dimension_semantics=("parallel",),       # batch blocks across TCs
            vmem_limit_bytes=32 * 1024 * 1024),
    )(cols, w1k, b1blk, pool1, g2cat, w2k, b2blk, wf1, bf1, w2fc, b2fc, w3fc, b3fc)

    return out[:b, :10]


# ---------------------------------------------------------------------------
# Pure-JAX reference (validation only)
# ---------------------------------------------------------------------------
def reference_forward(x, p):
    dn = ("NCHW", "OIHW", "NCHW")
    y = jax.lax.conv_general_dilated(x, p["w1"], (1, 1), "VALID", dimension_numbers=dn)
    y = jax.nn.relu(y + p["b1"].reshape(1, -1, 1, 1))
    b, c, h, w = y.shape
    y = y.reshape(b, c, h // 2, 2, w // 2, 2).mean(axis=(3, 5))
    y = jax.lax.conv_general_dilated(y, p["w2"], (1, 1), "VALID", dimension_numbers=dn)
    y = jax.nn.relu(y + p["b2"].reshape(1, -1, 1, 1))
    b, c, h, w = y.shape
    y = y.reshape(b, c, h // 2, 2, w // 2, 2).mean(axis=(3, 5))
    h, w = y.shape[2], y.shape[3]
    yp = jnp.pad(y, ((0, 0), (0, 0), (1, 1), (1, 1)))
    y = sum(yp[:, :, dh:dh + h, dw:dw + w] for dh in range(3) for dw in range(3)) / 9.0
    y = y.reshape(y.shape[0], -1)
    y = jax.nn.relu(y @ p["fc1w"].T + p["fc1b"])
    y = jax.nn.relu(y @ p["fc2w"].T + p["fc2b"])
    y = y @ p["fc3w"].T + p["fc3b"]
    return y


if __name__ == "__main__":
    key = jax.random.PRNGKey(0)
    kx, kp = jax.random.split(key)
    params = init_params(kp)
    packed = pack_weights(params, bt=BT)
    # LeNet5 on 32x32 RGB (flatten == 16*5*5 == fc1 in_features), small batch.
    x = jax.random.normal(kx, (2, 3, 32, 32), jnp.float32)

    fwd = jax.jit(lenet5c_forward)
    out = jax.block_until_ready(fwd(x, packed))
    ref = jax.block_until_ready(reference_forward(x, params))

    assert out.shape == (2, 10)
    # atol slightly relaxed for the bf16 conv-path operands (f32 accumulation).
    np.testing.assert_allclose(np.asarray(out), np.asarray(ref),
                               rtol=2e-2, atol=3e-2)
    print("KERNEL_OK")
</pallas_src>

<mosaic_0001>
module attributes {stable_mosaic.version = 11 : i64} {
  func.func @_lenet5c_kernel(%arg0: i32, %arg1: memref<1x640x784xbf16, #tpu.memory_space<vmem>>, %arg2: memref<64x640xbf16, #tpu.memory_space<vmem>>, %arg3: memref<64x1xf32, #tpu.memory_space<vmem>>, %arg4: memref<784x196xbf16, #tpu.memory_space<vmem>>, %arg5: memref<196x3200xbf16, #tpu.memory_space<vmem>>, %arg6: memref<25x128x64xbf16, #tpu.memory_space<vmem>>, %arg7: memref<128x1xf32, #tpu.memory_space<vmem>>, %arg8: memref<16x128x128xf32, #tpu.memory_space<vmem>>, %arg9: memref<1x128xf32, #tpu.memory_space<vmem>>, %arg10: memref<128x128xf32, #tpu.memory_space<vmem>>, %arg11: memref<1x128xf32, #tpu.memory_space<vmem>>, %arg12: memref<128x128xf32, #tpu.memory_space<vmem>>, %arg13: memref<1x128xf32, #tpu.memory_space<vmem>>, %arg14: memref<8x128xf32, #tpu.memory_space<vmem>>) attributes {dimension_semantics = [#tpu.dimension_semantics<parallel>], iteration_bounds = array<i64: 1>, scalar_prefetch = 0 : i64, scratch_operands = 0 : i64, tpu.core_type = #tpu.core_type<tc>, window_params = [{transform_indices = @transform_0, window_bounds = array<i64: 1, 640, 784>}, {pipeline_mode = #tpu.pipeline_mode<synchronous>, transform_indices = @transform_1, window_bounds = array<i64: 64, 640>}, {pipeline_mode = #tpu.pipeline_mode<synchronous>, transform_indices = @transform_2, window_bounds = array<i64: 64, 1>}, {pipeline_mode = #tpu.pipeline_mode<synchronous>, transform_indices = @transform_3, window_bounds = array<i64: 784, 196>}, {pipeline_mode = #tpu.pipeline_mode<synchronous>, transform_indices = @transform_4, window_bounds = array<i64: 196, 3200>}, {pipeline_mode = #tpu.pipeline_mode<synchronous>, transform_indices = @transform_5, window_bounds = array<i64: 25, 128, 64>}, {pipeline_mode = #tpu.pipeline_mode<synchronous>, transform_indices = @transform_6, window_bounds = array<i64: 128, 1>}, {pipeline_mode = #tpu.pipeline_mode<synchronous>, transform_indices = @transform_7, window_bounds = array<i64: 16, 128, 128>}, {pipeline_mode = #tpu.pipeline_mode<synchronous>, transform_indices = @transform_8, window_bounds = array<i64: 1, 128>}, {pipeline_mode = #tpu.pipeline_mode<synchronous>, transform_indices = @transform_9, window_bounds = array<i64: 128, 128>}, {pipeline_mode = #tpu.pipeline_mode<synchronous>, transform_indices = @transform_10, window_bounds = array<i64: 1, 128>}, {pipeline_mode = #tpu.pipeline_mode<synchronous>, transform_indices = @transform_11, window_bounds = array<i64: 128, 128>}, {pipeline_mode = #tpu.pipeline_mode<synchronous>, transform_indices = @transform_12, window_bounds = array<i64: 1, 128>}, {transform_indices = @transform_13, window_bounds = array<i64: 8, 128>}]} {
    %c0 = arith.constant 0 : index
    %c0_0 = arith.constant 0 : index
    %c0_1 = arith.constant 0 : index
    %0 = vector.load %arg1[%c0, %c0_0, %c0_1] : memref<1x640x784xbf16, #tpu.memory_space<vmem>>, vector<1x640x784xbf16>
    %1 = vector.shape_cast %0 : vector<1x640x784xbf16> to vector<640x784xbf16>
    %c0_2 = arith.constant 0 : index
    %c0_3 = arith.constant 0 : index
    %2 = vector.load %arg2[%c0_2, %c0_3] : memref<64x640xbf16, #tpu.memory_space<vmem>>, vector<64x640xbf16>
    %cst = arith.constant dense<0.000000e+00> : vector<64x784xf32>
    %3 = tpu.matmul %2, %1, %cst {dimension_numbers = #tpu.dot_dimension_numbers<[1], [0], [0], [1], [0, 0, 1, 1], [], []>} : vector<64x640xbf16>, vector<640x784xbf16>, vector<64x784xf32> -> vector<64x784xf32>
    %c0_4 = arith.constant 0 : index
    %c0_5 = arith.constant 0 : index
    %4 = vector.load %arg3[%c0_4, %c0_5] : memref<64x1xf32, #tpu.memory_space<vmem>>, vector<64x1xf32>
    %5 = vector.broadcast %4 : vector<64x1xf32> to vector<64x784xf32>
    %6 = arith.addf %3, %5 : vector<64x784xf32>
    %cst_6 = arith.constant 0.000000e+00 : f32
    %7 = vector.broadcast %cst_6 : f32 to vector<64x784xf32>
    %8 = arith.maximumf %6, %7 : vector<64x784xf32>
    %9 = arith.truncf %8 : vector<64x784xf32> to vector<64x784xbf16>
    %c0_7 = arith.constant 0 : index
    %c0_8 = arith.constant 0 : index
    %10 = vector.load %arg4[%c0_7, %c0_8] : memref<784x196xbf16, #tpu.memory_space<vmem>>, vector<784x196xbf16>
    %cst_9 = arith.constant dense<0.000000e+00> : vector<64x196xf32>
    %11 = tpu.matmul %9, %10, %cst_9 {dimension_numbers = #tpu.dot_dimension_numbers<[1], [0], [0], [1], [0, 0, 1, 1], [], []>} : vector<64x784xbf16>, vector<784x196xbf16>, vector<64x196xf32> -> vector<64x196xf32>
    %12 = arith.truncf %11 : vector<64x196xf32> to vector<64x196xbf16>
    %c0_10 = arith.constant 0 : index
    %c0_11 = arith.constant 0 : index
    %13 = vector.load %arg5[%c0_10, %c0_11] : memref<196x3200xbf16, #tpu.memory_space<vmem>>, vector<196x3200xbf16>
    %cst_12 = arith.constant dense<0.000000e+00> : vector<64x3200xf32>
    %14 = tpu.matmul %12, %13, %cst_12 {dimension_numbers = #tpu.dot_dimension_numbers<[1], [0], [0], [1], [0, 0, 1, 1], [], []>} : vector<64x196xbf16>, vector<196x3200xbf16>, vector<64x3200xf32> -> vector<64x3200xf32>
    %15 = arith.truncf %14 : vector<64x3200xf32> to vector<64x3200xbf16>
    %cst_13 = arith.constant 0.000000e+00 : f32
    %16 = vector.broadcast %cst_13 : f32 to vector<128x128xf32>
    %c0_14 = arith.constant 0 : index
    %c0_15 = arith.constant 0 : index
    %c0_16 = arith.constant 0 : index
    %17 = vector.load %arg6[%c0_14, %c0_15, %c0_16] : memref<25x128x64xbf16, #tpu.memory_space<vmem>>, vector<1x128x64xbf16>
    %18 = vector.shape_cast %17 : vector<1x128x64xbf16> to vector<128x64xbf16>
    %19 = vector.extract_strided_slice %15 {offsets = [0, 0], sizes = [64, 128], strides = [1, 1]} : vector<64x3200xbf16> to vector<64x128xbf16>
    %cst_17 = arith.constant dense<0.000000e+00> : vector<128x128xf32>
    %20 = tpu.matmul %18, %19, %cst_17 {dimension_numbers = #tpu.dot_dimension_numbers<[1], [0], [0], [1], [0, 0, 1, 1], [], []>} : vector<128x64xbf16>, vector<64x128xbf16>, vector<128x128xf32> -> vector<128x128xf32>
    %21 = arith.addf %16, %20 : vector<128x128xf32>
    %c1 = arith.constant 1 : index
    %c0_18 = arith.constant 0 : index
    %c0_19 = arith.constant 0 : index
    %22 = vector.load %arg6[%c1, %c0_18, %c0_19] : memref<25x128x64xbf16, #tpu.memory_space<vmem>>, vector<1x128x64xbf16>
    %23 = vector.shape_cast %22 : vector<1x128x64xbf16> to vector<128x64xbf16>
    %24 = vector.extract_strided_slice %15 {offsets = [0, 128], sizes = [64, 128], strides = [1, 1]} : vector<64x3200xbf16> to vector<64x128xbf16>
    %cst_20 = arith.constant dense<0.000000e+00> : vector<128x128xf32>
    %25 = tpu.matmul %23, %24, %cst_20 {dimension_numbers = #tpu.dot_dimension_numbers<[1], [0], [0], [1], [0, 0, 1, 1], [], []>} : vector<128x64xbf16>, vector<64x128xbf16>, vector<128x128xf32> -> vector<128x128xf32>
    %26 = arith.addf %21, %25 : vector<128x128xf32>
    %c2 = arith.constant 2 : index
    %c0_21 = arith.constant 0 : index
    %c0_22 = arith.constant 0 : index
    %27 = vector.load %arg6[%c2, %c0_21, %c0_22] : memref<25x128x64xbf16, #tpu.memory_space<vmem>>, vector<1x128x64xbf16>
    %28 = vector.shape_cast %27 : vector<1x128x64xbf16> to vector<128x64xbf16>
    %29 = vector.extract_strided_slice %15 {offsets = [0, 256], sizes = [64, 128], strides = [1, 1]} : vector<64x3200xbf16> to vector<64x128xbf16>
    %cst_23 = arith.constant dense<0.000000e+00> : vector<128x128xf32>
    %30 = tpu.matmul %28, %29, %cst_23 {dimension_numbers = #tpu.dot_dimension_numbers<[1], [0], [0], [1], [0, 0, 1, 1], [], []>} : vector<128x64xbf16>, vector<64x128xbf16>, vector<128x128xf32> -> vector<128x128xf32>
    %31 = arith.addf %26, %30 : vector<128x128xf32>
    %c3 = arith.constant 3 : index
    %c0_24 = arith.constant 0 : index
    %c0_25 = arith.constant 0 : index
    %32 = vector.load %arg6[%c3, %c0_24, %c0_25] : memref<25x128x64xbf16, #tpu.memory_space<vmem>>, vector<1x128x64xbf16>
    %33 = vector.shape_cast %32 : vector<1x128x64xbf16> to vector<128x64xbf16>
    %34 = vector.extract_strided_slice %15 {offsets = [0, 384], sizes = [64, 128], strides = [1, 1]} : vector<64x3200xbf16> to vector<64x128xbf16>
    %cst_26 = arith.constant dense<0.000000e+00> : vector<128x128xf32>
    %35 = tpu.matmul %33, %34, %cst_26 {dimension_numbers = #tpu.dot_dimension_numbers<[1], [0], [0], [1], [0, 0, 1, 1], [], []>} : vector<128x64xbf16>, vector<64x128xbf16>, vector<128x128xf32> -> vector<128x128xf32>
    %36 = arith.addf %31, %35 : vector<128x128xf32>
    %c4 = arith.constant 4 : index
    %c0_27 = arith.constant 0 : index
    %c0_28 = arith.constant 0 : index
    %37 = vector.load %arg6[%c4, %c0_27, %c0_28] : memref<25x128x64xbf16, #tpu.memory_space<vmem>>, vector<1x128x64xbf16>
    %38 = vector.shape_cast %37 : vector<1x128x64xbf16> to vector<128x64xbf16>
    %39 = vector.extract_strided_slice %15 {offsets = [0, 512], sizes = [64, 128], strides = [1, 1]} : vector<64x3200xbf16> to vector<64x128xbf16>
    %cst_29 = arith.constant dense<0.000000e+00> : vector<128x128xf32>
    %40 = tpu.matmul %38, %39, %cst_29 {dimension_numbers = #tpu.dot_dimension_numbers<[1], [0], [0], [1], [0, 0, 1, 1], [], []>} : vector<128x64xbf16>, vector<64x128xbf16>, vector<128x128xf32> -> vector<128x128xf32>
    %41 = arith.addf %36, %40 : vector<128x128xf32>
    %c5 = arith.constant 5 : index
    %c0_30 = arith.constant 0 : index
    %c0_31 = arith.constant 0 : index
    %42 = vector.load %arg6[%c5, %c0_30, %c0_31] : memref<25x128x64xbf16, #tpu.memory_space<vmem>>, vector<1x128x64xbf16>
    %43 = vector.shape_cast %42 : vector<1x128x64xbf16> to vector<128x64xbf16>
    %44 = vector.extract_strided_slice %15 {offsets = [0, 640], sizes = [64, 128], strides = [1, 1]} : vector<64x3200xbf16> to vector<64x128xbf16>
    %cst_32 = arith.constant dense<0.000000e+00> : vector<128x128xf32>
    %45 = tpu.matmul %43, %44, %cst_32 {dimension_numbers = #tpu.dot_dimension_numbers<[1], [0], [0], [1], [0, 0, 1, 1], [], []>} : vector<128x64xbf16>, vector<64x128xbf16>, vector<128x128xf32> -> vector<128x128xf32>
    %46 = arith.addf %41, %45 : vector<128x128xf32>
    %c6 = arith.constant 6 : index
    %c0_33 = arith.constant 0 : index
    %c0_34 = arith.constant 0 : index
    %47 = vector.load %arg6[%c6, %c0_33, %c0_34] : memref<25x128x64xbf16, #tpu.memory_space<vmem>>, vector<1x128x64xbf16>
    %48 = vector.shape_cast %47 : vector<1x128x64xbf16> to vector<128x64xbf16>
    %49 = vector.extract_strided_slice %15 {offsets = [0, 768], sizes = [64, 128], strides = [1, 1]} : vector<64x3200xbf16> to vector<64x128xbf16>
    %cst_35 = arith.constant dense<0.000000e+00> : vector<128x128xf32>
    %50 = tpu.matmul %48, %49, %cst_35 {dimension_numbers = #tpu.dot_dimension_numbers<[1], [0], [0], [1], [0, 0, 1, 1], [], []>} : vector<128x64xbf16>, vector<64x128xbf16>, vector<128x128xf32> -> vector<128x128xf32>
    %51 = arith.addf %46, %50 : vector<128x128xf32>
    %c7 = arith.constant 7 : index
    %c0_36 = arith.constant 0 : index
    %c0_37 = arith.constant 0 : index
    %52 = vector.load %arg6[%c7, %c0_36, %c0_37] : memref<25x128x64xbf16, #tpu.memory_space<vmem>>, vector<1x128x64xbf16>
    %53 = vector.shape_cast %52 : vector<1x128x64xbf16> to vector<128x64xbf16>
    %54 = vector.extract_strided_slice %15 {offsets = [0, 896], sizes = [64, 128], strides = [1, 1]} : vector<64x3200xbf16> to vector<64x128xbf16>
    %cst_38 = arith.constant dense<0.000000e+00> : vector<128x128xf32>
    %55 = tpu.matmul %53, %54, %cst_38 {dimension_numbers = #tpu.dot_dimension_numbers<[1], [0], [0], [1], [0, 0, 1, 1], [], []>} : vector<128x64xbf16>, vector<64x128xbf16>, vector<128x128xf32> -> vector<128x128xf32>
    %56 = arith.addf %51, %55 : vector<128x128xf32>
    %c8 = arith.constant 8 : index
    %c0_39 = arith.constant 0 : index
    %c0_40 = arith.constant 0 : index
    %57 = vector.load %arg6[%c8, %c0_39, %c0_40] : memref<25x128x64xbf16, #tpu.memory_space<vmem>>, vector<1x128x64xbf16>
    %58 = vector.shape_cast %57 : vector<1x128x64xbf16> to vector<128x64xbf16>
    %59 = vector.extract_strided_slice %15 {offsets = [0, 1024], sizes = [64, 128], strides = [1, 1]} : vector<64x3200xbf16> to vector<64x128xbf16>
    %cst_41 = arith.constant dense<0.000000e+00> : vector<128x128xf32>
    %60 = tpu.matmul %58, %59, %cst_41 {dimension_numbers = #tpu.dot_dimension_numbers<[1], [0], [0], [1], [0, 0, 1, 1], [], []>} : vector<128x64xbf16>, vector<64x128xbf16>, vector<128x128xf32> -> vector<128x128xf32>
    %61 = arith.addf %56, %60 : vector<128x128xf32>
    %c9 = arith.constant 9 : index
    %c0_42 = arith.constant 0 : index
    %c0_43 = arith.constant 0 : index
    %62 = vector.load %arg6[%c9, %c0_42, %c0_43] : memref<25x128x64xbf16, #tpu.memory_space<vmem>>, vector<1x128x64xbf16>
    %63 = vector.shape_cast %62 : vector<1x128x64xbf16> to vector<128x64xbf16>
    %64 = vector.extract_strided_slice %15 {offsets = [0, 1152], sizes = [64, 128], strides = [1, 1]} : vector<64x3200xbf16> to vector<64x128xbf16>
    %cst_44 = arith.constant dense<0.000000e+00> : vector<128x128xf32>
    %65 = tpu.matmul %63, %64, %cst_44 {dimension_numbers = #tpu.dot_dimension_numbers<[1], [0], [0], [1], [0, 0, 1, 1], [], []>} : vector<128x64xbf16>, vector<64x128xbf16>, vector<128x128xf32> -> vector<128x128xf32>
    %66 = arith.addf %61, %65 : vector<128x128xf32>
    %c10 = arith.constant 10 : index
    %c0_45 = arith.constant 0 : index
    %c0_46 = arith.constant 0 : index
    %67 = vector.load %arg6[%c10, %c0_45, %c0_46] : memref<25x128x64xbf16, #tpu.memory_space<vmem>>, vector<1x128x64xbf16>
    %68 = vector.shape_cast %67 : vector<1x128x64xbf16> to vector<128x64xbf16>
    %69 = vector.extract_strided_slice %15 {offsets = [0, 1280], sizes = [64, 128], strides = [1, 1]} : vector<64x3200xbf16> to vector<64x128xbf16>
    %cst_47 = arith.constant dense<0.000000e+00> : vector<128x128xf32>
    %70 = tpu.matmul %68, %69, %cst_47 {dimension_numbers = #tpu.dot_dimension_numbers<[1], [0], [0], [1], [0, 0, 1, 1], [], []>} : vector<128x64xbf16>, vector<64x128xbf16>, vector<128x128xf32> -> vector<128x128xf32>
    %71 = arith.addf %66, %70 : vector<128x128xf32>
    %c11 = arith.constant 11 : index
    %c0_48 = arith.constant 0 : index
    %c0_49 = arith.constant 0 : index
    %72 = vector.load %arg6[%c11, %c0_48, %c0_49] : memref<25x128x64xbf16, #tpu.memory_space<vmem>>, vector<1x128x64xbf16>
    %73 = vector.shape_cast %72 : vector<1x128x64xbf16> to vector<128x64xbf16>
    %74 = vector.extract_strided_slice %15 {offsets = [0, 1408], sizes = [64, 128], strides = [1, 1]} : vector<64x3200xbf16> to vector<64x128xbf16>
    %cst_50 = arith.constant dense<0.000000e+00> : vector<128x128xf32>
    %75 = tpu.matmul %73, %74, %cst_50 {dimension_numbers = #tpu.dot_dimension_numbers<[1], [0], [0], [1], [0, 0, 1, 1], [], []>} : vector<128x64xbf16>, vector<64x128xbf16>, vector<128x128xf32> -> vector<128x128xf32>
    %76 = arith.addf %71, %75 : vector<128x128xf32>
    %c12 = arith.constant 12 : index
    %c0_51 = arith.constant 0 : index
    %c0_52 = arith.constant 0 : index
    %77 = vector.load %arg6[%c12, %c0_51, %c0_52] : memref<25x128x64xbf16, #tpu.memory_space<vmem>>, vector<1x128x64xbf16>
    %78 = vector.shape_cast %77 : vector<1x128x64xbf16> to vector<128x64xbf16>
    %79 = vector.extract_strided_slice %15 {offsets = [0, 1536], sizes = [64, 128], strides = [1, 1]} : vector<64x3200xbf16> to vector<64x128xbf16>
    %cst_53 = arith.constant dense<0.000000e+00> : vector<128x128xf32>
    %80 = tpu.matmul %78, %79, %cst_53 {dimension_numbers = #tpu.dot_dimension_numbers<[1], [0], [0], [1], [0, 0, 1, 1], [], []>} : vector<128x64xbf16>, vector<64x128xbf16>, vector<128x128xf32> -> vector<128x128xf32>
    %81 = arith.addf %76, %80 : vector<128x128xf32>
    %c13 = arith.constant 13 : index
    %c0_54 = arith.constant 0 : index
    %c0_55 = arith.constant 0 : index
    %82 = vector.load %arg6[%c13, %c0_54, %c0_55] : memref<25x128x64xbf16, #tpu.memory_space<vmem>>, vector<1x128x64xbf16>
    %83 = vector.shape_cast %82 : vector<1x128x64xbf16> to vector<128x64xbf16>
    %84 = vector.extract_strided_slice %15 {offsets = [0, 1664], sizes = [64, 128], strides = [1, 1]} : vector<64x3200xbf16> to vector<64x128xbf16>
    %cst_56 = arith.constant dense<0.000000e+00> : vector<128x128xf32>
    %85 = tpu.matmul %83, %84, %cst_56 {dimension_numbers = #tpu.dot_dimension_numbers<[1], [0], [0], [1], [0, 0, 1, 1], [], []>} : vector<128x64xbf16>, vector<64x128xbf16>, vector<128x128xf32> -> vector<128x128xf32>
    %86 = arith.addf %81, %85 : vector<128x128xf32>
    %c14 = arith.constant 14 : index
    %c0_57 = arith.constant 0 : index
    %c0_58 = arith.constant 0 : index
    %87 = vector.load %arg6[%c14, %c0_57, %c0_58] : memref<25x128x64xbf16, #tpu.memory_space<vmem>>, vector<1x128x64xbf16>
    %88 = vector.shape_cast %87 : vector<1x128x64xbf16> to vector<128x64xbf16>
    %89 = vector.extract_strided_slice %15 {offsets = [0, 1792], sizes = [64, 128], strides = [1, 1]} : vector<64x3200xbf16> to vector<64x128xbf16>
    %cst_59 = arith.constant dense<0.000000e+00> : vector<128x128xf32>
    %90 = tpu.matmul %88, %89, %cst_59 {dimension_numbers = #tpu.dot_dimension_numbers<[1], [0], [0], [1], [0, 0, 1, 1], [], []>} : vector<128x64xbf16>, vector<64x128xbf16>, vector<128x128xf32> -> vector<128x128xf32>
    %91 = arith.addf %86, %90 : vector<128x128xf32>
    %c15 = arith.constant 15 : index
    %c0_60 = arith.constant 0 : index
    %c0_61 = arith.constant 0 : index
    %92 = vector.load %arg6[%c15, %c0_60, %c0_61] : memref<25x128x64xbf16, #tpu.memory_space<vmem>>, vector<1x128x64xbf16>
    %93 = vector.shape_cast %92 : vector<1x128x64xbf16> to vector<128x64xbf16>
    %94 = vector.extract_strided_slice %15 {offsets = [0, 1920], sizes = [64, 128], strides = [1, 1]} : vector<64x3200xbf16> to vector<64x128xbf16>
    %cst_62 = arith.constant dense<0.000000e+00> : vector<128x128xf32>
    %95 = tpu.matmul %93, %94, %cst_62 {dimension_numbers = #tpu.dot_dimension_numbers<[1], [0], [0], [1], [0, 0, 1, 1], [], []>} : vector<128x64xbf16>, vector<64x128xbf16>, vector<128x128xf32> -> vector<128x128xf32>
    %96 = arith.addf %91, %95 : vector<128x128xf32>
    %c16 = arith.constant 16 : index
    %c0_63 = arith.constant 0 : index
    %c0_64 = arith.constant 0 : index
    %97 = vector.load %arg6[%c16, %c0_63, %c0_64] : memref<25x128x64xbf16, #tpu.memory_space<vmem>>, vector<1x128x64xbf16>
    %98 = vector.shape_cast %97 : vector<1x128x64xbf16> to vector<128x64xbf16>
    %99 = vector.extract_strided_slice %15 {offsets = [0, 2048], sizes = [64, 128], strides = [1, 1]} : vector<64x3200xbf16> to vector<64x128xbf16>
    %cst_65 = arith.constant dense<0.000000e+00> : vector<128x128xf32>
    %100 = tpu.matmul %98, %99, %cst_65 {dimension_numbers = #tpu.dot_dimension_numbers<[1], [0], [0], [1], [0, 0, 1, 1], [], []>} : vector<128x64xbf16>, vector<64x128xbf16>, vector<128x128xf32> -> vector<128x128xf32>
    %101 = arith.addf %96, %100 : vector<128x128xf32>
    %c17 = arith.constant 17 : index
    %c0_66 = arith.constant 0 : index
    %c0_67 = arith.constant 0 : index
    %102 = vector.load %arg6[%c17, %c0_66, %c0_67] : memref<25x128x64xbf16, #tpu.memory_space<vmem>>, vector<1x128x64xbf16>
    %103 = vector.shape_cast %102 : vector<1x128x64xbf16> to vector<128x64xbf16>
    %104 = vector.extract_strided_slice %15 {offsets = [0, 2176], sizes = [64, 128], strides = [1, 1]} : vector<64x3200xbf16> to vector<64x128xbf16>
    %cst_68 = arith.constant dense<0.000000e+00> : vector<128x128xf32>
    %105 = tpu.matmul %103, %104, %cst_68 {dimension_numbers = #tpu.dot_dimension_numbers<[1], [0], [0], [1], [0, 0, 1, 1], [], []>} : vector<128x64xbf16>, vector<64x128xbf16>, vector<128x128xf32> -> vector<128x128xf32>
    %106 = arith.addf %101, %105 : vector<128x128xf32>
    %c18 = arith.constant 18 : index
    %c0_69 = arith.constant 0 : index
    %c0_70 = arith.constant 0 : index
    %107 = vector.load %arg6[%c18, %c0_69, %c0_70] : memref<25x128x64xbf16, #tpu.memory_space<vmem>>, vector<1x128x64xbf16>
    %108 = vector.shape_cast %107 : vector<1x128x64xbf16> to vector<128x64xbf16>
    %109 = vector.extract_strided_slice %15 {offsets = [0, 2304], sizes = [64, 128], strides = [1, 1]} : vector<64x3200xbf16> to vector<64x128xbf16>
    %cst_71 = arith.constant dense<0.000000e+00> : vector<128x128xf32>
    %110 = tpu.matmul %108, %109, %cst_71 {dimension_numbers = #tpu.dot_dimension_numbers<[1], [0], [0], [1], [0, 0, 1, 1], [], []>} : vector<128x64xbf16>, vector<64x128xbf16>, vector<128x128xf32> -> vector<128x128xf32>
    %111 = arith.addf %106, %110 : vector<128x128xf32>
    %c19 = arith.constant 19 : index
    %c0_72 = arith.constant 0 : index
    %c0_73 = arith.constant 0 : index
    %112 = vector.load %arg6[%c19, %c0_72, %c0_73] : memref<25x128x64xbf16, #tpu.memory_space<vmem>>, vector<1x128x64xbf16>
    %113 = vector.shape_cast %112 : vector<1x128x64xbf16> to vector<128x64xbf16>
    %114 = vector.extract_strided_slice %15 {offsets = [0, 2432], sizes = [64, 128], strides = [1, 1]} : vector<64x3200xbf16> to vector<64x128xbf16>
    %cst_74 = arith.constant dense<0.000000e+00> : vector<128x128xf32>
    %115 = tpu.matmul %113, %114, %cst_74 {dimension_numbers = #tpu.dot_dimension_numbers<[1], [0], [0], [1], [0, 0, 1, 1], [], []>} : vector<128x64xbf16>, vector<64x128xbf16>, vector<128x128xf32> -> vector<128x128xf32>
    %116 = arith.addf %111, %115 : vector<128x128xf32>
    %c20 = arith.constant 20 : index
    %c0_75 = arith.constant 0 : index
    %c0_76 = arith.constant 0 : index
    %117 = vector.load %arg6[%c20, %c0_75, %c0_76] : memref<25x128x64xbf16, #tpu.memory_space<vmem>>, vector<1x128x64xbf16>
    %118 = vector.shape_cast %117 : vector<1x128x64xbf16> to vector<128x64xbf16>
    %119 = vector.extract_strided_slice %15 {offsets = [0, 2560], sizes = [64, 128], strides = [1, 1]} : vector<64x3200xbf16> to vector<64x128xbf16>
    %cst_77 = arith.constant dense<0.000000e+00> : vector<128x128xf32>
    %120 = tpu.matmul %118, %119, %cst_77 {dimension_numbers = #tpu.dot_dimension_numbers<[1], [0], [0], [1], [0, 0, 1, 1], [], []>} : vector<128x64xbf16>, vector<64x128xbf16>, vector<128x128xf32> -> vector<128x128xf32>
    %121 = arith.addf %116, %120 : vector<128x128xf32>
    %c21 = arith.constant 21 : index
    %c0_78 = arith.constant 0 : index
    %c0_79 = arith.constant 0 : index
    %122 = vector.load %arg6[%c21, %c0_78, %c0_79] : memref<25x128x64xbf16, #tpu.memory_space<vmem>>, vector<1x128x64xbf16>
    %123 = vector.shape_cast %122 : vector<1x128x64xbf16> to vector<128x64xbf16>
    %124 = vector.extract_strided_slice %15 {offsets = [0, 2688], sizes = [64, 128], strides = [1, 1]} : vector<64x3200xbf16> to vector<64x128xbf16>
    %cst_80 = arith.constant dense<0.000000e+00> : vector<128x128xf32>
    %125 = tpu.matmul %123, %124, %cst_80 {dimension_numbers = #tpu.dot_dimension_numbers<[1], [0], [0], [1], [0, 0, 1, 1], [], []>} : vector<128x64xbf16>, vector<64x128xbf16>, vector<128x128xf32> -> vector<128x128xf32>
    %126 = arith.addf %121, %125 : vector<128x128xf32>
    %c22 = arith.constant 22 : index
    %c0_81 = arith.constant 0 : index
    %c0_82 = arith.constant 0 : index
    %127 = vector.load %arg6[%c22, %c0_81, %c0_82] : memref<25x128x64xbf16, #tpu.memory_space<vmem>>, vector<1x128x64xbf16>
    %128 = vector.shape_cast %127 : vector<1x128x64xbf16> to vector<128x64xbf16>
    %129 = vector.extract_strided_slice %15 {offsets = [0, 2816], sizes = [64, 128], strides = [1, 1]} : vector<64x3200xbf16> to vector<64x128xbf16>
    %cst_83 = arith.constant dense<0.000000e+00> : vector<128x128xf32>
    %130 = tpu.matmul %128, %129, %cst_83 {dimension_numbers = #tpu.dot_dimension_numbers<[1], [0], [0], [1], [0, 0, 1, 1], [], []>} : vector<128x64xbf16>, vector<64x128xbf16>, vector<128x128xf32> -> vector<128x128xf32>
    %131 = arith.addf %126, %130 : vector<128x128xf32>
    %c23 = arith.constant 23 : index
    %c0_84 = arith.constant 0 : index
    %c0_85 = arith.constant 0 : index
    %132 = vector.load %arg6[%c23, %c0_84, %c0_85] : memref<25x128x64xbf16, #tpu.memory_space<vmem>>, vector<1x128x64xbf16>
    %133 = vector.shape_cast %132 : vector<1x128x64xbf16> to vector<128x64xbf16>
    %134 = vector.extract_strided_slice %15 {offsets = [0, 2944], sizes = [64, 128], strides = [1, 1]} : vector<64x3200xbf16> to vector<64x128xbf16>
    %cst_86 = arith.constant dense<0.000000e+00> : vector<128x128xf32>
    %135 = tpu.matmul %133, %134, %cst_86 {dimension_numbers = #tpu.dot_dimension_numbers<[1], [0], [0], [1], [0, 0, 1, 1], [], []>} : vector<128x64xbf16>, vector<64x128xbf16>, vector<128x128xf32> -> vector<128x128xf32>
    %136 = arith.addf %131, %135 : vector<128x128xf32>
    %c24 = arith.constant 24 : index
    %c0_87 = arith.constant 0 : index
    %c0_88 = arith.constant 0 : index
    %137 = vector.load %arg6[%c24, %c0_87, %c0_88] : memref<25x128x64xbf16, #tpu.memory_space<vmem>>, vector<1x128x64xbf16>
    %138 = vector.shape_cast %137 : vector<1x128x64xbf16> to vector<128x64xbf16>
    %139 = vector.extract_strided_slice %15 {offsets = [0, 3072], sizes = [64, 128], strides = [1, 1]} : vector<64x3200xbf16> to vector<64x128xbf16>
    %cst_89 = arith.constant dense<0.000000e+00> : vector<128x128xf32>
    %140 = tpu.matmul %138, %139, %cst_89 {dimension_numbers = #tpu.dot_dimension_numbers<[1], [0], [0], [1], [0, 0, 1, 1], [], []>} : vector<128x64xbf16>, vector<64x128xbf16>, vector<128x128xf32> -> vector<128x128xf32>
    %141 = arith.addf %136, %140 : vector<128x128xf32>
    %c0_90 = arith.constant 0 : index
    %c0_91 = arith.constant 0 : index
    %142 = vector.load %arg7[%c0_90, %c0_91] : memref<128x1xf32, #tpu.memory_space<vmem>>, vector<128x1xf32>
    %143 = vector.broadcast %142 : vector<128x1xf32> to vector<128x128xf32>
    %144 = arith.addf %141, %143 : vector<128x128xf32>
    %cst_92 = arith.constant 0.000000e+00 : f32
    %145 = vector.broadcast %cst_92 : f32 to vector<128x128xf32>
    %146 = arith.maximumf %144, %145 : vector<128x128xf32>
    %cst_93 = arith.constant 0.000000e+00 : f32
    %147 = vector.broadcast %cst_93 : f32 to vector<8x128xf32>
    %148 = vector.extract_strided_slice %146 {offsets = [0, 0], sizes = [8, 128], strides = [1, 1]} : vector<128x128xf32> to vector<8x128xf32>
    %c0_94 = arith.constant 0 : index
    %c0_95 = arith.constant 0 : index
    %c0_96 = arith.constant 0 : index
    %149 = vector.load %arg8[%c0_94, %c0_95, %c0_96] : memref<16x128x128xf32, #tpu.memory_space<vmem>>, vector<1x128x128xf32>
    %150 = vector.shape_cast %149 : vector<1x128x128xf32> to vector<128x128xf32>
    %cst_97 = arith.constant dense<0.000000e+00> : vector<8x128xf32>
    %151 = tpu.matmul %148, %150, %cst_97 {dimension_numbers = #tpu.dot_dimension_numbers<[1], [0], [0], [1], [0, 0, 1, 1], [], []>} : vector<8x128xf32>, vector<128x128xf32>, vector<8x128xf32> -> vector<8x128xf32>
    %152 = arith.addf %147, %151 : vector<8x128xf32>
    %153 = vector.extract_strided_slice %146 {offsets = [8, 0], sizes = [8, 128], strides = [1, 1]} : vector<128x128xf32> to vector<8x128xf32>
    %c1_98 = arith.constant 1 : index
    %c0_99 = arith.constant 0 : index
    %c0_100 = arith.constant 0 : index
    %154 = vector.load %arg8[%c1_98, %c0_99, %c0_100] : memref<16x128x128xf32, #tpu.memory_space<vmem>>, vector<1x128x128xf32>
    %155 = vector.shape_cast %154 : vector<1x128x128xf32> to vector<128x128xf32>
    %cst_101 = arith.constant dense<0.000000e+00> : vector<8x128xf32>
    %156 = tpu.matmul %153, %155, %cst_101 {dimension_numbers = #tpu.dot_dimension_numbers<[1], [0], [0], [1], [0, 0, 1, 1], [], []>} : vector<8x128xf32>, vector<128x128xf32>, vector<8x128xf32> -> vector<8x128xf32>
    %157 = arith.addf %152, %156 : vector<8x128xf32>
    %158 = vector.extract_strided_slice %146 {offsets = [16, 0], sizes = [8, 128], strides = [1, 1]} : vector<128x128xf32> to vector<8x128xf32>
    %c2_102 = arith.constant 2 : index
    %c0_103 = arith.constant 0 : index
    %c0_104 = arith.constant 0 : index
    %159 = vector.load %arg8[%c2_102, %c0_103, %c0_104] : memref<16x128x128xf32, #tpu.memory_space<vmem>>, vector<1x128x128xf32>
    %160 = vector.shape_cast %159 : vector<1x128x128xf32> to vector<128x128xf32>
    %cst_105 = arith.constant dense<0.000000e+00> : vector<8x128xf32>
    %161 = tpu.matmul %158, %160, %cst_105 {dimension_numbers = #tpu.dot_dimension_numbers<[1], [0], [0], [1], [0, 0, 1, 1], [], []>} : vector<8x128xf32>, vector<128x128xf32>, vector<8x128xf32> -> vector<8x128xf32>
    %162 = arith.addf %157, %161 : vector<8x128xf32>
    %163 = vector.extract_strided_slice %146 {offsets = [24, 0], sizes = [8, 128], strides = [1, 1]} : vector<128x128xf32> to vector<8x128xf32>
    %c3_106 = arith.constant 3 : index
    %c0_107 = arith.constant 0 : index
    %c0_108 = arith.constant 0 : index
    %164 = vector.load %arg8[%c3_106, %c0_107, %c0_108] : memref<16x128x128xf32, #tpu.memory_space<vmem>>, vector<1x128x128xf32>
    %165 = vector.shape_cast %164 : vector<1x128x128xf32> to vector<128x128xf32>
    %cst_109 = arith.constant dense<0.000000e+00> : vector<8x128xf32>
    %166 = tpu.matmul %163, %165, %cst_109 {dimension_numbers = #tpu.dot_dimension_numbers<[1], [0], [0], [1], [0, 0, 1, 1], [], []>} : vector<8x128xf32>, vector<128x128xf32>, vector<8x128xf32> -> vector<8x128xf32>
    %167 = arith.addf %162, %166 : vector<8x128xf32>
    %168 = vector.extract_strided_slice %146 {offsets = [32, 0], sizes = [8, 128], strides = [1, 1]} : vector<128x128xf32> to vector<8x128xf32>
    %c4_110 = arith.constant 4 : index
    %c0_111 = arith.constant 0 : index
    %c0_112 = arith.constant 0 : index
    %169 = vector.load %arg8[%c4_110, %c0_111, %c0_112] : memref<16x128x128xf32, #tpu.memory_space<vmem>>, vector<1x128x128xf32>
    %170 = vector.shape_cast %169 : vector<1x128x128xf32> to vector<128x128xf32>
    %cst_113 = arith.constant dense<0.000000e+00> : vector<8x128xf32>
    %171 = tpu.matmul %168, %170, %cst_113 {dimension_numbers = #tpu.dot_dimension_numbers<[1], [0], [0], [1], [0, 0, 1, 1], [], []>} : vector<8x128xf32>, vector<128x128xf32>, vector<8x128xf32> -> vector<8x128xf32>
    %172 = arith.addf %167, %171 : vector<8x128xf32>
    %173 = vector.extract_strided_slice %146 {offsets = [40, 0], sizes = [8, 128], strides = [1, 1]} : vector<128x128xf32> to vector<8x128xf32>
    %c5_114 = arith.constant 5 : index
    %c0_115 = arith.constant 0 : index
    %c0_116 = arith.constant 0 : index
    %174 = vector.load %arg8[%c5_114, %c0_115, %c0_116] : memref<16x128x128xf32, #tpu.memory_space<vmem>>, vector<1x128x128xf32>
    %175 = vector.shape_cast %174 : vector<1x128x128xf32> to vector<128x128xf32>
    %cst_117 = arith.constant dense<0.000000e+00> : vector<8x128xf32>
    %176 = tpu.matmul %173, %175, %cst_117 {dimension_numbers = #tpu.dot_dimension_numbers<[1], [0], [0], [1], [0, 0, 1, 1], [], []>} : vector<8x128xf32>, vector<128x128xf32>, vector<8x128xf32> -> vector<8x128xf32>
    %177 = arith.addf %172, %176 : vector<8x128xf32>
    %178 = vector.extract_strided_slice %146 {offsets = [48, 0], sizes = [8, 128], strides = [1, 1]} : vector<128x128xf32> to vector<8x128xf32>
    %c6_118 = arith.constant 6 : index
    %c0_119 = arith.constant 0 : index
    %c0_120 = arith.constant 0 : index
    %179 = vector.load %arg8[%c6_118, %c0_119, %c0_120] : memref<16x128x128xf32, #tpu.memory_space<vmem>>, vector<1x128x128xf32>
    %180 = vector.shape_cast %179 : vector<1x128x128xf32> to vector<128x128xf32>
    %cst_121 = arith.constant dense<0.000000e+00> : vector<8x128xf32>
    %181 = tpu.matmul %178, %180, %cst_121 {dimension_numbers = #tpu.dot_dimension_numbers<[1], [0], [0], [1], [0, 0, 1, 1], [], []>} : vector<8x128xf32>, vector<128x128xf32>, vector<8x128xf32> -> vector<8x128xf32>
    %182 = arith.addf %177, %181 : vector<8x128xf32>
    %183 = vector.extract_strided_slice %146 {offsets = [56, 0], sizes = [8, 128], strides = [1, 1]} : vector<128x128xf32> to vector<8x128xf32>
    %c7_122 = arith.constant 7 : index
    %c0_123 = arith.constant 0 : index
    %c0_124 = arith.constant 0 : index
    %184 = vector.load %arg8[%c7_122, %c0_123, %c0_124] : memref<16x128x128xf32, #tpu.memory_space<vmem>>, vector<1x128x128xf32>
    %185 = vector.shape_cast %184 : vector<1x128x128xf32> to vector<128x128xf32>
    %cst_125 = arith.constant dense<0.000000e+00> : vector<8x128xf32>
    %186 = tpu.matmul %183, %185, %cst_125 {dimension_numbers = #tpu.dot_dimension_numbers<[1], [0], [0], [1], [0, 0, 1, 1], [], []>} : vector<8x128xf32>, vector<128x128xf32>, vector<8x128xf32> -> vector<8x128xf32>
    %187 = arith.addf %182, %186 : vector<8x128xf32>
    %188 = vector.extract_strided_slice %146 {offsets = [64, 0], sizes = [8, 128], strides = [1, 1]} : vector<128x128xf32> to vector<8x128xf32>
    %c8_126 = arith.constant 8 : index
    %c0_127 = arith.constant 0 : index
    %c0_128 = arith.constant 0 : index
    %189 = vector.load %arg8[%c8_126, %c0_127, %c0_128] : memref<16x128x128xf32, #tpu.memory_space<vmem>>, vector<1x128x128xf32>
    %190 = vector.shape_cast %189 : vector<1x128x128xf32> to vector<128x128xf32>
    %cst_129 = arith.constant dense<0.000000e+00> : vector<8x128xf32>
    %191 = tpu.matmul %188, %190, %cst_129 {dimension_numbers = #tpu.dot_dimension_numbers<[1], [0], [0], [1], [0, 0, 1, 1], [], []>} : vector<8x128xf32>, vector<128x128xf32>, vector<8x128xf32> -> vector<8x128xf32>
    %192 = arith.addf %187, %191 : vector<8x128xf32>
    %193 = vector.extract_strided_slice %146 {offsets = [72, 0], sizes = [8, 128], strides = [1, 1]} : vector<128x128xf32> to vector<8x128xf32>
    %c9_130 = arith.constant 9 : index
    %c0_131 = arith.constant 0 : index
    %c0_132 = arith.constant 0 : index
    %194 = vector.load %arg8[%c9_130, %c0_131, %c0_132] : memref<16x128x128xf32, #tpu.memory_space<vmem>>, vector<1x128x128xf32>
    %195 = vector.shape_cast %194 : vector<1x128x128xf32> to vector<128x128xf32>
    %cst_133 = arith.constant dense<0.000000e+00> : vector<8x128xf32>
    %196 = tpu.matmul %193, %195, %cst_133 {dimension_numbers = #tpu.dot_dimension_numbers<[1], [0], [0], [1], [0, 0, 1, 1], [], []>} : vector<8x128xf32>, vector<128x128xf32>, vector<8x128xf32> -> vector<8x128xf32>
    %197 = arith.addf %192, %196 : vector<8x128xf32>
    %198 = vector.extract_strided_slice %146 {offsets = [80, 0], sizes = [8, 128], strides = [1, 1]} : vector<128x128xf32> to vector<8x128xf32>
    %c10_134 = arith.constant 10 : index
    %c0_135 = arith.constant 0 : index
    %c0_136 = arith.constant 0 : index
    %199 = vector.load %arg8[%c10_134, %c0_135, %c0_136] : memref<16x128x128xf32, #tpu.memory_space<vmem>>, vector<1x128x128xf32>
    %200 = vector.shape_cast %199 : vector<1x128x128xf32> to vector<128x128xf32>
    %cst_137 = arith.constant dense<0.000000e+00> : vector<8x128xf32>
    %201 = tpu.matmul %198, %200, %cst_137 {dimension_numbers = #tpu.dot_dimension_numbers<[1], [0], [0], [1], [0, 0, 1, 1], [], []>} : vector<8x128xf32>, vector<128x128xf32>, vector<8x128xf32> -> vector<8x128xf32>
    %202 = arith.addf %197, %201 : vector<8x128xf32>
    %203 = vector.extract_strided_slice %146 {offsets = [88, 0], sizes = [8, 128], strides = [1, 1]} : vector<128x128xf32> to vector<8x128xf32>
    %c11_138 = arith.constant 11 : index
    %c0_139 = arith.constant 0 : index
    %c0_140 = arith.constant 0 : index
    %204 = vector.load %arg8[%c11_138, %c0_139, %c0_140] : memref<16x128x128xf32, #tpu.memory_space<vmem>>, vector<1x128x128xf32>
    %205 = vector.shape_cast %204 : vector<1x128x128xf32> to vector<128x128xf32>
    %cst_141 = arith.constant dense<0.000000e+00> : vector<8x128xf32>
    %206 = tpu.matmul %203, %205, %cst_141 {dimension_numbers = #tpu.dot_dimension_numbers<[1], [0], [0], [1], [0, 0, 1, 1], [], []>} : vector<8x128xf32>, vector<128x128xf32>, vector<8x128xf32> -> vector<8x128xf32>
    %207 = arith.addf %202, %206 : vector<8x128xf32>
    %208 = vector.extract_strided_slice %146 {offsets = [96, 0], sizes = [8, 128], strides = [1, 1]} : vector<128x128xf32> to vector<8x128xf32>
    %c12_142 = arith.constant 12 : index
    %c0_143 = arith.constant 0 : index
    %c0_144 = arith.constant 0 : index
    %209 = vector.load %arg8[%c12_142, %c0_143, %c0_144] : memref<16x128x128xf32, #tpu.memory_space<vmem>>, vector<1x128x128xf32>
    %210 = vector.shape_cast %209 : vector<1x128x128xf32> to vector<128x128xf32>
    %cst_145 = arith.constant dense<0.000000e+00> : vector<8x128xf32>
    %211 = tpu.matmul %208, %210, %cst_145 {dimension_numbers = #tpu.dot_dimension_numbers<[1], [0], [0], [1], [0, 0, 1, 1], [], []>} : vector<8x128xf32>, vector<128x128xf32>, vector<8x128xf32> -> vector<8x128xf32>
    %212 = arith.addf %207, %211 : vector<8x128xf32>
    %213 = vector.extract_strided_slice %146 {offsets = [104, 0], sizes = [8, 128], strides = [1, 1]} : vector<128x128xf32> to vector<8x128xf32>
    %c13_146 = arith.constant 13 : index
    %c0_147 = arith.constant 0 : index
    %c0_148 = arith.constant 0 : index
    %214 = vector.load %arg8[%c13_146, %c0_147, %c0_148] : memref<16x128x128xf32, #tpu.memory_space<vmem>>, vector<1x128x128xf32>
    %215 = vector.shape_cast %214 : vector<1x128x128xf32> to vector<128x128xf32>
    %cst_149 = arith.constant dense<0.000000e+00> : vector<8x128xf32>
    %216 = tpu.matmul %213, %215, %cst_149 {dimension_numbers = #tpu.dot_dimension_numbers<[1], [0], [0], [1], [0, 0, 1, 1], [], []>} : vector<8x128xf32>, vector<128x128xf32>, vector<8x128xf32> -> vector<8x128xf32>
    %217 = arith.addf %212, %216 : vector<8x128xf32>
    %218 = vector.extract_strided_slice %146 {offsets = [112, 0], sizes = [8, 128], strides = [1, 1]} : vector<128x128xf32> to vector<8x128xf32>
    %c14_150 = arith.constant 14 : index
    %c0_151 = arith.constant 0 : index
    %c0_152 = arith.constant 0 : index
    %219 = vector.load %arg8[%c14_150, %c0_151, %c0_152] : memref<16x128x128xf32, #tpu.memory_space<vmem>>, vector<1x128x128xf32>
    %220 = vector.shape_cast %219 : vector<1x128x128xf32> to vector<128x128xf32>
    %cst_153 = arith.constant dense<0.000000e+00> : vector<8x128xf32>
    %221 = tpu.matmul %218, %220, %cst_153 {dimension_numbers = #tpu.dot_dimension_numbers<[1], [0], [0], [1], [0, 0, 1, 1], [], []>} : vector<8x128xf32>, vector<128x128xf32>, vector<8x128xf32> -> vector<8x128xf32>
    %222 = arith.addf %217, %221 : vector<8x128xf32>
    %223 = vector.extract_strided_slice %146 {offsets = [120, 0], sizes = [8, 128], strides = [1, 1]} : vector<128x128xf32> to vector<8x128xf32>
    %c15_154 = arith.constant 15 : index
    %c0_155 = arith.constant 0 : index
    %c0_156 = arith.constant 0 : index
    %224 = vector.load %arg8[%c15_154, %c0_155, %c0_156] : memref<16x128x128xf32, #tpu.memory_space<vmem>>, vector<1x128x128xf32>
    %225 = vector.shape_cast %224 : vector<1x128x128xf32> to vector<128x128xf32>
    %cst_157 = arith.constant dense<0.000000e+00> : vector<8x128xf32>
    %226 = tpu.matmul %223, %225, %cst_157 {dimension_numbers = #tpu.dot_dimension_numbers<[1], [0], [0], [1], [0, 0, 1, 1], [], []>} : vector<8x128xf32>, vector<128x128xf32>, vector<8x128xf32> -> vector<8x128xf32>
    %227 = arith.addf %222, %226 : vector<8x128xf32>
    %c0_158 = arith.constant 0 : index
    %c0_159 = arith.constant 0 : index
    %228 = vector.load %arg9[%c0_158, %c0_159] : memref<1x128xf32, #tpu.memory_space<vmem>>, vector<1x128xf32>
    %229 = vector.broadcast %228 : vector<1x128xf32> to vector<8x128xf32>
    %230 = arith.addf %227, %229 : vector<8x128xf32>
    %cst_160 = arith.constant 0.000000e+00 : f32
    %231 = vector.broadcast %cst_160 : f32 to vector<8x128xf32>
    %232 = arith.maximumf %230, %231 : vector<8x128xf32>
    %c0_161 = arith.constant 0 : index
    %c0_162 = arith.constant 0 : index
    %233 = vector.load %arg10[%c0_161, %c0_162] : memref<128x128xf32, #tpu.memory_space<vmem>>, vector<128x128xf32>
    %cst_163 = arith.constant dense<0.000000e+00> : vector<8x128xf32>
    %234 = tpu.matmul %232, %233, %cst_163 {dimension_numbers = #tpu.dot_dimension_numbers<[1], [0], [0], [1], [0, 0, 1, 1], [], []>} : vector<8x128xf32>, vector<128x128xf32>, vector<8x128xf32> -> vector<8x128xf32>
    %c0_164 = arith.constant 0 : index
    %c0_165 = arith.constant 0 : index
    %235 = vector.load %arg11[%c0_164, %c0_165] : memref<1x128xf32, #tpu.memory_space<vmem>>, vector<1x128xf32>
    %236 = vector.broadcast %235 : vector<1x128xf32> to vector<8x128xf32>
    %237 = arith.addf %234, %236 : vector<8x128xf32>
    %cst_166 = arith.constant 0.000000e+00 : f32
    %238 = vector.broadcast %cst_166 : f32 to vector<8x128xf32>
    %239 = arith.maximumf %237, %238 : vector<8x128xf32>
    %c0_167 = arith.constant 0 : index
    %c0_168 = arith.constant 0 : index
    %240 = vector.load %arg12[%c0_167, %c0_168] : memref<128x128xf32, #tpu.memory_space<vmem>>, vector<128x128xf32>
    %cst_169 = arith.constant dense<0.000000e+00> : vector<8x128xf32>
    %241 = tpu.matmul %239, %240, %cst_169 {dimension_numbers = #tpu.dot_dimension_numbers<[1], [0], [0], [1], [0, 0, 1, 1], [], []>} : vector<8x128xf32>, vector<128x128xf32>, vector<8x128xf32> -> vector<8x128xf32>
    %c0_170 = arith.constant 0 : index
    %c0_171 = arith.constant 0 : index
    %242 = vector.load %arg13[%c0_170, %c0_171] : memref<1x128xf32, #tpu.memory_space<vmem>>, vector<1x128xf32>
    %243 = vector.broadcast %242 : vector<1x128xf32> to vector<8x128xf32>
    %244 = arith.addf %241, %243 : vector<8x128xf32>
    %c0_172 = arith.constant 0 : index
    %c0_173 = arith.constant 0 : index
    %245 = vector.load %arg14[%c0_172, %c0_173] : memref<8x128xf32, #tpu.memory_space<vmem>>, vector<8x128xf32>
    tpu.vector_store %arg14[%c0_172, %c0_173], %244 {strides = array<i32>} : memref<8x128xf32, #tpu.memory_space<vmem>>, vector<8x128xf32>,
    return
  }
  func.func @transform_0(%arg0: i32) -> (i32, i32, i32) {
    %c0_i32 = arith.constant 0 : i32
    %c0_i32_0 = arith.constant 0 : i32
    %c0_i32_1 = arith.constant 0 : i32
    return %arg0, %c0_i32, %c0_i32_0 : i32, i32, i32
  }
  func.func @transform_1(%arg0: i32) -> (i32, i32) {
    %c0_i32 = arith.constant 0 : i32
    %c0_i32_0 = arith.constant 0 : i32
    %c0_i32_1 = arith.constant 0 : i32
    return %c0_i32, %c0_i32_0 : i32, i32
  }
  func.func @transform_2(%arg0: i32) -> (i32, i32) {
    %c0_i32 = arith.constant 0 : i32
    %c0_i32_0 = arith.constant 0 : i32
    %c0_i32_1 = arith.constant 0 : i32
    return %c0_i32, %c0_i32_0 : i32, i32
  }
  func.func @transform_3(%arg0: i32) -> (i32, i32) {
    %c0_i32 = arith.constant 0 : i32
    %c0_i32_0 = arith.constant 0 : i32
    %c0_i32_1 = arith.constant 0 : i32
    return %c0_i32, %c0_i32_0 : i32, i32
  }
  func.func @transform_4(%arg0: i32) -> (i32, i32) {
    %c0_i32 = arith.constant 0 : i32
    %c0_i32_0 = arith.constant 0 : i32
    %c0_i32_1 = arith.constant 0 : i32
    return %c0_i32, %c0_i32_0 : i32, i32
  }
  func.func @transform_5(%arg0: i32) -> (i32, i32, i32) {
    %c0_i32 = arith.constant 0 : i32
    %c0_i32_0 = arith.constant 0 : i32
    %c0_i32_1 = arith.constant 0 : i32
    %c0_i32_2 = arith.constant 0 : i32
    return %c0_i32, %c0_i32_0, %c0_i32_1 : i32, i32, i32
  }
  func.func @transform_6(%arg0: i32) -> (i32, i32) {
    %c0_i32 = arith.constant 0 : i32
    %c0_i32_0 = arith.constant 0 : i32
    %c0_i32_1 = arith.constant 0 : i32
    return %c0_i32, %c0_i32_0 : i32, i32
  }
  func.func @transform_7(%arg0: i32) -> (i32, i32, i32) {
    %c0_i32 = arith.constant 0 : i32
    %c0_i32_0 = arith.constant 0 : i32
    %c0_i32_1 = arith.constant 0 : i32
    %c0_i32_2 = arith.constant 0 : i32
    return %c0_i32, %c0_i32_0, %c0_i32_1 : i32, i32, i32
  }
  func.func @transform_8(%arg0: i32) -> (i32, i32) {
    %c0_i32 = arith.constant 0 : i32
    %c0_i32_0 = arith.constant 0 : i32
    %c0_i32_1 = arith.constant 0 : i32
    return %c0_i32, %c0_i32_0 : i32, i32
  }
  func.func @transform_9(%arg0: i32) -> (i32, i32) {
    %c0_i32 = arith.constant 0 : i32
    %c0_i32_0 = arith.constant 0 : i32
    %c0_i32_1 = arith.constant 0 : i32
    return %c0_i32, %c0_i32_0 : i32, i32
  }
  func.func @transform_10(%arg0: i32) -> (i32, i32) {
    %c0_i32 = arith.constant 0 : i32
    %c0_i32_0 = arith.constant 0 : i32
    %c0_i32_1 = arith.constant 0 : i32
    return %c0_i32, %c0_i32_0 : i32, i32
  }
  func.func @transform_11(%arg0: i32) -> (i32, i32) {
    %c0_i32 = arith.constant 0 : i32
    %c0_i32_0 = arith.constant 0 : i32
    %c0_i32_1 = arith.constant 0 : i32
    return %c0_i32, %c0_i32_0 : i32, i32
  }
  func.func @transform_12(%arg0: i32) -> (i32, i32) {
    %c0_i32 = arith.constant 0 : i32
    %c0_i32_0 = arith.constant 0 : i32
    %c0_i32_1 = arith.constant 0 : i32
    return %c0_i32, %c0_i32_0 : i32, i32
  }
  func.func @transform_13(%arg0: i32) -> (i32, i32) {
    %c0_i32 = arith.constant 0 : i32
    %c0_i32_0 = arith.constant 0 : i32
    return %arg0, %c0_i32 : i32, i32
  }
}

</mosaic_0001>

<llo_original>
// kernel: lenet5c_forward.1
$region0: #{lenet5c_forward.1}
  #allocation0 [shape = 'u32[]', space=smem, size = 0x4, offset = 0x4, fixed_abs, tag = 'smem constant byte address 0x4 - core index']
  #allocation1 [shape = 'u32[144,128]{1,0:T(1,128)}', space=vmem, size = 0x12000, scoped, tag = 'internal scratch']
  %s0 = inlined_call_operand.vmem [shape: bf16[1,640,784], index: 0, kind: input, shape index: {}]
  %s1 = inlined_call_operand.vmem [shape: bf16[64,640], index: 1, kind: input, shape index: {}]
  %s2 = inlined_call_operand.vmem [shape: f32[64,1], index: 2, kind: input, shape index: {}]
  %s3 = inlined_call_operand.vmem [shape: bf16[784,196], index: 3, kind: input, shape index: {}]
  %s4 = inlined_call_operand.vmem [shape: bf16[196,3200], index: 4, kind: input, shape index: {}]
  %s5 = inlined_call_operand.vmem [shape: bf16[25,128,64], index: 5, kind: input, shape index: {}]
  %s6 = inlined_call_operand.vmem [shape: f32[128,1], index: 6, kind: input, shape index: {}]
  %s7 = inlined_call_operand.vmem [shape: f32[16,128,128], index: 7, kind: input, shape index: {}]
  %s8 = inlined_call_operand.vmem [shape: f32[1,128], index: 8, kind: input, shape index: {}]
  %s9 = inlined_call_operand.vmem [shape: f32[128,128], index: 9, kind: input, shape index: {}]
  %s10 = inlined_call_operand.vmem [shape: f32[1,128], index: 10, kind: input, shape index: {}]
  %s11 = inlined_call_operand.vmem [shape: f32[128,128], index: 11, kind: input, shape index: {}]
  %s12 = inlined_call_operand.vmem [shape: f32[1,128], index: 12, kind: input, shape index: {}]
  %s13 = inlined_call_operand.vmem [shape: f32[8,128], index: 13, kind: output, shape index: {}]
  %s14 = sld [smem:[#allocation0]]
  $region62: #{lenet5c_forward.1} parent=0
    _
  %s16 = ssub.s32 1, %s14
  %s17 = scalar_select 0, %s16, %s14
  // Predicated region
  $region2: #{lenet5c_forward.1} parent=0 // pred_check
    _
  $region3: #{lenet5c_forward.1} parent=0 // pred_check_branch
    %19 = sbr.rel (0) target = $region5
  $region4: #{lenet5c_forward.1} parent=0 // pred_region
    _
  $region5: #{lenet5c_forward.1} parent=0 // pred_fallthru
    _
  // Predicated region
  $region6: #{lenet5c_forward.1} parent=0 // pred_check
    _
  $region7: #{lenet5c_forward.1} parent=0 // pred_check_branch
    %21 = sbr.rel (0) target = $region9
  $region8: #{lenet5c_forward.1} parent=0 // pred_region
    _
  $region9: #{lenet5c_forward.1} parent=0 // pred_fallthru
    _
  // Predicated region
  $region10: #{lenet5c_forward.1} parent=0 // pred_check
    _
  $region11: #{lenet5c_forward.1} parent=0 // pred_check_branch
    %23 = sbr.rel (0) target = $region13
  $region12: #{lenet5c_forward.1} parent=0 // pred_region
    _
  $region13: #{lenet5c_forward.1} parent=0 // pred_fallthru
    _
  // Predicated region
  $region14: #{lenet5c_forward.1} parent=0 // pred_check
    _
  $region15: #{lenet5c_forward.1} parent=0 // pred_check_branch
    %25 = sbr.rel (0) target = $region17
  $region16: #{lenet5c_forward.1} parent=0 // pred_region
    _
  $region17: #{lenet5c_forward.1} parent=0 // pred_fallthru
    _
  // Predicated region
  $region18: #{lenet5c_forward.1} parent=0 // pred_check
    _
  $region19: #{lenet5c_forward.1} parent=0 // pred_check_branch
    %27 = sbr.rel (0) target = $region21
  $region20: #{lenet5c_forward.1} parent=0 // pred_region
    _
  $region21: #{lenet5c_forward.1} parent=0 // pred_fallthru
    _
  // Predicated region
  $region22: #{lenet5c_forward.1} parent=0 // pred_check
    _
  $region23: #{lenet5c_forward.1} parent=0 // pred_check_branch
    %29 = sbr.rel (0) target = $region25
  $region24: #{lenet5c_forward.1} parent=0 // pred_region
    _
  $region25: #{lenet5c_forward.1} parent=0 // pred_fallthru
    _
  // Predicated region
  $region26: #{lenet5c_forward.1} parent=0 // pred_check
    _
  $region27: #{lenet5c_forward.1} parent=0 // pred_check_branch
    %31 = sbr.rel (0) target = $region29
  $region28: #{lenet5c_forward.1} parent=0 // pred_region
    _
  $region29: #{lenet5c_forward.1} parent=0 // pred_fallthru
    _
  // Predicated region
  $region30: #{lenet5c_forward.1} parent=0 // pred_check
    _
  $region31: #{lenet5c_forward.1} parent=0 // pred_check_branch
    %33 = sbr.rel (0) target = $region33
  $region32: #{lenet5c_forward.1} parent=0 // pred_region
    _
  $region33: #{lenet5c_forward.1} parent=0 // pred_fallthru
    _
  // Predicated region
  $region34: #{lenet5c_forward.1} parent=0 // pred_check
    _
  $region35: #{lenet5c_forward.1} parent=0 // pred_check_branch
    %35 = sbr.rel (0) target = $region37
  $region36: #{lenet5c_forward.1} parent=0 // pred_region
    _
  $region37: #{lenet5c_forward.1} parent=0 // pred_fallthru
    _
  // Predicated region
  $region38: #{lenet5c_forward.1} parent=0 // pred_check
    _
  $region39: #{lenet5c_forward.1} parent=0 // pred_check_branch
    %37 = sbr.rel (0) target = $region41
  $region40: #{lenet5c_forward.1} parent=0 // pred_region
    _
  $region41: #{lenet5c_forward.1} parent=0 // pred_fallthru
    _
  // Predicated region
  $region42: #{lenet5c_forward.1} parent=0 // pred_check
    _
  $region43: #{lenet5c_forward.1} parent=0 // pred_check_branch
    %39 = sbr.rel (0) target = $region45
  $region44: #{lenet5c_forward.1} parent=0 // pred_region
    _
  $region45: #{lenet5c_forward.1} parent=0 // pred_fallthru
    _
  // Predicated region
  $region46: #{lenet5c_forward.1} parent=0 // pred_check
    _
  $region47: #{lenet5c_forward.1} parent=0 // pred_check_branch
    %41 = sbr.rel (0) target = $region49
  $region48: #{lenet5c_forward.1} parent=0 // pred_region
    _
  $region49: #{lenet5c_forward.1} parent=0 // pred_fallthru
    _
  // Predicated region
  $region50: #{lenet5c_forward.1} parent=0 // pred_check
    _
  $region51: #{lenet5c_forward.1} parent=0 // pred_check_branch
    %43 = sbr.rel (0) target = $region53
  $region52: #{lenet5c_forward.1} parent=0 // pred_region
    _
  $region53: #{lenet5c_forward.1} parent=0 // pred_fallthru
    _
  %v45 = vld [vmem:[%s0] sm:$0xff]
  %v46 = vld [vmem:[%s0 + $0x8] sm:$0xff]
  %v47 = vld [vmem:[%s0 + $0x10] sm:$0xff]
  %v48 = vld [vmem:[%s0 + $0x18] sm:$0xf]
  %v49 = vld [vmem:[%s0 + $0x1c] sm:$0xff]
  %v50 = vld [vmem:[%s0 + $0x24] sm:$0xff]
  %v51 = vld [vmem:[%s0 + $0x2c] sm:$0xff]
  %v52 = vld [vmem:[%s0 + $0x34] sm:$0xf]
  %v53 = vld [vmem:[%s0 + $0x38] sm:$0xff]
  %v54 = vld [vmem:[%s0 + $0x40] sm:$0xff]
  %v55 = vld [vmem:[%s0 + $0x48] sm:$0xff]
  %v56 = vld [vmem:[%s0 + $0x50] sm:$0xf]
  %v57 = vld [vmem:[%s0 + $0x54] sm:$0xff]
  %v58 = vld [vmem:[%s0 + $0x5c] sm:$0xff]
  %v59 = vld [vmem:[%s0 + $0x64] sm:$0xff]
  %v60 = vld [vmem:[%s0 + $0x6c] sm:$0xf]
  %v61 = vld [vmem:[%s0 + $0x70] sm:$0xff]
  %v62 = vld [vmem:[%s0 + $0x78] sm:$0xff]
  %v63 = vld [vmem:[%s0 + $0x80] sm:$0xff]
  %v64 = vld [vmem:[%s0 + $0x88] sm:$0xf]
  %v65 = vld [vmem:[%s0 + $0x8c] sm:$0xff]
  %v66 = vld [vmem:[%s0 + $0x94] sm:$0xff]
  %v67 = vld [vmem:[%s0 + $0x9c] sm:$0xff]
  %v68 = vld [vmem:[%s0 + $0xa4] sm:$0xf]
  %v69 = vld [vmem:[%s0 + $0xa8] sm:$0xff]
  %v70 = vld [vmem:[%s0 + $0xb0] sm:$0xff]
  %v71 = vld [vmem:[%s0 + $0xb8] sm:$0xff]
  %v72 = vld [vmem:[%s0 + $0xc0] sm:$0xf]
  %v73 = vld [vmem:[%s0 + $0xc4] sm:$0xff]
  %v74 = vld [vmem:[%s0 + $0xcc] sm:$0xff]
  %v75 = vld [vmem:[%s0 + $0xd4] sm:$0xff]
  %v76 = vld [vmem:[%s0 + $0xdc] sm:$0xf]
  %v77 = vld [vmem:[%s0 + $0xe0] sm:$0xff]
  %v78 = vld [vmem:[%s0 + $0xe8] sm:$0xff]
  %v79 = vld [vmem:[%s0 + $0xf0] sm:$0xff]
  %v80 = vld [vmem:[%s0 + $0xf8] sm:$0xf]
  %v81 = vld [vmem:[%s0 + $0xfc] sm:$0xff]
  %v82 = vld [vmem:[%s0 + $0x104] sm:$0xff]
  %v83 = vld [vmem:[%s0 + $0x10c] sm:$0xff]
  %v84 = vld [vmem:[%s0 + $0x114] sm:$0xf]
  %v85 = vld [vmem:[%s0 + $0x118] sm:$0xff]
  %v86 = vld [vmem:[%s0 + $0x120] sm:$0xff]
  %v87 = vld [vmem:[%s0 + $0x128] sm:$0xff]
  %v88 = vld [vmem:[%s0 + $0x130] sm:$0xf]
  %v89 = vld [vmem:[%s0 + $0x134] sm:$0xff]
  %v90 = vld [vmem:[%s0 + $0x13c] sm:$0xff]
  %v91 = vld [vmem:[%s0 + $0x144] sm:$0xff]
  %v92 = vld [vmem:[%s0 + $0x14c] sm:$0xf]
  %v93 = vld [vmem:[%s0 + $0x150] sm:$0xff]
  %v94 = vld [vmem:[%s0 + $0x158] sm:$0xff]
  %v95 = vld [vmem:[%s0 + $0x160] sm:$0xff]
  %v96 = vld [vmem:[%s0 + $0x168] sm:$0xf]
  %v97 = vld [vmem:[%s0 + $0x16c] sm:$0xff]
  %v98 = vld [vmem:[%s0 + $0x174] sm:$0xff]
  %v99 = vld [vmem:[%s0 + $0x17c] sm:$0xff]
  %v100 = vld [vmem:[%s0 + $0x184] sm:$0xf]
  %v101 = vld [vmem:[%s0 + $0x188] sm:$0xff]
  %v102 = vld [vmem:[%s0 + $0x190] sm:$0xff]
  %v103 = vld [vmem:[%s0 + $0x198] sm:$0xff]
  %v104 = vld [vmem:[%s0 + $0x1a0] sm:$0xf]
  %v105 = vld [vmem:[%s0 + $0x1a4] sm:$0xff]
  %v106 = vld [vmem:[%s0 + $0x1ac] sm:$0xff]
  %v107 = vld [vmem:[%s0 + $0x1b4] sm:$0xff]
  %v108 = vld [vmem:[%s0 + $0x1bc] sm:$0xf]
  %v109 = vld [vmem:[%s0 + $0x1c0] sm:$0xff]
  %v110 = vld [vmem:[%s0 + $0x1c8] sm:$0xff]
  %v111 = vld [vmem:[%s0 + $0x1d0] sm:$0xff]
  %v112 = vld [vmem:[%s0 + $0x1d8] sm:$0xf]
  %v113 = vld [vmem:[%s0 + $0x1dc] sm:$0xff]
  %v114 = vld [vmem:[%s0 + $0x1e4] sm:$0xff]
  %v115 = vld [vmem:[%s0 + $0x1ec] sm:$0xff]
  %v116 = vld [vmem:[%s0 + $0x1f4] sm:$0xf]
  %v117 = vld [vmem:[%s0 + $0x1f8] sm:$0xff]
  %v118 = vld [vmem:[%s0 + $0x200] sm:$0xff]
  %v119 = vld [vmem:[%s0 + $0x208] sm:$0xff]
  %v120 = vld [vmem:[%s0 + $0x210] sm:$0xf]
  %v121 = vld [vmem:[%s0 + $0x214] sm:$0xff]
  %v122 = vld [vmem:[%s0 + $0x21c] sm:$0xff]
  %v123 = vld [vmem:[%s0 + $0x224] sm:$0xff]
  %v124 = vld [vmem:[%s0 + $0x22c] sm:$0xf]
  %v125 = vld [vmem:[%s0 + $0x230] sm:$0xff]
  %v126 = vld [vmem:[%s0 + $0x238] sm:$0xff]
  %v127 = vld [vmem:[%s0 + $0x240] sm:$0xff]
  %v128 = vld [vmem:[%s0 + $0x248] sm:$0xf]
  %v129 = vld [vmem:[%s0 + $0x24c] sm:$0xff]
  %v130 = vld [vmem:[%s0 + $0x254] sm:$0xff]
  %v131 = vld [vmem:[%s0 + $0x25c] sm:$0xff]
  %v132 = vld [vmem:[%s0 + $0x264] sm:$0xf]
  %v133 = vld [vmem:[%s0 + $0x268] sm:$0xff]
  %v134 = vld [vmem:[%s0 + $0x270] sm:$0xff]
  %v135 = vld [vmem:[%s0 + $0x278] sm:$0xff]
  %v136 = vld [vmem:[%s0 + $0x280] sm:$0xf]
  %v137 = vld [vmem:[%s0 + $0x284] sm:$0xff]
  %v138 = vld [vmem:[%s0 + $0x28c] sm:$0xff]
  %v139 = vld [vmem:[%s0 + $0x294] sm:$0xff]
  %v140 = vld [vmem:[%s0 + $0x29c] sm:$0xf]
  %v141 = vld [vmem:[%s0 + $0x2a0] sm:$0xff]
  %v142 = vld [vmem:[%s0 + $0x2a8] sm:$0xff]
  %v143 = vld [vmem:[%s0 + $0x2b0] sm:$0xff]
  %v144 = vld [vmem:[%s0 + $0x2b8] sm:$0xf]
  %v145 = vld [vmem:[%s0 + $0x2bc] sm:$0xff]
  %v146 = vld [vmem:[%s0 + $0x2c4] sm:$0xff]
  %v147 = vld [vmem:[%s0 + $0x2cc] sm:$0xff]
  %v148 = vld [vmem:[%s0 + $0x2d4] sm:$0xf]
  %v149 = vld [vmem:[%s0 + $0x2d8] sm:$0xff]
  %v150 = vld [vmem:[%s0 + $0x2e0] sm:$0xff]
  %v151 = vld [vmem:[%s0 + $0x2e8] sm:$0xff]
  %v152 = vld [vmem:[%s0 + $0x2f0] sm:$0xf]
  %v153 = vld [vmem:[%s0 + $0x2f4] sm:$0xff]
  %v154 = vld [vmem:[%s0 + $0x2fc] sm:$0xff]
  %v155 = vld [vmem:[%s0 + $0x304] sm:$0xff]
  %v156 = vld [vmem:[%s0 + $0x30c] sm:$0xf]
  %v157 = vld [vmem:[%s0 + $0x310] sm:$0xff]
  %v158 = vld [vmem:[%s0 + $0x318] sm:$0xff]
  %v159 = vld [vmem:[%s0 + $0x320] sm:$0xff]
  %v160 = vld [vmem:[%s0 + $0x328] sm:$0xf]
  %v161 = vld [vmem:[%s0 + $0x32c] sm:$0xff]
  %v162 = vld [vmem:[%s0 + $0x334] sm:$0xff]
  %v163 = vld [vmem:[%s0 + $0x33c] sm:$0xff]
  %v164 = vld [vmem:[%s0 + $0x344] sm:$0xf]
  %v165 = vld [vmem:[%s0 + $0x348] sm:$0xff]
  %v166 = vld [vmem:[%s0 + $0x350] sm:$0xff]
  %v167 = vld [vmem:[%s0 + $0x358] sm:$0xff]
  %v168 = vld [vmem:[%s0 + $0x360] sm:$0xf]
  %v169 = vld [vmem:[%s0 + $0x364] sm:$0xff]
  %v170 = vld [vmem:[%s0 + $0x36c] sm:$0xff]
  %v171 = vld [vmem:[%s0 + $0x374] sm:$0xff]
  %v172 = vld [vmem:[%s0 + $0x37c] sm:$0xf]
  %v173 = vld [vmem:[%s0 + $0x380] sm:$0xff]
  %v174 = vld [vmem:[%s0 + $0x388] sm:$0xff]
  %v175 = vld [vmem:[%s0 + $0x390] sm:$0xff]
  %v176 = vld [vmem:[%s0 + $0x398] sm:$0xf]
  %v177 = vld [vmem:[%s0 + $0x39c] sm:$0xff]
  %v178 = vld [vmem:[%s0 + $0x3a4] sm:$0xff]
  %v179 = vld [vmem:[%s0 + $0x3ac] sm:$0xff]
  %v180 = vld [vmem:[%s0 + $0x3b4] sm:$0xf]
  %v181 = vld [vmem:[%s0 + $0x3b8] sm:$0xff]
  %v182 = vld [vmem:[%s0 + $0x3c0] sm:$0xff]
  %v183 = vld [vmem:[%s0 + $0x3c8] sm:$0xff]
  %v184 = vld [vmem:[%s0 + $0x3d0] sm:$0xf]
  %v185 = vld [vmem:[%s0 + $0x3d4] sm:$0xff]
  %v186 = vld [vmem:[%s0 + $0x3dc] sm:$0xff]
  %v187 = vld [vmem:[%s0 + $0x3e4] sm:$0xff]
  %v188 = vld [vmem:[%s0 + $0x3ec] sm:$0xf]
  %v189 = vld [vmem:[%s0 + $0x3f0] sm:$0xff]
  %v190 = vld [vmem:[%s0 + $0x3f8] sm:$0xff]
  %v191 = vld [vmem:[%s0 + $0x400] sm:$0xff]
  %v192 = vld [vmem:[%s0 + $0x408] sm:$0xf]
  %v193 = vld [vmem:[%s0 + $0x40c] sm:$0xff]
  %v194 = vld [vmem:[%s0 + $0x414] sm:$0xff]
  %v195 = vld [vmem:[%s0 + $0x41c] sm:$0xff]
  %v196 = vld [vmem:[%s0 + $0x424] sm:$0xf]
  %v197 = vld [vmem:[%s0 + $0x428] sm:$0xff]
  %v198 = vld [vmem:[%s0 + $0x430] sm:$0xff]
  %v199 = vld [vmem:[%s0 + $0x438] sm:$0xff]
  %v200 = vld [vmem:[%s0 + $0x440] sm:$0xf]
  %v201 = vld [vmem:[%s0 + $0x444] sm:$0xff]
  %v202 = vld [vmem:[%s0 + $0x44c] sm:$0xff]
  %v203 = vld [vmem:[%s0 + $0x454] sm:$0xff]
  %v204 = vld [vmem:[%s0 + $0x45c] sm:$0xf]
  %v205 = vld [vmem:[%s0 + $0x460] sm:$0xff]
  %v206 = vld [vmem:[%s0 + $0x468] sm:$0xff]
  %v207 = vld [vmem:[%s0 + $0x470] sm:$0xff]
  %v208 = vld [vmem:[%s0 + $0x478] sm:$0xf]
  %v209 = vld [vmem:[%s0 + $0x47c] sm:$0xff]
  %v210 = vld [vmem:[%s0 + $0x484] sm:$0xff]
  %v211 = vld [vmem:[%s0 + $0x48c] sm:$0xff]
  %v212 = vld [vmem:[%s0 + $0x494] sm:$0xf]
  %v213 = vld [vmem:[%s0 + $0x498] sm:$0xff]
  %v214 = vld [vmem:[%s0 + $0x4a0] sm:$0xff]
  %v215 = vld [vmem:[%s0 + $0x4a8] sm:$0xff]
  %v216 = vld [vmem:[%s0 + $0x4b0] sm:$0xf]
  %v217 = vld [vmem:[%s0 + $0x4b4] sm:$0xff]
  %v218 = vld [vmem:[%s0 + $0x4bc] sm:$0xff]
  %v219 = vld [vmem:[%s0 + $0x4c4] sm:$0xff]
  %v220 = vld [vmem:[%s0 + $0x4cc] sm:$0xf]
  %v221 = vld [vmem:[%s0 + $0x4d0] sm:$0xff]
  %v222 = vld [vmem:[%s0 + $0x4d8] sm:$0xff]
  %v223 = vld [vmem:[%s0 + $0x4e0] sm:$0xff]
  %v224 = vld [vmem:[%s0 + $0x4e8] sm:$0xf]
  %v225 = vld [vmem:[%s0 + $0x4ec] sm:$0xff]
  %v226 = vld [vmem:[%s0 + $0x4f4] sm:$0xff]
  %v227 = vld [vmem:[%s0 + $0x4fc] sm:$0xff]
  %v228 = vld [vmem:[%s0 + $0x504] sm:$0xf]
  %v229 = vld [vmem:[%s0 + $0x508] sm:$0xff]
  %v230 = vld [vmem:[%s0 + $0x510] sm:$0xff]
  %v231 = vld [vmem:[%s0 + $0x518] sm:$0xff]
  %v232 = vld [vmem:[%s0 + $0x520] sm:$0xf]
  %v233 = vld [vmem:[%s0 + $0x524] sm:$0xff]
  %v234 = vld [vmem:[%s0 + $0x52c] sm:$0xff]
  %v235 = vld [vmem:[%s0 + $0x534] sm:$0xff]
  %v236 = vld [vmem:[%s0 + $0x53c] sm:$0xf]
  %v237 = vld [vmem:[%s0 + $0x540] sm:$0xff]
  %v238 = vld [vmem:[%s0 + $0x548] sm:$0xff]
  %v239 = vld [vmem:[%s0 + $0x550] sm:$0xff]
  %v240 = vld [vmem:[%s0 + $0x558] sm:$0xf]
  %v241 = vld [vmem:[%s0 + $0x55c] sm:$0xff]
  %v242 = vld [vmem:[%s0 + $0x564] sm:$0xff]
  %v243 = vld [vmem:[%s0 + $0x56c] sm:$0xff]
  %v244 = vld [vmem:[%s0 + $0x574] sm:$0xf]
  %v245 = vld [vmem:[%s0 + $0x578] sm:$0xff]
  %v246 = vld [vmem:[%s0 + $0x580] sm:$0xff]
  %v247 = vld [vmem:[%s0 + $0x588] sm:$0xff]
  %v248 = vld [vmem:[%s0 + $0x590] sm:$0xf]
  %v249 = vld [vmem:[%s0 + $0x594] sm:$0xff]
  %v250 = vld [vmem:[%s0 + $0x59c] sm:$0xff]
  %v251 = vld [vmem:[%s0 + $0x5a4] sm:$0xff]
  %v252 = vld [vmem:[%s0 + $0x5ac] sm:$0xf]
  %v253 = vld [vmem:[%s0 + $0x5b0] sm:$0xff]
  %v254 = vld [vmem:[%s0 + $0x5b8] sm:$0xff]
  %v255 = vld [vmem:[%s0 + $0x5c0] sm:$0xff]
  %v256 = vld [vmem:[%s0 + $0x5c8] sm:$0xf]
  %v257 = vld [vmem:[%s0 + $0x5cc] sm:$0xff]
  %v258 = vld [vmem:[%s0 + $0x5d4] sm:$0xff]
  %v259 = vld [vmem:[%s0 + $0x5dc] sm:$0xff]
  %v260 = vld [vmem:[%s0 + $0x5e4] sm:$0xf]
  %v261 = vld [vmem:[%s0 + $0x5e8] sm:$0xff]
  %v262 = vld [vmem:[%s0 + $0x5f0] sm:$0xff]
  %v263 = vld [vmem:[%s0 + $0x5f8] sm:$0xff]
  %v264 = vld [vmem:[%s0 + $0x600] sm:$0xf]
  %v265 = vld [vmem:[%s0 + $0x604] sm:$0xff]
  %v266 = vld [vmem:[%s0 + $0x60c] sm:$0xff]
  %v267 = vld [vmem:[%s0 + $0x614] sm:$0xff]
  %v268 = vld [vmem:[%s0 + $0x61c] sm:$0xf]
  %v269 = vld [vmem:[%s0 + $0x620] sm:$0xff]
  %v270 = vld [vmem:[%s0 + $0x628] sm:$0xff]
  %v271 = vld [vmem:[%s0 + $0x630] sm:$0xff]
  %v272 = vld [vmem:[%s0 + $0x638] sm:$0xf]
  %v273 = vld [vmem:[%s0 + $0x63c] sm:$0xff]
  %v274 = vld [vmem:[%s0 + $0x644] sm:$0xff]
  %v275 = vld [vmem:[%s0 + $0x64c] sm:$0xff]
  %v276 = vld [vmem:[%s0 + $0x654] sm:$0xf]
  %v277 = vld [vmem:[%s0 + $0x658] sm:$0xff]
  %v278 = vld [vmem:[%s0 + $0x660] sm:$0xff]
  %v279 = vld [vmem:[%s0 + $0x668] sm:$0xff]
  %v280 = vld [vmem:[%s0 + $0x670] sm:$0xf]
  %v281 = vld [vmem:[%s0 + $0x674] sm:$0xff]
  %v282 = vld [vmem:[%s0 + $0x67c] sm:$0xff]
  %v283 = vld [vmem:[%s0 + $0x684] sm:$0xff]
  %v284 = vld [vmem:[%s0 + $0x68c] sm:$0xf]
  %v285 = vld [vmem:[%s0 + $0x690] sm:$0xff]
  %v286 = vld [vmem:[%s0 + $0x698] sm:$0xff]
  %v287 = vld [vmem:[%s0 + $0x6a0] sm:$0xff]
  %v288 = vld [vmem:[%s0 + $0x6a8] sm:$0xf]
  %v289 = vld [vmem:[%s0 + $0x6ac] sm:$0xff]
  %v290 = vld [vmem:[%s0 + $0x6b4] sm:$0xff]
  %v291 = vld [vmem:[%s0 + $0x6bc] sm:$0xff]
  %v292 = vld [vmem:[%s0 + $0x6c4] sm:$0xf]
  %v293 = vld [vmem:[%s0 + $0x6c8] sm:$0xff]
  %v294 = vld [vmem:[%s0 + $0x6d0] sm:$0xff]
  %v295 = vld [vmem:[%s0 + $0x6d8] sm:$0xff]
  %v296 = vld [vmem:[%s0 + $0x6e0] sm:$0xf]
  %v297 = vld [vmem:[%s0 + $0x6e4] sm:$0xff]
  %v298 = vld [vmem:[%s0 + $0x6ec] sm:$0xff]
  %v299 = vld [vmem:[%s0 + $0x6f4] sm:$0xff]
  %v300 = vld [vmem:[%s0 + $0x6fc] sm:$0xf]
  %v301 = vld [vmem:[%s0 + $0x700] sm:$0xff]
  %v302 = vld [vmem:[%s0 + $0x708] sm:$0xff]
  %v303 = vld [vmem:[%s0 + $0x710] sm:$0xff]
  %v304 = vld [vmem:[%s0 + $0x718] sm:$0xf]
  %v305 = vld [vmem:[%s0 + $0x71c] sm:$0xff]
  %v306 = vld [vmem:[%s0 + $0x724] sm:$0xff]
  %v307 = vld [vmem:[%s0 + $0x72c] sm:$0xff]
  %v308 = vld [vmem:[%s0 + $0x734] sm:$0xf]
  %v309 = vld [vmem:[%s0 + $0x738] sm:$0xff]
  %v310 = vld [vmem:[%s0 + $0x740] sm:$0xff]
  %v311 = vld [vmem:[%s0 + $0x748] sm:$0xff]
  %v312 = vld [vmem:[%s0 + $0x750] sm:$0xf]
  %v313 = vld [vmem:[%s0 + $0x754] sm:$0xff]
  %v314 = vld [vmem:[%s0 + $0x75c] sm:$0xff]
  %v315 = vld [vmem:[%s0 + $0x764] sm:$0xff]
  %v316 = vld [vmem:[%s0 + $0x76c] sm:$0xf]
  %v317 = vld [vmem:[%s0 + $0x770] sm:$0xff]
  %v318 = vld [vmem:[%s0 + $0x778] sm:$0xff]
  %v319 = vld [vmem:[%s0 + $0x780] sm:$0xff]
  %v320 = vld [vmem:[%s0 + $0x788] sm:$0xf]
  %v321 = vld [vmem:[%s0 + $0x78c] sm:$0xff]
  %v322 = vld [vmem:[%s0 + $0x794] sm:$0xff]
  %v323 = vld [vmem:[%s0 + $0x79c] sm:$0xff]
  %v324 = vld [vmem:[%s0 + $0x7a4] sm:$0xf]
  %v325 = vld [vmem:[%s0 + $0x7a8] sm:$0xff]
  %v326 = vld [vmem:[%s0 + $0x7b0] sm:$0xff]
  %v327 = vld [vmem:[%s0 + $0x7b8] sm:$0xff]
  %v328 = vld [vmem:[%s0 + $0x7c0] sm:$0xf]
  %v329 = vld [vmem:[%s0 + $0x7c4] sm:$0xff]
  %v330 = vld [vmem:[%s0 + $0x7cc] sm:$0xff]
  %v331 = vld [vmem:[%s0 + $0x7d4] sm:$0xff]
  %v332 = vld [vmem:[%s0 + $0x7dc] sm:$0xf]
  %v333 = vld [vmem:[%s0 + $0x7e0] sm:$0xff]
  %v334 = vld [vmem:[%s0 + $0x7e8] sm:$0xff]
  %v335 = vld [vmem:[%s0 + $0x7f0] sm:$0xff]
  %v336 = vld [vmem:[%s0 + $0x7f8] sm:$0xf]
  %v337 = vld [vmem:[%s0 + $0x7fc] sm:$0xff]
  %v338 = vld [vmem:[%s0 + $0x804] sm:$0xff]
  %v339 = vld [vmem:[%s0 + $0x80c] sm:$0xff]
  %v340 = vld [vmem:[%s0 + $0x814] sm:$0xf]
  %v341 = vld [vmem:[%s0 + $0x818] sm:$0xff]
  %v342 = vld [vmem:[%s0 + $0x820] sm:$0xff]
  %v343 = vld [vmem:[%s0 + $0x828] sm:$0xff]
  %v344 = vld [vmem:[%s0 + $0x830] sm:$0xf]
  %v345 = vld [vmem:[%s0 + $0x834] sm:$0xff]
  %v346 = vld [vmem:[%s0 + $0x83c] sm:$0xff]
  %v347 = vld [vmem:[%s0 + $0x844] sm:$0xff]
  %v348 = vld [vmem:[%s0 + $0x84c] sm:$0xf]
  %v349 = vld [vmem:[%s0 + $0x850] sm:$0xff]
  %v350 = vld [vmem:[%s0 + $0x858] sm:$0xff]
  %v351 = vld [vmem:[%s0 + $0x860] sm:$0xff]
  %v352 = vld [vmem:[%s0 + $0x868] sm:$0xf]
  %v353 = vld [vmem:[%s0 + $0x86c] sm:$0xff]
  %v354 = vld [vmem:[%s0 + $0x874] sm:$0xff]
  %v355 = vld [vmem:[%s0 + $0x87c] sm:$0xff]
  %v356 = vld [vmem:[%s0 + $0x884] sm:$0xf]
  %v357 = vld [vmem:[%s0 + $0x888] sm:$0xff]
  %v358 = vld [vmem:[%s0 + $0x890] sm:$0xff]
  %v359 = vld [vmem:[%s0 + $0x898] sm:$0xff]
  %v360 = vld [vmem:[%s0 + $0x8a0] sm:$0xf]
  %v361 = vld [vmem:[%s0 + $0x8a4] sm:$0xff]
  %v362 = vld [vmem:[%s0 + $0x8ac] sm:$0xff]
  %v363 = vld [vmem:[%s0 + $0x8b4] sm:$0xff]
  %v364 = vld [vmem:[%s0 + $0x8bc] sm:$0xf]
  %v365 = vld [vmem:[%s1] sm:$0xff]
  %v366 = vld [vmem:[%s1 + $0x8] sm:$0xff]
  %v367 = vld [vmem:[%s1 + $0x10] sm:$0xf]
  %v368 = vld [vmem:[%s1 + $0x14] sm:$0xff]
  %v369 = vld [vmem:[%s1 + $0x1c] sm:$0xff]
  %v370 = vld [vmem:[%s1 + $0x24] sm:$0xf]
  %v371 = vld [vmem:[%s1 + $0x28] sm:$0xff]
  %v372 = vld [vmem:[%s1 + $0x30] sm:$0xff]
  %v373 = vld [vmem:[%s1 + $0x38] sm:$0xf]
  %v374 = vld [vmem:[%s1 + $0x3c] sm:$0xff]
  %v375 = vld [vmem:[%s1 + $0x44] sm:$0xff]
  %v376 = vld [vmem:[%s1 + $0x4c] sm:$0xf]
  %v377 = vld [vmem:[%s1 + $0x50] sm:$0xff]
  %v378 = vld [vmem:[%s1 + $0x58] sm:$0xff]
  %v379 = vld [vmem:[%s1 + $0x60] sm:$0xf]
  %v380 = vld [vmem:[%s1 + $0x64] sm:$0xff]
  %v381 = vld [vmem:[%s1 + $0x6c] sm:$0xff]
  %v382 = vld [vmem:[%s1 + $0x74] sm:$0xf]
  %v383 = vld [vmem:[%s1 + $0x78] sm:$0xff]
  %v384 = vld [vmem:[%s1 + $0x80] sm:$0xff]
  %v385 = vld [vmem:[%s1 + $0x88] sm:$0xf]
  %v386 = vld [vmem:[%s1 + $0x8c] sm:$0xff]
  %v387 = vld [vmem:[%s1 + $0x94] sm:$0xff]
  %v388 = vld [vmem:[%s1 + $0x9c] sm:$0xf]
  %v389 = vld [vmem:[%s2] sm:$0xff]
  %v390 = vld [vmem:[%s2 + $0x8] sm:$0xff]
  %v391 = vld [vmem:[%s2 + $0x10] sm:$0xff]
  %v392 = vld [vmem:[%s2 + $0x18] sm:$0xff]
  %v393 = vld [vmem:[%s2 + $0x20] sm:$0xff]
  %v394 = vld [vmem:[%s2 + $0x28] sm:$0xff]
  %v395 = vld [vmem:[%s2 + $0x30] sm:$0xff]
  %v396 = vld [vmem:[%s2 + $0x38] sm:$0xff]
  %398 = vset.pattern.permute.xlu0 0
  %399 = vperm.xlu0 %398, %v389
  %v400 = vpop.permute.xlu0 %399
  %403 = vset.pattern.permute.xlu0 0
  %404 = vperm.xlu0 %403, %v390
  %v405 = vpop.permute.xlu0 %404
  %408 = vset.pattern.permute.xlu0 0
  %409 = vperm.xlu0 %408, %v391
  %v410 = vpop.permute.xlu0 %409
  %413 = vset.pattern.permute.xlu0 0
  %414 = vperm.xlu0 %413, %v392
  %v415 = vpop.permute.xlu0 %414
  %418 = vset.pattern.permute.xlu0 0
  %419 = vperm.xlu0 %418, %v393
  %v420 = vpop.permute.xlu0 %419
  %423 = vset.pattern.permute.xlu0 0
  %424 = vperm.xlu0 %423, %v394
  %v425 = vpop.permute.xlu0 %424
  %428 = vset.pattern.permute.xlu0 0
  %429 = vperm.xlu0 %428, %v395
  %v430 = vpop.permute.xlu0 %429
  %433 = vset.pattern.permute.xlu0 0
  %434 = vperm.xlu0 %433, %v396
  %v435 = vpop.permute.xlu0 %434
  %v461 = vunpack.c.l.b16 %v365
  %v462 = vunpack.c.h.b16 %v365
  %v463 = vunpack.c.l.b16 %v366
  %v464 = vunpack.c.h.b16 %v366
  %v465 = vunpack.c.l.b16 %v367
  %v466 = vunpack.c.l.b16 %v368
  %v467 = vunpack.c.h.b16 %v368
  %v468 = vunpack.c.l.b16 %v369
  %v469 = vunpack.c.h.b16 %v369
  %v470 = vunpack.c.l.b16 %v370
  %v471 = vunpack.c.l.b16 %v371
  %v472 = vunpack.c.h.b16 %v371
  %v473 = vunpack.c.l.b16 %v372
  %v474 = vunpack.c.h.b16 %v372
  %v475 = vunpack.c.l.b16 %v373
  %v476 = vunpack.c.l.b16 %v374
  %v477 = vunpack.c.h.b16 %v374
  %v478 = vunpack.c.l.b16 %v375
  %v479 = vunpack.c.h.b16 %v375
  %v480 = vunpack.c.l.b16 %v376
  %v481 = vunpack.c.l.b16 %v377
  %v482 = vunpack.c.h.b16 %v377
  %v483 = vunpack.c.l.b16 %v378
  %v484 = vunpack.c.h.b16 %v378
  %v485 = vunpack.c.l.b16 %v379
  %v486 = vunpack.c.l.b16 %v380
  %v487 = vunpack.c.h.b16 %v380
  %v488 = vunpack.c.l.b16 %v381
  %v489 = vunpack.c.h.b16 %v381
  %v490 = vunpack.c.l.b16 %v382
  %v491 = vunpack.c.l.b16 %v383
  %v492 = vunpack.c.h.b16 %v383
  %v493 = vunpack.c.l.b16 %v384
  %v494 = vunpack.c.h.b16 %v384
  %v495 = vunpack.c.l.b16 %v385
  %v496 = vunpack.c.l.b16 %v386
  %v497 = vunpack.c.h.b16 %v386
  %v498 = vunpack.c.l.b16 %v387
  %v499 = vunpack.c.h.b16 %v387
  %v500 = vunpack.c.l.b16 %v388
  %v501 = vpack.c.b16 %v466, %v461
  %v502 = vpack.c.b16 %v467, %v462
  %v503 = vpack.c.b16 %v468, %v463
  %v504 = vpack.c.b16 %v469, %v464
  %v505 = vpack.c.b16 %v470, %v465
  %v506 = vpack.c.b16 %v476, %v471
  %v507 = vpack.c.b16 %v477, %v472
  %v508 = vpack.c.b16 %v478, %v473
  %v509 = vpack.c.b16 %v479, %v474
  %v510 = vpack.c.b16 %v480, %v475
  %v511 = vpack.c.b16 %v486, %v481
  %v512 = vpack.c.b16 %v487, %v482
  %v513 = vpack.c.b16 %v488, %v483
  %v514 = vpack.c.b16 %v489, %v484
  %v515 = vpack.c.b16 %v490, %v485
  %v516 = vpack.c.b16 %v496, %v491
  %v517 = vpack.c.b16 %v497, %v492
  %v518 = vpack.c.b16 %v498, %v493
  %v519 = vpack.c.b16 %v499, %v494
  %v520 = vpack.c.b16 %v500, %v495
  %v861 = vunpack.c.l.b16 %v45
  %v862 = vunpack.c.h.b16 %v45
  %v863 = vunpack.c.l.b16 %v46
  %v864 = vunpack.c.h.b16 %v46
  %v865 = vunpack.c.l.b16 %v47
  %v866 = vunpack.c.h.b16 %v47
  %v867 = vunpack.c.l.b16 %v48
  %v868 = vunpack.c.l.b16 %v49
  %v869 = vunpack.c.h.b16 %v49
  %v870 = vunpack.c.l.b16 %v50
  %v871 = vunpack.c.h.b16 %v50
  %v872 = vunpack.c.l.b16 %v51
  %v873 = vunpack.c.h.b16 %v51
  %v874 = vunpack.c.l.b16 %v52
  %v875 = vunpack.c.l.b16 %v53
  %v876 = vunpack.c.h.b16 %v53
  %v877 = vunpack.c.l.b16 %v54
  %v878 = vunpack.c.h.b16 %v54
  %v879 = vunpack.c.l.b16 %v55
  %v880 = vunpack.c.h.b16 %v55
  %v881 = vunpack.c.l.b16 %v56
  %v882 = vunpack.c.l.b16 %v57
  %v883 = vunpack.c.h.b16 %v57
  %v884 = vunpack.c.l.b16 %v58
  %v885 = vunpack.c.h.b16 %v58
  %v886 = vunpack.c.l.b16 %v59
  %v887 = vunpack.c.h.b16 %v59
  %v888 = vunpack.c.l.b16 %v60
  %v889 = vunpack.c.l.b16 %v61
  %v890 = vunpack.c.h.b16 %v61
  %v891 = vunpack.c.l.b16 %v62
  %v892 = vunpack.c.h.b16 %v62
  %v893 = vunpack.c.l.b16 %v63
  %v894 = vunpack.c.h.b16 %v63
  %v895 = vunpack.c.l.b16 %v64
  %v896 = vunpack.c.l.b16 %v65
  %v897 = vunpack.c.h.b16 %v65
  %v898 = vunpack.c.l.b16 %v66
  %v899 = vunpack.c.h.b16 %v66
  %v900 = vunpack.c.l.b16 %v67
  %v901 = vunpack.c.h.b16 %v67
  %v902 = vunpack.c.l.b16 %v68
  %v903 = vunpack.c.l.b16 %v69
  %v904 = vunpack.c.h.b16 %v69
  %v905 = vunpack.c.l.b16 %v70
  %v906 = vunpack.c.h.b16 %v70
  %v907 = vunpack.c.l.b16 %v71
  %v908 = vunpack.c.h.b16 %v71
  %v909 = vunpack.c.l.b16 %v72
  %v910 = vunpack.c.l.b16 %v73
  %v911 = vunpack.c.h.b16 %v73
  %v912 = vunpack.c.l.b16 %v74
  %v913 = vunpack.c.h.b16 %v74
  %v914 = vunpack.c.l.b16 %v75
  %v915 = vunpack.c.h.b16 %v75
  %v916 = vunpack.c.l.b16 %v76
  %v917 = vunpack.c.l.b16 %v77
  %v918 = vunpack.c.h.b16 %v77
  %v919 = vunpack.c.l.b16 %v78
  %v920 = vunpack.c.h.b16 %v78
  %v921 = vunpack.c.l.b16 %v79
  %v922 = vunpack.c.h.b16 %v79
  %v923 = vunpack.c.l.b16 %v80
  %v924 = vunpack.c.l.b16 %v81
  %v925 = vunpack.c.h.b16 %v81
  %v926 = vunpack.c.l.b16 %v82
  %v927 = vunpack.c.h.b16 %v82
  %v928 = vunpack.c.l.b16 %v83
  %v929 = vunpack.c.h.b16 %v83
  %v930 = vunpack.c.l.b16 %v84
  %v931 = vunpack.c.l.b16 %v85
  %v932 = vunpack.c.h.b16 %v85
  %v933 = vunpack.c.l.b16 %v86
  %v934 = vunpack.c.h.b16 %v86
  %v935 = vunpack.c.l.b16 %v87
  %v936 = vunpack.c.h.b16 %v87
  %v937 = vunpack.c.l.b16 %v88
  %v938 = vunpack.c.l.b16 %v89
  %v939 = vunpack.c.h.b16 %v89
  %v940 = vunpack.c.l.b16 %v90
  %v941 = vunpack.c.h.b16 %v90
  %v942 = vunpack.c.l.b16 %v91
  %v943 = vunpack.c.h.b16 %v91
  %v944 = vunpack.c.l.b16 %v92
  %v945 = vunpack.c.l.b16 %v93
  %v946 = vunpack.c.h.b16 %v93
  %v947 = vunpack.c.l.b16 %v94
  %v948 = vunpack.c.h.b16 %v94
  %v949 = vunpack.c.l.b16 %v95
  %v950 = vunpack.c.h.b16 %v95
  %v951 = vunpack.c.l.b16 %v96
  %v952 = vunpack.c.l.b16 %v97
  %v953 = vunpack.c.h.b16 %v97
  %v954 = vunpack.c.l.b16 %v98
  %v955 = vunpack.c.h.b16 %v98
  %v956 = vunpack.c.l.b16 %v99
  %v957 = vunpack.c.h.b16 %v99
  %v958 = vunpack.c.l.b16 %v100
  %v959 = vunpack.c.l.b16 %v101
  %v960 = vunpack.c.h.b16 %v101
  %v961 = vunpack.c.l.b16 %v102
  %v962 = vunpack.c.h.b16 %v102
  %v963 = vunpack.c.l.b16 %v103
  %v964 = vunpack.c.h.b16 %v103
  %v965 = vunpack.c.l.b16 %v104
  %v966 = vunpack.c.l.b16 %v105
  %v967 = vunpack.c.h.b16 %v105
  %v968 = vunpack.c.l.b16 %v106
  %v969 = vunpack.c.h.b16 %v106
  %v970 = vunpack.c.l.b16 %v107
  %v971 = vunpack.c.h.b16 %v107
  %v972 = vunpack.c.l.b16 %v108
  %v973 = vunpack.c.l.b16 %v109
  %v974 = vunpack.c.h.b16 %v109
  %v975 = vunpack.c.l.b16 %v110
  %v976 = vunpack.c.h.b16 %v110
  %v977 = vunpack.c.l.b16 %v111
  %v978 = vunpack.c.h.b16 %v111
  %v979 = vunpack.c.l.b16 %v112
  %v980 = vunpack.c.l.b16 %v113
  %v981 = vunpack.c.h.b16 %v113
  %v982 = vunpack.c.l.b16 %v114
  %v983 = vunpack.c.h.b16 %v114
  %v984 = vunpack.c.l.b16 %v115
  %v985 = vunpack.c.h.b16 %v115
  %v986 = vunpack.c.l.b16 %v116
  %v987 = vunpack.c.l.b16 %v117
  %v988 = vunpack.c.h.b16 %v117
  %v989 = vunpack.c.l.b16 %v118
  %v990 = vunpack.c.h.b16 %v118
  %v991 = vunpack.c.l.b16 %v119
  %v992 = vunpack.c.h.b16 %v119
  %v993 = vunpack.c.l.b16 %v120
  %v994 = vunpack.c.l.b16 %v121
  %v995 = vunpack.c.h.b16 %v121
  %v996 = vunpack.c.l.b16 %v122
  %v997 = vunpack.c.h.b16 %v122
  %v998 = vunpack.c.l.b16 %v123
  %v999 = vunpack.c.h.b16 %v123
  %v1000 = vunpack.c.l.b16 %v124
  %v1001 = vunpack.c.l.b16 %v125
  %v1002 = vunpack.c.h.b16 %v125
  %v1003 = vunpack.c.l.b16 %v126
  %v1004 = vunpack.c.h.b16 %v126
  %v1005 = vunpack.c.l.b16 %v127
  %v1006 = vunpack.c.h.b16 %v127
  %v1007 = vunpack.c.l.b16 %v128
  %v1008 = vunpack.c.l.b16 %v129
  %v1009 = vunpack.c.h.b16 %v129
  %v1010 = vunpack.c.l.b16 %v130
  %v1011 = vunpack.c.h.b16 %v130
  %v1012 = vunpack.c.l.b16 %v131
  %v1013 = vunpack.c.h.b16 %v131
  %v1014 = vunpack.c.l.b16 %v132
  %v1015 = vunpack.c.l.b16 %v133
  %v1016 = vunpack.c.h.b16 %v133
  %v1017 = vunpack.c.l.b16 %v134
  %v1018 = vunpack.c.h.b16 %v134
  %v1019 = vunpack.c.l.b16 %v135
  %v1020 = vunpack.c.h.b16 %v135
  %v1021 = vunpack.c.l.b16 %v136
  %v1022 = vunpack.c.l.b16 %v137
  %v1023 = vunpack.c.h.b16 %v137
  %v1024 = vunpack.c.l.b16 %v138
  %v1025 = vunpack.c.h.b16 %v138
  %v1026 = vunpack.c.l.b16 %v139
  %v1027 = vunpack.c.h.b16 %v139
  %v1028 = vunpack.c.l.b16 %v140
  %v1029 = vunpack.c.l.b16 %v141
  %v1030 = vunpack.c.h.b16 %v141
  %v1031 = vunpack.c.l.b16 %v142
  %v1032 = vunpack.c.h.b16 %v142
  %v1033 = vunpack.c.l.b16 %v143
  %v1034 = vunpack.c.h.b16 %v143
  %v1035 = vunpack.c.l.b16 %v144
  %v1036 = vunpack.c.l.b16 %v145
  %v1037 = vunpack.c.h.b16 %v145
  %v1038 = vunpack.c.l.b16 %v146
  %v1039 = vunpack.c.h.b16 %v146
  %v1040 = vunpack.c.l.b16 %v147
  %v1041 = vunpack.c.h.b16 %v147
  %v1042 = vunpack.c.l.b16 %v148
  %v1043 = vunpack.c.l.b16 %v149
  %v1044 = vunpack.c.h.b16 %v149
  %v1045 = vunpack.c.l.b16 %v150
  %v1046 = vunpack.c.h.b16 %v150
  %v1047 = vunpack.c.l.b16 %v151
  %v1048 = vunpack.c.h.b16 %v151
  %v1049 = vunpack.c.l.b16 %v152
  %v1050 = vunpack.c.l.b16 %v153
  %v1051 = vunpack.c.h.b16 %v153
  %v1052 = vunpack.c.l.b16 %v154
  %v1053 = vunpack.c.h.b16 %v154
  %v1054 = vunpack.c.l.b16 %v155
  %v1055 = vunpack.c.h.b16 %v155
  %v1056 = vunpack.c.l.b16 %v156
  %v1057 = vunpack.c.l.b16 %v157
  %v1058 = vunpack.c.h.b16 %v157
  %v1059 = vunpack.c.l.b16 %v158
  %v1060 = vunpack.c.h.b16 %v158
  %v1061 = vunpack.c.l.b16 %v159
  %v1062 = vunpack.c.h.b16 %v159
  %v1063 = vunpack.c.l.b16 %v160
  %v1064 = vunpack.c.l.b16 %v161
  %v1065 = vunpack.c.h.b16 %v161
  %v1066 = vunpack.c.l.b16 %v162
  %v1067 = vunpack.c.h.b16 %v162
  %v1068 = vunpack.c.l.b16 %v163
  %v1069 = vunpack.c.h.b16 %v163
  %v1070 = vunpack.c.l.b16 %v164
  %v1071 = vunpack.c.l.b16 %v165
  %v1072 = vunpack.c.h.b16 %v165
  %v1073 = vunpack.c.l.b16 %v166
  %v1074 = vunpack.c.h.b16 %v166
  %v1075 = vunpack.c.l.b16 %v167
  %v1076 = vunpack.c.h.b16 %v167
  %v1077 = vunpack.c.l.b16 %v168
  %v1078 = vunpack.c.l.b16 %v169
  %v1079 = vunpack.c.h.b16 %v169
  %v1080 = vunpack.c.l.b16 %v170
  %v1081 = vunpack.c.h.b16 %v170
  %v1082 = vunpack.c.l.b16 %v171
  %v1083 = vunpack.c.h.b16 %v171
  %v1084 = vunpack.c.l.b16 %v172
  %v1085 = vunpack.c.l.b16 %v173
  %v1086 = vunpack.c.h.b16 %v173
  %v1087 = vunpack.c.l.b16 %v174
  %v1088 = vunpack.c.h.b16 %v174
  %v1089 = vunpack.c.l.b16 %v175
  %v1090 = vunpack.c.h.b16 %v175
  %v1091 = vunpack.c.l.b16 %v176
  %v1092 = vunpack.c.l.b16 %v177
  %v1093 = vunpack.c.h.b16 %v177
  %v1094 = vunpack.c.l.b16 %v178
  %v1095 = vunpack.c.h.b16 %v178
  %v1096 = vunpack.c.l.b16 %v179
  %v1097 = vunpack.c.h.b16 %v179
  %v1098 = vunpack.c.l.b16 %v180
  %v1099 = vunpack.c.l.b16 %v181
  %v1100 = vunpack.c.h.b16 %v181
  %v1101 = vunpack.c.l.b16 %v182
  %v1102 = vunpack.c.h.b16 %v182
  %v1103 = vunpack.c.l.b16 %v183
  %v1104 = vunpack.c.h.b16 %v183
  %v1105 = vunpack.c.l.b16 %v184
  %v1106 = vunpack.c.l.b16 %v185
  %v1107 = vunpack.c.h.b16 %v185
  %v1108 = vunpack.c.l.b16 %v186
  %v1109 = vunpack.c.h.b16 %v186
  %v1110 = vunpack.c.l.b16 %v187
  %v1111 = vunpack.c.h.b16 %v187
  %v1112 = vunpack.c.l.b16 %v188
  %v1113 = vunpack.c.l.b16 %v189
  %v1114 = vunpack.c.h.b16 %v189
  %v1115 = vunpack.c.l.b16 %v190
  %v1116 = vunpack.c.h.b16 %v190
  %v1117 = vunpack.c.l.b16 %v191
  %v1118 = vunpack.c.h.b16 %v191
  %v1119 = vunpack.c.l.b16 %v192
  %v1120 = vunpack.c.l.b16 %v193
  %v1121 = vunpack.c.h.b16 %v193
  %v1122 = vunpack.c.l.b16 %v194
  %v1123 = vunpack.c.h.b16 %v194
  %v1124 = vunpack.c.l.b16 %v195
  %v1125 = vunpack.c.h.b16 %v195
  %v1126 = vunpack.c.l.b16 %v196
  %v1127 = vunpack.c.l.b16 %v197
  %v1128 = vunpack.c.h.b16 %v197
  %v1129 = vunpack.c.l.b16 %v198
  %v1130 = vunpack.c.h.b16 %v198
  %v1131 = vunpack.c.l.b16 %v199
  %v1132 = vunpack.c.h.b16 %v199
  %v1133 = vunpack.c.l.b16 %v200
  %v1134 = vunpack.c.l.b16 %v201
  %v1135 = vunpack.c.h.b16 %v201
  %v1136 = vunpack.c.l.b16 %v202
  %v1137 = vunpack.c.h.b16 %v202
  %v1138 = vunpack.c.l.b16 %v203
  %v1139 = vunpack.c.h.b16 %v203
  %v1140 = vunpack.c.l.b16 %v204
  %v1141 = vunpack.c.l.b16 %v205
  %v1142 = vunpack.c.h.b16 %v205
  %v1143 = vunpack.c.l.b16 %v206
  %v1144 = vunpack.c.h.b16 %v206
  %v1145 = vunpack.c.l.b16 %v207
  %v1146 = vunpack.c.h.b16 %v207
  %v1147 = vunpack.c.l.b16 %v208
  %v1148 = vunpack.c.l.b16 %v209
  %v1149 = vunpack.c.h.b16 %v209
  %v1150 = vunpack.c.l.b16 %v210
  %v1151 = vunpack.c.h.b16 %v210
  %v1152 = vunpack.c.l.b16 %v211
  %v1153 = vunpack.c.h.b16 %v211
  %v1154 = vunpack.c.l.b16 %v212
  %v1155 = vunpack.c.l.b16 %v213
  %v1156 = vunpack.c.h.b16 %v213
  %v1157 = vunpack.c.l.b16 %v214
  %v1158 = vunpack.c.h.b16 %v214
  %v1159 = vunpack.c.l.b16 %v215
  %v1160 = vunpack.c.h.b16 %v215
  %v1161 = vunpack.c.l.b16 %v216
  %v1162 = vunpack.c.l.b16 %v217
  %v1163 = vunpack.c.h.b16 %v217
  %v1164 = vunpack.c.l.b16 %v218
  %v1165 = vunpack.c.h.b16 %v218
  %v1166 = vunpack.c.l.b16 %v219
  %v1167 = vunpack.c.h.b16 %v219
  %v1168 = vunpack.c.l.b16 %v220
  %v1169 = vunpack.c.l.b16 %v221
  %v1170 = vunpack.c.h.b16 %v221
  %v1171 = vunpack.c.l.b16 %v222
  %v1172 = vunpack.c.h.b16 %v222
  %v1173 = vunpack.c.l.b16 %v223
  %v1174 = vunpack.c.h.b16 %v223
  %v1175 = vunpack.c.l.b16 %v224
  %v1176 = vunpack.c.l.b16 %v225
  %v1177 = vunpack.c.h.b16 %v225
  %v1178 = vunpack.c.l.b16 %v226
  %v1179 = vunpack.c.h.b16 %v226
  %v1180 = vunpack.c.l.b16 %v227
  %v1181 = vunpack.c.h.b16 %v227
  %v1182 = vunpack.c.l.b16 %v228
  %v1183 = vunpack.c.l.b16 %v229
  %v1184 = vunpack.c.h.b16 %v229
  %v1185 = vunpack.c.l.b16 %v230
  %v1186 = vunpack.c.h.b16 %v230
  %v1187 = vunpack.c.l.b16 %v231
  %v1188 = vunpack.c.h.b16 %v231
  %v1189 = vunpack.c.l.b16 %v232
  %v1190 = vunpack.c.l.b16 %v233
  %v1191 = vunpack.c.h.b16 %v233
  %v1192 = vunpack.c.l.b16 %v234
  %v1193 = vunpack.c.h.b16 %v234
  %v1194 = vunpack.c.l.b16 %v235
  %v1195 = vunpack.c.h.b16 %v235
  %v1196 = vunpack.c.l.b16 %v236
  %v1197 = vunpack.c.l.b16 %v237
  %v1198 = vunpack.c.h.b16 %v237
  %v1199 = vunpack.c.l.b16 %v238
  %v1200 = vunpack.c.h.b16 %v238
  %v1201 = vunpack.c.l.b16 %v239
  %v1202 = vunpack.c.h.b16 %v239
  %v1203 = vunpack.c.l.b16 %v240
  %v1204 = vunpack.c.l.b16 %v241
  %v1205 = vunpack.c.h.b16 %v241
  %v1206 = vunpack.c.l.b16 %v242
  %v1207 = vunpack.c.h.b16 %v242
  %v1208 = vunpack.c.l.b16 %v243
  %v1209 = vunpack.c.h.b16 %v243
  %v1210 = vunpack.c.l.b16 %v244
  %v1211 = vunpack.c.l.b16 %v245
  %v1212 = vunpack.c.h.b16 %v245
  %v1213 = vunpack.c.l.b16 %v246
  %v1214 = vunpack.c.h.b16 %v246
  %v1215 = vunpack.c.l.b16 %v247
  %v1216 = vunpack.c.h.b16 %v247
  %v1217 = vunpack.c.l.b16 %v248
  %v1218 = vunpack.c.l.b16 %v249
  %v1219 = vunpack.c.h.b16 %v249
  %v1220 = vunpack.c.l.b16 %v250
  %v1221 = vunpack.c.h.b16 %v250
  %v1222 = vunpack.c.l.b16 %v251
  %v1223 = vunpack.c.h.b16 %v251
  %v1224 = vunpack.c.l.b16 %v252
  %v1225 = vunpack.c.l.b16 %v253
  %v1226 = vunpack.c.h.b16 %v253
  %v1227 = vunpack.c.l.b16 %v254
  %v1228 = vunpack.c.h.b16 %v254
  %v1229 = vunpack.c.l.b16 %v255
  %v1230 = vunpack.c.h.b16 %v255
  %v1231 = vunpack.c.l.b16 %v256
  %v1232 = vunpack.c.l.b16 %v257
  %v1233 = vunpack.c.h.b16 %v257
  %v1234 = vunpack.c.l.b16 %v258
  %v1235 = vunpack.c.h.b16 %v258
  %v1236 = vunpack.c.l.b16 %v259
  %v1237 = vunpack.c.h.b16 %v259
  %v1238 = vunpack.c.l.b16 %v260
  %v1239 = vunpack.c.l.b16 %v261
  %v1240 = vunpack.c.h.b16 %v261
  %v1241 = vunpack.c.l.b16 %v262
  %v1242 = vunpack.c.h.b16 %v262
  %v1243 = vunpack.c.l.b16 %v263
  %v1244 = vunpack.c.h.b16 %v263
  %v1245 = vunpack.c.l.b16 %v264
  %v1246 = vunpack.c.l.b16 %v265
  %v1247 = vunpack.c.h.b16 %v265
  %v1248 = vunpack.c.l.b16 %v266
  %v1249 = vunpack.c.h.b16 %v266
  %v1250 = vunpack.c.l.b16 %v267
  %v1251 = vunpack.c.h.b16 %v267
  %v1252 = vunpack.c.l.b16 %v268
  %v1253 = vunpack.c.l.b16 %v269
  %v1254 = vunpack.c.h.b16 %v269
  %v1255 = vunpack.c.l.b16 %v270
  %v1256 = vunpack.c.h.b16 %v270
  %v1257 = vunpack.c.l.b16 %v271
  %v1258 = vunpack.c.h.b16 %v271
  %v1259 = vunpack.c.l.b16 %v272
  %v1260 = vunpack.c.l.b16 %v273
  %v1261 = vunpack.c.h.b16 %v273
  %v1262 = vunpack.c.l.b16 %v274
  %v1263 = vunpack.c.h.b16 %v274
  %v1264 = vunpack.c.l.b16 %v275
  %v1265 = vunpack.c.h.b16 %v275
  %v1266 = vunpack.c.l.b16 %v276
  %v1267 = vunpack.c.l.b16 %v277
  %v1268 = vunpack.c.h.b16 %v277
  %v1269 = vunpack.c.l.b16 %v278
  %v1270 = vunpack.c.h.b16 %v278
  %v1271 = vunpack.c.l.b16 %v279
  %v1272 = vunpack.c.h.b16 %v279
  %v1273 = vunpack.c.l.b16 %v280
  %v1274 = vunpack.c.l.b16 %v281
  %v1275 = vunpack.c.h.b16 %v281
  %v1276 = vunpack.c.l.b16 %v282
  %v1277 = vunpack.c.h.b16 %v282
  %v1278 = vunpack.c.l.b16 %v283
  %v1279 = vunpack.c.h.b16 %v283
  %v1280 = vunpack.c.l.b16 %v284
  %v1281 = vunpack.c.l.b16 %v285
  %v1282 = vunpack.c.h.b16 %v285
  %v1283 = vunpack.c.l.b16 %v286
  %v1284 = vunpack.c.h.b16 %v286
  %v1285 = vunpack.c.l.b16 %v287
  %v1286 = vunpack.c.h.b16 %v287
  %v1287 = vunpack.c.l.b16 %v288
  %v1288 = vunpack.c.l.b16 %v289
  %v1289 = vunpack.c.h.b16 %v289
  %v1290 = vunpack.c.l.b16 %v290
  %v1291 = vunpack.c.h.b16 %v290
  %v1292 = vunpack.c.l.b16 %v291
  %v1293 = vunpack.c.h.b16 %v291
  %v1294 = vunpack.c.l.b16 %v292
  %v1295 = vunpack.c.l.b16 %v293
  %v1296 = vunpack.c.h.b16 %v293
  %v1297 = vunpack.c.l.b16 %v294
  %v1298 = vunpack.c.h.b16 %v294
  %v1299 = vunpack.c.l.b16 %v295
  %v1300 = vunpack.c.h.b16 %v295
  %v1301 = vunpack.c.l.b16 %v296
  %v1302 = vunpack.c.l.b16 %v297
  %v1303 = vunpack.c.h.b16 %v297
  %v1304 = vunpack.c.l.b16 %v298
  %v1305 = vunpack.c.h.b16 %v298
  %v1306 = vunpack.c.l.b16 %v299
  %v1307 = vunpack.c.h.b16 %v299
  %v1308 = vunpack.c.l.b16 %v300
  %v1309 = vunpack.c.l.b16 %v301
  %v1310 = vunpack.c.h.b16 %v301
  %v1311 = vunpack.c.l.b16 %v302
  %v1312 = vunpack.c.h.b16 %v302
  %v1313 = vunpack.c.l.b16 %v303
  %v1314 = vunpack.c.h.b16 %v303
  %v1315 = vunpack.c.l.b16 %v304
  %v1316 = vunpack.c.l.b16 %v305
  %v1317 = vunpack.c.h.b16 %v305
  %v1318 = vunpack.c.l.b16 %v306
  %v1319 = vunpack.c.h.b16 %v306
  %v1320 = vunpack.c.l.b16 %v307
  %v1321 = vunpack.c.h.b16 %v307
  %v1322 = vunpack.c.l.b16 %v308
  %v1323 = vunpack.c.l.b16 %v309
  %v1324 = vunpack.c.h.b16 %v309
  %v1325 = vunpack.c.l.b16 %v310
  %v1326 = vunpack.c.h.b16 %v310
  %v1327 = vunpack.c.l.b16 %v311
  %v1328 = vunpack.c.h.b16 %v311
  %v1329 = vunpack.c.l.b16 %v312
  %v1330 = vunpack.c.l.b16 %v313
  %v1331 = vunpack.c.h.b16 %v313
  %v1332 = vunpack.c.l.b16 %v314
  %v1333 = vunpack.c.h.b16 %v314
  %v1334 = vunpack.c.l.b16 %v315
  %v1335 = vunpack.c.h.b16 %v315
  %v1336 = vunpack.c.l.b16 %v316
  %v1337 = vunpack.c.l.b16 %v317
  %v1338 = vunpack.c.h.b16 %v317
  %v1339 = vunpack.c.l.b16 %v318
  %v1340 = vunpack.c.h.b16 %v318
  %v1341 = vunpack.c.l.b16 %v319
  %v1342 = vunpack.c.h.b16 %v319
  %v1343 = vunpack.c.l.b16 %v320
  %v1344 = vunpack.c.l.b16 %v321
  %v1345 = vunpack.c.h.b16 %v321
  %v1346 = vunpack.c.l.b16 %v322
  %v1347 = vunpack.c.h.b16 %v322
  %v1348 = vunpack.c.l.b16 %v323
  %v1349 = vunpack.c.h.b16 %v323
  %v1350 = vunpack.c.l.b16 %v324
  %v1351 = vunpack.c.l.b16 %v325
  %v1352 = vunpack.c.h.b16 %v325
  %v1353 = vunpack.c.l.b16 %v326
  %v1354 = vunpack.c.h.b16 %v326
  %v1355 = vunpack.c.l.b16 %v327
  %v1356 = vunpack.c.h.b16 %v327
  %v1357 = vunpack.c.l.b16 %v328
  %v1358 = vunpack.c.l.b16 %v329
  %v1359 = vunpack.c.h.b16 %v329
  %v1360 = vunpack.c.l.b16 %v330
  %v1361 = vunpack.c.h.b16 %v330
  %v1362 = vunpack.c.l.b16 %v331
  %v1363 = vunpack.c.h.b16 %v331
  %v1364 = vunpack.c.l.b16 %v332
  %v1365 = vunpack.c.l.b16 %v333
  %v1366 = vunpack.c.h.b16 %v333
  %v1367 = vunpack.c.l.b16 %v334
  %v1368 = vunpack.c.h.b16 %v334
  %v1369 = vunpack.c.l.b16 %v335
  %v1370 = vunpack.c.h.b16 %v335
  %v1371 = vunpack.c.l.b16 %v336
  %v1372 = vunpack.c.l.b16 %v337
  %v1373 = vunpack.c.h.b16 %v337
  %v1374 = vunpack.c.l.b16 %v338
  %v1375 = vunpack.c.h.b16 %v338
  %v1376 = vunpack.c.l.b16 %v339
  %v1377 = vunpack.c.h.b16 %v339
  %v1378 = vunpack.c.l.b16 %v340
  %v1379 = vunpack.c.l.b16 %v341
  %v1380 = vunpack.c.h.b16 %v341
  %v1381 = vunpack.c.l.b16 %v342
  %v1382 = vunpack.c.h.b16 %v342
  %v1383 = vunpack.c.l.b16 %v343
  %v1384 = vunpack.c.h.b16 %v343
  %v1385 = vunpack.c.l.b16 %v344
  %v1386 = vunpack.c.l.b16 %v345
  %v1387 = vunpack.c.h.b16 %v345
  %v1388 = vunpack.c.l.b16 %v346
  %v1389 = vunpack.c.h.b16 %v346
  %v1390 = vunpack.c.l.b16 %v347
  %v1391 = vunpack.c.h.b16 %v347
  %v1392 = vunpack.c.l.b16 %v348
  %v1393 = vunpack.c.l.b16 %v349
  %v1394 = vunpack.c.h.b16 %v349
  %v1395 = vunpack.c.l.b16 %v350
  %v1396 = vunpack.c.h.b16 %v350
  %v1397 = vunpack.c.l.b16 %v351
  %v1398 = vunpack.c.h.b16 %v351
  %v1399 = vunpack.c.l.b16 %v352
  %v1400 = vunpack.c.l.b16 %v353
  %v1401 = vunpack.c.h.b16 %v353
  %v1402 = vunpack.c.l.b16 %v354
  %v1403 = vunpack.c.h.b16 %v354
  %v1404 = vunpack.c.l.b16 %v355
  %v1405 = vunpack.c.h.b16 %v355
  %v1406 = vunpack.c.l.b16 %v356
  %v1407 = vunpack.c.l.b16 %v357
  %v1408 = vunpack.c.h.b16 %v357
  %v1409 = vunpack.c.l.b16 %v358
  %v1410 = vunpack.c.h.b16 %v358
  %v1411 = vunpack.c.l.b16 %v359
  %v1412 = vunpack.c.h.b16 %v359
  %v1413 = vunpack.c.l.b16 %v360
  %v1414 = vunpack.c.l.b16 %v361
  %v1415 = vunpack.c.h.b16 %v361
  %v1416 = vunpack.c.l.b16 %v362
  %v1417 = vunpack.c.h.b16 %v362
  %v1418 = vunpack.c.l.b16 %v363
  %v1419 = vunpack.c.h.b16 %v363
  %v1420 = vunpack.c.l.b16 %v364
  %v1421 = vpack.c.b16 %v868, %v861
  %v1422 = vpack.c.b16 %v869, %v862
  %v1423 = vpack.c.b16 %v870, %v863
  %v1424 = vpack.c.b16 %v871, %v864
  %v1425 = vpack.c.b16 %v872, %v865
  %v1426 = vpack.c.b16 %v873, %v866
  %v1427 = vpack.c.b16 %v874, %v867
  %v1428 = vpack.c.b16 %v882, %v875
  %v1429 = vpack.c.b16 %v883, %v876
  %v1430 = vpack.c.b16 %v884, %v877
  %v1431 = vpack.c.b16 %v885, %v878
  %v1432 = vpack.c.b16 %v886, %v879
  %v1433 = vpack.c.b16 %v887, %v880
  %v1434 = vpack.c.b16 %v888, %v881
  %v1435 = vpack.c.b16 %v896, %v889
  %v1436 = vpack.c.b16 %v897, %v890
  %v1437 = vpack.c.b16 %v898, %v891
  %v1438 = vpack.c.b16 %v899, %v892
  %v1439 = vpack.c.b16 %v900, %v893
  %v1440 = vpack.c.b16 %v901, %v894
  %v1441 = vpack.c.b16 %v902, %v895
  %v1442 = vpack.c.b16 %v910, %v903
  %v1443 = vpack.c.b16 %v911, %v904
  %v1444 = vpack.c.b16 %v912, %v905
  %v1445 = vpack.c.b16 %v913, %v906
  %v1446 = vpack.c.b16 %v914, %v907
  %v1447 = vpack.c.b16 %v915, %v908
  %v1448 = vpack.c.b16 %v916, %v909
  %v1449 = vpack.c.b16 %v924, %v917
  %v1450 = vpack.c.b16 %v925, %v918
  %v1451 = vpack.c.b16 %v926, %v919
  %v1452 = vpack.c.b16 %v927, %v920
  %v1453 = vpack.c.b16 %v928, %v921
  %v1454 = vpack.c.b16 %v929, %v922
  %v1455 = vpack.c.b16 %v930, %v923
  %v1456 = vpack.c.b16 %v938, %v931
  %v1457 = vpack.c.b16 %v939, %v932
  %v1458 = vpack.c.b16 %v940, %v933
  %v1459 = vpack.c.b16 %v941, %v934
  %v1460 = vpack.c.b16 %v942, %v935
  %v1461 = vpack.c.b16 %v943, %v936
  %v1462 = vpack.c.b16 %v944, %v937
  %v1463 = vpack.c.b16 %v952, %v945
  %v1464 = vpack.c.b16 %v953, %v946
  %v1465 = vpack.c.b16 %v954, %v947
  %v1466 = vpack.c.b16 %v955, %v948
  %v1467 = vpack.c.b16 %v956, %v949
  %v1468 = vpack.c.b16 %v957, %v950
  %v1469 = vpack.c.b16 %v958, %v951
  %v1470 = vpack.c.b16 %v966, %v959
  %v1471 = vpack.c.b16 %v967, %v960
  %v1472 = vpack.c.b16 %v968, %v961
  %v1473 = vpack.c.b16 %v969, %v962
  %v1474 = vpack.c.b16 %v970, %v963
  %v1475 = vpack.c.b16 %v971, %v964
  %v1476 = vpack.c.b16 %v972, %v965
  %v1477 = vpack.c.b16 %v980, %v973
  %v1478 = vpack.c.b16 %v981, %v974
  %v1479 = vpack.c.b16 %v982, %v975
  %v1480 = vpack.c.b16 %v983, %v976
  %v1481 = vpack.c.b16 %v984, %v977
  %v1482 = vpack.c.b16 %v985, %v978
  %v1483 = vpack.c.b16 %v986, %v979
  %v1484 = vpack.c.b16 %v994, %v987
  %v1485 = vpack.c.b16 %v995, %v988
  %v1486 = vpack.c.b16 %v996, %v989
  %v1487 = vpack.c.b16 %v997, %v990
  %v1488 = vpack.c.b16 %v998, %v991
  %v1489 = vpack.c.b16 %v999, %v992
  %v1490 = vpack.c.b16 %v1000, %v993
  %v1491 = vpack.c.b16 %v1008, %v1001
  %v1492 = vpack.c.b16 %v1009, %v1002
  %v1493 = vpack.c.b16 %v1010, %v1003
  %v1494 = vpack.c.b16 %v1011, %v1004
  %v1495 = vpack.c.b16 %v1012, %v1005
  %v1496 = vpack.c.b16 %v1013, %v1006
  %v1497 = vpack.c.b16 %v1014, %v1007
  %v1498 = vpack.c.b16 %v1022, %v1015
  %v1499 = vpack.c.b16 %v1023, %v1016
  %v1500 = vpack.c.b16 %v1024, %v1017
  %v1501 = vpack.c.b16 %v1025, %v1018
  %v1502 = vpack.c.b16 %v1026, %v1019
  %v1503 = vpack.c.b16 %v1027, %v1020
  %v1504 = vpack.c.b16 %v1028, %v1021
  %v1505 = vpack.c.b16 %v1036, %v1029
  %v1506 = vpack.c.b16 %v1037, %v1030
  %v1507 = vpack.c.b16 %v1038, %v1031
  %v1508 = vpack.c.b16 %v1039, %v1032
  %v1509 = vpack.c.b16 %v1040, %v1033
  %v1510 = vpack.c.b16 %v1041, %v1034
  %v1511 = vpack.c.b16 %v1042, %v1035
  %v1512 = vpack.c.b16 %v1050, %v1043
  %v1513 = vpack.c.b16 %v1051, %v1044
  %v1514 = vpack.c.b16 %v1052, %v1045
  %v1515 = vpack.c.b16 %v1053, %v1046
  %v1516 = vpack.c.b16 %v1054, %v1047
  %v1517 = vpack.c.b16 %v1055, %v1048
  %v1518 = vpack.c.b16 %v1056, %v1049
  %v1519 = vpack.c.b16 %v1064, %v1057
  %v1520 = vpack.c.b16 %v1065, %v1058
  %v1521 = vpack.c.b16 %v1066, %v1059
  %v1522 = vpack.c.b16 %v1067, %v1060
  %v1523 = vpack.c.b16 %v1068, %v1061
  %v1524 = vpack.c.b16 %v1069, %v1062
  %v1525 = vpack.c.b16 %v1070, %v1063
  %v1526 = vpack.c.b16 %v1078, %v1071
  %v1527 = vpack.c.b16 %v1079, %v1072
  %v1528 = vpack.c.b16 %v1080, %v1073
  %v1529 = vpack.c.b16 %v1081, %v1074
  %v1530 = vpack.c.b16 %v1082, %v1075
  %v1531 = vpack.c.b16 %v1083, %v1076
  %v1532 = vpack.c.b16 %v1084, %v1077
  %v1533 = vpack.c.b16 %v1092, %v1085
  %v1534 = vpack.c.b16 %v1093, %v1086
  %v1535 = vpack.c.b16 %v1094, %v1087
  %v1536 = vpack.c.b16 %v1095, %v1088
  %v1537 = vpack.c.b16 %v1096, %v1089
  %v1538 = vpack.c.b16 %v1097, %v1090
  %v1539 = vpack.c.b16 %v1098, %v1091
  %v1540 = vpack.c.b16 %v1106, %v1099
  %v1541 = vpack.c.b16 %v1107, %v1100
  %v1542 = vpack.c.b16 %v1108, %v1101
  %v1543 = vpack.c.b16 %v1109, %v1102
  %v1544 = vpack.c.b16 %v1110, %v1103
  %v1545 = vpack.c.b16 %v1111, %v1104
  %v1546 = vpack.c.b16 %v1112, %v1105
  %v1547 = vpack.c.b16 %v1120, %v1113
  %v1548 = vpack.c.b16 %v1121, %v1114
  %v1549 = vpack.c.b16 %v1122, %v1115
  %v1550 = vpack.c.b16 %v1123, %v1116
  %v1551 = vpack.c.b16 %v1124, %v1117
  %v1552 = vpack.c.b16 %v1125, %v1118
  %v1553 = vpack.c.b16 %v1126, %v1119
  %v1554 = vpack.c.b16 %v1134, %v1127
  %v1555 = vpack.c.b16 %v1135, %v1128
  %v1556 = vpack.c.b16 %v1136, %v1129
  %v1557 = vpack.c.b16 %v1137, %v1130
  %v1558 = vpack.c.b16 %v1138, %v1131
  %v1559 = vpack.c.b16 %v1139, %v1132
  %v1560 = vpack.c.b16 %v1140, %v1133
  %v1561 = vpack.c.b16 %v1148, %v1141
  %v1562 = vpack.c.b16 %v1149, %v1142
  %v1563 = vpack.c.b16 %v1150, %v1143
  %v1564 = vpack.c.b16 %v1151, %v1144
  %v1565 = vpack.c.b16 %v1152, %v1145
  %v1566 = vpack.c.b16 %v1153, %v1146
  %v1567 = vpack.c.b16 %v1154, %v1147
  %v1568 = vpack.c.b16 %v1162, %v1155
  %v1569 = vpack.c.b16 %v1163, %v1156
  %v1570 = vpack.c.b16 %v1164, %v1157
  %v1571 = vpack.c.b16 %v1165, %v1158
  %v1572 = vpack.c.b16 %v1166, %v1159
  %v1573 = vpack.c.b16 %v1167, %v1160
  %v1574 = vpack.c.b16 %v1168, %v1161
  %v1575 = vpack.c.b16 %v1176, %v1169
  %v1576 = vpack.c.b16 %v1177, %v1170
  %v1577 = vpack.c.b16 %v1178, %v1171
  %v1578 = vpack.c.b16 %v1179, %v1172
  %v1579 = vpack.c.b16 %v1180, %v1173
  %v1580 = vpack.c.b16 %v1181, %v1174
  %v1581 = vpack.c.b16 %v1182, %v1175
  %v1582 = vpack.c.b16 %v1190, %v1183
  %v1583 = vpack.c.b16 %v1191, %v1184
  %v1584 = vpack.c.b16 %v1192, %v1185
  %v1585 = vpack.c.b16 %v1193, %v1186
  %v1586 = vpack.c.b16 %v1194, %v1187
  %v1587 = vpack.c.b16 %v1195, %v1188
  %v1588 = vpack.c.b16 %v1196, %v1189
  %v1589 = vpack.c.b16 %v1204, %v1197
  %v1590 = vpack.c.b16 %v1205, %v1198
  %v1591 = vpack.c.b16 %v1206, %v1199
  %v1592 = vpack.c.b16 %v1207, %v1200
  %v1593 = vpack.c.b16 %v1208, %v1201
  %v1594 = vpack.c.b16 %v1209, %v1202
  %v1595 = vpack.c.b16 %v1210, %v1203
  %v1596 = vpack.c.b16 %v1218, %v1211
  %v1597 = vpack.c.b16 %v1219, %v1212
  %v1598 = vpack.c.b16 %v1220, %v1213
  %v1599 = vpack.c.b16 %v1221, %v1214
  %v1600 = vpack.c.b16 %v1222, %v1215
  %v1601 = vpack.c.b16 %v1223, %v1216
  %v1602 = vpack.c.b16 %v1224, %v1217
  %v1603 = vpack.c.b16 %v1232, %v1225
  %v1604 = vpack.c.b16 %v1233, %v1226
  %v1605 = vpack.c.b16 %v1234, %v1227
  %v1606 = vpack.c.b16 %v1235, %v1228
  %v1607 = vpack.c.b16 %v1236, %v1229
  %v1608 = vpack.c.b16 %v1237, %v1230
  %v1609 = vpack.c.b16 %v1238, %v1231
  %v1610 = vpack.c.b16 %v1246, %v1239
  %v1611 = vpack.c.b16 %v1247, %v1240
  %v1612 = vpack.c.b16 %v1248, %v1241
  %v1613 = vpack.c.b16 %v1249, %v1242
  %v1614 = vpack.c.b16 %v1250, %v1243
  %v1615 = vpack.c.b16 %v1251, %v1244
  %v1616 = vpack.c.b16 %v1252, %v1245
  %v1617 = vpack.c.b16 %v1260, %v1253
  %v1618 = vpack.c.b16 %v1261, %v1254
  %v1619 = vpack.c.b16 %v1262, %v1255
  %v1620 = vpack.c.b16 %v1263, %v1256
  %v1621 = vpack.c.b16 %v1264, %v1257
  %v1622 = vpack.c.b16 %v1265, %v1258
  %v1623 = vpack.c.b16 %v1266, %v1259
  %v1624 = vpack.c.b16 %v1274, %v1267
  %v1625 = vpack.c.b16 %v1275, %v1268
  %v1626 = vpack.c.b16 %v1276, %v1269
  %v1627 = vpack.c.b16 %v1277, %v1270
  %v1628 = vpack.c.b16 %v1278, %v1271
  %v1629 = vpack.c.b16 %v1279, %v1272
  %v1630 = vpack.c.b16 %v1280, %v1273
  %v1631 = vpack.c.b16 %v1288, %v1281
  %v1632 = vpack.c.b16 %v1289, %v1282
  %v1633 = vpack.c.b16 %v1290, %v1283
  %v1634 = vpack.c.b16 %v1291, %v1284
  %v1635 = vpack.c.b16 %v1292, %v1285
  %v1636 = vpack.c.b16 %v1293, %v1286
  %v1637 = vpack.c.b16 %v1294, %v1287
  %v1638 = vpack.c.b16 %v1302, %v1295
  %v1639 = vpack.c.b16 %v1303, %v1296
  %v1640 = vpack.c.b16 %v1304, %v1297
  %v1641 = vpack.c.b16 %v1305, %v1298
  %v1642 = vpack.c.b16 %v1306, %v1299
  %v1643 = vpack.c.b16 %v1307, %v1300
  %v1644 = vpack.c.b16 %v1308, %v1301
  %v1645 = vpack.c.b16 %v1316, %v1309
  %v1646 = vpack.c.b16 %v1317, %v1310
  %v1647 = vpack.c.b16 %v1318, %v1311
  %v1648 = vpack.c.b16 %v1319, %v1312
  %v1649 = vpack.c.b16 %v1320, %v1313
  %v1650 = vpack.c.b16 %v1321, %v1314
  %v1651 = vpack.c.b16 %v1322, %v1315
  %v1652 = vpack.c.b16 %v1330, %v1323
  %v1653 = vpack.c.b16 %v1331, %v1324
  %v1654 = vpack.c.b16 %v1332, %v1325
  %v1655 = vpack.c.b16 %v1333, %v1326
  %v1656 = vpack.c.b16 %v1334, %v1327
  %v1657 = vpack.c.b16 %v1335, %v1328
  %v1658 = vpack.c.b16 %v1336, %v1329
  %v1659 = vpack.c.b16 %v1344, %v1337
  %v1660 = vpack.c.b16 %v1345, %v1338
  %v1661 = vpack.c.b16 %v1346, %v1339
  %v1662 = vpack.c.b16 %v1347, %v1340
  %v1663 = vpack.c.b16 %v1348, %v1341
  %v1664 = vpack.c.b16 %v1349, %v1342
  %v1665 = vpack.c.b16 %v1350, %v1343
  %v1666 = vpack.c.b16 %v1358, %v1351
  %v1667 = vpack.c.b16 %v1359, %v1352
  %v1668 = vpack.c.b16 %v1360, %v1353
  %v1669 = vpack.c.b16 %v1361, %v1354
  %v1670 = vpack.c.b16 %v1362, %v1355
  %v1671 = vpack.c.b16 %v1363, %v1356
  %v1672 = vpack.c.b16 %v1364, %v1357
  %v1673 = vpack.c.b16 %v1372, %v1365
  %v1674 = vpack.c.b16 %v1373, %v1366
  %v1675 = vpack.c.b16 %v1374, %v1367
  %v1676 = vpack.c.b16 %v1375, %v1368
  %v1677 = vpack.c.b16 %v1376, %v1369
  %v1678 = vpack.c.b16 %v1377, %v1370
  %v1679 = vpack.c.b16 %v1378, %v1371
  %v1680 = vpack.c.b16 %v1386, %v1379
  %v1681 = vpack.c.b16 %v1387, %v1380
  %v1682 = vpack.c.b16 %v1388, %v1381
  %v1683 = vpack.c.b16 %v1389, %v1382
  %v1684 = vpack.c.b16 %v1390, %v1383
  %v1685 = vpack.c.b16 %v1391, %v1384
  %v1686 = vpack.c.b16 %v1392, %v1385
  %v1687 = vpack.c.b16 %v1400, %v1393
  %v1688 = vpack.c.b16 %v1401, %v1394
  %v1689 = vpack.c.b16 %v1402, %v1395
  %v1690 = vpack.c.b16 %v1403, %v1396
  %v1691 = vpack.c.b16 %v1404, %v1397
  %v1692 = vpack.c.b16 %v1405, %v1398
  %v1693 = vpack.c.b16 %v1406, %v1399
  %v1694 = vpack.c.b16 %v1414, %v1407
  %v1695 = vpack.c.b16 %v1415, %v1408
  %v1696 = vpack.c.b16 %v1416, %v1409
  %v1697 = vpack.c.b16 %v1417, %v1410
  %v1698 = vpack.c.b16 %v1418, %v1411
  %v1699 = vpack.c.b16 %v1419, %v1412
  %v1700 = vpack.c.b16 %v1420, %v1413
  %1981 = vmatprep.subr.bf16.mxu0 %v1471
  %1982 = vmatpush1.bf16.msra.mxu0 %v1470
  %1983 = vmatprep.subr.bf16.mxu0 %v1464
  %1984 = vmatpush1.bf16.msra.mxu0 %v1463
  %1985 = vmatprep.subr.bf16.mxu0 %v1457
  %1986 = vmatpush1.bf16.msra.mxu0 %v1456
  %1987 = vmatprep.subr.bf16.mxu0 %v1450
  %1988 = vmatpush1.bf16.msra.mxu0 %v1449
  %1989 = vmatprep.subr.bf16.mxu0 %v1443
  %1990 = vmatpush1.bf16.msra.mxu0 %v1442
  %1991 = vmatprep.subr.bf16.mxu0 %v1436
  %1992 = vmatpush1.bf16.msra.mxu0 %v1435
  %1993 = vmatprep.subr.bf16.mxu0 %v1429
  %1994 = vmatpush1.bf16.msra.mxu0 %v1428
  %1995 = vmatprep.subr.bf16.mxu0 %v1422
  %1996 = vmatpush1.bf16.msra.mxu0 %v1421
  %1997 = vmatprep.subr.bf16.mxu0 %v1527
  %1998 = vmatpush2.bf16.msra.mxu0 %v1526
  %1999 = vmatprep.subr.bf16.mxu0 %v1520
  %2000 = vmatpush2.bf16.msra.mxu0 %v1519
  %2001 = vmatprep.subr.bf16.mxu0 %v1513
  %2002 = vmatpush2.bf16.msra.mxu0 %v1512
  %2003 = vmatprep.subr.bf16.mxu0 %v1506
  %2004 = vmatpush2.bf16.msra.mxu0 %v1505
  %2005 = vmatprep.subr.bf16.mxu0 %v1499
  %2006 = vmatpush2.bf16.msra.mxu0 %v1498
  %2007 = vmatprep.subr.bf16.mxu0 %v1492
  %2008 = vmatpush2.bf16.msra.mxu0 %v1491
  %2009 = vmatprep.subr.bf16.mxu0 %v1485
  %2010 = vmatpush2.bf16.msra.mxu0 %v1484
  %2011 = vmatprep.subr.bf16.mxu0 %v1478
  %2012 = vmatpush2.bf16.msra.mxu0 %v1477
  %2013 = vmatprep.mubr.bf16.mxu0 %v502
  %2014 = vmatmul.mubr.bf16.gmra.mxu0 %v501
  %v2015 = vpop.f32.mrf.mxu0
  %v2016 = vadd.f32 %v400, %v2015
  %v2017 = vpop.f32.mrf.mxu0
  %v2018 = vadd.f32 %v400, %v2017
  %v2019 = vpop.f32.mrf.mxu0
  %v2020 = vadd.f32 %v405, %v2019
  %v2021 = vpop.f32.mrf.mxu0
  %v2022 = vadd.f32 %v405, %v2021
  %2023 = vmatprep.mubr.bf16.mxu0 %v507
  %2024 = vmatmul.mubr.bf16.gmra.mxu0 %v506
  %v2025 = vpop.f32.mrf.mxu0
  %v2026 = vadd.f32 %v410, %v2025
  %v2027 = vpop.f32.mrf.mxu0
  %v2028 = vadd.f32 %v410, %v2027
  %v2029 = vpop.f32.mrf.mxu0
  %v2030 = vadd.f32 %v415, %v2029
  %v2031 = vpop.f32.mrf.mxu0
  %v2032 = vadd.f32 %v415, %v2031
  %2033 = vmatprep.mubr.bf16.mxu0 %v512
  %2034 = vmatmul.mubr.bf16.gmra.mxu0 %v511
  %v2035 = vpop.f32.mrf.mxu0
  %v2036 = vadd.f32 %v420, %v2035
  %v2037 = vpop.f32.mrf.mxu0
  %v2038 = vadd.f32 %v420, %v2037
  %v2039 = vpop.f32.mrf.mxu0
  %v2040 = vadd.f32 %v425, %v2039
  %v2041 = vpop.f32.mrf.mxu0
  %v2042 = vadd.f32 %v425, %v2041
  %2043 = vmatprep.mubr.bf16.mxu0 %v517
  %2044 = vmatmul.mubr.bf16.gmra.mxu0 %v516
  %v2045 = vpop.f32.mrf.mxu0
  %v2046 = vadd.f32 %v430, %v2045
  %v2047 = vpop.f32.mrf.mxu0
  %v2048 = vadd.f32 %v430, %v2047
  %v2049 = vpop.f32.mrf.mxu0
  %v2050 = vadd.f32 %v435, %v2049
  %v2051 = vpop.f32.mrf.mxu0
  %v2052 = vadd.f32 %v435, %v2051
  %2053 = vdwg.mxu0
  %2054 = vmatprep.subr.bf16.mxu0 %v1583
  %2055 = vmatpush1.bf16.msra.mxu0 %v1582
  %2056 = vmatprep.subr.bf16.mxu0 %v1576
  %2057 = vmatpush1.bf16.msra.mxu0 %v1575
  %2058 = vmatprep.subr.bf16.mxu0 %v1569
  %2059 = vmatpush1.bf16.msra.mxu0 %v1568
  %2060 = vmatprep.subr.bf16.mxu0 %v1562
  %2061 = vmatpush1.bf16.msra.mxu0 %v1561
  %2062 = vmatprep.subr.bf16.mxu0 %v1555
  %2063 = vmatpush1.bf16.msra.mxu0 %v1554
  %2064 = vmatprep.subr.bf16.mxu0 %v1548
  %2065 = vmatpush1.bf16.msra.mxu0 %v1547
  %2066 = vmatprep.subr.bf16.mxu0 %v1541
  %2067 = vmatpush1.bf16.msra.mxu0 %v1540
  %2068 = vmatprep.subr.bf16.mxu0 %v1534
  %2069 = vmatpush1.bf16.msra.mxu0 %v1533
  %2070 = vmatprep.subr.bf16.mxu0 %v1639
  %2071 = vmatpush2.bf16.msra.mxu0 %v1638
  %2072 = vmatprep.subr.bf16.mxu0 %v1632
  %2073 = vmatpush2.bf16.msra.mxu0 %v1631
  %2074 = vmatprep.subr.bf16.mxu0 %v1625
  %2075 = vmatpush2.bf16.msra.mxu0 %v1624
  %2076 = vmatprep.subr.bf16.mxu0 %v1618
  %2077 = vmatpush2.bf16.msra.mxu0 %v1617
  %2078 = vmatprep.subr.bf16.mxu0 %v1611
  %2079 = vmatpush2.bf16.msra.mxu0 %v1610
  %2080 = vmatprep.subr.bf16.mxu0 %v1604
  %2081 = vmatpush2.bf16.msra.mxu0 %v1603
  %2082 = vmatprep.subr.bf16.mxu0 %v1597
  %2083 = vmatpush2.bf16.msra.mxu0 %v1596
  %2084 = vmatprep.subr.bf16.mxu0 %v1590
  %2085 = vmatpush2.bf16.msra.mxu0 %v1589
  %2086 = vmatprep.mubr.bf16.mxu0 %v504
  %2087 = vmatmul.mubr.bf16.gmra.mxu0 %v503
  %v2088 = vpop.f32.mrf.mxu0
  %v2089 = vadd.f32 %v2016, %v2088
  %v2090 = vpop.f32.mrf.mxu0
  %v2091 = vadd.f32 %v2018, %v2090
  %v2092 = vpop.f32.mrf.mxu0
  %v2093 = vadd.f32 %v2020, %v2092
  %v2094 = vpop.f32.mrf.mxu0
  %v2095 = vadd.f32 %v2022, %v2094
  %2096 = vmatprep.mubr.bf16.mxu0 %v509
  %2097 = vmatmul.mubr.bf16.gmra.mxu0 %v508
  %v2098 = vpop.f32.mrf.mxu0
  %v2099 = vadd.f32 %v2026, %v2098
  %v2100 = vpop.f32.mrf.mxu0
  %v2101 = vadd.f32 %v2028, %v2100
  %v2102 = vpop.f32.mrf.mxu0
  %v2103 = vadd.f32 %v2030, %v2102
  %v2104 = vpop.f32.mrf.mxu0
  %v2105 = vadd.f32 %v2032, %v2104
  %2106 = vmatprep.mubr.bf16.mxu0 %v514
  %2107 = vmatmul.mubr.bf16.gmra.mxu0 %v513
  %v2108 = vpop.f32.mrf.mxu0
  %v2109 = vadd.f32 %v2036, %v2108
  %v2110 = vpop.f32.mrf.mxu0
  %v2111 = vadd.f32 %v2038, %v2110
  %v2112 = vpop.f32.mrf.mxu0
  %v2113 = vadd.f32 %v2040, %v2112
  %v2114 = vpop.f32.mrf.mxu0
  %v2115 = vadd.f32 %v2042, %v2114
  %2116 = vmatprep.mubr.bf16.mxu0 %v519
  %2117 = vmatmul.mubr.bf16.gmra.mxu0 %v518
  %v2118 = vpop.f32.mrf.mxu0
  %v2119 = vadd.f32 %v2046, %v2118
  %v2120 = vpop.f32.mrf.mxu0
  %v2121 = vadd.f32 %v2048, %v2120
  %v2122 = vpop.f32.mrf.mxu0
  %v2123 = vadd.f32 %v2050, %v2122
  %v2124 = vpop.f32.mrf.mxu0
  %v2125 = vadd.f32 %v2052, %v2124
  %2126 = vdwg.mxu0
  %2127 = vmatprep.subr.bf16.mxu0 %v1695
  %2128 = vmatpush1.bf16.msra.mxu0 %v1694
  %2129 = vmatprep.subr.bf16.mxu0 %v1688
  %2130 = vmatpush1.bf16.msra.mxu0 %v1687
  %2131 = vmatprep.subr.bf16.mxu0 %v1681
  %2132 = vmatpush1.bf16.msra.mxu0 %v1680
  %2133 = vmatprep.subr.bf16.mxu0 %v1674
  %2134 = vmatpush1.bf16.msra.mxu0 %v1673
  %2135 = vmatprep.subr.bf16.mxu0 %v1667
  %2136 = vmatpush1.bf16.msra.mxu0 %v1666
  %2137 = vmatprep.subr.bf16.mxu0 %v1660
  %2138 = vmatpush1.bf16.msra.mxu0 %v1659
  %2139 = vmatprep.subr.bf16.mxu0 %v1653
  %2140 = vmatpush1.bf16.msra.mxu0 %v1652
  %2141 = vmatprep.subr.bf16.mxu0 %v1646
  %2142 = vmatpush1.bf16.msra.mxu0 %v1645
  %2143 = vmatprep.subr.bf16.mxu0 0
  %2144 = vmatpush2.bf16.msra.mxu0 0
  %2145 = vmatprep.subr.bf16.mxu0 0
  %2146 = vmatpush2.bf16.msra.mxu0 0
  %2147 = vmatprep.subr.bf16.mxu0 0
  %2148 = vmatpush2.bf16.msra.mxu0 0
  %2149 = vmatprep.subr.bf16.mxu0 0
  %2150 = vmatpush2.bf16.msra.mxu0 0
  %2151 = vmatprep.subr.bf16.mxu0 0
  %2152 = vmatpush2.bf16.msra.mxu0 0
  %2153 = vmatprep.subr.bf16.mxu0 0
  %2154 = vmatpush2.bf16.msra.mxu0 0
  %2155 = vmatprep.subr.bf16.mxu0 0
  %2156 = vmatpush2.bf16.msra.mxu0 0
  %2157 = vmatprep.subr.bf16.mxu0 0
  %2158 = vmatpush2.bf16.msra.mxu0 0
  %2159 = vmatprep.mubr.bf16.mxu0 0
  %2160 = vmatmul.mubr.bf16.gmra.mxu0 %v505
  %v2161 = vpop.f32.mrf.mxu0
  %v2162 = vadd.f32 %v2089, %v2161
  %v2163 = vpop.f32.mrf.mxu0
  %v2164 = vadd.f32 %v2091, %v2163
  %v2165 = vpop.f32.mrf.mxu0
  %v2166 = vadd.f32 %v2093, %v2165
  %v2167 = vpop.f32.mrf.mxu0
  %v2168 = vadd.f32 %v2095, %v2167
  %2169 = vmatprep.mubr.bf16.mxu0 0
  %2170 = vmatmul.mubr.bf16.gmra.mxu0 %v510
  %v2171 = vpop.f32.mrf.mxu0
  %v2172 = vadd.f32 %v2099, %v2171
  %v2173 = vpop.f32.mrf.mxu0
  %v2174 = vadd.f32 %v2101, %v2173
  %v2175 = vpop.f32.mrf.mxu0
  %v2176 = vadd.f32 %v2103, %v2175
  %v2177 = vpop.f32.mrf.mxu0
  %v2178 = vadd.f32 %v2105, %v2177
  %2179 = vmatprep.mubr.bf16.mxu0 0
  %2180 = vmatmul.mubr.bf16.gmra.mxu0 %v515
  %v2181 = vpop.f32.mrf.mxu0
  %v2182 = vadd.f32 %v2109, %v2181
  %v2183 = vpop.f32.mrf.mxu0
  %v2184 = vadd.f32 %v2111, %v2183
  %v2185 = vpop.f32.mrf.mxu0
  %v2186 = vadd.f32 %v2113, %v2185
  %v2187 = vpop.f32.mrf.mxu0
  %v2188 = vadd.f32 %v2115, %v2187
  %2189 = vmatprep.mubr.bf16.mxu0 0
  %2190 = vmatmul.mubr.bf16.gmra.mxu0 %v520
  %v2191 = vpop.f32.mrf.mxu0
  %v2192 = vadd.f32 %v2119, %v2191
  %v2193 = vpop.f32.mrf.mxu0
  %v2194 = vadd.f32 %v2121, %v2193
  %v2195 = vpop.f32.mrf.mxu0
  %v2196 = vadd.f32 %v2123, %v2195
  %v2197 = vpop.f32.mrf.mxu0
  %v2198 = vadd.f32 %v2125, %v2197
  %2199 = vdwg.mxu0
  %2200 = vmatprep.subr.bf16.mxu0 %v1473
  %2201 = vmatpush1.bf16.msra.mxu0 %v1472
  %2202 = vmatprep.subr.bf16.mxu0 %v1466
  %2203 = vmatpush1.bf16.msra.mxu0 %v1465
  %2204 = vmatprep.subr.bf16.mxu0 %v1459
  %2205 = vmatpush1.bf16.msra.mxu0 %v1458
  %2206 = vmatprep.subr.bf16.mxu0 %v1452
  %2207 = vmatpush1.bf16.msra.mxu0 %v1451
  %2208 = vmatprep.subr.bf16.mxu0 %v1445
  %2209 = vmatpush1.bf16.msra.mxu0 %v1444
  %2210 = vmatprep.subr.bf16.mxu0 %v1438
  %2211 = vmatpush1.bf16.msra.mxu0 %v1437
  %2212 = vmatprep.subr.bf16.mxu0 %v1431
  %2213 = vmatpush1.bf16.msra.mxu0 %v1430
  %2214 = vmatprep.subr.bf16.mxu0 %v1424
  %2215 = vmatpush1.bf16.msra.mxu0 %v1423
  %2216 = vmatprep.subr.bf16.mxu0 %v1529
  %2217 = vmatpush2.bf16.msra.mxu0 %v1528
  %2218 = vmatprep.subr.bf16.mxu0 %v1522
  %2219 = vmatpush2.bf16.msra.mxu0 %v1521
  %2220 = vmatprep.subr.bf16.mxu0 %v1515
  %2221 = vmatpush2.bf16.msra.mxu0 %v1514
  %2222 = vmatprep.subr.bf16.mxu0 %v1508
  %2223 = vmatpush2.bf16.msra.mxu0 %v1507
  %2224 = vmatprep.subr.bf16.mxu0 %v1501
  %2225 = vmatpush2.bf16.msra.mxu0 %v1500
  %2226 = vmatprep.subr.bf16.mxu0 %v1494
  %2227 = vmatpush2.bf16.msra.mxu0 %v1493
  %2228 = vmatprep.subr.bf16.mxu0 %v1487
  %2229 = vmatpush2.bf16.msra.mxu0 %v1486
  %2230 = vmatprep.subr.bf16.mxu0 %v1480
  %2231 = vmatpush2.bf16.msra.mxu0 %v1479
  %2232 = vmatprep.mubr.bf16.mxu0 %v502
  %2233 = vmatmul.mubr.bf16.gmra.mxu0 %v501
  %v2234 = vpop.f32.mrf.mxu0
  %v2235 = vadd.f32 %v400, %v2234
  %v2236 = vpop.f32.mrf.mxu0
  %v2237 = vadd.f32 %v400, %v2236
  %v2238 = vpop.f32.mrf.mxu0
  %v2239 = vadd.f32 %v405, %v2238
  %v2240 = vpop.f32.mrf.mxu0
  %v2241 = vadd.f32 %v405, %v2240
  %2242 = vmatprep.mubr.bf16.mxu0 %v507
  %2243 = vmatmul.mubr.bf16.gmra.mxu0 %v506
  %v2244 = vpop.f32.mrf.mxu0
  %v2245 = vadd.f32 %v410, %v2244
  %v2246 = vpop.f32.mrf.mxu0
  %v2247 = vadd.f32 %v410, %v2246
  %v2248 = vpop.f32.mrf.mxu0
  %v2249 = vadd.f32 %v415, %v2248
  %v2250 = vpop.f32.mrf.mxu0
  %v2251 = vadd.f32 %v415, %v2250
  %2252 = vmatprep.mubr.bf16.mxu0 %v512
  %2253 = vmatmul.mubr.bf16.gmra.mxu0 %v511
  %v2254 = vpop.f32.mrf.mxu0
  %v2255 = vadd.f32 %v420, %v2254
  %v2256 = vpop.f32.mrf.mxu0
  %v2257 = vadd.f32 %v420, %v2256
  %v2258 = vpop.f32.mrf.mxu0
  %v2259 = vadd.f32 %v425, %v2258
  %v2260 = vpop.f32.mrf.mxu0
  %v2261 = vadd.f32 %v425, %v2260
  %2262 = vmatprep.mubr.bf16.mxu0 %v517
  %2263 = vmatmul.mubr.bf16.gmra.mxu0 %v516
  %v2264 = vpop.f32.mrf.mxu0
  %v2265 = vadd.f32 %v430, %v2264
  %v2266 = vpop.f32.mrf.mxu0
  %v2267 = vadd.f32 %v430, %v2266
  %v2268 = vpop.f32.mrf.mxu0
  %v2269 = vadd.f32 %v435, %v2268
  %v2270 = vpop.f32.mrf.mxu0
  %v2271 = vadd.f32 %v435, %v2270
  %2272 = vdwg.mxu0
  %2273 = vmatprep.subr.bf16.mxu0 %v1585
  %2274 = vmatpush1.bf16.msra.mxu0 %v1584
  %2275 = vmatprep.subr.bf16.mxu0 %v1578
  %2276 = vmatpush1.bf16.msra.mxu0 %v1577
  %2277 = vmatprep.subr.bf16.mxu0 %v1571
  %2278 = vmatpush1.bf16.msra.mxu0 %v1570
  %2279 = vmatprep.subr.bf16.mxu0 %v1564
  %2280 = vmatpush1.bf16.msra.mxu0 %v1563
  %2281 = vmatprep.subr.bf16.mxu0 %v1557
  %2282 = vmatpush1.bf16.msra.mxu0 %v1556
  %2283 = vmatprep.subr.bf16.mxu0 %v1550
  %2284 = vmatpush1.bf16.msra.mxu0 %v1549
  %2285 = vmatprep.subr.bf16.mxu0 %v1543
  %2286 = vmatpush1.bf16.msra.mxu0 %v1542
  %2287 = vmatprep.subr.bf16.mxu0 %v1536
  %2288 = vmatpush1.bf16.msra.mxu0 %v1535
  %2289 = vmatprep.subr.bf16.mxu0 %v1641
  %2290 = vmatpush2.bf16.msra.mxu0 %v1640
  %2291 = vmatprep.subr.bf16.mxu0 %v1634
  %2292 = vmatpush2.bf16.msra.mxu0 %v1633
  %2293 = vmatprep.subr.bf16.mxu0 %v1627
  %2294 = vmatpush2.bf16.msra.mxu0 %v1626
  %2295 = vmatprep.subr.bf16.mxu0 %v1620
  %2296 = vmatpush2.bf16.msra.mxu0 %v1619
  %2297 = vmatprep.subr.bf16.mxu0 %v1613
  %2298 = vmatpush2.bf16.msra.mxu0 %v1612
  %2299 = vmatprep.subr.bf16.mxu0 %v1606
  %2300 = vmatpush2.bf16.msra.mxu0 %v1605
  %2301 = vmatprep.subr.bf16.mxu0 %v1599
  %2302 = vmatpush2.bf16.msra.mxu0 %v1598
  %2303 = vmatprep.subr.bf16.mxu0 %v1592
  %2304 = vmatpush2.bf16.msra.mxu0 %v1591
  %2305 = vmatprep.mubr.bf16.mxu0 %v504
  %2306 = vmatmul.mubr.bf16.gmra.mxu0 %v503
  %v2307 = vpop.f32.mrf.mxu0
  %v2308 = vadd.f32 %v2235, %v2307
  %v2309 = vpop.f32.mrf.mxu0
  %v2310 = vadd.f32 %v2237, %v2309
  %v2311 = vpop.f32.mrf.mxu0
  %v2312 = vadd.f32 %v2239, %v2311
  %v2313 = vpop.f32.mrf.mxu0
  %v2314 = vadd.f32 %v2241, %v2313
  %2315 = vmatprep.mubr.bf16.mxu0 %v509
  %2316 = vmatmul.mubr.bf16.gmra.mxu0 %v508
  %v2317 = vpop.f32.mrf.mxu0
  %v2318 = vadd.f32 %v2245, %v2317
  %v2319 = vpop.f32.mrf.mxu0
  %v2320 = vadd.f32 %v2247, %v2319
  %v2321 = vpop.f32.mrf.mxu0
  %v2322 = vadd.f32 %v2249, %v2321
  %v2323 = vpop.f32.mrf.mxu0
  %v2324 = vadd.f32 %v2251, %v2323
  %2325 = vmatprep.mubr.bf16.mxu0 %v514
  %2326 = vmatmul.mubr.bf16.gmra.mxu0 %v513
  %v2327 = vpop.f32.mrf.mxu0
  %v2328 = vadd.f32 %v2255, %v2327
  %v2329 = vpop.f32.mrf.mxu0
  %v2330 = vadd.f32 %v2257, %v2329
  %v2331 = vpop.f32.mrf.mxu0
  %v2332 = vadd.f32 %v2259, %v2331
  %v2333 = vpop.f32.mrf.mxu0
  %v2334 = vadd.f32 %v2261, %v2333
  %2335 = vmatprep.mubr.bf16.mxu0 %v519
  %2336 = vmatmul.mubr.bf16.gmra.mxu0 %v518
  %v2337 = vpop.f32.mrf.mxu0
  %v2338 = vadd.f32 %v2265, %v2337
  %v2339 = vpop.f32.mrf.mxu0
  %v2340 = vadd.f32 %v2267, %v2339
  %v2341 = vpop.f32.mrf.mxu0
  %v2342 = vadd.f32 %v2269, %v2341
  %v2343 = vpop.f32.mrf.mxu0
  %v2344 = vadd.f32 %v2271, %v2343
  %2345 = vdwg.mxu0
  %2346 = vmatprep.subr.bf16.mxu0 %v1697
  %2347 = vmatpush1.bf16.msra.mxu0 %v1696
  %2348 = vmatprep.subr.bf16.mxu0 %v1690
  %2349 = vmatpush1.bf16.msra.mxu0 %v1689
  %2350 = vmatprep.subr.bf16.mxu0 %v1683
  %2351 = vmatpush1.bf16.msra.mxu0 %v1682
  %2352 = vmatprep.subr.bf16.mxu0 %v1676
  %2353 = vmatpush1.bf16.msra.mxu0 %v1675
  %2354 = vmatprep.subr.bf16.mxu0 %v1669
  %2355 = vmatpush1.bf16.msra.mxu0 %v1668
  %2356 = vmatprep.subr.bf16.mxu0 %v1662
  %2357 = vmatpush1.bf16.msra.mxu0 %v1661
  %2358 = vmatprep.subr.bf16.mxu0 %v1655
  %2359 = vmatpush1.bf16.msra.mxu0 %v1654
  %2360 = vmatprep.subr.bf16.mxu0 %v1648
  %2361 = vmatpush1.bf16.msra.mxu0 %v1647
  %2362 = vmatprep.subr.bf16.mxu0 0
  %2363 = vmatpush2.bf16.msra.mxu0 0
  %2364 = vmatprep.subr.bf16.mxu0 0
  %2365 = vmatpush2.bf16.msra.mxu0 0
  %2366 = vmatprep.subr.bf16.mxu0 0
  %2367 = vmatpush2.bf16.msra.mxu0 0
  %2368 = vmatprep.subr.bf16.mxu0 0
  %2369 = vmatpush2.bf16.msra.mxu0 0
  %2370 = vmatprep.subr.bf16.mxu0 0
  %2371 = vmatpush2.bf16.msra.mxu0 0
  %2372 = vmatprep.subr.bf16.mxu0 0
  %2373 = vmatpush2.bf16.msra.mxu0 0
  %2374 = vmatprep.subr.bf16.mxu0 0
  %2375 = vmatpush2.bf16.msra.mxu0 0
  %2376 = vmatprep.subr.bf16.mxu0 0
  %2377 = vmatpush2.bf16.msra.mxu0 0
  %2378 = vmatprep.mubr.bf16.mxu0 0
  %2379 = vmatmul.mubr.bf16.gmra.mxu0 %v505
  %v2380 = vpop.f32.mrf.mxu0
  %v2381 = vadd.f32 %v2308, %v2380
  %v2382 = vpop.f32.mrf.mxu0
  %v2383 = vadd.f32 %v2310, %v2382
  %v2384 = vpop.f32.mrf.mxu0
  %v2385 = vadd.f32 %v2312, %v2384
  %v2386 = vpop.f32.mrf.mxu0
  %v2387 = vadd.f32 %v2314, %v2386
  %2388 = vmatprep.mubr.bf16.mxu0 0
  %2389 = vmatmul.mubr.bf16.gmra.mxu0 %v510
  %v2390 = vpop.f32.mrf.mxu0
  %v2391 = vadd.f32 %v2318, %v2390
  %v2392 = vpop.f32.mrf.mxu0
  %v2393 = vadd.f32 %v2320, %v2392
  %v2394 = vpop.f32.mrf.mxu0
  %v2395 = vadd.f32 %v2322, %v2394
  %v2396 = vpop.f32.mrf.mxu0
  %v2397 = vadd.f32 %v2324, %v2396
  %2398 = vmatprep.mubr.bf16.mxu0 0
  %2399 = vmatmul.mubr.bf16.gmra.mxu0 %v515
  %v2400 = vpop.f32.mrf.mxu0
  %v2401 = vadd.f32 %v2328, %v2400
  %v2402 = vpop.f32.mrf.mxu0
  %v2403 = vadd.f32 %v2330, %v2402
  %v2404 = vpop.f32.mrf.mxu0
  %v2405 = vadd.f32 %v2332, %v2404
  %v2406 = vpop.f32.mrf.mxu0
  %v2407 = vadd.f32 %v2334, %v2406
  %2408 = vmatprep.mubr.bf16.mxu0 0
  %2409 = vmatmul.mubr.bf16.gmra.mxu0 %v520
  %v2410 = vpop.f32.mrf.mxu0
  %v2411 = vadd.f32 %v2338, %v2410
  %v2412 = vpop.f32.mrf.mxu0
  %v2413 = vadd.f32 %v2340, %v2412
  %v2414 = vpop.f32.mrf.mxu0
  %v2415 = vadd.f32 %v2342, %v2414
  %v2416 = vpop.f32.mrf.mxu0
  %v2417 = vadd.f32 %v2344, %v2416
  %2418 = vdwg.mxu0
  %2419 = vmatprep.subr.bf16.mxu0 %v1475
  %2420 = vmatpush1.bf16.msra.mxu0 %v1474
  %2421 = vmatprep.subr.bf16.mxu0 %v1468
  %2422 = vmatpush1.bf16.msra.mxu0 %v1467
  %2423 = vmatprep.subr.bf16.mxu0 %v1461
  %2424 = vmatpush1.bf16.msra.mxu0 %v1460
  %2425 = vmatprep.subr.bf16.mxu0 %v1454
  %2426 = vmatpush1.bf16.msra.mxu0 %v1453
  %2427 = vmatprep.subr.bf16.mxu0 %v1447
  %2428 = vmatpush1.bf16.msra.mxu0 %v1446
  %2429 = vmatprep.subr.bf16.mxu0 %v1440
  %2430 = vmatpush1.bf16.msra.mxu0 %v1439
  %2431 = vmatprep.subr.bf16.mxu0 %v1433
  %2432 = vmatpush1.bf16.msra.mxu0 %v1432
  %2433 = vmatprep.subr.bf16.mxu0 %v1426
  %2434 = vmatpush1.bf16.msra.mxu0 %v1425
  %2435 = vmatprep.subr.bf16.mxu0 %v1531
  %2436 = vmatpush2.bf16.msra.mxu0 %v1530
  %2437 = vmatprep.subr.bf16.mxu0 %v1524
  %2438 = vmatpush2.bf16.msra.mxu0 %v1523
  %2439 = vmatprep.subr.bf16.mxu0 %v1517
  %2440 = vmatpush2.bf16.msra.mxu0 %v1516
  %2441 = vmatprep.subr.bf16.mxu0 %v1510
  %2442 = vmatpush2.bf16.msra.mxu0 %v1509
  %2443 = vmatprep.subr.bf16.mxu0 %v1503
  %2444 = vmatpush2.bf16.msra.mxu0 %v1502
  %2445 = vmatprep.subr.bf16.mxu0 %v1496
  %2446 = vmatpush2.bf16.msra.mxu0 %v1495
  %2447 = vmatprep.subr.bf16.mxu0 %v1489
  %2448 = vmatpush2.bf16.msra.mxu0 %v1488
  %2449 = vmatprep.subr.bf16.mxu0 %v1482
  %2450 = vmatpush2.bf16.msra.mxu0 %v1481
  %2451 = vmatprep.mubr.bf16.mxu0 %v502
  %2452 = vmatmul.mubr.bf16.gmra.mxu0 %v501
  %v2453 = vpop.f32.mrf.mxu0
  %v2454 = vadd.f32 %v400, %v2453
  %v2455 = vpop.f32.mrf.mxu0
  %v2456 = vadd.f32 %v400, %v2455
  %v2457 = vpop.f32.mrf.mxu0
  %v2458 = vadd.f32 %v405, %v2457
  %v2459 = vpop.f32.mrf.mxu0
  %v2460 = vadd.f32 %v405, %v2459
  %2461 = vmatprep.mubr.bf16.mxu0 %v507
  %2462 = vmatmul.mubr.bf16.gmra.mxu0 %v506
  %v2463 = vpop.f32.mrf.mxu0
  %v2464 = vadd.f32 %v410, %v2463
  %v2465 = vpop.f32.mrf.mxu0
  %v2466 = vadd.f32 %v410, %v2465
  %v2467 = vpop.f32.mrf.mxu0
  %v2468 = vadd.f32 %v415, %v2467
  %v2469 = vpop.f32.mrf.mxu0
  %v2470 = vadd.f32 %v415, %v2469
  %2471 = vmatprep.mubr.bf16.mxu0 %v512
  %2472 = vmatmul.mubr.bf16.gmra.mxu0 %v511
  %v2473 = vpop.f32.mrf.mxu0
  %v2474 = vadd.f32 %v420, %v2473
  %v2475 = vpop.f32.mrf.mxu0
  %v2476 = vadd.f32 %v420, %v2475
  %v2477 = vpop.f32.mrf.mxu0
  %v2478 = vadd.f32 %v425, %v2477
  %v2479 = vpop.f32.mrf.mxu0
  %v2480 = vadd.f32 %v425, %v2479
  %2481 = vmatprep.mubr.bf16.mxu0 %v517
  %2482 = vmatmul.mubr.bf16.gmra.mxu0 %v516
  %v2483 = vpop.f32.mrf.mxu0
  %v2484 = vadd.f32 %v430, %v2483
  %v2485 = vpop.f32.mrf.mxu0
  %v2486 = vadd.f32 %v430, %v2485
  %v2487 = vpop.f32.mrf.mxu0
  %v2488 = vadd.f32 %v435, %v2487
  %v2489 = vpop.f32.mrf.mxu0
  %v2490 = vadd.f32 %v435, %v2489
  %2491 = vdwg.mxu0
  %2492 = vmatprep.subr.bf16.mxu0 %v1587
  %2493 = vmatpush1.bf16.msra.mxu0 %v1586
  %2494 = vmatprep.subr.bf16.mxu0 %v1580
  %2495 = vmatpush1.bf16.msra.mxu0 %v1579
  %2496 = vmatprep.subr.bf16.mxu0 %v1573
  %2497 = vmatpush1.bf16.msra.mxu0 %v1572
  %2498 = vmatprep.subr.bf16.mxu0 %v1566
  %2499 = vmatpush1.bf16.msra.mxu0 %v1565
  %2500 = vmatprep.subr.bf16.mxu0 %v1559
  %2501 = vmatpush1.bf16.msra.mxu0 %v1558
  %2502 = vmatprep.subr.bf16.mxu0 %v1552
  %2503 = vmatpush1.bf16.msra.mxu0 %v1551
  %2504 = vmatprep.subr.bf16.mxu0 %v1545
  %2505 = vmatpush1.bf16.msra.mxu0 %v1544
  %2506 = vmatprep.subr.bf16.mxu0 %v1538
  %2507 = vmatpush1.bf16.msra.mxu0 %v1537
  %2508 = vmatprep.subr.bf16.mxu0 %v1643
  %2509 = vmatpush2.bf16.msra.mxu0 %v1642
  %2510 = vmatprep.subr.bf16.mxu0 %v1636
  %2511 = vmatpush2.bf16.msra.mxu0 %v1635
  %2512 = vmatprep.subr.bf16.mxu0 %v1629
  %2513 = vmatpush2.bf16.msra.mxu0 %v1628
  %2514 = vmatprep.subr.bf16.mxu0 %v1622
  %2515 = vmatpush2.bf16.msra.mxu0 %v1621
  %2516 = vmatprep.subr.bf16.mxu0 %v1615
  %2517 = vmatpush2.bf16.msra.mxu0 %v1614
  %2518 = vmatprep.subr.bf16.mxu0 %v1608
  %2519 = vmatpush2.bf16.msra.mxu0 %v1607
  %2520 = vmatprep.subr.bf16.mxu0 %v1601
  %2521 = vmatpush2.bf16.msra.mxu0 %v1600
  %2522 = vmatprep.subr.bf16.mxu0 %v1594
  %2523 = vmatpush2.bf16.msra.mxu0 %v1593
  %2524 = vmatprep.mubr.bf16.mxu0 %v504
  %2525 = vmatmul.mubr.bf16.gmra.mxu0 %v503
  %v2526 = vpop.f32.mrf.mxu0
  %v2527 = vadd.f32 %v2454, %v2526
  %v2528 = vpop.f32.mrf.mxu0
  %v2529 = vadd.f32 %v2456, %v2528
  %v2530 = vpop.f32.mrf.mxu0
  %v2531 = vadd.f32 %v2458, %v2530
  %v2532 = vpop.f32.mrf.mxu0
  %v2533 = vadd.f32 %v2460, %v2532
  %2534 = vmatprep.mubr.bf16.mxu0 %v509
  %2535 = vmatmul.mubr.bf16.gmra.mxu0 %v508
  %v2536 = vpop.f32.mrf.mxu0
  %v2537 = vadd.f32 %v2464, %v2536
  %v2538 = vpop.f32.mrf.mxu0
  %v2539 = vadd.f32 %v2466, %v2538
  %v2540 = vpop.f32.mrf.mxu0
  %v2541 = vadd.f32 %v2468, %v2540
  %v2542 = vpop.f32.mrf.mxu0
  %v2543 = vadd.f32 %v2470, %v2542
  %2544 = vmatprep.mubr.bf16.mxu0 %v514
  %2545 = vmatmul.mubr.bf16.gmra.mxu0 %v513
  %v2546 = vpop.f32.mrf.mxu0
  %v2547 = vadd.f32 %v2474, %v2546
  %v2548 = vpop.f32.mrf.mxu0
  %v2549 = vadd.f32 %v2476, %v2548
  %v2550 = vpop.f32.mrf.mxu0
  %v2551 = vadd.f32 %v2478, %v2550
  %v2552 = vpop.f32.mrf.mxu0
  %v2553 = vadd.f32 %v2480, %v2552
  %2554 = vmatprep.mubr.bf16.mxu0 %v519
  %2555 = vmatmul.mubr.bf16.gmra.mxu0 %v518
  %v2556 = vpop.f32.mrf.mxu0
  %v2557 = vadd.f32 %v2484, %v2556
  %v2558 = vpop.f32.mrf.mxu0
  %v2559 = vadd.f32 %v2486, %v2558
  %v2560 = vpop.f32.mrf.mxu0
  %v2561 = vadd.f32 %v2488, %v2560
  %v2562 = vpop.f32.mrf.mxu0
  %v2563 = vadd.f32 %v2490, %v2562
  %2564 = vdwg.mxu0
  %2565 = vmatprep.subr.bf16.mxu0 %v1699
  %2566 = vmatpush1.bf16.msra.mxu0 %v1698
  %2567 = vmatprep.subr.bf16.mxu0 %v1692
  %2568 = vmatpush1.bf16.msra.mxu0 %v1691
  %2569 = vmatprep.subr.bf16.mxu0 %v1685
  %2570 = vmatpush1.bf16.msra.mxu0 %v1684
  %2571 = vmatprep.subr.bf16.mxu0 %v1678
  %2572 = vmatpush1.bf16.msra.mxu0 %v1677
  %2573 = vmatprep.subr.bf16.mxu0 %v1671
  %2574 = vmatpush1.bf16.msra.mxu0 %v1670
  %2575 = vmatprep.subr.bf16.mxu0 %v1664
  %2576 = vmatpush1.bf16.msra.mxu0 %v1663
  %2577 = vmatprep.subr.bf16.mxu0 %v1657
  %2578 = vmatpush1.bf16.msra.mxu0 %v1656
  %2579 = vmatprep.subr.bf16.mxu0 %v1650
  %2580 = vmatpush1.bf16.msra.mxu0 %v1649
  %2581 = vmatprep.subr.bf16.mxu0 0
  %2582 = vmatpush2.bf16.msra.mxu0 0
  %2583 = vmatprep.subr.bf16.mxu0 0
  %2584 = vmatpush2.bf16.msra.mxu0 0
  %2585 = vmatprep.subr.bf16.mxu0 0
  %2586 = vmatpush2.bf16.msra.mxu0 0
  %2587 = vmatprep.subr.bf16.mxu0 0
  %2588 = vmatpush2.bf16.msra.mxu0 0
  %2589 = vmatprep.subr.bf16.mxu0 0
  %2590 = vmatpush2.bf16.msra.mxu0 0
  %2591 = vmatprep.subr.bf16.mxu0 0
  %2592 = vmatpush2.bf16.msra.mxu0 0
  %2593 = vmatprep.subr.bf16.mxu0 0
  %2594 = vmatpush2.bf16.msra.mxu0 0
  %2595 = vmatprep.subr.bf16.mxu0 0
  %2596 = vmatpush2.bf16.msra.mxu0 0
  %2597 = vmatprep.mubr.bf16.mxu0 0
  %2598 = vmatmul.mubr.bf16.gmra.mxu0 %v505
  %v2599 = vpop.f32.mrf.mxu0
  %v2600 = vadd.f32 %v2527, %v2599
  %v2601 = vpop.f32.mrf.mxu0
  %v2602 = vadd.f32 %v2529, %v2601
  %v2603 = vpop.f32.mrf.mxu0
  %v2604 = vadd.f32 %v2531, %v2603
  %v2605 = vpop.f32.mrf.mxu0
  %v2606 = vadd.f32 %v2533, %v2605
  %2607 = vmatprep.mubr.bf16.mxu0 0
  %2608 = vmatmul.mubr.bf16.gmra.mxu0 %v510
  %v2609 = vpop.f32.mrf.mxu0
  %v2610 = vadd.f32 %v2537, %v2609
  %v2611 = vpop.f32.mrf.mxu0
  %v2612 = vadd.f32 %v2539, %v2611
  %v2613 = vpop.f32.mrf.mxu0
  %v2614 = vadd.f32 %v2541, %v2613
  %v2615 = vpop.f32.mrf.mxu0
  %v2616 = vadd.f32 %v2543, %v2615
  %2617 = vmatprep.mubr.bf16.mxu0 0
  %2618 = vmatmul.mubr.bf16.gmra.mxu0 %v515
  %v2619 = vpop.f32.mrf.mxu0
  %v2620 = vadd.f32 %v2547, %v2619
  %v2621 = vpop.f32.mrf.mxu0
  %v2622 = vadd.f32 %v2549, %v2621
  %v2623 = vpop.f32.mrf.mxu0
  %v2624 = vadd.f32 %v2551, %v2623
  %v2625 = vpop.f32.mrf.mxu0
  %v2626 = vadd.f32 %v2553, %v2625
  %2627 = vmatprep.mubr.bf16.mxu0 0
  %2628 = vmatmul.mubr.bf16.gmra.mxu0 %v520
  %v2629 = vpop.f32.mrf.mxu0
  %v2630 = vadd.f32 %v2557, %v2629
  %v2631 = vpop.f32.mrf.mxu0
  %v2632 = vadd.f32 %v2559, %v2631
  %v2633 = vpop.f32.mrf.mxu0
  %v2634 = vadd.f32 %v2561, %v2633
  %v2635 = vpop.f32.mrf.mxu0
  %v2636 = vadd.f32 %v2563, %v2635
  %2637 = vdwg.mxu0
  %2638 = vmatprep.subr.bf16.mxu0 0
  %2639 = vmatpush1.bf16.msra.mxu0 %v1476
  %2640 = vmatprep.subr.bf16.mxu0 0
  %2641 = vmatpush1.bf16.msra.mxu0 %v1469
  %2642 = vmatprep.subr.bf16.mxu0 0
  %2643 = vmatpush1.bf16.msra.mxu0 %v1462
  %2644 = vmatprep.subr.bf16.mxu0 0
  %2645 = vmatpush1.bf16.msra.mxu0 %v1455
  %2646 = vmatprep.subr.bf16.mxu0 0
  %2647 = vmatpush1.bf16.msra.mxu0 %v1448
  %2648 = vmatprep.subr.bf16.mxu0 0
  %2649 = vmatpush1.bf16.msra.mxu0 %v1441
  %2650 = vmatprep.subr.bf16.mxu0 0
  %2651 = vmatpush1.bf16.msra.mxu0 %v1434
  %2652 = vmatprep.subr.bf16.mxu0 0
  %2653 = vmatpush1.bf16.msra.mxu0 %v1427
  %2654 = vmatprep.subr.bf16.mxu0 0
  %2655 = vmatpush2.bf16.msra.mxu0 %v1532
  %2656 = vmatprep.subr.bf16.mxu0 0
  %2657 = vmatpush2.bf16.msra.mxu0 %v1525
  %2658 = vmatprep.subr.bf16.mxu0 0
  %2659 = vmatpush2.bf16.msra.mxu0 %v1518
  %2660 = vmatprep.subr.bf16.mxu0 0
  %2661 = vmatpush2.bf16.msra.mxu0 %v1511
  %2662 = vmatprep.subr.bf16.mxu0 0
  %2663 = vmatpush2.bf16.msra.mxu0 %v1504
  %2664 = vmatprep.subr.bf16.mxu0 0
  %2665 = vmatpush2.bf16.msra.mxu0 %v1497
  %2666 = vmatprep.subr.bf16.mxu0 0
  %2667 = vmatpush2.bf16.msra.mxu0 %v1490
  %2668 = vmatprep.subr.bf16.mxu0 0
  %2669 = vmatpush2.bf16.msra.mxu0 %v1483
  %2670 = vmatprep.mubr.bf16.mxu0 %v502
  %2671 = vmatmul.mubr.bf16.gmra.mxu0 %v501
  %v2672 = vpop.f32.mrf.mxu0
  %v2673 = vadd.f32 %v400, %v2672
  %v2674 = vpop.f32.mrf.mxu0
  %v2675 = vpop.f32.mrf.mxu0
  %v2676 = vadd.f32 %v405, %v2675
  %v2677 = vpop.f32.mrf.mxu0
  %2678 = vmatprep.mubr.bf16.mxu0 %v507
  %2679 = vmatmul.mubr.bf16.gmra.mxu0 %v506
  %v2680 = vpop.f32.mrf.mxu0
  %v2681 = vadd.f32 %v410, %v2680
  %v2682 = vpop.f32.mrf.mxu0
  %v2683 = vpop.f32.mrf.mxu0
  %v2684 = vadd.f32 %v415, %v2683
  %v2685 = vpop.f32.mrf.mxu0
  %2686 = vmatprep.mubr.bf16.mxu0 %v512
  %2687 = vmatmul.mubr.bf16.gmra.mxu0 %v511
  %v2688 = vpop.f32.mrf.mxu0
  %v2689 = vadd.f32 %v420, %v2688
  %v2690 = vpop.f32.mrf.mxu0
  %v2691 = vpop.f32.mrf.mxu0
  %v2692 = vadd.f32 %v425, %v2691
  %v2693 = vpop.f32.mrf.mxu0
  %2694 = vmatprep.mubr.bf16.mxu0 %v517
  %2695 = vmatmul.mubr.bf16.gmra.mxu0 %v516
  %v2696 = vpop.f32.mrf.mxu0
  %v2697 = vadd.f32 %v430, %v2696
  %v2698 = vpop.f32.mrf.mxu0
  %v2699 = vpop.f32.mrf.mxu0
  %v2700 = vadd.f32 %v435, %v2699
  %v2701 = vpop.f32.mrf.mxu0
  %2702 = vdwg.mxu0
  %2703 = vmatprep.subr.bf16.mxu0 0
  %2704 = vmatpush1.bf16.msra.mxu0 %v1588
  %2705 = vmatprep.subr.bf16.mxu0 0
  %2706 = vmatpush1.bf16.msra.mxu0 %v1581
  %2707 = vmatprep.subr.bf16.mxu0 0
  %2708 = vmatpush1.bf16.msra.mxu0 %v1574
  %2709 = vmatprep.subr.bf16.mxu0 0
  %2710 = vmatpush1.bf16.msra.mxu0 %v1567
  %2711 = vmatprep.subr.bf16.mxu0 0
  %2712 = vmatpush1.bf16.msra.mxu0 %v1560
  %2713 = vmatprep.subr.bf16.mxu0 0
  %2714 = vmatpush1.bf16.msra.mxu0 %v1553
  %2715 = vmatprep.subr.bf16.mxu0 0
  %2716 = vmatpush1.bf16.msra.mxu0 %v1546
  %2717 = vmatprep.subr.bf16.mxu0 0
  %2718 = vmatpush1.bf16.msra.mxu0 %v1539
  %2719 = vmatprep.subr.bf16.mxu0 0
  %2720 = vmatpush2.bf16.msra.mxu0 %v1644
  %2721 = vmatprep.subr.bf16.mxu0 0
  %2722 = vmatpush2.bf16.msra.mxu0 %v1637
  %2723 = vmatprep.subr.bf16.mxu0 0
  %2724 = vmatpush2.bf16.msra.mxu0 %v1630
  %2725 = vmatprep.subr.bf16.mxu0 0
  %2726 = vmatpush2.bf16.msra.mxu0 %v1623
  %2727 = vmatprep.subr.bf16.mxu0 0
  %2728 = vmatpush2.bf16.msra.mxu0 %v1616
  %2729 = vmatprep.subr.bf16.mxu0 0
  %2730 = vmatpush2.bf16.msra.mxu0 %v1609
  %2731 = vmatprep.subr.bf16.mxu0 0
  %2732 = vmatpush2.bf16.msra.mxu0 %v1602
  %2733 = vmatprep.subr.bf16.mxu0 0
  %2734 = vmatpush2.bf16.msra.mxu0 %v1595
  %2735 = vmatprep.mubr.bf16.mxu0 %v504
  %2736 = vmatmul.mubr.bf16.gmra.mxu0 %v503
  %v2737 = vpop.f32.mrf.mxu0
  %v2738 = vadd.f32 %v2673, %v2737
  %v2739 = vpop.f32.mrf.mxu0
  %v2740 = vpop.f32.mrf.mxu0
  %v2741 = vadd.f32 %v2676, %v2740
  %v2742 = vpop.f32.mrf.mxu0
  %2743 = vmatprep.mubr.bf16.mxu0 %v509
  %2744 = vmatmul.mubr.bf16.gmra.mxu0 %v508
  %v2745 = vpop.f32.mrf.mxu0
  %v2746 = vadd.f32 %v2681, %v2745
  %v2747 = vpop.f32.mrf.mxu0
  %v2748 = vpop.f32.mrf.mxu0
  %v2749 = vadd.f32 %v2684, %v2748
  %v2750 = vpop.f32.mrf.mxu0
  %2751 = vmatprep.mubr.bf16.mxu0 %v514
  %2752 = vmatmul.mubr.bf16.gmra.mxu0 %v513
  %v2753 = vpop.f32.mrf.mxu0
  %v2754 = vadd.f32 %v2689, %v2753
  %v2755 = vpop.f32.mrf.mxu0
  %v2756 = vpop.f32.mrf.mxu0
  %v2757 = vadd.f32 %v2692, %v2756
  %v2758 = vpop.f32.mrf.mxu0
  %2759 = vmatprep.mubr.bf16.mxu0 %v519
  %2760 = vmatmul.mubr.bf16.gmra.mxu0 %v518
  %v2761 = vpop.f32.mrf.mxu0
  %v2762 = vadd.f32 %v2697, %v2761
  %v2763 = vpop.f32.mrf.mxu0
  %v2764 = vpop.f32.mrf.mxu0
  %v2765 = vadd.f32 %v2700, %v2764
  %v2766 = vpop.f32.mrf.mxu0
  %2767 = vdwg.mxu0
  %2768 = vmatprep.subr.bf16.mxu0 0
  %2769 = vmatpush1.bf16.msra.mxu0 %v1700
  %2770 = vmatprep.subr.bf16.mxu0 0
  %2771 = vmatpush1.bf16.msra.mxu0 %v1693
  %2772 = vmatprep.subr.bf16.mxu0 0
  %2773 = vmatpush1.bf16.msra.mxu0 %v1686
  %2774 = vmatprep.subr.bf16.mxu0 0
  %2775 = vmatpush1.bf16.msra.mxu0 %v1679
  %2776 = vmatprep.subr.bf16.mxu0 0
  %2777 = vmatpush1.bf16.msra.mxu0 %v1672
  %2778 = vmatprep.subr.bf16.mxu0 0
  %2779 = vmatpush1.bf16.msra.mxu0 %v1665
  %2780 = vmatprep.subr.bf16.mxu0 0
  %2781 = vmatpush1.bf16.msra.mxu0 %v1658
  %2782 = vmatprep.subr.bf16.mxu0 0
  %2783 = vmatpush1.bf16.msra.mxu0 %v1651
  %2784 = vmatprep.subr.bf16.mxu0 0
  %2785 = vmatpush2.bf16.msra.mxu0 0
  %2786 = vmatprep.subr.bf16.mxu0 0
  %2787 = vmatpush2.bf16.msra.mxu0 0
  %2788 = vmatprep.subr.bf16.mxu0 0
  %2789 = vmatpush2.bf16.msra.mxu0 0
  %2790 = vmatprep.subr.bf16.mxu0 0
  %2791 = vmatpush2.bf16.msra.mxu0 0
  %2792 = vmatprep.subr.bf16.mxu0 0
  %2793 = vmatpush2.bf16.msra.mxu0 0
  %2794 = vmatprep.subr.bf16.mxu0 0
  %2795 = vmatpush2.bf16.msra.mxu0 0
  %2796 = vmatprep.subr.bf16.mxu0 0
  %2797 = vmatpush2.bf16.msra.mxu0 0
  %2798 = vmatprep.subr.bf16.mxu0 0
  %2799 = vmatpush2.bf16.msra.mxu0 0
  %2800 = vmatprep.mubr.bf16.mxu0 0
  %2801 = vmatmul.mubr.bf16.gmra.mxu0 %v505
  %v2802 = vpop.f32.mrf.mxu0
  %v2803 = vadd.f32 %v2738, %v2802
  %v2804 = vpop.f32.mrf.mxu0
  %v2805 = vpop.f32.mrf.mxu0
  %v2806 = vadd.f32 %v2741, %v2805
  %v2807 = vpop.f32.mrf.mxu0
  %2808 = vmatprep.mubr.bf16.mxu0 0
  %2809 = vmatmul.mubr.bf16.gmra.mxu0 %v510
  %v2810 = vpop.f32.mrf.mxu0
  %v2811 = vadd.f32 %v2746, %v2810
  %v2812 = vpop.f32.mrf.mxu0
  %v2813 = vpop.f32.mrf.mxu0
  %v2814 = vadd.f32 %v2749, %v2813
  %v2815 = vpop.f32.mrf.mxu0
  %2816 = vmatprep.mubr.bf16.mxu0 0
  %2817 = vmatmul.mubr.bf16.gmra.mxu0 %v515
  %v2818 = vpop.f32.mrf.mxu0
  %v2819 = vadd.f32 %v2754, %v2818
  %v2820 = vpop.f32.mrf.mxu0
  %v2821 = vpop.f32.mrf.mxu0
  %v2822 = vadd.f32 %v2757, %v2821
  %v2823 = vpop.f32.mrf.mxu0
  %2824 = vmatprep.mubr.bf16.mxu0 0
  %2825 = vmatmul.mubr.bf16.gmra.mxu0 %v520
  %v2826 = vpop.f32.mrf.mxu0
  %v2827 = vadd.f32 %v2762, %v2826
  %v2828 = vpop.f32.mrf.mxu0
  %v2829 = vpop.f32.mrf.mxu0
  %v2830 = vadd.f32 %v2765, %v2829
  %v2831 = vpop.f32.mrf.mxu0
  %2832 = vdwg.mxu0
  %v2833 = vmax.f32 %v2162, 0.0
  %v2834 = vmax.f32 %v2164, 0.0
  %v2835 = vmax.f32 %v2381, 0.0
  %v2836 = vmax.f32 %v2383, 0.0
  %v2837 = vmax.f32 %v2600, 0.0
  %v2838 = vmax.f32 %v2602, 0.0
  %v2839 = vmax.f32 %v2803, 0.0
  %v2840 = vmax.f32 %v2166, 0.0
  %v2841 = vmax.f32 %v2168, 0.0
  %v2842 = vmax.f32 %v2385, 0.0
  %v2843 = vmax.f32 %v2387, 0.0
  %v2844 = vmax.f32 %v2604, 0.0
  %v2845 = vmax.f32 %v2606, 0.0
  %v2846 = vmax.f32 %v2806, 0.0
  %v2847 = vmax.f32 %v2172, 0.0
  %v2848 = vmax.f32 %v2174, 0.0
  %v2849 = vmax.f32 %v2391, 0.0
  %v2850 = vmax.f32 %v2393, 0.0
  %v2851 = vmax.f32 %v2610, 0.0
  %v2852 = vmax.f32 %v2612, 0.0
  %v2853 = vmax.f32 %v2811, 0.0
  %v2854 = vmax.f32 %v2176, 0.0
  %v2855 = vmax.f32 %v2178, 0.0
  %v2856 = vmax.f32 %v2395, 0.0
  %v2857 = vmax.f32 %v2397, 0.0
  %v2858 = vmax.f32 %v2614, 0.0
  %v2859 = vmax.f32 %v2616, 0.0
  %v2860 = vmax.f32 %v2814, 0.0
  %v2861 = vmax.f32 %v2182, 0.0
  %v2862 = vmax.f32 %v2184, 0.0
  %v2863 = vmax.f32 %v2401, 0.0
  %v2864 = vmax.f32 %v2403, 0.0
  %v2865 = vmax.f32 %v2620, 0.0
  %v2866 = vmax.f32 %v2622, 0.0
  %v2867 = vmax.f32 %v2819, 0.0
  %v2868 = vmax.f32 %v2186, 0.0
  %v2869 = vmax.f32 %v2188, 0.0
  %v2870 = vmax.f32 %v2405, 0.0
  %v2871 = vmax.f32 %v2407, 0.0
  %v2872 = vmax.f32 %v2624, 0.0
  %v2873 = vmax.f32 %v2626, 0.0
  %v2874 = vmax.f32 %v2822, 0.0
  %v2875 = vmax.f32 %v2192, 0.0
  %v2876 = vmax.f32 %v2194, 0.0
  %v2877 = vmax.f32 %v2411, 0.0
  %v2878 = vmax.f32 %v2413, 0.0
  %v2879 = vmax.f32 %v2630, 0.0
  %v2880 = vmax.f32 %v2632, 0.0
  %v2881 = vmax.f32 %v2827, 0.0
  %v2882 = vmax.f32 %v2196, 0.0
  %v2883 = vmax.f32 %v2198, 0.0
  %v2884 = vmax.f32 %v2415, 0.0
  %v2885 = vmax.f32 %v2417, 0.0
  %v2886 = vmax.f32 %v2634, 0.0
  %v2887 = vmax.f32 %v2636, 0.0
  %v2888 = vmax.f32 %v2830, 0.0
  %v2889 = vpack.c.bf16 %v2840, %v2833
  %v2890 = vpack.c.bf16 %v2841, %v2834
  %v2891 = vpack.c.bf16 %v2842, %v2835
  %v2892 = vpack.c.bf16 %v2843, %v2836
  %v2893 = vpack.c.bf16 %v2844, %v2837
  %v2894 = vpack.c.bf16 %v2845, %v2838
  %v2895 = vpack.c.bf16 %v2846, %v2839
  %v2896 = vpack.c.bf16 %v2854, %v2847
  %v2897 = vpack.c.bf16 %v2855, %v2848
  %v2898 = vpack.c.bf16 %v2856, %v2849
  %v2899 = vpack.c.bf16 %v2857, %v2850
  %v2900 = vpack.c.bf16 %v2858, %v2851
  %v2901 = vpack.c.bf16 %v2859, %v2852
  %v2902 = vpack.c.bf16 %v2860, %v2853
  %v2903 = vpack.c.bf16 %v2868, %v2861
  %v2904 = vpack.c.bf16 %v2869, %v2862
  %v2905 = vpack.c.bf16 %v2870, %v2863
  %v2906 = vpack.c.bf16 %v2871, %v2864
  %v2907 = vpack.c.bf16 %v2872, %v2865
  %v2908 = vpack.c.bf16 %v2873, %v2866
  %v2909 = vpack.c.bf16 %v2874, %v2867
  %v2910 = vpack.c.bf16 %v2882, %v2875
  %v2911 = vpack.c.bf16 %v2883, %v2876
  %v2912 = vpack.c.bf16 %v2884, %v2877
  %v2913 = vpack.c.bf16 %v2885, %v2878
  %v2914 = vpack.c.bf16 %v2886, %v2879
  %v2915 = vpack.c.bf16 %v2887, %v2880
  %v2916 = vpack.c.bf16 %v2888, %v2881
  %v2917 = vld [vmem:[%s3] sm:$0xff]
  %v2918 = vld [vmem:[%s3 + $0x8] sm:$0xff]
  %v2919 = vld [vmem:[%s3 + $0x10] sm:$0xff]
  %v2920 = vld [vmem:[%s3 + $0x18] sm:$0xff]
  %v2921 = vld [vmem:[%s3 + $0x20] sm:$0xff]
  %v2922 = vld [vmem:[%s3 + $0x28] sm:$0xff]
  %v2923 = vld [vmem:[%s3 + $0x30] sm:$0xff]
  %v2924 = vld [vmem:[%s3 + $0x38] sm:$0xff]
  %v2925 = vld [vmem:[%s3 + $0x40] sm:$0xff]
  %v2926 = vld [vmem:[%s3 + $0x48] sm:$0xff]
  %v2927 = vld [vmem:[%s3 + $0x50] sm:$0xff]
  %v2928 = vld [vmem:[%s3 + $0x58] sm:$0xff]
  %v2929 = vld [vmem:[%s3 + $0x60] sm:$0xff]
  %v2930 = vld [vmem:[%s3 + $0x68] sm:$0xff]
  %v2931 = vld [vmem:[%s3 + $0x70] sm:$0xff]
  %v2932 = vld [vmem:[%s3 + $0x78] sm:$0xff]
  %v2933 = vld [vmem:[%s3 + $0x80] sm:$0xff]
  %v2934 = vld [vmem:[%s3 + $0x88] sm:$0xff]
  %v2935 = vld [vmem:[%s3 + $0x90] sm:$0xff]
  %v2936 = vld [vmem:[%s3 + $0x98] sm:$0xff]
  %v2937 = vld [vmem:[%s3 + $0xa0] sm:$0xff]
  %v2938 = vld [vmem:[%s3 + $0xa8] sm:$0xff]
  %v2939 = vld [vmem:[%s3 + $0xb0] sm:$0xff]
  %v2940 = vld [vmem:[%s3 + $0xb8] sm:$0xff]
  %v2941 = vld [vmem:[%s3 + $0xc0] sm:$0xff]
  %v2942 = vld [vmem:[%s3 + $0xc8] sm:$0xff]
  %v2943 = vld [vmem:[%s3 + $0xd0] sm:$0xff]
  %v2944 = vld [vmem:[%s3 + $0xd8] sm:$0xff]
  %v2945 = vld [vmem:[%s3 + $0xe0] sm:$0xff]
  %v2946 = vld [vmem:[%s3 + $0xe8] sm:$0xff]
  %v2947 = vld [vmem:[%s3 + $0xf0] sm:$0xff]
  %v2948 = vld [vmem:[%s3 + $0xf8] sm:$0xff]
  %v2949 = vld [vmem:[%s3 + $0x100] sm:$0xff]
  %v2950 = vld [vmem:[%s3 + $0x108] sm:$0xff]
  %v2951 = vld [vmem:[%s3 + $0x110] sm:$0xff]
  %v2952 = vld [vmem:[%s3 + $0x118] sm:$0xff]
  %v2953 = vld [vmem:[%s3 + $0x120] sm:$0xff]
  %v2954 = vld [vmem:[%s3 + $0x128] sm:$0xff]
  %v2955 = vld [vmem:[%s3 + $0x130] sm:$0xff]
  %v2956 = vld [vmem:[%s3 + $0x138] sm:$0xff]
  %v2957 = vld [vmem:[%s3 + $0x140] sm:$0xff]
  %v2958 = vld [vmem:[%s3 + $0x148] sm:$0xff]
  %v2959 = vld [vmem:[%s3 + $0x150] sm:$0xff]
  %v2960 = vld [vmem:[%s3 + $0x158] sm:$0xff]
  %v2961 = vld [vmem:[%s3 + $0x160] sm:$0xff]
  %v2962 = vld [vmem:[%s3 + $0x168] sm:$0xff]
  %v2963 = vld [vmem:[%s3 + $0x170] sm:$0xff]
  %v2964 = vld [vmem:[%s3 + $0x178] sm:$0xff]
  %v2965 = vld [vmem:[%s3 + $0x180] sm:$0xff]
  %v2966 = vld [vmem:[%s3 + $0x188] sm:$0xff]
  %v2967 = vld [vmem:[%s3 + $0x190] sm:$0xff]
  %v2968 = vld [vmem:[%s3 + $0x198] sm:$0xff]
  %v2969 = vld [vmem:[%s3 + $0x1a0] sm:$0xff]
  %v2970 = vld [vmem:[%s3 + $0x1a8] sm:$0xff]
  %v2971 = vld [vmem:[%s3 + $0x1b0] sm:$0xff]
  %v2972 = vld [vmem:[%s3 + $0x1b8] sm:$0xff]
  %v2973 = vld [vmem:[%s3 + $0x1c0] sm:$0xff]
  %v2974 = vld [vmem:[%s3 + $0x1c8] sm:$0xff]
  %v2975 = vld [vmem:[%s3 + $0x1d0] sm:$0xff]
  %v2976 = vld [vmem:[%s3 + $0x1d8] sm:$0xff]
  %v2977 = vld [vmem:[%s3 + $0x1e0] sm:$0xff]
  %v2978 = vld [vmem:[%s3 + $0x1e8] sm:$0xff]
  %v2979 = vld [vmem:[%s3 + $0x1f0] sm:$0xff]
  %v2980 = vld [vmem:[%s3 + $0x1f8] sm:$0xff]
  %v2981 = vld [vmem:[%s3 + $0x200] sm:$0xff]
  %v2982 = vld [vmem:[%s3 + $0x208] sm:$0xff]
  %v2983 = vld [vmem:[%s3 + $0x210] sm:$0xff]
  %v2984 = vld [vmem:[%s3 + $0x218] sm:$0xff]
  %v2985 = vld [vmem:[%s3 + $0x220] sm:$0xff]
  %v2986 = vld [vmem:[%s3 + $0x228] sm:$0xff]
  %v2987 = vld [vmem:[%s3 + $0x230] sm:$0xff]
  %v2988 = vld [vmem:[%s3 + $0x238] sm:$0xff]
  %v2989 = vld [vmem:[%s3 + $0x240] sm:$0xff]
  %v2990 = vld [vmem:[%s3 + $0x248] sm:$0xff]
  %v2991 = vld [vmem:[%s3 + $0x250] sm:$0xff]
  %v2992 = vld [vmem:[%s3 + $0x258] sm:$0xff]
  %v2993 = vld [vmem:[%s3 + $0x260] sm:$0xff]
  %v2994 = vld [vmem:[%s3 + $0x268] sm:$0xff]
  %v2995 = vld [vmem:[%s3 + $0x270] sm:$0xff]
  %v2996 = vld [vmem:[%s3 + $0x278] sm:$0xff]
  %v2997 = vld [vmem:[%s3 + $0x280] sm:$0xff]
  %v2998 = vld [vmem:[%s3 + $0x288] sm:$0xff]
  %v2999 = vld [vmem:[%s3 + $0x290] sm:$0xff]
  %v3000 = vld [vmem:[%s3 + $0x298] sm:$0xff]
  %v3001 = vld [vmem:[%s3 + $0x2a0] sm:$0xff]
  %v3002 = vld [vmem:[%s3 + $0x2a8] sm:$0xff]
  %v3003 = vld [vmem:[%s3 + $0x2b0] sm:$0xff]
  %v3004 = vld [vmem:[%s3 + $0x2b8] sm:$0xff]
  %v3005 = vld [vmem:[%s3 + $0x2c0] sm:$0xff]
  %v3006 = vld [vmem:[%s3 + $0x2c8] sm:$0xff]
  %v3007 = vld [vmem:[%s3 + $0x2d0] sm:$0xff]
  %v3008 = vld [vmem:[%s3 + $0x2d8] sm:$0xff]
  %v3009 = vld [vmem:[%s3 + $0x2e0] sm:$0xff]
  %v3010 = vld [vmem:[%s3 + $0x2e8] sm:$0xff]
  %v3011 = vld [vmem:[%s3 + $0x2f0] sm:$0xff]
  %v3012 = vld [vmem:[%s3 + $0x2f8] sm:$0xff]
  %v3013 = vld [vmem:[%s3 + $0x300] sm:$0xff]
  %v3014 = vld [vmem:[%s3 + $0x308] sm:$0xff]
  %v3113 = vunpack.c.l.b16 %v2917
  %v3114 = vunpack.c.h.b16 %v2917
  %v3115 = vunpack.c.l.b16 %v2918
  %v3116 = vunpack.c.h.b16 %v2918
  %v3117 = vunpack.c.l.b16 %v2919
  %v3118 = vunpack.c.h.b16 %v2919
  %v3119 = vunpack.c.l.b16 %v2920
  %v3120 = vunpack.c.h.b16 %v2920
  %v3121 = vunpack.c.l.b16 %v2921
  %v3122 = vunpack.c.h.b16 %v2921
  %v3123 = vunpack.c.l.b16 %v2922
  %v3124 = vunpack.c.h.b16 %v2922
  %v3125 = vunpack.c.l.b16 %v2923
  %v3126 = vunpack.c.h.b16 %v2923
  %v3127 = vunpack.c.l.b16 %v2924
  %v3128 = vunpack.c.h.b16 %v2924
  %v3129 = vunpack.c.l.b16 %v2925
  %v3130 = vunpack.c.h.b16 %v2925
  %v3131 = vunpack.c.l.b16 %v2926
  %v3132 = vunpack.c.h.b16 %v2926
  %v3133 = vunpack.c.l.b16 %v2927
  %v3134 = vunpack.c.h.b16 %v2927
  %v3135 = vunpack.c.l.b16 %v2928
  %v3136 = vunpack.c.h.b16 %v2928
  %v3137 = vunpack.c.l.b16 %v2929
  %v3138 = vunpack.c.h.b16 %v2929
  %v3139 = vunpack.c.l.b16 %v2930
  %v3140 = vunpack.c.h.b16 %v2930
  %v3141 = vunpack.c.l.b16 %v2931
  %v3142 = vunpack.c.h.b16 %v2931
  %v3143 = vunpack.c.l.b16 %v2932
  %v3144 = vunpack.c.h.b16 %v2932
  %v3145 = vunpack.c.l.b16 %v2933
  %v3146 = vunpack.c.h.b16 %v2933
  %v3147 = vunpack.c.l.b16 %v2934
  %v3148 = vunpack.c.h.b16 %v2934
  %v3149 = vunpack.c.l.b16 %v2935
  %v3150 = vunpack.c.h.b16 %v2935
  %v3151 = vunpack.c.l.b16 %v2936
  %v3152 = vunpack.c.h.b16 %v2936
  %v3153 = vunpack.c.l.b16 %v2937
  %v3154 = vunpack.c.h.b16 %v2937
  %v3155 = vunpack.c.l.b16 %v2938
  %v3156 = vunpack.c.h.b16 %v2938
  %v3157 = vunpack.c.l.b16 %v2939
  %v3158 = vunpack.c.h.b16 %v2939
  %v3159 = vunpack.c.l.b16 %v2940
  %v3160 = vunpack.c.h.b16 %v2940
  %v3161 = vunpack.c.l.b16 %v2941
  %v3162 = vunpack.c.h.b16 %v2941
  %v3163 = vunpack.c.l.b16 %v2942
  %v3164 = vunpack.c.h.b16 %v2942
  %v3165 = vunpack.c.l.b16 %v2943
  %v3166 = vunpack.c.h.b16 %v2943
  %v3167 = vunpack.c.l.b16 %v2944
  %v3168 = vunpack.c.h.b16 %v2944
  %v3169 = vunpack.c.l.b16 %v2945
  %v3170 = vunpack.c.h.b16 %v2945
  %v3171 = vunpack.c.l.b16 %v2946
  %v3172 = vunpack.c.h.b16 %v2946
  %v3173 = vunpack.c.l.b16 %v2947
  %v3174 = vunpack.c.h.b16 %v2947
  %v3175 = vunpack.c.l.b16 %v2948
  %v3176 = vunpack.c.h.b16 %v2948
  %v3177 = vunpack.c.l.b16 %v2949
  %v3178 = vunpack.c.h.b16 %v2949
  %v3179 = vunpack.c.l.b16 %v2950
  %v3180 = vunpack.c.h.b16 %v2950
  %v3181 = vunpack.c.l.b16 %v2951
  %v3182 = vunpack.c.h.b16 %v2951
  %v3183 = vunpack.c.l.b16 %v2952
  %v3184 = vunpack.c.h.b16 %v2952
  %v3185 = vunpack.c.l.b16 %v2953
  %v3186 = vunpack.c.h.b16 %v2953
  %v3187 = vunpack.c.l.b16 %v2954
  %v3188 = vunpack.c.h.b16 %v2954
  %v3189 = vunpack.c.l.b16 %v2955
  %v3190 = vunpack.c.h.b16 %v2955
  %v3191 = vunpack.c.l.b16 %v2956
  %v3192 = vunpack.c.h.b16 %v2956
  %v3193 = vunpack.c.l.b16 %v2957
  %v3194 = vunpack.c.h.b16 %v2957
  %v3195 = vunpack.c.l.b16 %v2958
  %v3196 = vunpack.c.h.b16 %v2958
  %v3197 = vunpack.c.l.b16 %v2959
  %v3198 = vunpack.c.h.b16 %v2959
  %v3199 = vunpack.c.l.b16 %v2960
  %v3200 = vunpack.c.h.b16 %v2960
  %v3201 = vunpack.c.l.b16 %v2961
  %v3202 = vunpack.c.h.b16 %v2961
  %v3203 = vunpack.c.l.b16 %v2962
  %v3204 = vunpack.c.h.b16 %v2962
  %v3205 = vunpack.c.l.b16 %v2963
  %v3206 = vunpack.c.h.b16 %v2963
  %v3207 = vunpack.c.l.b16 %v2964
  %v3208 = vunpack.c.h.b16 %v2964
  %v3209 = vunpack.c.l.b16 %v2965
  %v3210 = vunpack.c.h.b16 %v2965
  %v3211 = vunpack.c.l.b16 %v2966
  %v3212 = vunpack.c.h.b16 %v2966
  %v3213 = vunpack.c.l.b16 %v2967
  %v3214 = vunpack.c.h.b16 %v2967
  %v3215 = vunpack.c.l.b16 %v2968
  %v3216 = vunpack.c.h.b16 %v2968
  %v3217 = vunpack.c.l.b16 %v2969
  %v3218 = vunpack.c.h.b16 %v2969
  %v3219 = vunpack.c.l.b16 %v2970
  %v3220 = vunpack.c.h.b16 %v2970
  %v3221 = vunpack.c.l.b16 %v2971
  %v3222 = vunpack.c.h.b16 %v2971
  %v3223 = vunpack.c.l.b16 %v2972
  %v3224 = vunpack.c.h.b16 %v2972
  %v3225 = vunpack.c.l.b16 %v2973
  %v3226 = vunpack.c.h.b16 %v2973
  %v3227 = vunpack.c.l.b16 %v2974
  %v3228 = vunpack.c.h.b16 %v2974
  %v3229 = vunpack.c.l.b16 %v2975
  %v3230 = vunpack.c.h.b16 %v2975
  %v3231 = vunpack.c.l.b16 %v2976
  %v3232 = vunpack.c.h.b16 %v2976
  %v3233 = vunpack.c.l.b16 %v2977
  %v3234 = vunpack.c.h.b16 %v2977
  %v3235 = vunpack.c.l.b16 %v2978
  %v3236 = vunpack.c.h.b16 %v2978
  %v3237 = vunpack.c.l.b16 %v2979
  %v3238 = vunpack.c.h.b16 %v2979
  %v3239 = vunpack.c.l.b16 %v2980
  %v3240 = vunpack.c.h.b16 %v2980
  %v3241 = vunpack.c.l.b16 %v2981
  %v3242 = vunpack.c.h.b16 %v2981
  %v3243 = vunpack.c.l.b16 %v2982
  %v3244 = vunpack.c.h.b16 %v2982
  %v3245 = vunpack.c.l.b16 %v2983
  %v3246 = vunpack.c.h.b16 %v2983
  %v3247 = vunpack.c.l.b16 %v2984
  %v3248 = vunpack.c.h.b16 %v2984
  %v3249 = vunpack.c.l.b16 %v2985
  %v3250 = vunpack.c.h.b16 %v2985
  %v3251 = vunpack.c.l.b16 %v2986
  %v3252 = vunpack.c.h.b16 %v2986
  %v3253 = vunpack.c.l.b16 %v2987
  %v3254 = vunpack.c.h.b16 %v2987
  %v3255 = vunpack.c.l.b16 %v2988
  %v3256 = vunpack.c.h.b16 %v2988
  %v3257 = vunpack.c.l.b16 %v2989
  %v3258 = vunpack.c.h.b16 %v2989
  %v3259 = vunpack.c.l.b16 %v2990
  %v3260 = vunpack.c.h.b16 %v2990
  %v3261 = vunpack.c.l.b16 %v2991
  %v3262 = vunpack.c.h.b16 %v2991
  %v3263 = vunpack.c.l.b16 %v2992
  %v3264 = vunpack.c.h.b16 %v2992
  %v3265 = vunpack.c.l.b16 %v2993
  %v3266 = vunpack.c.h.b16 %v2993
  %v3267 = vunpack.c.l.b16 %v2994
  %v3268 = vunpack.c.h.b16 %v2994
  %v3269 = vunpack.c.l.b16 %v2995
  %v3270 = vunpack.c.h.b16 %v2995
  %v3271 = vunpack.c.l.b16 %v2996
  %v3272 = vunpack.c.h.b16 %v2996
  %v3273 = vunpack.c.l.b16 %v2997
  %v3274 = vunpack.c.h.b16 %v2997
  %v3275 = vunpack.c.l.b16 %v2998
  %v3276 = vunpack.c.h.b16 %v2998
  %v3277 = vunpack.c.l.b16 %v2999
  %v3278 = vunpack.c.h.b16 %v2999
  %v3279 = vunpack.c.l.b16 %v3000
  %v3280 = vunpack.c.h.b16 %v3000
  %v3281 = vunpack.c.l.b16 %v3001
  %v3282 = vunpack.c.h.b16 %v3001
  %v3283 = vunpack.c.l.b16 %v3002
  %v3284 = vunpack.c.h.b16 %v3002
  %v3285 = vunpack.c.l.b16 %v3003
  %v3286 = vunpack.c.h.b16 %v3003
  %v3287 = vunpack.c.l.b16 %v3004
  %v3288 = vunpack.c.h.b16 %v3004
  %v3289 = vunpack.c.l.b16 %v3005
  %v3290 = vunpack.c.h.b16 %v3005
  %v3291 = vunpack.c.l.b16 %v3006
  %v3292 = vunpack.c.h.b16 %v3006
  %v3293 = vunpack.c.l.b16 %v3007
  %v3294 = vunpack.c.h.b16 %v3007
  %v3295 = vunpack.c.l.b16 %v3008
  %v3296 = vunpack.c.h.b16 %v3008
  %v3297 = vunpack.c.l.b16 %v3009
  %v3298 = vunpack.c.h.b16 %v3009
  %v3299 = vunpack.c.l.b16 %v3010
  %v3300 = vunpack.c.h.b16 %v3010
  %v3301 = vunpack.c.l.b16 %v3011
  %v3302 = vunpack.c.h.b16 %v3011
  %v3303 = vunpack.c.l.b16 %v3012
  %v3304 = vunpack.c.h.b16 %v3012
  %v3305 = vunpack.c.l.b16 %v3013
  %v3306 = vunpack.c.h.b16 %v3013
  %v3307 = vunpack.c.l.b16 %v3014
  %v3308 = vunpack.c.h.b16 %v3014
  %v3309 = vpack.c.b16 %v3115, %v3113
  %v3310 = vpack.c.b16 %v3116, %v3114
  %v3311 = vpack.c.b16 %v3119, %v3117
  %v3312 = vpack.c.b16 %v3120, %v3118
  %v3313 = vpack.c.b16 %v3123, %v3121
  %v3314 = vpack.c.b16 %v3124, %v3122
  %v3315 = vpack.c.b16 %v3127, %v3125
  %v3316 = vpack.c.b16 %v3128, %v3126
  %v3317 = vpack.c.b16 %v3131, %v3129
  %v3318 = vpack.c.b16 %v3132, %v3130
  %v3319 = vpack.c.b16 %v3135, %v3133
  %v3320 = vpack.c.b16 %v3136, %v3134
  %v3321 = vpack.c.b16 %v3139, %v3137
  %v3322 = vpack.c.b16 %v3140, %v3138
  %v3323 = vpack.c.b16 %v3143, %v3141
  %v3324 = vpack.c.b16 %v3144, %v3142
  %v3325 = vpack.c.b16 %v3147, %v3145
  %v3326 = vpack.c.b16 %v3148, %v3146
  %v3327 = vpack.c.b16 %v3151, %v3149
  %v3328 = vpack.c.b16 %v3152, %v3150
  %v3329 = vpack.c.b16 %v3155, %v3153
  %v3330 = vpack.c.b16 %v3156, %v3154
  %v3331 = vpack.c.b16 %v3159, %v3157
  %v3332 = vpack.c.b16 %v3160, %v3158
  %v3333 = vpack.c.b16 %v3163, %v3161
  %v3334 = vpack.c.b16 %v3164, %v3162
  %v3335 = vpack.c.b16 %v3167, %v3165
  %v3336 = vpack.c.b16 %v3168, %v3166
  %v3337 = vpack.c.b16 %v3171, %v3169
  %v3338 = vpack.c.b16 %v3172, %v3170
  %v3339 = vpack.c.b16 %v3175, %v3173
  %v3340 = vpack.c.b16 %v3176, %v3174
  %v3341 = vpack.c.b16 %v3179, %v3177
  %v3342 = vpack.c.b16 %v3180, %v3178
  %v3343 = vpack.c.b16 %v3183, %v3181
  %v3344 = vpack.c.b16 %v3184, %v3182
  %v3345 = vpack.c.b16 %v3187, %v3185
  %v3346 = vpack.c.b16 %v3188, %v3186
  %v3347 = vpack.c.b16 %v3191, %v3189
  %v3348 = vpack.c.b16 %v3192, %v3190
  %v3349 = vpack.c.b16 %v3195, %v3193
  %v3350 = vpack.c.b16 %v3196, %v3194
  %v3351 = vpack.c.b16 %v3199, %v3197
  %v3352 = vpack.c.b16 %v3200, %v3198
  %v3353 = vpack.c.b16 %v3203, %v3201
  %v3354 = vpack.c.b16 %v3204, %v3202
  %v3355 = vpack.c.b16 %v3207, %v3205
  %v3356 = vpack.c.b16 %v3208, %v3206
  %v3357 = vpack.c.b16 %v3211, %v3209
  %v3358 = vpack.c.b16 %v3212, %v3210
  %v3359 = vpack.c.b16 %v3215, %v3213
  %v3360 = vpack.c.b16 %v3216, %v3214
  %v3361 = vpack.c.b16 %v3219, %v3217
  %v3362 = vpack.c.b16 %v3220, %v3218
  %v3363 = vpack.c.b16 %v3223, %v3221
  %v3364 = vpack.c.b16 %v3224, %v3222
  %v3365 = vpack.c.b16 %v3227, %v3225
  %v3366 = vpack.c.b16 %v3228, %v3226
  %v3367 = vpack.c.b16 %v3231, %v3229
  %v3368 = vpack.c.b16 %v3232, %v3230
  %v3369 = vpack.c.b16 %v3235, %v3233
  %v3370 = vpack.c.b16 %v3236, %v3234
  %v3371 = vpack.c.b16 %v3239, %v3237
  %v3372 = vpack.c.b16 %v3240, %v3238
  %v3373 = vpack.c.b16 %v3243, %v3241
  %v3374 = vpack.c.b16 %v3244, %v3242
  %v3375 = vpack.c.b16 %v3247, %v3245
  %v3376 = vpack.c.b16 %v3248, %v3246
  %v3377 = vpack.c.b16 %v3251, %v3249
  %v3378 = vpack.c.b16 %v3252, %v3250
  %v3379 = vpack.c.b16 %v3255, %v3253
  %v3380 = vpack.c.b16 %v3256, %v3254
  %v3381 = vpack.c.b16 %v3259, %v3257
  %v3382 = vpack.c.b16 %v3260, %v3258
  %v3383 = vpack.c.b16 %v3263, %v3261
  %v3384 = vpack.c.b16 %v3264, %v3262
  %v3385 = vpack.c.b16 %v3267, %v3265
  %v3386 = vpack.c.b16 %v3268, %v3266
  %v3387 = vpack.c.b16 %v3271, %v3269
  %v3388 = vpack.c.b16 %v3272, %v3270
  %v3389 = vpack.c.b16 %v3275, %v3273
  %v3390 = vpack.c.b16 %v3276, %v3274
  %v3391 = vpack.c.b16 %v3279, %v3277
  %v3392 = vpack.c.b16 %v3280, %v3278
  %v3393 = vpack.c.b16 %v3283, %v3281
  %v3394 = vpack.c.b16 %v3284, %v3282
  %v3395 = vpack.c.b16 %v3287, %v3285
  %v3396 = vpack.c.b16 %v3288, %v3286
  %v3397 = vpack.c.b16 %v3291, %v3289
  %v3398 = vpack.c.b16 %v3292, %v3290
  %v3399 = vpack.c.b16 %v3295, %v3293
  %v3400 = vpack.c.b16 %v3296, %v3294
  %v3401 = vpack.c.b16 %v3299, %v3297
  %v3402 = vpack.c.b16 %v3300, %v3298
  %v3403 = vpack.c.b16 %v3303, %v3301
  %v3404 = vpack.c.b16 %v3304, %v3302
  %v3405 = vpack.c.b16 %v3307, %v3305
  %v3406 = vpack.c.b16 %v3308, %v3306
  %vm3505 = vcmask 130048
  %v3507 = vsel %vm3505, %v2895, 0
  %v3510 = vsel %vm3505, %v2902, 0
  %v3513 = vsel %vm3505, %v2909, 0
  %v3516 = vsel %vm3505, %v2916, 0
  %3518 = vmatprep.subr.bf16.mxu0 %v3324
  %3519 = vmatpush1.bf16.msra.mxu0 %v3323
  %3520 = vmatprep.subr.bf16.mxu0 %v3322
  %3521 = vmatpush1.bf16.msra.mxu0 %v3321
  %3522 = vmatprep.subr.bf16.mxu0 %v3320
  %3523 = vmatpush1.bf16.msra.mxu0 %v3319
  %3524 = vmatprep.subr.bf16.mxu0 %v3318
  %3525 = vmatpush1.bf16.msra.mxu0 %v3317
  %3526 = vmatprep.subr.bf16.mxu0 %v3316
  %3527 = vmatpush1.bf16.msra.mxu0 %v3315
  %3528 = vmatprep.subr.bf16.mxu0 %v3314
  %3529 = vmatpush1.bf16.msra.mxu0 %v3313
  %3530 = vmatprep.subr.bf16.mxu0 %v3312
  %3531 = vmatpush1.bf16.msra.mxu0 %v3311
  %3532 = vmatprep.subr.bf16.mxu0 %v3310
  %3533 = vmatpush1.bf16.msra.mxu0 %v3309
  %3534 = vmatprep.subr.bf16.mxu0 %v3340
  %3535 = vmatpush2.bf16.msra.mxu0 %v3339
  %3536 = vmatprep.subr.bf16.mxu0 %v3338
  %3537 = vmatpush2.bf16.msra.mxu0 %v3337
  %3538 = vmatprep.subr.bf16.mxu0 %v3336
  %3539 = vmatpush2.bf16.msra.mxu0 %v3335
  %3540 = vmatprep.subr.bf16.mxu0 %v3334
  %3541 = vmatpush2.bf16.msra.mxu0 %v3333
  %3542 = vmatprep.subr.bf16.mxu0 %v3332
  %3543 = vmatpush2.bf16.msra.mxu0 %v3331
  %3544 = vmatprep.subr.bf16.mxu0 %v3330
  %3545 = vmatpush2.bf16.msra.mxu0 %v3329
  %3546 = vmatprep.subr.bf16.mxu0 %v3328
  %3547 = vmatpush2.bf16.msra.mxu0 %v3327
  %3548 = vmatprep.subr.bf16.mxu0 %v3326
  %3549 = vmatpush2.bf16.msra.mxu0 %v3325
  %3550 = vmatprep.mubr.bf16.mxu0 %v2890
  %3551 = vmatmul.mubr.bf16.gmra.mxu0 %v2889
  %v3552 = vpop.f32.mrf.mxu0
  %v3553 = vadd.f32 0.0, %v3552
  %v3554 = vpop.f32.mrf.mxu0
  %v3555 = vadd.f32 0.0, %v3554
  %v3556 = vpop.f32.mrf.mxu0
  %v3557 = vadd.f32 0.0, %v3556
  %v3558 = vpop.f32.mrf.mxu0
  %v3559 = vadd.f32 0.0, %v3558
  %3560 = vmatprep.mubr.bf16.mxu0 %v2897
  %3561 = vmatmul.mubr.bf16.gmra.mxu0 %v2896
  %v3562 = vpop.f32.mrf.mxu0
  %v3563 = vadd.f32 0.0, %v3562
  %v3564 = vpop.f32.mrf.mxu0
  %v3565 = vadd.f32 0.0, %v3564
  %v3566 = vpop.f32.mrf.mxu0
  %v3567 = vadd.f32 0.0, %v3566
  %v3568 = vpop.f32.mrf.mxu0
  %v3569 = vadd.f32 0.0, %v3568
  %3570 = vmatprep.mubr.bf16.mxu0 %v2904
  %3571 = vmatmul.mubr.bf16.gmra.mxu0 %v2903
  %v3572 = vpop.f32.mrf.mxu0
  %v3573 = vadd.f32 0.0, %v3572
  %v3574 = vpop.f32.mrf.mxu0
  %v3575 = vadd.f32 0.0, %v3574
  %v3576 = vpop.f32.mrf.mxu0
  %v3577 = vadd.f32 0.0, %v3576
  %v3578 = vpop.f32.mrf.mxu0
  %v3579 = vadd.f32 0.0, %v3578
  %3580 = vmatprep.mubr.bf16.mxu0 %v2911
  %3581 = vmatmul.mubr.bf16.gmra.mxu0 %v2910
  %v3582 = vpop.f32.mrf.mxu0
  %v3583 = vadd.f32 0.0, %v3582
  %v3584 = vpop.f32.mrf.mxu0
  %v3585 = vadd.f32 0.0, %v3584
  %v3586 = vpop.f32.mrf.mxu0
  %v3587 = vadd.f32 0.0, %v3586
  %v3588 = vpop.f32.mrf.mxu0
  %v3589 = vadd.f32 0.0, %v3588
  %3590 = vdwg.mxu0
  %3591 = vmatprep.subr.bf16.mxu0 %v3356
  %3592 = vmatpush1.bf16.msra.mxu0 %v3355
  %3593 = vmatprep.subr.bf16.mxu0 %v3354
  %3594 = vmatpush1.bf16.msra.mxu0 %v3353
  %3595 = vmatprep.subr.bf16.mxu0 %v3352
  %3596 = vmatpush1.bf16.msra.mxu0 %v3351
  %3597 = vmatprep.subr.bf16.mxu0 %v3350
  %3598 = vmatpush1.bf16.msra.mxu0 %v3349
  %3599 = vmatprep.subr.bf16.mxu0 %v3348
  %3600 = vmatpush1.bf16.msra.mxu0 %v3347
  %3601 = vmatprep.subr.bf16.mxu0 %v3346
  %3602 = vmatpush1.bf16.msra.mxu0 %v3345
  %3603 = vmatprep.subr.bf16.mxu0 %v3344
  %3604 = vmatpush1.bf16.msra.mxu0 %v3343
  %3605 = vmatprep.subr.bf16.mxu0 %v3342
  %3606 = vmatpush1.bf16.msra.mxu0 %v3341
  %3607 = vmatprep.subr.bf16.mxu0 %v3372
  %3608 = vmatpush2.bf16.msra.mxu0 %v3371
  %3609 = vmatprep.subr.bf16.mxu0 %v3370
  %3610 = vmatpush2.bf16.msra.mxu0 %v3369
  %3611 = vmatprep.subr.bf16.mxu0 %v3368
  %3612 = vmatpush2.bf16.msra.mxu0 %v3367
  %3613 = vmatprep.subr.bf16.mxu0 %v3366
  %3614 = vmatpush2.bf16.msra.mxu0 %v3365
  %3615 = vmatprep.subr.bf16.mxu0 %v3364
  %3616 = vmatpush2.bf16.msra.mxu0 %v3363
  %3617 = vmatprep.subr.bf16.mxu0 %v3362
  %3618 = vmatpush2.bf16.msra.mxu0 %v3361
  %3619 = vmatprep.subr.bf16.mxu0 %v3360
  %3620 = vmatpush2.bf16.msra.mxu0 %v3359
  %3621 = vmatprep.subr.bf16.mxu0 %v3358
  %3622 = vmatpush2.bf16.msra.mxu0 %v3357
  %3623 = vmatprep.mubr.bf16.mxu0 %v2892
  %3624 = vmatmul.mubr.bf16.gmra.mxu0 %v2891
  %v3625 = vpop.f32.mrf.mxu0
  %v3626 = vadd.f32 %v3553, %v3625
  %v3627 = vpop.f32.mrf.mxu0
  %v3628 = vadd.f32 %v3555, %v3627
  %v3629 = vpop.f32.mrf.mxu0
  %v3630 = vadd.f32 %v3557, %v3629
  %v3631 = vpop.f32.mrf.mxu0
  %v3632 = vadd.f32 %v3559, %v3631
  %3633 = vmatprep.mubr.bf16.mxu0 %v2899
  %3634 = vmatmul.mubr.bf16.gmra.mxu0 %v2898
  %v3635 = vpop.f32.mrf.mxu0
  %v3636 = vadd.f32 %v3563, %v3635
  %v3637 = vpop.f32.mrf.mxu0
  %v3638 = vadd.f32 %v3565, %v3637
  %v3639 = vpop.f32.mrf.mxu0
  %v3640 = vadd.f32 %v3567, %v3639
  %v3641 = vpop.f32.mrf.mxu0
  %v3642 = vadd.f32 %v3569, %v3641
  %3643 = vmatprep.mubr.bf16.mxu0 %v2906
  %3644 = vmatmul.mubr.bf16.gmra.mxu0 %v2905
  %v3645 = vpop.f32.mrf.mxu0
  %v3646 = vadd.f32 %v3573, %v3645
  %v3647 = vpop.f32.mrf.mxu0
  %v3648 = vadd.f32 %v3575, %v3647
  %v3649 = vpop.f32.mrf.mxu0
  %v3650 = vadd.f32 %v3577, %v3649
  %v3651 = vpop.f32.mrf.mxu0
  %v3652 = vadd.f32 %v3579, %v3651
  %3653 = vmatprep.mubr.bf16.mxu0 %v2913
  %3654 = vmatmul.mubr.bf16.gmra.mxu0 %v2912
  %v3655 = vpop.f32.mrf.mxu0
  %v3656 = vadd.f32 %v3583, %v3655
  %v3657 = vpop.f32.mrf.mxu0
  %v3658 = vadd.f32 %v3585, %v3657
  %v3659 = vpop.f32.mrf.mxu0
  %v3660 = vadd.f32 %v3587, %v3659
  %v3661 = vpop.f32.mrf.mxu0
  %v3662 = vadd.f32 %v3589, %v3661
  %3663 = vdwg.mxu0
  %3664 = vmatprep.subr.bf16.mxu0 %v3388
  %3665 = vmatpush1.bf16.msra.mxu0 %v3387
  %3666 = vmatprep.subr.bf16.mxu0 %v3386
  %3667 = vmatpush1.bf16.msra.mxu0 %v3385
  %3668 = vmatprep.subr.bf16.mxu0 %v3384
  %3669 = vmatpush1.bf16.msra.mxu0 %v3383
  %3670 = vmatprep.subr.bf16.mxu0 %v3382
  %3671 = vmatpush1.bf16.msra.mxu0 %v3381
  %3672 = vmatprep.subr.bf16.mxu0 %v3380
  %3673 = vmatpush1.bf16.msra.mxu0 %v3379
  %3674 = vmatprep.subr.bf16.mxu0 %v3378
  %3675 = vmatpush1.bf16.msra.mxu0 %v3377
  %3676 = vmatprep.subr.bf16.mxu0 %v3376
  %3677 = vmatpush1.bf16.msra.mxu0 %v3375
  %3678 = vmatprep.subr.bf16.mxu0 %v3374
  %3679 = vmatpush1.bf16.msra.mxu0 %v3373
  %3680 = vmatprep.subr.bf16.mxu0 %v3404
  %3681 = vmatpush2.bf16.msra.mxu0 %v3403
  %3682 = vmatprep.subr.bf16.mxu0 %v3402
  %3683 = vmatpush2.bf16.msra.mxu0 %v3401
  %3684 = vmatprep.subr.bf16.mxu0 %v3400
  %3685 = vmatpush2.bf16.msra.mxu0 %v3399
  %3686 = vmatprep.subr.bf16.mxu0 %v3398
  %3687 = vmatpush2.bf16.msra.mxu0 %v3397
  %3688 = vmatprep.subr.bf16.mxu0 %v3396
  %3689 = vmatpush2.bf16.msra.mxu0 %v3395
  %3690 = vmatprep.subr.bf16.mxu0 %v3394
  %3691 = vmatpush2.bf16.msra.mxu0 %v3393
  %3692 = vmatprep.subr.bf16.mxu0 %v3392
  %3693 = vmatpush2.bf16.msra.mxu0 %v3391
  %3694 = vmatprep.subr.bf16.mxu0 %v3390
  %3695 = vmatpush2.bf16.msra.mxu0 %v3389
  %3696 = vmatprep.mubr.bf16.mxu0 %v2894
  %3697 = vmatmul.mubr.bf16.gmra.mxu0 %v2893
  %v3698 = vpop.f32.mrf.mxu0
  %v3699 = vadd.f32 %v3626, %v3698
  %v3700 = vpop.f32.mrf.mxu0
  %v3701 = vadd.f32 %v3628, %v3700
  %v3702 = vpop.f32.mrf.mxu0
  %v3703 = vadd.f32 %v3630, %v3702
  %v3704 = vpop.f32.mrf.mxu0
  %v3705 = vadd.f32 %v3632, %v3704
  %3706 = vmatprep.mubr.bf16.mxu0 %v2901
  %3707 = vmatmul.mubr.bf16.gmra.mxu0 %v2900
  %v3708 = vpop.f32.mrf.mxu0
  %v3709 = vadd.f32 %v3636, %v3708
  %v3710 = vpop.f32.mrf.mxu0
  %v3711 = vadd.f32 %v3638, %v3710
  %v3712 = vpop.f32.mrf.mxu0
  %v3713 = vadd.f32 %v3640, %v3712
  %v3714 = vpop.f32.mrf.mxu0
  %v3715 = vadd.f32 %v3642, %v3714
  %3716 = vmatprep.mubr.bf16.mxu0 %v2908
  %3717 = vmatmul.mubr.bf16.gmra.mxu0 %v2907
  %v3718 = vpop.f32.mrf.mxu0
  %v3719 = vadd.f32 %v3646, %v3718
  %v3720 = vpop.f32.mrf.mxu0
  %v3721 = vadd.f32 %v3648, %v3720
  %v3722 = vpop.f32.mrf.mxu0
  %v3723 = vadd.f32 %v3650, %v3722
  %v3724 = vpop.f32.mrf.mxu0
  %v3725 = vadd.f32 %v3652, %v3724
  %3726 = vmatprep.mubr.bf16.mxu0 %v2915
  %3727 = vmatmul.mubr.bf16.gmra.mxu0 %v2914
  %v3728 = vpop.f32.mrf.mxu0
  %v3729 = vadd.f32 %v3656, %v3728
  %v3730 = vpop.f32.mrf.mxu0
  %v3731 = vadd.f32 %v3658, %v3730
  %v3732 = vpop.f32.mrf.mxu0
  %v3733 = vadd.f32 %v3660, %v3732
  %v3734 = vpop.f32.mrf.mxu0
  %v3735 = vadd.f32 %v3662, %v3734
  %3736 = vdwg.mxu0
  %3737 = vmatprep.subr.bf16.mxu0 0
  %3738 = vmatpush1.bf16.msra.mxu0 0
  %3739 = vmatprep.subr.bf16.mxu0 0
  %3740 = vmatpush1.bf16.msra.mxu0 0
  %3741 = vmatprep.subr.bf16.mxu0 0
  %3742 = vmatpush1.bf16.msra.mxu0 0
  %3743 = vmatprep.subr.bf16.mxu0 0
  %3744 = vmatpush1.bf16.msra.mxu0 0
  %3745 = vmatprep.subr.bf16.mxu0 0
  %3746 = vmatpush1.bf16.msra.mxu0 0
  %3747 = vmatprep.subr.bf16.mxu0 0
  %3748 = vmatpush1.bf16.msra.mxu0 0
  %3749 = vmatprep.subr.bf16.mxu0 0
  %3750 = vmatpush1.bf16.msra.mxu0 0
  %3751 = vmatprep.subr.bf16.mxu0 %v3406
  %3752 = vmatpush1.bf16.msra.mxu0 %v3405
  %3753 = vmatprep.subr.bf16.mxu0 0
  %3754 = vmatpush2.bf16.msra.mxu0 0
  %3755 = vmatprep.subr.bf16.mxu0 0
  %3756 = vmatpush2.bf16.msra.mxu0 0
  %3757 = vmatprep.subr.bf16.mxu0 0
  %3758 = vmatpush2.bf16.msra.mxu0 0
  %3759 = vmatprep.subr.bf16.mxu0 0
  %3760 = vmatpush2.bf16.msra.mxu0 0
  %3761 = vmatprep.subr.bf16.mxu0 0
  %3762 = vmatpush2.bf16.msra.mxu0 0
  %3763 = vmatprep.subr.bf16.mxu0 0
  %3764 = vmatpush2.bf16.msra.mxu0 0
  %3765 = vmatprep.subr.bf16.mxu0 0
  %3766 = vmatpush2.bf16.msra.mxu0 0
  %3767 = vmatprep.subr.bf16.mxu0 0
  %3768 = vmatpush2.bf16.msra.mxu0 0
  %3769 = vmatprep.mubr.bf16.mxu0 0
  %3770 = vmatmul.mubr.bf16.gmra.mxu0 %v3507
  %v3771 = vpop.f32.mrf.mxu0
  %v3772 = vadd.f32 %v3699, %v3771
  %v3773 = vpop.f32.mrf.mxu0
  %v3774 = vadd.f32 %v3701, %v3773
  %v3775 = vpop.f32.mrf.mxu0
  %v3776 = vadd.f32 %v3703, %v3775
  %v3777 = vpop.f32.mrf.mxu0
  %v3778 = vadd.f32 %v3705, %v3777
  %3779 = vmatprep.mubr.bf16.mxu0 0
  %3780 = vmatmul.mubr.bf16.gmra.mxu0 %v3510
  %v3781 = vpop.f32.mrf.mxu0
  %v3782 = vadd.f32 %v3709, %v3781
  %v3783 = vpop.f32.mrf.mxu0
  %v3784 = vadd.f32 %v3711, %v3783
  %v3785 = vpop.f32.mrf.mxu0
  %v3786 = vadd.f32 %v3713, %v3785
  %v3787 = vpop.f32.mrf.mxu0
  %v3788 = vadd.f32 %v3715, %v3787
  %3789 = vmatprep.mubr.bf16.mxu0 0
  %3790 = vmatmul.mubr.bf16.gmra.mxu0 %v3513
  %v3791 = vpop.f32.mrf.mxu0
  %v3792 = vadd.f32 %v3719, %v3791
  %v3793 = vpop.f32.mrf.mxu0
  %v3794 = vadd.f32 %v3721, %v3793
  %v3795 = vpop.f32.mrf.mxu0
  %v3796 = vadd.f32 %v3723, %v3795
  %v3797 = vpop.f32.mrf.mxu0
  %v3798 = vadd.f32 %v3725, %v3797
  %3799 = vmatprep.mubr.bf16.mxu0 0
  %3800 = vmatmul.mubr.bf16.gmra.mxu0 %v3516
  %v3801 = vpop.f32.mrf.mxu0
  %v3802 = vadd.f32 %v3729, %v3801
  %v3803 = vpop.f32.mrf.mxu0
  %v3804 = vadd.f32 %v3731, %v3803
  %v3805 = vpop.f32.mrf.mxu0
  %v3806 = vadd.f32 %v3733, %v3805
  %v3807 = vpop.f32.mrf.mxu0
  %v3808 = vadd.f32 %v3735, %v3807
  %3809 = vdwg.mxu0
  %v3810 = vpack.c.bf16 %v3776, %v3772
  %v3811 = vpack.c.bf16 %v3778, %v3774
  %v3812 = vpack.c.bf16 %v3786, %v3782
  %v3813 = vpack.c.bf16 %v3788, %v3784
  %v3814 = vpack.c.bf16 %v3796, %v3792
  %v3815 = vpack.c.bf16 %v3798, %v3794
  %v3816 = vpack.c.bf16 %v3806, %v3802
  %v3817 = vpack.c.bf16 %v3808, %v3804
  %v3818 = vld [vmem:[%s4] sm:$0xff]
  %v3819 = vld [vmem:[%s4 + $0x8] sm:$0xff]
  %v3820 = vld [vmem:[%s4 + $0x10] sm:$0xff]
  %v3821 = vld [vmem:[%s4 + $0x18] sm:$0xff]
  %v3822 = vld [vmem:[%s4 + $0x20] sm:$0xff]
  %v3823 = vld [vmem:[%s4 + $0x28] sm:$0xff]
  %v3824 = vld [vmem:[%s4 + $0x30] sm:$0xff]
  %v3825 = vld [vmem:[%s4 + $0x38] sm:$0xff]
  %v3826 = vld [vmem:[%s4 + $0x40] sm:$0xff]
  %v3827 = vld [vmem:[%s4 + $0x48] sm:$0xff]
  %v3828 = vld [vmem:[%s4 + $0x50] sm:$0xff]
  %v3829 = vld [vmem:[%s4 + $0x58] sm:$0xff]
  %v3830 = vld [vmem:[%s4 + $0x60] sm:$0xf]
  %v3831 = vld [vmem:[%s4 + $0x64] sm:$0xff]
  %v3832 = vld [vmem:[%s4 + $0x6c] sm:$0xff]
  %v3833 = vld [vmem:[%s4 + $0x74] sm:$0xff]
  %v3834 = vld [vmem:[%s4 + $0x7c] sm:$0xff]
  %v3835 = vld [vmem:[%s4 + $0x84] sm:$0xff]
  %v3836 = vld [vmem:[%s4 + $0x8c] sm:$0xff]
  %v3837 = vld [vmem:[%s4 + $0x94] sm:$0xff]
  %v3838 = vld [vmem:[%s4 + $0x9c] sm:$0xff]
  %v3839 = vld [vmem:[%s4 + $0xa4] sm:$0xff]
  %v3840 = vld [vmem:[%s4 + $0xac] sm:$0xff]
  %v3841 = vld [vmem:[%s4 + $0xb4] sm:$0xff]
  %v3842 = vld [vmem:[%s4 + $0xbc] sm:$0xff]
  %v3843 = vld [vmem:[%s4 + $0xc4] sm:$0xf]
  %v3844 = vld [vmem:[%s4 + $0xc8] sm:$0xff]
  %v3845 = vld [vmem:[%s4 + $0xd0] sm:$0xff]
  %v3846 = vld [vmem:[%s4 + $0xd8] sm:$0xff]
  %v3847 = vld [vmem:[%s4 + $0xe0] sm:$0xff]
  %v3848 = vld [vmem:[%s4 + $0xe8] sm:$0xff]
  %v3849 = vld [vmem:[%s4 + $0xf0] sm:$0xff]
  %v3850 = vld [vmem:[%s4 + $0xf8] sm:$0xff]
  %v3851 = vld [vmem:[%s4 + $0x100] sm:$0xff]
  %v3852 = vld [vmem:[%s4 + $0x108] sm:$0xff]
  %v3853 = vld [vmem:[%s4 + $0x110] sm:$0xff]
  %v3854 = vld [vmem:[%s4 + $0x118] sm:$0xff]
  %v3855 = vld [vmem:[%s4 + $0x120] sm:$0xff]
  %v3856 = vld [vmem:[%s4 + $0x128] sm:$0xf]
  %v3857 = vld [vmem:[%s4 + $0x12c] sm:$0xff]
  %v3858 = vld [vmem:[%s4 + $0x134] sm:$0xff]
  %v3859 = vld [vmem:[%s4 + $0x13c] sm:$0xff]
  %v3860 = vld [vmem:[%s4 + $0x144] sm:$0xff]
  %v3861 = vld [vmem:[%s4 + $0x14c] sm:$0xff]
  %v3862 = vld [vmem:[%s4 + $0x154] sm:$0xff]
  %v3863 = vld [vmem:[%s4 + $0x15c] sm:$0xff]
  %v3864 = vld [vmem:[%s4 + $0x164] sm:$0xff]
  %v3865 = vld [vmem:[%s4 + $0x16c] sm:$0xff]
  %v3866 = vld [vmem:[%s4 + $0x174] sm:$0xff]
  %v3867 = vld [vmem:[%s4 + $0x17c] sm:$0xff]
  %v3868 = vld [vmem:[%s4 + $0x184] sm:$0xff]
  %v3869 = vld [vmem:[%s4 + $0x18c] sm:$0xf]
  %v3870 = vld [vmem:[%s4 + $0x190] sm:$0xff]
  %v3871 = vld [vmem:[%s4 + $0x198] sm:$0xff]
  %v3872 = vld [vmem:[%s4 + $0x1a0] sm:$0xff]
  %v3873 = vld [vmem:[%s4 + $0x1a8] sm:$0xff]
  %v3874 = vld [vmem:[%s4 + $0x1b0] sm:$0xff]
  %v3875 = vld [vmem:[%s4 + $0x1b8] sm:$0xff]
  %v3876 = vld [vmem:[%s4 + $0x1c0] sm:$0xff]
  %v3877 = vld [vmem:[%s4 + $0x1c8] sm:$0xff]
  %v3878 = vld [vmem:[%s4 + $0x1d0] sm:$0xff]
  %v3879 = vld [vmem:[%s4 + $0x1d8] sm:$0xff]
  %v3880 = vld [vmem:[%s4 + $0x1e0] sm:$0xff]
  %v3881 = vld [vmem:[%s4 + $0x1e8] sm:$0xff]
  %v3882 = vld [vmem:[%s4 + $0x1f0] sm:$0xf]
  %v3883 = vld [vmem:[%s4 + $0x1f4] sm:$0xff]
  %v3884 = vld [vmem:[%s4 + $0x1fc] sm:$0xff]
  %v3885 = vld [vmem:[%s4 + $0x204] sm:$0xff]
  %v3886 = vld [vmem:[%s4 + $0x20c] sm:$0xff]
  %v3887 = vld [vmem:[%s4 + $0x214] sm:$0xff]
  %v3888 = vld [vmem:[%s4 + $0x21c] sm:$0xff]
  %v3889 = vld [vmem:[%s4 + $0x224] sm:$0xff]
  %v3890 = vld [vmem:[%s4 + $0x22c] sm:$0xff]
  %v3891 = vld [vmem:[%s4 + $0x234] sm:$0xff]
  %v3892 = vld [vmem:[%s4 + $0x23c] sm:$0xff]
  %v3893 = vld [vmem:[%s4 + $0x244] sm:$0xff]
  %v3894 = vld [vmem:[%s4 + $0x24c] sm:$0xff]
  %v3895 = vld [vmem:[%s4 + $0x254] sm:$0xf]
  %v3896 = vld [vmem:[%s4 + $0x258] sm:$0xff]
  %v3897 = vld [vmem:[%s4 + $0x260] sm:$0xff]
  %v3898 = vld [vmem:[%s4 + $0x268] sm:$0xff]
  %v3899 = vld [vmem:[%s4 + $0x270] sm:$0xff]
  %v3900 = vld [vmem:[%s4 + $0x278] sm:$0xff]
  %v3901 = vld [vmem:[%s4 + $0x280] sm:$0xff]
  %v3902 = vld [vmem:[%s4 + $0x288] sm:$0xff]
  %v3903 = vld [vmem:[%s4 + $0x290] sm:$0xff]
  %v3904 = vld [vmem:[%s4 + $0x298] sm:$0xff]
  %v3905 = vld [vmem:[%s4 + $0x2a0] sm:$0xff]
  %v3906 = vld [vmem:[%s4 + $0x2a8] sm:$0xff]
  %v3907 = vld [vmem:[%s4 + $0x2b0] sm:$0xff]
  %v3908 = vld [vmem:[%s4 + $0x2b8] sm:$0xf]
  %v3909 = vld [vmem:[%s4 + $0x2bc] sm:$0xff]
  %v3910 = vld [vmem:[%s4 + $0x2c4] sm:$0xff]
  %v3911 = vld [vmem:[%s4 + $0x2cc] sm:$0xff]
  %v3912 = vld [vmem:[%s4 + $0x2d4] sm:$0xff]
  %v3913 = vld [vmem:[%s4 + $0x2dc] sm:$0xff]
  %v3914 = vld [vmem:[%s4 + $0x2e4] sm:$0xff]
  %v3915 = vld [vmem:[%s4 + $0x2ec] sm:$0xff]
  %v3916 = vld [vmem:[%s4 + $0x2f4] sm:$0xff]
  %v3917 = vld [vmem:[%s4 + $0x2fc] sm:$0xff]
  %v3918 = vld [vmem:[%s4 + $0x304] sm:$0xff]
  %v3919 = vld [vmem:[%s4 + $0x30c] sm:$0xff]
  %v3920 = vld [vmem:[%s4 + $0x314] sm:$0xff]
  %v3921 = vld [vmem:[%s4 + $0x31c] sm:$0xf]
  %v3922 = vld [vmem:[%s4 + $0x320] sm:$0xff]
  %v3923 = vld [vmem:[%s4 + $0x328] sm:$0xff]
  %v3924 = vld [vmem:[%s4 + $0x330] sm:$0xff]
  %v3925 = vld [vmem:[%s4 + $0x338] sm:$0xff]
  %v3926 = vld [vmem:[%s4 + $0x340] sm:$0xff]
  %v3927 = vld [vmem:[%s4 + $0x348] sm:$0xff]
  %v3928 = vld [vmem:[%s4 + $0x350] sm:$0xff]
  %v3929 = vld [vmem:[%s4 + $0x358] sm:$0xff]
  %v3930 = vld [vmem:[%s4 + $0x360] sm:$0xff]
  %v3931 = vld [vmem:[%s4 + $0x368] sm:$0xff]
  %v3932 = vld [vmem:[%s4 + $0x370] sm:$0xff]
  %v3933 = vld [vmem:[%s4 + $0x378] sm:$0xff]
  %v3934 = vld [vmem:[%s4 + $0x380] sm:$0xf]
  %v3935 = vld [vmem:[%s4 + $0x384] sm:$0xff]
  %v3936 = vld [vmem:[%s4 + $0x38c] sm:$0xff]
  %v3937 = vld [vmem:[%s4 + $0x394] sm:$0xff]
  %v3938 = vld [vmem:[%s4 + $0x39c] sm:$0xff]
  %v3939 = vld [vmem:[%s4 + $0x3a4] sm:$0xff]
  %v3940 = vld [vmem:[%s4 + $0x3ac] sm:$0xff]
  %v3941 = vld [vmem:[%s4 + $0x3b4] sm:$0xff]
  %v3942 = vld [vmem:[%s4 + $0x3bc] sm:$0xff]
  %v3943 = vld [vmem:[%s4 + $0x3c4] sm:$0xff]
  %v3944 = vld [vmem:[%s4 + $0x3cc] sm:$0xff]
  %v3945 = vld [vmem:[%s4 + $0x3d4] sm:$0xff]
  %v3946 = vld [vmem:[%s4 + $0x3dc] sm:$0xff]
  %v3947 = vld [vmem:[%s4 + $0x3e4] sm:$0xf]
  %v3948 = vld [vmem:[%s4 + $0x3e8] sm:$0xff]
  %v3949 = vld [vmem:[%s4 + $0x3f0] sm:$0xff]
  %v3950 = vld [vmem:[%s4 + $0x3f8] sm:$0xff]
  %v3951 = vld [vmem:[%s4 + $0x400] sm:$0xff]
  %v3952 = vld [vmem:[%s4 + $0x408] sm:$0xff]
  %v3953 = vld [vmem:[%s4 + $0x410] sm:$0xff]
  %v3954 = vld [vmem:[%s4 + $0x418] sm:$0xff]
  %v3955 = vld [vmem:[%s4 + $0x420] sm:$0xff]
  %v3956 = vld [vmem:[%s4 + $0x428] sm:$0xff]
  %v3957 = vld [vmem:[%s4 + $0x430] sm:$0xff]
  %v3958 = vld [vmem:[%s4 + $0x438] sm:$0xff]
  %v3959 = vld [vmem:[%s4 + $0x440] sm:$0xff]
  %v3960 = vld [vmem:[%s4 + $0x448] sm:$0xf]
  %v3961 = vld [vmem:[%s4 + $0x44c] sm:$0xff]
  %v3962 = vld [vmem:[%s4 + $0x454] sm:$0xff]
  %v3963 = vld [vmem:[%s4 + $0x45c] sm:$0xff]
  %v3964 = vld [vmem:[%s4 + $0x464] sm:$0xff]
  %v3965 = vld [vmem:[%s4 + $0x46c] sm:$0xff]
  %v3966 = vld [vmem:[%s4 + $0x474] sm:$0xff]
  %v3967 = vld [vmem:[%s4 + $0x47c] sm:$0xff]
  %v3968 = vld [vmem:[%s4 + $0x484] sm:$0xff]
  %v3969 = vld [vmem:[%s4 + $0x48c] sm:$0xff]
  %v3970 = vld [vmem:[%s4 + $0x494] sm:$0xff]
  %v3971 = vld [vmem:[%s4 + $0x49c] sm:$0xff]
  %v3972 = vld [vmem:[%s4 + $0x4a4] sm:$0xff]
  %v3973 = vld [vmem:[%s4 + $0x4ac] sm:$0xf]
  %v3974 = vld [vmem:[%s4 + $0x4b0] sm:$0xff]
  %v3975 = vld [vmem:[%s4 + $0x4b8] sm:$0xff]
  %v3976 = vld [vmem:[%s4 + $0x4c0] sm:$0xff]
  %v3977 = vld [vmem:[%s4 + $0x4c8] sm:$0xff]
  %v3978 = vld [vmem:[%s4 + $0x4d0] sm:$0xff]
  %v3979 = vld [vmem:[%s4 + $0x4d8] sm:$0xff]
  %v3980 = vld [vmem:[%s4 + $0x4e0] sm:$0xff]
  %v3981 = vld [vmem:[%s4 + $0x4e8] sm:$0xff]
  %v3982 = vld [vmem:[%s4 + $0x4f0] sm:$0xff]
  %v3983 = vld [vmem:[%s4 + $0x4f8] sm:$0xff]
  %v3984 = vld [vmem:[%s4 + $0x500] sm:$0xff]
  %v3985 = vld [vmem:[%s4 + $0x508] sm:$0xff]
  %v3986 = vld [vmem:[%s4 + $0x510] sm:$0xf]
  %v3987 = vld [vmem:[%s4 + $0x514] sm:$0xff]
  %v3988 = vld [vmem:[%s4 + $0x51c] sm:$0xff]
  %v3989 = vld [vmem:[%s4 + $0x524] sm:$0xff]
  %v3990 = vld [vmem:[%s4 + $0x52c] sm:$0xff]
  %v3991 = vld [vmem:[%s4 + $0x534] sm:$0xff]
  %v3992 = vld [vmem:[%s4 + $0x53c] sm:$0xff]
  %v3993 = vld [vmem:[%s4 + $0x544] sm:$0xff]
  %v3994 = vld [vmem:[%s4 + $0x54c] sm:$0xff]
  %v3995 = vld [vmem:[%s4 + $0x554] sm:$0xff]
  %v3996 = vld [vmem:[%s4 + $0x55c] sm:$0xff]
  %v3997 = vld [vmem:[%s4 + $0x564] sm:$0xff]
  %v3998 = vld [vmem:[%s4 + $0x56c] sm:$0xff]
  %v3999 = vld [vmem:[%s4 + $0x574] sm:$0xf]
  %v4000 = vld [vmem:[%s4 + $0x578] sm:$0xff]
  %v4001 = vld [vmem:[%s4 + $0x580] sm:$0xff]
  %v4002 = vld [vmem:[%s4 + $0x588] sm:$0xff]
  %v4003 = vld [vmem:[%s4 + $0x590] sm:$0xff]
  %v4004 = vld [vmem:[%s4 + $0x598] sm:$0xff]
  %v4005 = vld [vmem:[%s4 + $0x5a0] sm:$0xff]
  %v4006 = vld [vmem:[%s4 + $0x5a8] sm:$0xff]
  %v4007 = vld [vmem:[%s4 + $0x5b0] sm:$0xff]
  %v4008 = vld [vmem:[%s4 + $0x5b8] sm:$0xff]
  %v4009 = vld [vmem:[%s4 + $0x5c0] sm:$0xff]
  %v4010 = vld [vmem:[%s4 + $0x5c8] sm:$0xff]
  %v4011 = vld [vmem:[%s4 + $0x5d0] sm:$0xff]
  %v4012 = vld [vmem:[%s4 + $0x5d8] sm:$0xf]
  %v4013 = vld [vmem:[%s4 + $0x5dc] sm:$0xff]
  %v4014 = vld [vmem:[%s4 + $0x5e4] sm:$0xff]
  %v4015 = vld [vmem:[%s4 + $0x5ec] sm:$0xff]
  %v4016 = vld [vmem:[%s4 + $0x5f4] sm:$0xff]
  %v4017 = vld [vmem:[%s4 + $0x5fc] sm:$0xff]
  %v4018 = vld [vmem:[%s4 + $0x604] sm:$0xff]
  %v4019 = vld [vmem:[%s4 + $0x60c] sm:$0xff]
  %v4020 = vld [vmem:[%s4 + $0x614] sm:$0xff]
  %v4021 = vld [vmem:[%s4 + $0x61c] sm:$0xff]
  %v4022 = vld [vmem:[%s4 + $0x624] sm:$0xff]
  %v4023 = vld [vmem:[%s4 + $0x62c] sm:$0xff]
  %v4024 = vld [vmem:[%s4 + $0x634] sm:$0xff]
  %v4025 = vld [vmem:[%s4 + $0x63c] sm:$0xf]
  %v4026 = vld [vmem:[%s4 + $0x640] sm:$0xff]
  %v4027 = vld [vmem:[%s4 + $0x648] sm:$0xff]
  %v4028 = vld [vmem:[%s4 + $0x650] sm:$0xff]
  %v4029 = vld [vmem:[%s4 + $0x658] sm:$0xff]
  %v4030 = vld [vmem:[%s4 + $0x660] sm:$0xff]
  %v4031 = vld [vmem:[%s4 + $0x668] sm:$0xff]
  %v4032 = vld [vmem:[%s4 + $0x670] sm:$0xff]
  %v4033 = vld [vmem:[%s4 + $0x678] sm:$0xff]
  %v4034 = vld [vmem:[%s4 + $0x680] sm:$0xff]
  %v4035 = vld [vmem:[%s4 + $0x688] sm:$0xff]
  %v4036 = vld [vmem:[%s4 + $0x690] sm:$0xff]
  %v4037 = vld [vmem:[%s4 + $0x698] sm:$0xff]
  %v4038 = vld [vmem:[%s4 + $0x6a0] sm:$0xf]
  %v4039 = vld [vmem:[%s4 + $0x6a4] sm:$0xff]
  %v4040 = vld [vmem:[%s4 + $0x6ac] sm:$0xff]
  %v4041 = vld [vmem:[%s4 + $0x6b4] sm:$0xff]
  %v4042 = vld [vmem:[%s4 + $0x6bc] sm:$0xff]
  %v4043 = vld [vmem:[%s4 + $0x6c4] sm:$0xff]
  %v4044 = vld [vmem:[%s4 + $0x6cc] sm:$0xff]
  %v4045 = vld [vmem:[%s4 + $0x6d4] sm:$0xff]
  %v4046 = vld [vmem:[%s4 + $0x6dc] sm:$0xff]
  %v4047 = vld [vmem:[%s4 + $0x6e4] sm:$0xff]
  %v4048 = vld [vmem:[%s4 + $0x6ec] sm:$0xff]
  %v4049 = vld [vmem:[%s4 + $0x6f4] sm:$0xff]
  %v4050 = vld [vmem:[%s4 + $0x6fc] sm:$0xff]
  %v4051 = vld [vmem:[%s4 + $0x704] sm:$0xf]
  %v4052 = vld [vmem:[%s4 + $0x708] sm:$0xff]
  %v4053 = vld [vmem:[%s4 + $0x710] sm:$0xff]
  %v4054 = vld [vmem:[%s4 + $0x718] sm:$0xff]
  %v4055 = vld [vmem:[%s4 + $0x720] sm:$0xff]
  %v4056 = vld [vmem:[%s4 + $0x728] sm:$0xff]
  %v4057 = vld [vmem:[%s4 + $0x730] sm:$0xff]
  %v4058 = vld [vmem:[%s4 + $0x738] sm:$0xff]
  %v4059 = vld [vmem:[%s4 + $0x740] sm:$0xff]
  %v4060 = vld [vmem:[%s4 + $0x748] sm:$0xff]
  %v4061 = vld [vmem:[%s4 + $0x750] sm:$0xff]
  %v4062 = vld [vmem:[%s4 + $0x758] sm:$0xff]
  %v4063 = vld [vmem:[%s4 + $0x760] sm:$0xff]
  %v4064 = vld [vmem:[%s4 + $0x768] sm:$0xf]
  %v4065 = vld [vmem:[%s4 + $0x76c] sm:$0xff]
  %v4066 = vld [vmem:[%s4 + $0x774] sm:$0xff]
  %v4067 = vld [vmem:[%s4 + $0x77c] sm:$0xff]
  %v4068 = vld [vmem:[%s4 + $0x784] sm:$0xff]
  %v4069 = vld [vmem:[%s4 + $0x78c] sm:$0xff]
  %v4070 = vld [vmem:[%s4 + $0x794] sm:$0xff]
  %v4071 = vld [vmem:[%s4 + $0x79c] sm:$0xff]
  %v4072 = vld [vmem:[%s4 + $0x7a4] sm:$0xff]
  %v4073 = vld [vmem:[%s4 + $0x7ac] sm:$0xff]
  %v4074 = vld [vmem:[%s4 + $0x7b4] sm:$0xff]
  %v4075 = vld [vmem:[%s4 + $0x7bc] sm:$0xff]
  %v4076 = vld [vmem:[%s4 + $0x7c4] sm:$0xff]
  %v4077 = vld [vmem:[%s4 + $0x7cc] sm:$0xf]
  %v4078 = vld [vmem:[%s4 + $0x7d0] sm:$0xff]
  %v4079 = vld [vmem:[%s4 + $0x7d8] sm:$0xff]
  %v4080 = vld [vmem:[%s4 + $0x7e0] sm:$0xff]
  %v4081 = vld [vmem:[%s4 + $0x7e8] sm:$0xff]
  %v4082 = vld [vmem:[%s4 + $0x7f0] sm:$0xff]
  %v4083 = vld [vmem:[%s4 + $0x7f8] sm:$0xff]
  %v4084 = vld [vmem:[%s4 + $0x800] sm:$0xff]
  %v4085 = vld [vmem:[%s4 + $0x808] sm:$0xff]
  %v4086 = vld [vmem:[%s4 + $0x810] sm:$0xff]
  %v4087 = vld [vmem:[%s4 + $0x818] sm:$0xff]
  %v4088 = vld [vmem:[%s4 + $0x820] sm:$0xff]
  %v4089 = vld [vmem:[%s4 + $0x828] sm:$0xff]
  %v4090 = vld [vmem:[%s4 + $0x830] sm:$0xf]
  %v4091 = vld [vmem:[%s4 + $0x834] sm:$0xff]
  %v4092 = vld [vmem:[%s4 + $0x83c] sm:$0xff]
  %v4093 = vld [vmem:[%s4 + $0x844] sm:$0xff]
  %v4094 = vld [vmem:[%s4 + $0x84c] sm:$0xff]
  %v4095 = vld [vmem:[%s4 + $0x854] sm:$0xff]
  %v4096 = vld [vmem:[%s4 + $0x85c] sm:$0xff]
  %v4097 = vld [vmem:[%s4 + $0x864] sm:$0xff]
  %v4098 = vld [vmem:[%s4 + $0x86c] sm:$0xff]
  %v4099 = vld [vmem:[%s4 + $0x874] sm:$0xff]
  %v4100 = vld [vmem:[%s4 + $0x87c] sm:$0xff]
  %v4101 = vld [vmem:[%s4 + $0x884] sm:$0xff]
  %v4102 = vld [vmem:[%s4 + $0x88c] sm:$0xff]
  %v4103 = vld [vmem:[%s4 + $0x894] sm:$0xf]
  %v4104 = vld [vmem:[%s4 + $0x898] sm:$0xff]
  %v4105 = vld [vmem:[%s4 + $0x8a0] sm:$0xff]
  %v4106 = vld [vmem:[%s4 + $0x8a8] sm:$0xff]
  %v4107 = vld [vmem:[%s4 + $0x8b0] sm:$0xff]
  %v4108 = vld [vmem:[%s4 + $0x8b8] sm:$0xff]
  %v4109 = vld [vmem:[%s4 + $0x8c0] sm:$0xff]
  %v4110 = vld [vmem:[%s4 + $0x8c8] sm:$0xff]
  %v4111 = vld [vmem:[%s4 + $0x8d0] sm:$0xff]
  %v4112 = vld [vmem:[%s4 + $0x8d8] sm:$0xff]
  %v4113 = vld [vmem:[%s4 + $0x8e0] sm:$0xff]
  %v4114 = vld [vmem:[%s4 + $0x8e8] sm:$0xff]
  %v4115 = vld [vmem:[%s4 + $0x8f0] sm:$0xff]
  %v4116 = vld [vmem:[%s4 + $0x8f8] sm:$0xf]
  %v4117 = vld [vmem:[%s4 + $0x8fc] sm:$0xff]
  %v4118 = vld [vmem:[%s4 + $0x904] sm:$0xff]
  %v4119 = vld [vmem:[%s4 + $0x90c] sm:$0xff]
  %v4120 = vld [vmem:[%s4 + $0x914] sm:$0xff]
  %v4121 = vld [vmem:[%s4 + $0x91c] sm:$0xff]
  %v4122 = vld [vmem:[%s4 + $0x924] sm:$0xff]
  %v4123 = vld [vmem:[%s4 + $0x92c] sm:$0xff]
  %v4124 = vld [vmem:[%s4 + $0x934] sm:$0xff]
  %v4125 = vld [vmem:[%s4 + $0x93c] sm:$0xff]
  %v4126 = vld [vmem:[%s4 + $0x944] sm:$0xff]
  %v4127 = vld [vmem:[%s4 + $0x94c] sm:$0xff]
  %v4128 = vld [vmem:[%s4 + $0x954] sm:$0xff]
  %v4129 = vld [vmem:[%s4 + $0x95c] sm:$0xf]
  %v4130 = vld [vmem:[%s4 + $0x960] sm:$0x33]
  %v4131 = vld [vmem:[%s4 + $0x968] sm:$0x33]
  %v4132 = vld [vmem:[%s4 + $0x970] sm:$0x33]
  %v4133 = vld [vmem:[%s4 + $0x978] sm:$0x33]
  %v4134 = vld [vmem:[%s4 + $0x980] sm:$0x33]
  %v4135 = vld [vmem:[%s4 + $0x988] sm:$0x33]
  %v4136 = vld [vmem:[%s4 + $0x990] sm:$0x33]
  %v4137 = vld [vmem:[%s4 + $0x998] sm:$0x33]
  %v4138 = vld [vmem:[%s4 + $0x9a0] sm:$0x33]
  %v4139 = vld [vmem:[%s4 + $0x9a8] sm:$0x33]
  %v4140 = vld [vmem:[%s4 + $0x9b0] sm:$0x33]
  %v4141 = vld [vmem:[%s4 + $0x9b8] sm:$0x33]
  %v4142 = vld [vmem:[%s4 + $0x9c0] sm:$0x3]
  %v4468 = vunpack.c.l.b16 %v3818
  %v4469 = vunpack.c.h.b16 %v3818
  %v4470 = vunpack.c.l.b16 %v3819
  %v4471 = vunpack.c.h.b16 %v3819
  %v4472 = vunpack.c.l.b16 %v3820
  %v4473 = vunpack.c.h.b16 %v3820
  %v4474 = vunpack.c.l.b16 %v3821
  %v4475 = vunpack.c.h.b16 %v3821
  %v4476 = vunpack.c.l.b16 %v3822
  %v4477 = vunpack.c.h.b16 %v3822
  %v4478 = vunpack.c.l.b16 %v3823
  %v4479 = vunpack.c.h.b16 %v3823
  %v4480 = vunpack.c.l.b16 %v3824
  %v4481 = vunpack.c.h.b16 %v3824
  %v4482 = vunpack.c.l.b16 %v3825
  %v4483 = vunpack.c.h.b16 %v3825
  %v4484 = vunpack.c.l.b16 %v3826
  %v4485 = vunpack.c.h.b16 %v3826
  %v4486 = vunpack.c.l.b16 %v3827
  %v4487 = vunpack.c.h.b16 %v3827
  %v4488 = vunpack.c.l.b16 %v3828
  %v4489 = vunpack.c.h.b16 %v3828
  %v4490 = vunpack.c.l.b16 %v3829
  %v4491 = vunpack.c.h.b16 %v3829
  %v4492 = vunpack.c.l.b16 %v3830
  %v4493 = vunpack.c.l.b16 %v3831
  %v4494 = vunpack.c.h.b16 %v3831
  %v4495 = vunpack.c.l.b16 %v3832
  %v4496 = vunpack.c.h.b16 %v3832
  %v4497 = vunpack.c.l.b16 %v3833
  %v4498 = vunpack.c.h.b16 %v3833
  %v4499 = vunpack.c.l.b16 %v3834
  %v4500 = vunpack.c.h.b16 %v3834
  %v4501 = vunpack.c.l.b16 %v3835
  %v4502 = vunpack.c.h.b16 %v3835
  %v4503 = vunpack.c.l.b16 %v3836
  %v4504 = vunpack.c.h.b16 %v3836
  %v4505 = vunpack.c.l.b16 %v3837
  %v4506 = vunpack.c.h.b16 %v3837
  %v4507 = vunpack.c.l.b16 %v3838
  %v4508 = vunpack.c.h.b16 %v3838
  %v4509 = vunpack.c.l.b16 %v3839
  %v4510 = vunpack.c.h.b16 %v3839
  %v4511 = vunpack.c.l.b16 %v3840
  %v4512 = vunpack.c.h.b16 %v3840
  %v4513 = vunpack.c.l.b16 %v3841
  %v4514 = vunpack.c.h.b16 %v3841
  %v4515 = vunpack.c.l.b16 %v3842
  %v4516 = vunpack.c.h.b16 %v3842
  %v4517 = vunpack.c.l.b16 %v3843
  %v4518 = vunpack.c.l.b16 %v3844
  %v4519 = vunpack.c.h.b16 %v3844
  %v4520 = vunpack.c.l.b16 %v3845
  %v4521 = vunpack.c.h.b16 %v3845
  %v4522 = vunpack.c.l.b16 %v3846
  %v4523 = vunpack.c.h.b16 %v3846
  %v4524 = vunpack.c.l.b16 %v3847
  %v4525 = vunpack.c.h.b16 %v3847
  %v4526 = vunpack.c.l.b16 %v3848
  %v4527 = vunpack.c.h.b16 %v3848
  %v4528 = vunpack.c.l.b16 %v3849
  %v4529 = vunpack.c.h.b16 %v3849
  %v4530 = vunpack.c.l.b16 %v3850
  %v4531 = vunpack.c.h.b16 %v3850
  %v4532 = vunpack.c.l.b16 %v3851
  %v4533 = vunpack.c.h.b16 %v3851
  %v4534 = vunpack.c.l.b16 %v3852
  %v4535 = vunpack.c.h.b16 %v3852
  %v4536 = vunpack.c.l.b16 %v3853
  %v4537 = vunpack.c.h.b16 %v3853
  %v4538 = vunpack.c.l.b16 %v3854
  %v4539 = vunpack.c.h.b16 %v3854
  %v4540 = vunpack.c.l.b16 %v3855
  %v4541 = vunpack.c.h.b16 %v3855
  %v4542 = vunpack.c.l.b16 %v3856
  %v4543 = vunpack.c.l.b16 %v3857
  %v4544 = vunpack.c.h.b16 %v3857
  %v4545 = vunpack.c.l.b16 %v3858
  %v4546 = vunpack.c.h.b16 %v3858
  %v4547 = vunpack.c.l.b16 %v3859
  %v4548 = vunpack.c.h.b16 %v3859
  %v4549 = vunpack.c.l.b16 %v3860
  %v4550 = vunpack.c.h.b16 %v3860
  %v4551 = vunpack.c.l.b16 %v3861
  %v4552 = vunpack.c.h.b16 %v3861
  %v4553 = vunpack.c.l.b16 %v3862
  %v4554 = vunpack.c.h.b16 %v3862
  %v4555 = vunpack.c.l.b16 %v3863
  %v4556 = vunpack.c.h.b16 %v3863
  %v4557 = vunpack.c.l.b16 %v3864
  %v4558 = vunpack.c.h.b16 %v3864
  %v4559 = vunpack.c.l.b16 %v3865
  %v4560 = vunpack.c.h.b16 %v3865
  %v4561 = vunpack.c.l.b16 %v3866
  %v4562 = vunpack.c.h.b16 %v3866
  %v4563 = vunpack.c.l.b16 %v3867
  %v4564 = vunpack.c.h.b16 %v3867
  %v4565 = vunpack.c.l.b16 %v3868
  %v4566 = vunpack.c.h.b16 %v3868
  %v4567 = vunpack.c.l.b16 %v3869
  %v4568 = vunpack.c.l.b16 %v3870
  %v4569 = vunpack.c.h.b16 %v3870
  %v4570 = vunpack.c.l.b16 %v3871
  %v4571 = vunpack.c.h.b16 %v3871
  %v4572 = vunpack.c.l.b16 %v3872
  %v4573 = vunpack.c.h.b16 %v3872
  %v4574 = vunpack.c.l.b16 %v3873
  %v4575 = vunpack.c.h.b16 %v3873
  %v4576 = vunpack.c.l.b16 %v3874
  %v4577 = vunpack.c.h.b16 %v3874
  %v4578 = vunpack.c.l.b16 %v3875
  %v4579 = vunpack.c.h.b16 %v3875
  %v4580 = vunpack.c.l.b16 %v3876
  %v4581 = vunpack.c.h.b16 %v3876
  %v4582 = vunpack.c.l.b16 %v3877
  %v4583 = vunpack.c.h.b16 %v3877
  %v4584 = vunpack.c.l.b16 %v3878
  %v4585 = vunpack.c.h.b16 %v3878
  %v4586 = vunpack.c.l.b16 %v3879
  %v4587 = vunpack.c.h.b16 %v3879
  %v4588 = vunpack.c.l.b16 %v3880
  %v4589 = vunpack.c.h.b16 %v3880
  %v4590 = vunpack.c.l.b16 %v3881
  %v4591 = vunpack.c.h.b16 %v3881
  %v4592 = vunpack.c.l.b16 %v3882
  %v4593 = vunpack.c.l.b16 %v3883
  %v4594 = vunpack.c.h.b16 %v3883
  %v4595 = vunpack.c.l.b16 %v3884
  %v4596 = vunpack.c.h.b16 %v3884
  %v4597 = vunpack.c.l.b16 %v3885
  %v4598 = vunpack.c.h.b16 %v3885
  %v4599 = vunpack.c.l.b16 %v3886
  %v4600 = vunpack.c.h.b16 %v3886
  %v4601 = vunpack.c.l.b16 %v3887
  %v4602 = vunpack.c.h.b16 %v3887
  %v4603 = vunpack.c.l.b16 %v3888
  %v4604 = vunpack.c.h.b16 %v3888
  %v4605 = vunpack.c.l.b16 %v3889
  %v4606 = vunpack.c.h.b16 %v3889
  %v4607 = vunpack.c.l.b16 %v3890
  %v4608 = vunpack.c.h.b16 %v3890
  %v4609 = vunpack.c.l.b16 %v3891
  %v4610 = vunpack.c.h.b16 %v3891
  %v4611 = vunpack.c.l.b16 %v3892
  %v4612 = vunpack.c.h.b16 %v3892
  %v4613 = vunpack.c.l.b16 %v3893
  %v4614 = vunpack.c.h.b16 %v3893
  %v4615 = vunpack.c.l.b16 %v3894
  %v4616 = vunpack.c.h.b16 %v3894
  %v4617 = vunpack.c.l.b16 %v3895
  %v4618 = vunpack.c.l.b16 %v3896
  %v4619 = vunpack.c.h.b16 %v3896
  %v4620 = vunpack.c.l.b16 %v3897
  %v4621 = vunpack.c.h.b16 %v3897
  %v4622 = vunpack.c.l.b16 %v3898
  %v4623 = vunpack.c.h.b16 %v3898
  %v4624 = vunpack.c.l.b16 %v3899
  %v4625 = vunpack.c.h.b16 %v3899
  %v4626 = vunpack.c.l.b16 %v3900
  %v4627 = vunpack.c.h.b16 %v3900
  %v4628 = vunpack.c.l.b16 %v3901
  %v4629 = vunpack.c.h.b16 %v3901
  %v4630 = vunpack.c.l.b16 %v3902
  %v4631 = vunpack.c.h.b16 %v3902
  %v4632 = vunpack.c.l.b16 %v3903
  %v4633 = vunpack.c.h.b16 %v3903
  %v4634 = vunpack.c.l.b16 %v3904
  %v4635 = vunpack.c.h.b16 %v3904
  %v4636 = vunpack.c.l.b16 %v3905
  %v4637 = vunpack.c.h.b16 %v3905
  %v4638 = vunpack.c.l.b16 %v3906
  %v4639 = vunpack.c.h.b16 %v3906
  %v4640 = vunpack.c.l.b16 %v3907
  %v4641 = vunpack.c.h.b16 %v3907
  %v4642 = vunpack.c.l.b16 %v3908
  %v4643 = vunpack.c.l.b16 %v3909
  %v4644 = vunpack.c.h.b16 %v3909
  %v4645 = vunpack.c.l.b16 %v3910
  %v4646 = vunpack.c.h.b16 %v3910
  %v4647 = vunpack.c.l.b16 %v3911
  %v4648 = vunpack.c.h.b16 %v3911
  %v4649 = vunpack.c.l.b16 %v3912
  %v4650 = vunpack.c.h.b16 %v3912
  %v4651 = vunpack.c.l.b16 %v3913
  %v4652 = vunpack.c.h.b16 %v3913
  %v4653 = vunpack.c.l.b16 %v3914
  %v4654 = vunpack.c.h.b16 %v3914
  %v4655 = vunpack.c.l.b16 %v3915
  %v4656 = vunpack.c.h.b16 %v3915
  %v4657 = vunpack.c.l.b16 %v3916
  %v4658 = vunpack.c.h.b16 %v3916
  %v4659 = vunpack.c.l.b16 %v3917
  %v4660 = vunpack.c.h.b16 %v3917
  %v4661 = vunpack.c.l.b16 %v3918
  %v4662 = vunpack.c.h.b16 %v3918
  %v4663 = vunpack.c.l.b16 %v3919
  %v4664 = vunpack.c.h.b16 %v3919
  %v4665 = vunpack.c.l.b16 %v3920
  %v4666 = vunpack.c.h.b16 %v3920
  %v4667 = vunpack.c.l.b16 %v3921
  %v4668 = vunpack.c.l.b16 %v3922
  %v4669 = vunpack.c.h.b16 %v3922
  %v4670 = vunpack.c.l.b16 %v3923
  %v4671 = vunpack.c.h.b16 %v3923
  %v4672 = vunpack.c.l.b16 %v3924
  %v4673 = vunpack.c.h.b16 %v3924
  %v4674 = vunpack.c.l.b16 %v3925
  %v4675 = vunpack.c.h.b16 %v3925
  %v4676 = vunpack.c.l.b16 %v3926
  %v4677 = vunpack.c.h.b16 %v3926
  %v4678 = vunpack.c.l.b16 %v3927
  %v4679 = vunpack.c.h.b16 %v3927
  %v4680 = vunpack.c.l.b16 %v3928
  %v4681 = vunpack.c.h.b16 %v3928
  %v4682 = vunpack.c.l.b16 %v3929
  %v4683 = vunpack.c.h.b16 %v3929
  %v4684 = vunpack.c.l.b16 %v3930
  %v4685 = vunpack.c.h.b16 %v3930
  %v4686 = vunpack.c.l.b16 %v3931
  %v4687 = vunpack.c.h.b16 %v3931
  %v4688 = vunpack.c.l.b16 %v3932
  %v4689 = vunpack.c.h.b16 %v3932
  %v4690 = vunpack.c.l.b16 %v3933
  %v4691 = vunpack.c.h.b16 %v3933
  %v4692 = vunpack.c.l.b16 %v3934
  %v4693 = vunpack.c.l.b16 %v3935
  %v4694 = vunpack.c.h.b16 %v3935
  %v4695 = vunpack.c.l.b16 %v3936
  %v4696 = vunpack.c.h.b16 %v3936
  %v4697 = vunpack.c.l.b16 %v3937
  %v4698 = vunpack.c.h.b16 %v3937
  %v4699 = vunpack.c.l.b16 %v3938
  %v4700 = vunpack.c.h.b16 %v3938
  %v4701 = vunpack.c.l.b16 %v3939
  %v4702 = vunpack.c.h.b16 %v3939
  %v4703 = vunpack.c.l.b16 %v3940
  %v4704 = vunpack.c.h.b16 %v3940
  %v4705 = vunpack.c.l.b16 %v3941
  %v4706 = vunpack.c.h.b16 %v3941
  %v4707 = vunpack.c.l.b16 %v3942
  %v4708 = vunpack.c.h.b16 %v3942
  %v4709 = vunpack.c.l.b16 %v3943
  %v4710 = vunpack.c.h.b16 %v3943
  %v4711 = vunpack.c.l.b16 %v3944
  %v4712 = vunpack.c.h.b16 %v3944
  %v4713 = vunpack.c.l.b16 %v3945
  %v4714 = vunpack.c.h.b16 %v3945
  %v4715 = vunpack.c.l.b16 %v3946
  %v4716 = vunpack.c.h.b16 %v3946
  %v4717 = vunpack.c.l.b16 %v3947
  %v4718 = vunpack.c.l.b16 %v3948
  %v4719 = vunpack.c.h.b16 %v3948
  %v4720 = vunpack.c.l.b16 %v3949
  %v4721 = vunpack.c.h.b16 %v3949
  %v4722 = vunpack.c.l.b16 %v3950
  %v4723 = vunpack.c.h.b16 %v3950
  %v4724 = vunpack.c.l.b16 %v3951
  %v4725 = vunpack.c.h.b16 %v3951
  %v4726 = vunpack.c.l.b16 %v3952
  %v4727 = vunpack.c.h.b16 %v3952
  %v4728 = vunpack.c.l.b16 %v3953
  %v4729 = vunpack.c.h.b16 %v3953
  %v4730 = vunpack.c.l.b16 %v3954
  %v4731 = vunpack.c.h.b16 %v3954
  %v4732 = vunpack.c.l.b16 %v3955
  %v4733 = vunpack.c.h.b16 %v3955
  %v4734 = vunpack.c.l.b16 %v3956
  %v4735 = vunpack.c.h.b16 %v3956
  %v4736 = vunpack.c.l.b16 %v3957
  %v4737 = vunpack.c.h.b16 %v3957
  %v4738 = vunpack.c.l.b16 %v3958
  %v4739 = vunpack.c.h.b16 %v3958
  %v4740 = vunpack.c.l.b16 %v3959
  %v4741 = vunpack.c.h.b16 %v3959
  %v4742 = vunpack.c.l.b16 %v3960
  %v4743 = vunpack.c.l.b16 %v3961
  %v4744 = vunpack.c.h.b16 %v3961
  %v4745 = vunpack.c.l.b16 %v3962
  %v4746 = vunpack.c.h.b16 %v3962
  %v4747 = vunpack.c.l.b16 %v3963
  %v4748 = vunpack.c.h.b16 %v3963
  %v4749 = vunpack.c.l.b16 %v3964
  %v4750 = vunpack.c.h.b16 %v3964
  %v4751 = vunpack.c.l.b16 %v3965
  %v4752 = vunpack.c.h.b16 %v3965
  %v4753 = vunpack.c.l.b16 %v3966
  %v4754 = vunpack.c.h.b16 %v3966
  %v4755 = vunpack.c.l.b16 %v3967
  %v4756 = vunpack.c.h.b16 %v3967
  %v4757 = vunpack.c.l.b16 %v3968
  %v4758 = vunpack.c.h.b16 %v3968
  %v4759 = vunpack.c.l.b16 %v3969
  %v4760 = vunpack.c.h.b16 %v3969
  %v4761 = vunpack.c.l.b16 %v3970
  %v4762 = vunpack.c.h.b16 %v3970
  %v4763 = vunpack.c.l.b16 %v3971
  %v4764 = vunpack.c.h.b16 %v3971
  %v4765 = vunpack.c.l.b16 %v3972
  %v4766 = vunpack.c.h.b16 %v3972
  %v4767 = vunpack.c.l.b16 %v3973
  %v4768 = vunpack.c.l.b16 %v3974
  %v4769 = vunpack.c.h.b16 %v3974
  %v4770 = vunpack.c.l.b16 %v3975
  %v4771 = vunpack.c.h.b16 %v3975
  %v4772 = vunpack.c.l.b16 %v3976
  %v4773 = vunpack.c.h.b16 %v3976
  %v4774 = vunpack.c.l.b16 %v3977
  %v4775 = vunpack.c.h.b16 %v3977
  %v4776 = vunpack.c.l.b16 %v3978
  %v4777 = vunpack.c.h.b16 %v3978
  %v4778 = vunpack.c.l.b16 %v3979
  %v4779 = vunpack.c.h.b16 %v3979
  %v4780 = vunpack.c.l.b16 %v3980
  %v4781 = vunpack.c.h.b16 %v3980
  %v4782 = vunpack.c.l.b16 %v3981
  %v4783 = vunpack.c.h.b16 %v3981
  %v4784 = vunpack.c.l.b16 %v3982
  %v4785 = vunpack.c.h.b16 %v3982
  %v4786 = vunpack.c.l.b16 %v3983
  %v4787 = vunpack.c.h.b16 %v3983
  %v4788 = vunpack.c.l.b16 %v3984
  %v4789 = vunpack.c.h.b16 %v3984
  %v4790 = vunpack.c.l.b16 %v3985
  %v4791 = vunpack.c.h.b16 %v3985
  %v4792 = vunpack.c.l.b16 %v3986
  %v4793 = vunpack.c.l.b16 %v3987
  %v4794 = vunpack.c.h.b16 %v3987
  %v4795 = vunpack.c.l.b16 %v3988
  %v4796 = vunpack.c.h.b16 %v3988
  %v4797 = vunpack.c.l.b16 %v3989
  %v4798 = vunpack.c.h.b16 %v3989
  %v4799 = vunpack.c.l.b16 %v3990
  %v4800 = vunpack.c.h.b16 %v3990
  %v4801 = vunpack.c.l.b16 %v3991
  %v4802 = vunpack.c.h.b16 %v3991
  %v4803 = vunpack.c.l.b16 %v3992
  %v4804 = vunpack.c.h.b16 %v3992
  %v4805 = vunpack.c.l.b16 %v3993
  %v4806 = vunpack.c.h.b16 %v3993
  %v4807 = vunpack.c.l.b16 %v3994
  %v4808 = vunpack.c.h.b16 %v3994
  %v4809 = vunpack.c.l.b16 %v3995
  %v4810 = vunpack.c.h.b16 %v3995
  %v4811 = vunpack.c.l.b16 %v3996
  %v4812 = vunpack.c.h.b16 %v3996
  %v4813 = vunpack.c.l.b16 %v3997
  %v4814 = vunpack.c.h.b16 %v3997
  %v4815 = vunpack.c.l.b16 %v3998
  %v4816 = vunpack.c.h.b16 %v3998
  %v4817 = vunpack.c.l.b16 %v3999
  %v4818 = vunpack.c.l.b16 %v4000
  %v4819 = vunpack.c.h.b16 %v4000
  %v4820 = vunpack.c.l.b16 %v4001
  %v4821 = vunpack.c.h.b16 %v4001
  %v4822 = vunpack.c.l.b16 %v4002
  %v4823 = vunpack.c.h.b16 %v4002
  %v4824 = vunpack.c.l.b16 %v4003
  %v4825 = vunpack.c.h.b16 %v4003
  %v4826 = vunpack.c.l.b16 %v4004
  %v4827 = vunpack.c.h.b16 %v4004
  %v4828 = vunpack.c.l.b16 %v4005
  %v4829 = vunpack.c.h.b16 %v4005
  %v4830 = vunpack.c.l.b16 %v4006
  %v4831 = vunpack.c.h.b16 %v4006
  %v4832 = vunpack.c.l.b16 %v4007
  %v4833 = vunpack.c.h.b16 %v4007
  %v4834 = vunpack.c.l.b16 %v4008
  %v4835 = vunpack.c.h.b16 %v4008
  %v4836 = vunpack.c.l.b16 %v4009
  %v4837 = vunpack.c.h.b16 %v4009
  %v4838 = vunpack.c.l.b16 %v4010
  %v4839 = vunpack.c.h.b16 %v4010
  %v4840 = vunpack.c.l.b16 %v4011
  %v4841 = vunpack.c.h.b16 %v4011
  %v4842 = vunpack.c.l.b16 %v4012
  %v4843 = vunpack.c.l.b16 %v4013
  %v4844 = vunpack.c.h.b16 %v4013
  %v4845 = vunpack.c.l.b16 %v4014
  %v4846 = vunpack.c.h.b16 %v4014
  %v4847 = vunpack.c.l.b16 %v4015
  %v4848 = vunpack.c.h.b16 %v4015
  %v4849 = vunpack.c.l.b16 %v4016
  %v4850 = vunpack.c.h.b16 %v4016
  %v4851 = vunpack.c.l.b16 %v4017
  %v4852 = vunpack.c.h.b16 %v4017
  %v4853 = vunpack.c.l.b16 %v4018
  %v4854 = vunpack.c.h.b16 %v4018
  %v4855 = vunpack.c.l.b16 %v4019
  %v4856 = vunpack.c.h.b16 %v4019
  %v4857 = vunpack.c.l.b16 %v4020
  %v4858 = vunpack.c.h.b16 %v4020
  %v4859 = vunpack.c.l.b16 %v4021
  %v4860 = vunpack.c.h.b16 %v4021
  %v4861 = vunpack.c.l.b16 %v4022
  %v4862 = vunpack.c.h.b16 %v4022
  %v4863 = vunpack.c.l.b16 %v4023
  %v4864 = vunpack.c.h.b16 %v4023
  %v4865 = vunpack.c.l.b16 %v4024
  %v4866 = vunpack.c.h.b16 %v4024
  %v4867 = vunpack.c.l.b16 %v4025
  %v4868 = vunpack.c.l.b16 %v4026
  %v4869 = vunpack.c.h.b16 %v4026
  %v4870 = vunpack.c.l.b16 %v4027
  %v4871 = vunpack.c.h.b16 %v4027
  %v4872 = vunpack.c.l.b16 %v4028
  %v4873 = vunpack.c.h.b16 %v4028
  %v4874 = vunpack.c.l.b16 %v4029
  %v4875 = vunpack.c.h.b16 %v4029
  %v4876 = vunpack.c.l.b16 %v4030
  %v4877 = vunpack.c.h.b16 %v4030
  %v4878 = vunpack.c.l.b16 %v4031
  %v4879 = vunpack.c.h.b16 %v4031
  %v4880 = vunpack.c.l.b16 %v4032
  %v4881 = vunpack.c.h.b16 %v4032
  %v4882 = vunpack.c.l.b16 %v4033
  %v4883 = vunpack.c.h.b16 %v4033
  %v4884 = vunpack.c.l.b16 %v4034
  %v4885 = vunpack.c.h.b16 %v4034
  %v4886 = vunpack.c.l.b16 %v4035
  %v4887 = vunpack.c.h.b16 %v4035
  %v4888 = vunpack.c.l.b16 %v4036
  %v4889 = vunpack.c.h.b16 %v4036
  %v4890 = vunpack.c.l.b16 %v4037
  %v4891 = vunpack.c.h.b16 %v4037
  %v4892 = vunpack.c.l.b16 %v4038
  %v4893 = vunpack.c.l.b16 %v4039
  %v4894 = vunpack.c.h.b16 %v4039
  %v4895 = vunpack.c.l.b16 %v4040
  %v4896 = vunpack.c.h.b16 %v4040
  %v4897 = vunpack.c.l.b16 %v4041
  %v4898 = vunpack.c.h.b16 %v4041
  %v4899 = vunpack.c.l.b16 %v4042
  %v4900 = vunpack.c.h.b16 %v4042
  %v4901 = vunpack.c.l.b16 %v4043
  %v4902 = vunpack.c.h.b16 %v4043
  %v4903 = vunpack.c.l.b16 %v4044
  %v4904 = vunpack.c.h.b16 %v4044
  %v4905 = vunpack.c.l.b16 %v4045
  %v4906 = vunpack.c.h.b16 %v4045
  %v4907 = vunpack.c.l.b16 %v4046
  %v4908 = vunpack.c.h.b16 %v4046
  %v4909 = vunpack.c.l.b16 %v4047
  %v4910 = vunpack.c.h.b16 %v4047
  %v4911 = vunpack.c.l.b16 %v4048
  %v4912 = vunpack.c.h.b16 %v4048
  %v4913 = vunpack.c.l.b16 %v4049
  %v4914 = vunpack.c.h.b16 %v4049
  %v4915 = vunpack.c.l.b16 %v4050
  %v4916 = vunpack.c.h.b16 %v4050
  %v4917 = vunpack.c.l.b16 %v4051
  %v4918 = vunpack.c.l.b16 %v4052
  %v4919 = vunpack.c.h.b16 %v4052
  %v4920 = vunpack.c.l.b16 %v4053
  %v4921 = vunpack.c.h.b16 %v4053
  %v4922 = vunpack.c.l.b16 %v4054
  %v4923 = vunpack.c.h.b16 %v4054
  %v4924 = vunpack.c.l.b16 %v4055
  %v4925 = vunpack.c.h.b16 %v4055
  %v4926 = vunpack.c.l.b16 %v4056
  %v4927 = vunpack.c.h.b16 %v4056
  %v4928 = vunpack.c.l.b16 %v4057
  %v4929 = vunpack.c.h.b16 %v4057
  %v4930 = vunpack.c.l.b16 %v4058
  %v4931 = vunpack.c.h.b16 %v4058
  %v4932 = vunpack.c.l.b16 %v4059
  %v4933 = vunpack.c.h.b16 %v4059
  %v4934 = vunpack.c.l.b16 %v4060
  %v4935 = vunpack.c.h.b16 %v4060
  %v4936 = vunpack.c.l.b16 %v4061
  %v4937 = vunpack.c.h.b16 %v4061
  %v4938 = vunpack.c.l.b16 %v4062
  %v4939 = vunpack.c.h.b16 %v4062
  %v4940 = vunpack.c.l.b16 %v4063
  %v4941 = vunpack.c.h.b16 %v4063
  %v4942 = vunpack.c.l.b16 %v4064
  %v4943 = vunpack.c.l.b16 %v4065
  %v4944 = vunpack.c.h.b16 %v4065
  %v4945 = vunpack.c.l.b16 %v4066
  %v4946 = vunpack.c.h.b16 %v4066
  %v4947 = vunpack.c.l.b16 %v4067
  %v4948 = vunpack.c.h.b16 %v4067
  %v4949 = vunpack.c.l.b16 %v4068
  %v4950 = vunpack.c.h.b16 %v4068
  %v4951 = vunpack.c.l.b16 %v4069
  %v4952 = vunpack.c.h.b16 %v4069
  %v4953 = vunpack.c.l.b16 %v4070
  %v4954 = vunpack.c.h.b16 %v4070
  %v4955 = vunpack.c.l.b16 %v4071
  %v4956 = vunpack.c.h.b16 %v4071
  %v4957 = vunpack.c.l.b16 %v4072
  %v4958 = vunpack.c.h.b16 %v4072
  %v4959 = vunpack.c.l.b16 %v4073
  %v4960 = vunpack.c.h.b16 %v4073
  %v4961 = vunpack.c.l.b16 %v4074
  %v4962 = vunpack.c.h.b16 %v4074
  %v4963 = vunpack.c.l.b16 %v4075
  %v4964 = vunpack.c.h.b16 %v4075
  %v4965 = vunpack.c.l.b16 %v4076
  %v4966 = vunpack.c.h.b16 %v4076
  %v4967 = vunpack.c.l.b16 %v4077
  %v4968 = vunpack.c.l.b16 %v4078
  %v4969 = vunpack.c.h.b16 %v4078
  %v4970 = vunpack.c.l.b16 %v4079
  %v4971 = vunpack.c.h.b16 %v4079
  %v4972 = vunpack.c.l.b16 %v4080
  %v4973 = vunpack.c.h.b16 %v4080
  %v4974 = vunpack.c.l.b16 %v4081
  %v4975 = vunpack.c.h.b16 %v4081
  %v4976 = vunpack.c.l.b16 %v4082
  %v4977 = vunpack.c.h.b16 %v4082
  %v4978 = vunpack.c.l.b16 %v4083
  %v4979 = vunpack.c.h.b16 %v4083
  %v4980 = vunpack.c.l.b16 %v4084
  %v4981 = vunpack.c.h.b16 %v4084
  %v4982 = vunpack.c.l.b16 %v4085
  %v4983 = vunpack.c.h.b16 %v4085
  %v4984 = vunpack.c.l.b16 %v4086
  %v4985 = vunpack.c.h.b16 %v4086
  %v4986 = vunpack.c.l.b16 %v4087
  %v4987 = vunpack.c.h.b16 %v4087
  %v4988 = vunpack.c.l.b16 %v4088
  %v4989 = vunpack.c.h.b16 %v4088
  %v4990 = vunpack.c.l.b16 %v4089
  %v4991 = vunpack.c.h.b16 %v4089
  %v4992 = vunpack.c.l.b16 %v4090
  %v4993 = vunpack.c.l.b16 %v4091
  %v4994 = vunpack.c.h.b16 %v4091
  %v4995 = vunpack.c.l.b16 %v4092
  %v4996 = vunpack.c.h.b16 %v4092
  %v4997 = vunpack.c.l.b16 %v4093
  %v4998 = vunpack.c.h.b16 %v4093
  %v4999 = vunpack.c.l.b16 %v4094
  %v5000 = vunpack.c.h.b16 %v4094
  %v5001 = vunpack.c.l.b16 %v4095
  %v5002 = vunpack.c.h.b16 %v4095
  %v5003 = vunpack.c.l.b16 %v4096
  %v5004 = vunpack.c.h.b16 %v4096
  %v5005 = vunpack.c.l.b16 %v4097
  %v5006 = vunpack.c.h.b16 %v4097
  %v5007 = vunpack.c.l.b16 %v4098
  %v5008 = vunpack.c.h.b16 %v4098
  %v5009 = vunpack.c.l.b16 %v4099
  %v5010 = vunpack.c.h.b16 %v4099
  %v5011 = vunpack.c.l.b16 %v4100
  %v5012 = vunpack.c.h.b16 %v4100
  %v5013 = vunpack.c.l.b16 %v4101
  %v5014 = vunpack.c.h.b16 %v4101
  %v5015 = vunpack.c.l.b16 %v4102
  %v5016 = vunpack.c.h.b16 %v4102
  %v5017 = vunpack.c.l.b16 %v4103
  %v5018 = vunpack.c.l.b16 %v4104
  %v5019 = vunpack.c.h.b16 %v4104
  %v5020 = vunpack.c.l.b16 %v4105
  %v5021 = vunpack.c.h.b16 %v4105
  %v5022 = vunpack.c.l.b16 %v4106
  %v5023 = vunpack.c.h.b16 %v4106
  %v5024 = vunpack.c.l.b16 %v4107
  %v5025 = vunpack.c.h.b16 %v4107
  %v5026 = vunpack.c.l.b16 %v4108
  %v5027 = vunpack.c.h.b16 %v4108
  %v5028 = vunpack.c.l.b16 %v4109
  %v5029 = vunpack.c.h.b16 %v4109
  %v5030 = vunpack.c.l.b16 %v4110
  %v5031 = vunpack.c.h.b16 %v4110
  %v5032 = vunpack.c.l.b16 %v4111
  %v5033 = vunpack.c.h.b16 %v4111
  %v5034 = vunpack.c.l.b16 %v4112
  %v5035 = vunpack.c.h.b16 %v4112
  %v5036 = vunpack.c.l.b16 %v4113
  %v5037 = vunpack.c.h.b16 %v4113
  %v5038 = vunpack.c.l.b16 %v4114
  %v5039 = vunpack.c.h.b16 %v4114
  %v5040 = vunpack.c.l.b16 %v4115
  %v5041 = vunpack.c.h.b16 %v4115
  %v5042 = vunpack.c.l.b16 %v4116
  %v5043 = vunpack.c.l.b16 %v4117
  %v5044 = vunpack.c.h.b16 %v4117
  %v5045 = vunpack.c.l.b16 %v4118
  %v5046 = vunpack.c.h.b16 %v4118
  %v5047 = vunpack.c.l.b16 %v4119
  %v5048 = vunpack.c.h.b16 %v4119
  %v5049 = vunpack.c.l.b16 %v4120
  %v5050 = vunpack.c.h.b16 %v4120
  %v5051 = vunpack.c.l.b16 %v4121
  %v5052 = vunpack.c.h.b16 %v4121
  %v5053 = vunpack.c.l.b16 %v4122
  %v5054 = vunpack.c.h.b16 %v4122
  %v5055 = vunpack.c.l.b16 %v4123
  %v5056 = vunpack.c.h.b16 %v4123
  %v5057 = vunpack.c.l.b16 %v4124
  %v5058 = vunpack.c.h.b16 %v4124
  %v5059 = vunpack.c.l.b16 %v4125
  %v5060 = vunpack.c.h.b16 %v4125
  %v5061 = vunpack.c.l.b16 %v4126
  %v5062 = vunpack.c.h.b16 %v4126
  %v5063 = vunpack.c.l.b16 %v4127
  %v5064 = vunpack.c.h.b16 %v4127
  %v5065 = vunpack.c.l.b16 %v4128
  %v5066 = vunpack.c.h.b16 %v4128
  %v5067 = vunpack.c.l.b16 %v4129
  %v5068 = vunpack.c.l.b16 %v4130
  %v5069 = vunpack.c.h.b16 %v4130
  %v5070 = vunpack.c.l.b16 %v4131
  %v5071 = vunpack.c.h.b16 %v4131
  %v5072 = vunpack.c.l.b16 %v4132
  %v5073 = vunpack.c.h.b16 %v4132
  %v5074 = vunpack.c.l.b16 %v4133
  %v5075 = vunpack.c.h.b16 %v4133
  %v5076 = vunpack.c.l.b16 %v4134
  %v5077 = vunpack.c.h.b16 %v4134
  %v5078 = vunpack.c.l.b16 %v4135
  %v5079 = vunpack.c.h.b16 %v4135
  %v5080 = vunpack.c.l.b16 %v4136
  %v5081 = vunpack.c.h.b16 %v4136
  %v5082 = vunpack.c.l.b16 %v4137
  %v5083 = vunpack.c.h.b16 %v4137
  %v5084 = vunpack.c.l.b16 %v4138
  %v5085 = vunpack.c.h.b16 %v4138
  %v5086 = vunpack.c.l.b16 %v4139
  %v5087 = vunpack.c.h.b16 %v4139
  %v5088 = vunpack.c.l.b16 %v4140
  %v5089 = vunpack.c.h.b16 %v4140
  %v5090 = vunpack.c.l.b16 %v4141
  %v5091 = vunpack.c.h.b16 %v4141
  %v5092 = vunpack.c.l.b16 %v4142
  %v5093 = vpack.c.b16 %v4493, %v4468
  %v5094 = vpack.c.b16 %v4494, %v4469
  %v5095 = vpack.c.b16 %v4495, %v4470
  %v5096 = vpack.c.b16 %v4496, %v4471
  %v5097 = vpack.c.b16 %v4497, %v4472
  %v5098 = vpack.c.b16 %v4498, %v4473
  %v5099 = vpack.c.b16 %v4499, %v4474
  %v5100 = vpack.c.b16 %v4500, %v4475
  %v5101 = vpack.c.b16 %v4501, %v4476
  %v5102 = vpack.c.b16 %v4502, %v4477
  %v5103 = vpack.c.b16 %v4503, %v4478
  %v5104 = vpack.c.b16 %v4504, %v4479
  %v5105 = vpack.c.b16 %v4505, %v4480
  %v5106 = vpack.c.b16 %v4506, %v4481
  %v5107 = vpack.c.b16 %v4507, %v4482
  %v5108 = vpack.c.b16 %v4508, %v4483
  %v5109 = vpack.c.b16 %v4509, %v4484
  %v5110 = vpack.c.b16 %v4510, %v4485
  %v5111 = vpack.c.b16 %v4511, %v4486
  %v5112 = vpack.c.b16 %v4512, %v4487
  %v5113 = vpack.c.b16 %v4513, %v4488
  %v5114 = vpack.c.b16 %v4514, %v4489
  %v5115 = vpack.c.b16 %v4515, %v4490
  %v5116 = vpack.c.b16 %v4516, %v4491
  %v5117 = vpack.c.b16 %v4517, %v4492
  %v5118 = vpack.c.b16 %v4543, %v4518
  %v5119 = vpack.c.b16 %v4544, %v4519
  %v5120 = vpack.c.b16 %v4545, %v4520
  %v5121 = vpack.c.b16 %v4546, %v4521
  %v5122 = vpack.c.b16 %v4547, %v4522
  %v5123 = vpack.c.b16 %v4548, %v4523
  %v5124 = vpack.c.b16 %v4549, %v4524
  %v5125 = vpack.c.b16 %v4550, %v4525
  %v5126 = vpack.c.b16 %v4551, %v4526
  %v5127 = vpack.c.b16 %v4552, %v4527
  %v5128 = vpack.c.b16 %v4553, %v4528
  %v5129 = vpack.c.b16 %v4554, %v4529
  %v5130 = vpack.c.b16 %v4555, %v4530
  %v5131 = vpack.c.b16 %v4556, %v4531
  %v5132 = vpack.c.b16 %v4557, %v4532
  %v5133 = vpack.c.b16 %v4558, %v4533
  %v5134 = vpack.c.b16 %v4559, %v4534
  %v5135 = vpack.c.b16 %v4560, %v4535
  %v5136 = vpack.c.b16 %v4561, %v4536
  %v5137 = vpack.c.b16 %v4562, %v4537
  %v5138 = vpack.c.b16 %v4563, %v4538
  %v5139 = vpack.c.b16 %v4564, %v4539
  %v5140 = vpack.c.b16 %v4565, %v4540
  %v5141 = vpack.c.b16 %v4566, %v4541
  %v5142 = vpack.c.b16 %v4567, %v4542
  %v5143 = vpack.c.b16 %v4593, %v4568
  %v5144 = vpack.c.b16 %v4594, %v4569
  %v5145 = vpack.c.b16 %v4595, %v4570
  %v5146 = vpack.c.b16 %v4596, %v4571
  %v5147 = vpack.c.b16 %v4597, %v4572
  %v5148 = vpack.c.b16 %v4598, %v4573
  %v5149 = vpack.c.b16 %v4599, %v4574
  %v5150 = vpack.c.b16 %v4600, %v4575
  %v5151 = vpack.c.b16 %v4601, %v4576
  %v5152 = vpack.c.b16 %v4602, %v4577
  %v5153 = vpack.c.b16 %v4603, %v4578
  %v5154 = vpack.c.b16 %v4604, %v4579
  %v5155 = vpack.c.b16 %v4605, %v4580
  %v5156 = vpack.c.b16 %v4606, %v4581
  %v5157 = vpack.c.b16 %v4607, %v4582
  %v5158 = vpack.c.b16 %v4608, %v4583
  %v5159 = vpack.c.b16 %v4609, %v4584
  %v5160 = vpack.c.b16 %v4610, %v4585
  %v5161 = vpack.c.b16 %v4611, %v4586
  %v5162 = vpack.c.b16 %v4612, %v4587
  %v5163 = vpack.c.b16 %v4613, %v4588
  %v5164 = vpack.c.b16 %v4614, %v4589
  %v5165 = vpack.c.b16 %v4615, %v4590
  %v5166 = vpack.c.b16 %v4616, %v4591
  %v5167 = vpack.c.b16 %v4617, %v4592
  %v5168 = vpack.c.b16 %v4643, %v4618
  %v5169 = vpack.c.b16 %v4644, %v4619
  %v5170 = vpack.c.b16 %v4645, %v4620
  %v5171 = vpack.c.b16 %v4646, %v4621
  %v5172 = vpack.c.b16 %v4647, %v4622
  %v5173 = vpack.c.b16 %v4648, %v4623
  %v5174 = vpack.c.b16 %v4649, %v4624
  %v5175 = vpack.c.b16 %v4650, %v4625
  %v5176 = vpack.c.b16 %v4651, %v4626
  %v5177 = vpack.c.b16 %v4652, %v4627
  %v5178 = vpack.c.b16 %v4653, %v4628
  %v5179 = vpack.c.b16 %v4654, %v4629
  %v5180 = vpack.c.b16 %v4655, %v4630
  %v5181 = vpack.c.b16 %v4656, %v4631
  %v5182 = vpack.c.b16 %v4657, %v4632
  %v5183 = vpack.c.b16 %v4658, %v4633
  %v5184 = vpack.c.b16 %v4659, %v4634
  %v5185 = vpack.c.b16 %v4660, %v4635
  %v5186 = vpack.c.b16 %v4661, %v4636
  %v5187 = vpack.c.b16 %v4662, %v4637
  %v5188 = vpack.c.b16 %v4663, %v4638
  %v5189 = vpack.c.b16 %v4664, %v4639
  %v5190 = vpack.c.b16 %v4665, %v4640
  %v5191 = vpack.c.b16 %v4666, %v4641
  %v5192 = vpack.c.b16 %v4667, %v4642
  %v5193 = vpack.c.b16 %v4693, %v4668
  %v5194 = vpack.c.b16 %v4694, %v4669
  %v5195 = vpack.c.b16 %v4695, %v4670
  %v5196 = vpack.c.b16 %v4696, %v4671
  %v5197 = vpack.c.b16 %v4697, %v4672
  %v5198 = vpack.c.b16 %v4698, %v4673
  %v5199 = vpack.c.b16 %v4699, %v4674
  %v5200 = vpack.c.b16 %v4700, %v4675
  %v5201 = vpack.c.b16 %v4701, %v4676
  %v5202 = vpack.c.b16 %v4702, %v4677
  %v5203 = vpack.c.b16 %v4703, %v4678
  %v5204 = vpack.c.b16 %v4704, %v4679
  %v5205 = vpack.c.b16 %v4705, %v4680
  %v5206 = vpack.c.b16 %v4706, %v4681
  %v5207 = vpack.c.b16 %v4707, %v4682
  %v5208 = vpack.c.b16 %v4708, %v4683
  %v5209 = vpack.c.b16 %v4709, %v4684
  %v5210 = vpack.c.b16 %v4710, %v4685
  %v5211 = vpack.c.b16 %v4711, %v4686
  %v5212 = vpack.c.b16 %v4712, %v4687
  %v5213 = vpack.c.b16 %v4713, %v4688
  %v5214 = vpack.c.b16 %v4714, %v4689
  %v5215 = vpack.c.b16 %v4715, %v4690
  %v5216 = vpack.c.b16 %v4716, %v4691
  %v5217 = vpack.c.b16 %v4717, %v4692
  %v5218 = vpack.c.b16 %v4743, %v4718
  %v5219 = vpack.c.b16 %v4744, %v4719
  %v5220 = vpack.c.b16 %v4745, %v4720
  %v5221 = vpack.c.b16 %v4746, %v4721
  %v5222 = vpack.c.b16 %v4747, %v4722
  %v5223 = vpack.c.b16 %v4748, %v4723
  %v5224 = vpack.c.b16 %v4749, %v4724
  %v5225 = vpack.c.b16 %v4750, %v4725
  %v5226 = vpack.c.b16 %v4751, %v4726
  %v5227 = vpack.c.b16 %v4752, %v4727
  %v5228 = vpack.c.b16 %v4753, %v4728
  %v5229 = vpack.c.b16 %v4754, %v4729
  %v5230 = vpack.c.b16 %v4755, %v4730
  %v5231 = vpack.c.b16 %v4756, %v4731
  %v5232 = vpack.c.b16 %v4757, %v4732
  %v5233 = vpack.c.b16 %v4758, %v4733
  %v5234 = vpack.c.b16 %v4759, %v4734
  %v5235 = vpack.c.b16 %v4760, %v4735
  %v5236 = vpack.c.b16 %v4761, %v4736
  %v5237 = vpack.c.b16 %v4762, %v4737
  %v5238 = vpack.c.b16 %v4763, %v4738
  %v5239 = vpack.c.b16 %v4764, %v4739
  %v5240 = vpack.c.b16 %v4765, %v4740
  %v5241 = vpack.c.b16 %v4766, %v4741
  %v5242 = vpack.c.b16 %v4767, %v4742
  %v5243 = vpack.c.b16 %v4793, %v4768
  %v5244 = vpack.c.b16 %v4794, %v4769
  %v5245 = vpack.c.b16 %v4795, %v4770
  %v5246 = vpack.c.b16 %v4796, %v4771
  %v5247 = vpack.c.b16 %v4797, %v4772
  %v5248 = vpack.c.b16 %v4798, %v4773
  %v5249 = vpack.c.b16 %v4799, %v4774
  %v5250 = vpack.c.b16 %v4800, %v4775
  %v5251 = vpack.c.b16 %v4801, %v4776
  %v5252 = vpack.c.b16 %v4802, %v4777
  %v5253 = vpack.c.b16 %v4803, %v4778
  %v5254 = vpack.c.b16 %v4804, %v4779
  %v5255 = vpack.c.b16 %v4805, %v4780
  %v5256 = vpack.c.b16 %v4806, %v4781
  %v5257 = vpack.c.b16 %v4807, %v4782
  %v5258 = vpack.c.b16 %v4808, %v4783
  %v5259 = vpack.c.b16 %v4809, %v4784
  %v5260 = vpack.c.b16 %v4810, %v4785
  %v5261 = vpack.c.b16 %v4811, %v4786
  %v5262 = vpack.c.b16 %v4812, %v4787
  %v5263 = vpack.c.b16 %v4813, %v4788
  %v5264 = vpack.c.b16 %v4814, %v4789
  %v5265 = vpack.c.b16 %v4815, %v4790
  %v5266 = vpack.c.b16 %v4816, %v4791
  %v5267 = vpack.c.b16 %v4817, %v4792
  %v5268 = vpack.c.b16 %v4843, %v4818
  %v5269 = vpack.c.b16 %v4844, %v4819
  %v5270 = vpack.c.b16 %v4845, %v4820
  %v5271 = vpack.c.b16 %v4846, %v4821
  %v5272 = vpack.c.b16 %v4847, %v4822
  %v5273 = vpack.c.b16 %v4848, %v4823
  %v5274 = vpack.c.b16 %v4849, %v4824
  %v5275 = vpack.c.b16 %v4850, %v4825
  %v5276 = vpack.c.b16 %v4851, %v4826
  %v5277 = vpack.c.b16 %v4852, %v4827
  %v5278 = vpack.c.b16 %v4853, %v4828
  %v5279 = vpack.c.b16 %v4854, %v4829
  %v5280 = vpack.c.b16 %v4855, %v4830
  %v5281 = vpack.c.b16 %v4856, %v4831
  %v5282 = vpack.c.b16 %v4857, %v4832
  %v5283 = vpack.c.b16 %v4858, %v4833
  %v5284 = vpack.c.b16 %v4859, %v4834
  %v5285 = vpack.c.b16 %v4860, %v4835
  %v5286 = vpack.c.b16 %v4861, %v4836
  %v5287 = vpack.c.b16 %v4862, %v4837
  %v5288 = vpack.c.b16 %v4863, %v4838
  %v5289 = vpack.c.b16 %v4864, %v4839
  %v5290 = vpack.c.b16 %v4865, %v4840
  %v5291 = vpack.c.b16 %v4866, %v4841
  %v5292 = vpack.c.b16 %v4867, %v4842
  %v5293 = vpack.c.b16 %v4893, %v4868
  %v5294 = vpack.c.b16 %v4894, %v4869
  %v5295 = vpack.c.b16 %v4895, %v4870
  %v5296 = vpack.c.b16 %v4896, %v4871
  %v5297 = vpack.c.b16 %v4897, %v4872
  %v5298 = vpack.c.b16 %v4898, %v4873
  %v5299 = vpack.c.b16 %v4899, %v4874
  %v5300 = vpack.c.b16 %v4900, %v4875
  %v5301 = vpack.c.b16 %v4901, %v4876
  %v5302 = vpack.c.b16 %v4902, %v4877
  %v5303 = vpack.c.b16 %v4903, %v4878
  %v5304 = vpack.c.b16 %v4904, %v4879
  %v5305 = vpack.c.b16 %v4905, %v4880
  %v5306 = vpack.c.b16 %v4906, %v4881
  %v5307 = vpack.c.b16 %v4907, %v4882
  %v5308 = vpack.c.b16 %v4908, %v4883
  %v5309 = vpack.c.b16 %v4909, %v4884
  %v5310 = vpack.c.b16 %v4910, %v4885
  %v5311 = vpack.c.b16 %v4911, %v4886
  %v5312 = vpack.c.b16 %v4912, %v4887
  %v5313 = vpack.c.b16 %v4913, %v4888
  %v5314 = vpack.c.b16 %v4914, %v4889
  %v5315 = vpack.c.b16 %v4915, %v4890
  %v5316 = vpack.c.b16 %v4916, %v4891
  %v5317 = vpack.c.b16 %v4917, %v4892
  %v5318 = vpack.c.b16 %v4943, %v4918
  %v5319 = vpack.c.b16 %v4944, %v4919
  %v5320 = vpack.c.b16 %v4945, %v4920
  %v5321 = vpack.c.b16 %v4946, %v4921
  %v5322 = vpack.c.b16 %v4947, %v4922
  %v5323 = vpack.c.b16 %v4948, %v4923
  %v5324 = vpack.c.b16 %v4949, %v4924
  %v5325 = vpack.c.b16 %v4950, %v4925
  %v5326 = vpack.c.b16 %v4951, %v4926
  %v5327 = vpack.c.b16 %v4952, %v4927
  %v5328 = vpack.c.b16 %v4953, %v4928
  %v5329 = vpack.c.b16 %v4954, %v4929
  %v5330 = vpack.c.b16 %v4955, %v4930
  %v5331 = vpack.c.b16 %v4956, %v4931
  %v5332 = vpack.c.b16 %v4957, %v4932
  %v5333 = vpack.c.b16 %v4958, %v4933
  %v5334 = vpack.c.b16 %v4959, %v4934
  %v5335 = vpack.c.b16 %v4960, %v4935
  %v5336 = vpack.c.b16 %v4961, %v4936
  %v5337 = vpack.c.b16 %v4962, %v4937
  %v5338 = vpack.c.b16 %v4963, %v4938
  %v5339 = vpack.c.b16 %v4964, %v4939
  %v5340 = vpack.c.b16 %v4965, %v4940
  %v5341 = vpack.c.b16 %v4966, %v4941
  %v5342 = vpack.c.b16 %v4967, %v4942
  %v5343 = vpack.c.b16 %v4993, %v4968
  %v5344 = vpack.c.b16 %v4994, %v4969
  %v5345 = vpack.c.b16 %v4995, %v4970
  %v5346 = vpack.c.b16 %v4996, %v4971
  %v5347 = vpack.c.b16 %v4997, %v4972
  %v5348 = vpack.c.b16 %v4998, %v4973
  %v5349 = vpack.c.b16 %v4999, %v4974
  %v5350 = vpack.c.b16 %v5000, %v4975
  %v5351 = vpack.c.b16 %v5001, %v4976
  %v5352 = vpack.c.b16 %v5002, %v4977
  %v5353 = vpack.c.b16 %v5003, %v4978
  %v5354 = vpack.c.b16 %v5004, %v4979
  %v5355 = vpack.c.b16 %v5005, %v4980
  %v5356 = vpack.c.b16 %v5006, %v4981
  %v5357 = vpack.c.b16 %v5007, %v4982
  %v5358 = vpack.c.b16 %v5008, %v4983
  %v5359 = vpack.c.b16 %v5009, %v4984
  %v5360 = vpack.c.b16 %v5010, %v4985
  %v5361 = vpack.c.b16 %v5011, %v4986
  %v5362 = vpack.c.b16 %v5012, %v4987
  %v5363 = vpack.c.b16 %v5013, %v4988
  %v5364 = vpack.c.b16 %v5014, %v4989
  %v5365 = vpack.c.b16 %v5015, %v4990
  %v5366 = vpack.c.b16 %v5016, %v4991
  %v5367 = vpack.c.b16 %v5017, %v4992
  %v5368 = vpack.c.b16 %v5043, %v5018
  %v5369 = vpack.c.b16 %v5044, %v5019
  %v5370 = vpack.c.b16 %v5045, %v5020
  %v5371 = vpack.c.b16 %v5046, %v5021
  %v5372 = vpack.c.b16 %v5047, %v5022
  %v5373 = vpack.c.b16 %v5048, %v5023
  %v5374 = vpack.c.b16 %v5049, %v5024
  %v5375 = vpack.c.b16 %v5050, %v5025
  %v5376 = vpack.c.b16 %v5051, %v5026
  %v5377 = vpack.c.b16 %v5052, %v5027
  %v5378 = vpack.c.b16 %v5053, %v5028
  %v5379 = vpack.c.b16 %v5054, %v5029
  %v5380 = vpack.c.b16 %v5055, %v5030
  %v5381 = vpack.c.b16 %v5056, %v5031
  %v5382 = vpack.c.b16 %v5057, %v5032
  %v5383 = vpack.c.b16 %v5058, %v5033
  %v5384 = vpack.c.b16 %v5059, %v5034
  %v5385 = vpack.c.b16 %v5060, %v5035
  %v5386 = vpack.c.b16 %v5061, %v5036
  %v5387 = vpack.c.b16 %v5062, %v5037
  %v5388 = vpack.c.b16 %v5063, %v5038
  %v5389 = vpack.c.b16 %v5064, %v5039
  %v5390 = vpack.c.b16 %v5065, %v5040
  %v5391 = vpack.c.b16 %v5066, %v5041
  %v5392 = vpack.c.b16 %v5067, %v5042
  %v5393 = vpack.c.b16 %v5068, %v5068
  %v5394 = vpack.c.b16 %v5069, %v5069
  %v5395 = vpack.c.b16 %v5070, %v5070
  %v5396 = vpack.c.b16 %v5071, %v5071
  %v5397 = vpack.c.b16 %v5072, %v5072
  %v5398 = vpack.c.b16 %v5073, %v5073
  %v5399 = vpack.c.b16 %v5074, %v5074
  %v5400 = vpack.c.b16 %v5075, %v5075
  %v5401 = vpack.c.b16 %v5076, %v5076
  %v5402 = vpack.c.b16 %v5077, %v5077
  %v5403 = vpack.c.b16 %v5078, %v5078
  %v5404 = vpack.c.b16 %v5079, %v5079
  %v5405 = vpack.c.b16 %v5080, %v5080
  %v5406 = vpack.c.b16 %v5081, %v5081
  %v5407 = vpack.c.b16 %v5082, %v5082
  %v5408 = vpack.c.b16 %v5083, %v5083
  %v5409 = vpack.c.b16 %v5084, %v5084
  %v5410 = vpack.c.b16 %v5085, %v5085
  %v5411 = vpack.c.b16 %v5086, %v5086
  %v5412 = vpack.c.b16 %v5087, %v5087
  %v5413 = vpack.c.b16 %v5088, %v5088
  %v5414 = vpack.c.b16 %v5089, %v5089
  %v5415 = vpack.c.b16 %v5090, %v5090
  %v5416 = vpack.c.b16 %v5091, %v5091
  %v5417 = vpack.c.b16 %v5092, %v5092
  %vm5718 = vcmask 556032
  %v5720 = vsel %vm5718, %v3811, 0
  %v5723 = vsel %vm5718, %v3813, 0
  %v5726 = vsel %vm5718, %v3815, 0
  %v5729 = vsel %vm5718, %v3817, 0
  %vm5731 = vcmask 1041408
  %v5733 = vsel %vm5731, %v5393, 0
  %v5736 = vsel %vm5731, %v5394, 0
  %v5739 = vsel %vm5731, %v5395, 0
  %v5742 = vsel %vm5731, %v5396, 0
  %v5745 = vsel %vm5731, %v5397, 0
  %v5748 = vsel %vm5731, %v5398, 0
  %v5751 = vsel %vm5731, %v5399, 0
  %v5754 = vsel %vm5731, %v5400, 0
  %v5757 = vsel %vm5731, %v5401, 0
  %v5760 = vsel %vm5731, %v5402, 0
  %v5763 = vsel %vm5731, %v5403, 0
  %v5766 = vsel %vm5731, %v5404, 0
  %v5769 = vsel %vm5731, %v5405, 0
  %v5772 = vsel %vm5731, %v5406, 0
  %v5775 = vsel %vm5731, %v5407, 0
  %v5778 = vsel %vm5731, %v5408, 0
  %v5781 = vsel %vm5731, %v5409, 0
  %v5784 = vsel %vm5731, %v5410, 0
  %v5787 = vsel %vm5731, %v5411, 0
  %v5790 = vsel %vm5731, %v5412, 0
  %v5793 = vsel %vm5731, %v5413, 0
  %v5796 = vsel %vm5731, %v5414, 0
  %v5799 = vsel %vm5731, %v5415, 0
  %v5802 = vsel %vm5731, %v5416, 0
  %v5805 = vsel %vm5731, %v5417, 0
  %5807 = vmatprep.subr.bf16.mxu0 %v5269
  %5808 = vmatpush1.bf16.msra.mxu0 %v5268
  %5809 = vmatprep.subr.bf16.mxu0 %v5244
  %5810 = vmatpush1.bf16.msra.mxu0 %v5243
  %5811 = vmatprep.subr.bf16.mxu0 %v5219
  %5812 = vmatpush1.bf16.msra.mxu0 %v5218
  %5813 = vmatprep.subr.bf16.mxu0 %v5194
  %5814 = vmatpush1.bf16.msra.mxu0 %v5193
  %5815 = vmatprep.subr.bf16.mxu0 %v5169
  %5816 = vmatpush1.bf16.msra.mxu0 %v5168
  %5817 = vmatprep.subr.bf16.mxu0 %v5144
  %5818 = vmatpush1.bf16.msra.mxu0 %v5143
  %5819 = vmatprep.subr.bf16.mxu0 %v5119
  %5820 = vmatpush1.bf16.msra.mxu0 %v5118
  %5821 = vmatprep.subr.bf16.mxu0 %v5094
  %5822 = vmatpush1.bf16.msra.mxu0 %v5093
  %5823 = vmatprep.subr.bf16.mxu0 0
  %5824 = vmatpush2.bf16.msra.mxu0 0
  %5825 = vmatprep.subr.bf16.mxu0 0
  %5826 = vmatpush2.bf16.msra.mxu0 0
  %5827 = vmatprep.subr.bf16.mxu0 0
  %5828 = vmatpush2.bf16.msra.mxu0 0
  %5829 = vmatprep.subr.bf16.mxu0 %v5736
  %5830 = vmatpush2.bf16.msra.mxu0 %v5733
  %5831 = vmatprep.subr.bf16.mxu0 %v5369
  %5832 = vmatpush2.bf16.msra.mxu0 %v5368
  %5833 = vmatprep.subr.bf16.mxu0 %v5344
  %5834 = vmatpush2.bf16.msra.mxu0 %v5343
  %5835 = vmatprep.subr.bf16.mxu0 %v5319
  %5836 = vmatpush2.bf16.msra.mxu0 %v5318
  %5837 = vmatprep.subr.bf16.mxu0 %v5294
  %5838 = vmatpush2.bf16.msra.mxu0 %v5293
  %5839 = vmatprep.mubr.bf16.mxu0 %v5720
  %5840 = vmatmul.mubr.bf16.gmra.mxu0 %v3810
  %v5841 = vpop.f32.mrf.mxu0
  %v5842 = vadd.f32 0.0, %v5841
  %v5843 = vpop.f32.mrf.mxu0
  %v5844 = vadd.f32 0.0, %v5843
  %v5845 = vpop.f32.mrf.mxu0
  %v5846 = vadd.f32 0.0, %v5845
  %v5847 = vpop.f32.mrf.mxu0
  %v5848 = vadd.f32 0.0, %v5847
  %5849 = vmatprep.mubr.bf16.mxu0 %v5723
  %5850 = vmatmul.mubr.bf16.gmra.mxu0 %v3812
  %v5851 = vpop.f32.mrf.mxu0
  %v5852 = vadd.f32 0.0, %v5851
  %v5853 = vpop.f32.mrf.mxu0
  %v5854 = vadd.f32 0.0, %v5853
  %v5855 = vpop.f32.mrf.mxu0
  %v5856 = vadd.f32 0.0, %v5855
  %v5857 = vpop.f32.mrf.mxu0
  %v5858 = vadd.f32 0.0, %v5857
  %5859 = vmatprep.mubr.bf16.mxu0 %v5726
  %5860 = vmatmul.mubr.bf16.gmra.mxu0 %v3814
  %v5861 = vpop.f32.mrf.mxu0
  %v5862 = vadd.f32 0.0, %v5861
  %v5863 = vpop.f32.mrf.mxu0
  %v5864 = vadd.f32 0.0, %v5863
  %v5865 = vpop.f32.mrf.mxu0
  %v5866 = vadd.f32 0.0, %v5865
  %v5867 = vpop.f32.mrf.mxu0
  %v5868 = vadd.f32 0.0, %v5867
  %5869 = vmatprep.mubr.bf16.mxu0 %v5729
  %5870 = vmatmul.mubr.bf16.gmra.mxu0 %v3816
  %v5871 = vpop.f32.mrf.mxu0
  %v5872 = vadd.f32 0.0, %v5871
  %v5873 = vpop.f32.mrf.mxu0
  %v5874 = vadd.f32 0.0, %v5873
  %v5875 = vpop.f32.mrf.mxu0
  %v5876 = vadd.f32 0.0, %v5875
  %v5877 = vpop.f32.mrf.mxu0
  %v5878 = vadd.f32 0.0, %v5877
  %5879 = vdwg.mxu0
  %5880 = vmatprep.subr.bf16.mxu0 %v5271
  %5881 = vmatpush1.bf16.msra.mxu0 %v5270
  %5882 = vmatprep.subr.bf16.mxu0 %v5246
  %5883 = vmatpush1.bf16.msra.mxu0 %v5245
  %5884 = vmatprep.subr.bf16.mxu0 %v5221
  %5885 = vmatpush1.bf16.msra.mxu0 %v5220
  %5886 = vmatprep.subr.bf16.mxu0 %v5196
  %5887 = vmatpush1.bf16.msra.mxu0 %v5195
  %5888 = vmatprep.subr.bf16.mxu0 %v5171
  %5889 = vmatpush1.bf16.msra.mxu0 %v5170
  %5890 = vmatprep.subr.bf16.mxu0 %v5146
  %5891 = vmatpush1.bf16.msra.mxu0 %v5145
  %5892 = vmatprep.subr.bf16.mxu0 %v5121
  %5893 = vmatpush1.bf16.msra.mxu0 %v5120
  %5894 = vmatprep.subr.bf16.mxu0 %v5096
  %5895 = vmatpush1.bf16.msra.mxu0 %v5095
  %5896 = vmatprep.subr.bf16.mxu0 0
  %5897 = vmatpush2.bf16.msra.mxu0 0
  %5898 = vmatprep.subr.bf16.mxu0 0
  %5899 = vmatpush2.bf16.msra.mxu0 0
  %5900 = vmatprep.subr.bf16.mxu0 0
  %5901 = vmatpush2.bf16.msra.mxu0 0
  %5902 = vmatprep.subr.bf16.mxu0 %v5742
  %5903 = vmatpush2.bf16.msra.mxu0 %v5739
  %5904 = vmatprep.subr.bf16.mxu0 %v5371
  %5905 = vmatpush2.bf16.msra.mxu0 %v5370
  %5906 = vmatprep.subr.bf16.mxu0 %v5346
  %5907 = vmatpush2.bf16.msra.mxu0 %v5345
  %5908 = vmatprep.subr.bf16.mxu0 %v5321
  %5909 = vmatpush2.bf16.msra.mxu0 %v5320
  %5910 = vmatprep.subr.bf16.mxu0 %v5296
  %5911 = vmatpush2.bf16.msra.mxu0 %v5295
  %5912 = vmatprep.mubr.bf16.mxu0 %v5720
  %5913 = vmatmul.mubr.bf16.gmra.mxu0 %v3810
  %v5914 = vpop.f32.mrf.mxu0
  %v5915 = vadd.f32 0.0, %v5914
  %v5916 = vpop.f32.mrf.mxu0
  %v5917 = vadd.f32 0.0, %v5916
  %v5918 = vpop.f32.mrf.mxu0
  %v5919 = vadd.f32 0.0, %v5918
  %v5920 = vpop.f32.mrf.mxu0
  %v5921 = vadd.f32 0.0, %v5920
  %5922 = vmatprep.mubr.bf16.mxu0 %v5723
  %5923 = vmatmul.mubr.bf16.gmra.mxu0 %v3812
  %v5924 = vpop.f32.mrf.mxu0
  %v5925 = vadd.f32 0.0, %v5924
  %v5926 = vpop.f32.mrf.mxu0
  %v5927 = vadd.f32 0.0, %v5926
  %v5928 = vpop.f32.mrf.mxu0
  %v5929 = vadd.f32 0.0, %v5928
  %v5930 = vpop.f32.mrf.mxu0
  %v5931 = vadd.f32 0.0, %v5930
  %5932 = vmatprep.mubr.bf16.mxu0 %v5726
  %5933 = vmatmul.mubr.bf16.gmra.mxu0 %v3814
  %v5934 = vpop.f32.mrf.mxu0
  %v5935 = vadd.f32 0.0, %v5934
  %v5936 = vpop.f32.mrf.mxu0
  %v5937 = vadd.f32 0.0, %v5936
  %v5938 = vpop.f32.mrf.mxu0
  %v5939 = vadd.f32 0.0, %v5938
  %v5940 = vpop.f32.mrf.mxu0
  %v5941 = vadd.f32 0.0, %v5940
  %5942 = vmatprep.mubr.bf16.mxu0 %v5729
  %5943 = vmatmul.mubr.bf16.gmra.mxu0 %v3816
  %v5944 = vpop.f32.mrf.mxu0
  %v5945 = vadd.f32 0.0, %v5944
  %v5946 = vpop.f32.mrf.mxu0
  %v5947 = vadd.f32 0.0, %v5946
  %v5948 = vpop.f32.mrf.mxu0
  %v5949 = vadd.f32 0.0, %v5948
  %v5950 = vpop.f32.mrf.mxu0
  %v5951 = vadd.f32 0.0, %v5950
  %5952 = vdwg.mxu0
  %5953 = vmatprep.subr.bf16.mxu0 %v5273
  %5954 = vmatpush1.bf16.msra.mxu0 %v5272
  %5955 = vmatprep.subr.bf16.mxu0 %v5248
  %5956 = vmatpush1.bf16.msra.mxu0 %v5247
  %5957 = vmatprep.subr.bf16.mxu0 %v5223
  %5958 = vmatpush1.bf16.msra.mxu0 %v5222
  %5959 = vmatprep.subr.bf16.mxu0 %v5198
  %5960 = vmatpush1.bf16.msra.mxu0 %v5197
  %5961 = vmatprep.subr.bf16.mxu0 %v5173
  %5962 = vmatpush1.bf16.msra.mxu0 %v5172
  %5963 = vmatprep.subr.bf16.mxu0 %v5148
  %5964 = vmatpush1.bf16.msra.mxu0 %v5147
  %5965 = vmatprep.subr.bf16.mxu0 %v5123
  %5966 = vmatpush1.bf16.msra.mxu0 %v5122
  %5967 = vmatprep.subr.bf16.mxu0 %v5098
  %5968 = vmatpush1.bf16.msra.mxu0 %v5097
  %5969 = vmatprep.subr.bf16.mxu0 0
  %5970 = vmatpush2.bf16.msra.mxu0 0
  %5971 = vmatprep.subr.bf16.mxu0 0
  %5972 = vmatpush2.bf16.msra.mxu0 0
  %5973 = vmatprep.subr.bf16.mxu0 0
  %5974 = vmatpush2.bf16.msra.mxu0 0
  %5975 = vmatprep.subr.bf16.mxu0 %v5748
  %5976 = vmatpush2.bf16.msra.mxu0 %v5745
  %5977 = vmatprep.subr.bf16.mxu0 %v5373
  %5978 = vmatpush2.bf16.msra.mxu0 %v5372
  %5979 = vmatprep.subr.bf16.mxu0 %v5348
  %5980 = vmatpush2.bf16.msra.mxu0 %v5347
  %5981 = vmatprep.subr.bf16.mxu0 %v5323
  %5982 = vmatpush2.bf16.msra.mxu0 %v5322
  %5983 = vmatprep.subr.bf16.mxu0 %v5298
  %5984 = vmatpush2.bf16.msra.mxu0 %v5297
  %5985 = vmatprep.mubr.bf16.mxu0 %v5720
  %5986 = vmatmul.mubr.bf16.gmra.mxu0 %v3810
  %v5987 = vpop.f32.mrf.mxu0
  %v5988 = vadd.f32 0.0, %v5987
  %v5989 = vpop.f32.mrf.mxu0
  %v5990 = vadd.f32 0.0, %v5989
  %v5991 = vpop.f32.mrf.mxu0
  %v5992 = vadd.f32 0.0, %v5991
  %v5993 = vpop.f32.mrf.mxu0
  %v5994 = vadd.f32 0.0, %v5993
  %5995 = vmatprep.mubr.bf16.mxu0 %v5723
  %5996 = vmatmul.mubr.bf16.gmra.mxu0 %v3812
  %v5997 = vpop.f32.mrf.mxu0
  %v5998 = vadd.f32 0.0, %v5997
  %v5999 = vpop.f32.mrf.mxu0
  %v6000 = vadd.f32 0.0, %v5999
  %v6001 = vpop.f32.mrf.mxu0
  %v6002 = vadd.f32 0.0, %v6001
  %v6003 = vpop.f32.mrf.mxu0
  %v6004 = vadd.f32 0.0, %v6003
  %6005 = vmatprep.mubr.bf16.mxu0 %v5726
  %6006 = vmatmul.mubr.bf16.gmra.mxu0 %v3814
  %v6007 = vpop.f32.mrf.mxu0
  %v6008 = vadd.f32 0.0, %v6007
  %v6009 = vpop.f32.mrf.mxu0
  %v6010 = vadd.f32 0.0, %v6009
  %v6011 = vpop.f32.mrf.mxu0
  %v6012 = vadd.f32 0.0, %v6011
  %v6013 = vpop.f32.mrf.mxu0
  %v6014 = vadd.f32 0.0, %v6013
  %6015 = vmatprep.mubr.bf16.mxu0 %v5729
  %6016 = vmatmul.mubr.bf16.gmra.mxu0 %v3816
  %v6017 = vpop.f32.mrf.mxu0
  %v6018 = vadd.f32 0.0, %v6017
  %v6019 = vpop.f32.mrf.mxu0
  %v6020 = vadd.f32 0.0, %v6019
  %v6021 = vpop.f32.mrf.mxu0
  %v6022 = vadd.f32 0.0, %v6021
  %v6023 = vpop.f32.mrf.mxu0
  %v6024 = vadd.f32 0.0, %v6023
  %6025 = vdwg.mxu0
  %6026 = vmatprep.subr.bf16.mxu0 %v5275
  %6027 = vmatpush1.bf16.msra.mxu0 %v5274
  %6028 = vmatprep.subr.bf16.mxu0 %v5250
  %6029 = vmatpush1.bf16.msra.mxu0 %v5249
  %6030 = vmatprep.subr.bf16.mxu0 %v5225
  %6031 = vmatpush1.bf16.msra.mxu0 %v5224
  %6032 = vmatprep.subr.bf16.mxu0 %v5200
  %6033 = vmatpush1.bf16.msra.mxu0 %v5199
  %6034 = vmatprep.subr.bf16.mxu0 %v5175
  %6035 = vmatpush1.bf16.msra.mxu0 %v5174
  %6036 = vmatprep.subr.bf16.mxu0 %v5150
  %6037 = vmatpush1.bf16.msra.mxu0 %v5149
  %6038 = vmatprep.subr.bf16.mxu0 %v5125
  %6039 = vmatpush1.bf16.msra.mxu0 %v5124
  %6040 = vmatprep.subr.bf16.mxu0 %v5100
  %6041 = vmatpush1.bf16.msra.mxu0 %v5099
  %6042 = vmatprep.subr.bf16.mxu0 0
  %6043 = vmatpush2.bf16.msra.mxu0 0
  %6044 = vmatprep.subr.bf16.mxu0 0
  %6045 = vmatpush2.bf16.msra.mxu0 0
  %6046 = vmatprep.subr.bf16.mxu0 0
  %6047 = vmatpush2.bf16.msra.mxu0 0
  %6048 = vmatprep.subr.bf16.mxu0 %v5754
  %6049 = vmatpush2.bf16.msra.mxu0 %v5751
  %6050 = vmatprep.subr.bf16.mxu0 %v5375
  %6051 = vmatpush2.bf16.msra.mxu0 %v5374
  %6052 = vmatprep.subr.bf16.mxu0 %v5350
  %6053 = vmatpush2.bf16.msra.mxu0 %v5349
  %6054 = vmatprep.subr.bf16.mxu0 %v5325
  %6055 = vmatpush2.bf16.msra.mxu0 %v5324
  %6056 = vmatprep.subr.bf16.mxu0 %v5300
  %6057 = vmatpush2.bf16.msra.mxu0 %v5299
  %6058 = vmatprep.mubr.bf16.mxu0 %v5720
  %6059 = vmatmul.mubr.bf16.gmra.mxu0 %v3810
  %v6060 = vpop.f32.mrf.mxu0
  %v6061 = vadd.f32 0.0, %v6060
  %v6062 = vpop.f32.mrf.mxu0
  %v6063 = vadd.f32 0.0, %v6062
  %v6064 = vpop.f32.mrf.mxu0
  %v6065 = vadd.f32 0.0, %v6064
  %v6066 = vpop.f32.mrf.mxu0
  %v6067 = vadd.f32 0.0, %v6066
  %6068 = vmatprep.mubr.bf16.mxu0 %v5723
  %6069 = vmatmul.mubr.bf16.gmra.mxu0 %v3812
  %v6070 = vpop.f32.mrf.mxu0
  %v6071 = vadd.f32 0.0, %v6070
  %v6072 = vpop.f32.mrf.mxu0
  %v6073 = vadd.f32 0.0, %v6072
  %v6074 = vpop.f32.mrf.mxu0
  %v6075 = vadd.f32 0.0, %v6074
  %v6076 = vpop.f32.mrf.mxu0
  %v6077 = vadd.f32 0.0, %v6076
  %6078 = vmatprep.mubr.bf16.mxu0 %v5726
  %6079 = vmatmul.mubr.bf16.gmra.mxu0 %v3814
  %v6080 = vpop.f32.mrf.mxu0
  %v6081 = vadd.f32 0.0, %v6080
  %v6082 = vpop.f32.mrf.mxu0
  %v6083 = vadd.f32 0.0, %v6082
  %v6084 = vpop.f32.mrf.mxu0
  %v6085 = vadd.f32 0.0, %v6084
  %v6086 = vpop.f32.mrf.mxu0
  %v6087 = vadd.f32 0.0, %v6086
  %6088 = vmatprep.mubr.bf16.mxu0 %v5729
  %6089 = vmatmul.mubr.bf16.gmra.mxu0 %v3816
  %v6090 = vpop.f32.mrf.mxu0
  %v6091 = vadd.f32 0.0, %v6090
  %v6092 = vpop.f32.mrf.mxu0
  %v6093 = vadd.f32 0.0, %v6092
  %v6094 = vpop.f32.mrf.mxu0
  %v6095 = vadd.f32 0.0, %v6094
  %v6096 = vpop.f32.mrf.mxu0
  %v6097 = vadd.f32 0.0, %v6096
  %6098 = vdwg.mxu0
  %6099 = vmatprep.subr.bf16.mxu0 %v5277
  %6100 = vmatpush1.bf16.msra.mxu0 %v5276
  %6101 = vmatprep.subr.bf16.mxu0 %v5252
  %6102 = vmatpush1.bf16.msra.mxu0 %v5251
  %6103 = vmatprep.subr.bf16.mxu0 %v5227
  %6104 = vmatpush1.bf16.msra.mxu0 %v5226
  %6105 = vmatprep.subr.bf16.mxu0 %v5202
  %6106 = vmatpush1.bf16.msra.mxu0 %v5201
  %6107 = vmatprep.subr.bf16.mxu0 %v5177
  %6108 = vmatpush1.bf16.msra.mxu0 %v5176
  %6109 = vmatprep.subr.bf16.mxu0 %v5152
  %6110 = vmatpush1.bf16.msra.mxu0 %v5151
  %6111 = vmatprep.subr.bf16.mxu0 %v5127
  %6112 = vmatpush1.bf16.msra.mxu0 %v5126
  %6113 = vmatprep.subr.bf16.mxu0 %v5102
  %6114 = vmatpush1.bf16.msra.mxu0 %v5101
  %6115 = vmatprep.subr.bf16.mxu0 0
  %6116 = vmatpush2.bf16.msra.mxu0 0
  %6117 = vmatprep.subr.bf16.mxu0 0
  %6118 = vmatpush2.bf16.msra.mxu0 0
  %6119 = vmatprep.subr.bf16.mxu0 0
  %6120 = vmatpush2.bf16.msra.mxu0 0
  %6121 = vmatprep.subr.bf16.mxu0 %v5760
  %6122 = vmatpush2.bf16.msra.mxu0 %v5757
  %6123 = vmatprep.subr.bf16.mxu0 %v5377
  %6124 = vmatpush2.bf16.msra.mxu0 %v5376
  %6125 = vmatprep.subr.bf16.mxu0 %v5352
  %6126 = vmatpush2.bf16.msra.mxu0 %v5351
  %6127 = vmatprep.subr.bf16.mxu0 %v5327
  %6128 = vmatpush2.bf16.msra.mxu0 %v5326
  %6129 = vmatprep.subr.bf16.mxu0 %v5302
  %6130 = vmatpush2.bf16.msra.mxu0 %v5301
  %6131 = vmatprep.mubr.bf16.mxu0 %v5720
  %6132 = vmatmul.mubr.bf16.gmra.mxu0 %v3810
  %v6133 = vpop.f32.mrf.mxu0
  %v6134 = vadd.f32 0.0, %v6133
  %v6135 = vpop.f32.mrf.mxu0
  %v6136 = vadd.f32 0.0, %v6135
  %v6137 = vpop.f32.mrf.mxu0
  %v6138 = vadd.f32 0.0, %v6137
  %v6139 = vpop.f32.mrf.mxu0
  %v6140 = vadd.f32 0.0, %v6139
  %6141 = vmatprep.mubr.bf16.mxu0 %v5723
  %6142 = vmatmul.mubr.bf16.gmra.mxu0 %v3812
  %v6143 = vpop.f32.mrf.mxu0
  %v6144 = vadd.f32 0.0, %v6143
  %v6145 = vpop.f32.mrf.mxu0
  %v6146 = vadd.f32 0.0, %v6145
  %v6147 = vpop.f32.mrf.mxu0
  %v6148 = vadd.f32 0.0, %v6147
  %v6149 = vpop.f32.mrf.mxu0
  %v6150 = vadd.f32 0.0, %v6149
  %6151 = vmatprep.mubr.bf16.mxu0 %v5726
  %6152 = vmatmul.mubr.bf16.gmra.mxu0 %v3814
  %v6153 = vpop.f32.mrf.mxu0
  %v6154 = vadd.f32 0.0, %v6153
  %v6155 = vpop.f32.mrf.mxu0
  %v6156 = vadd.f32 0.0, %v6155
  %v6157 = vpop.f32.mrf.mxu0
  %v6158 = vadd.f32 0.0, %v6157
  %v6159 = vpop.f32.mrf.mxu0
  %v6160 = vadd.f32 0.0, %v6159
  %6161 = vmatprep.mubr.bf16.mxu0 %v5729
  %6162 = vmatmul.mubr.bf16.gmra.mxu0 %v3816
  %v6163 = vpop.f32.mrf.mxu0
  %v6164 = vadd.f32 0.0, %v6163
  %v6165 = vpop.f32.mrf.mxu0
  %v6166 = vadd.f32 0.0, %v6165
  %v6167 = vpop.f32.mrf.mxu0
  %v6168 = vadd.f32 0.0, %v6167
  %v6169 = vpop.f32.mrf.mxu0
  %v6170 = vadd.f32 0.0, %v6169
  %6171 = vdwg.mxu0
  %6172 = vmatprep.subr.bf16.mxu0 %v5279
  %6173 = vmatpush1.bf16.msra.mxu0 %v5278
  %6174 = vmatprep.subr.bf16.mxu0 %v5254
  %6175 = vmatpush1.bf16.msra.mxu0 %v5253
  %6176 = vmatprep.subr.bf16.mxu0 %v5229
  %6177 = vmatpush1.bf16.msra.mxu0 %v5228
  %6178 = vmatprep.subr.bf16.mxu0 %v5204
  %6179 = vmatpush1.bf16.msra.mxu0 %v5203
  %6180 = vmatprep.subr.bf16.mxu0 %v5179
  %6181 = vmatpush1.bf16.msra.mxu0 %v5178
  %6182 = vmatprep.subr.bf16.mxu0 %v5154
  %6183 = vmatpush1.bf16.msra.mxu0 %v5153
  %6184 = vmatprep.subr.bf16.mxu0 %v5129
  %6185 = vmatpush1.bf16.msra.mxu0 %v5128
  %6186 = vmatprep.subr.bf16.mxu0 %v5104
  %6187 = vmatpush1.bf16.msra.mxu0 %v5103
  %6188 = vmatprep.subr.bf16.mxu0 0
  %6189 = vmatpush2.bf16.msra.mxu0 0
  %6190 = vmatprep.subr.bf16.mxu0 0
  %6191 = vmatpush2.bf16.msra.mxu0 0
  %6192 = vmatprep.subr.bf16.mxu0 0
  %6193 = vmatpush2.bf16.msra.mxu0 0
  %6194 = vmatprep.subr.bf16.mxu0 %v5766
  %6195 = vmatpush2.bf16.msra.mxu0 %v5763
  %6196 = vmatprep.subr.bf16.mxu0 %v5379
  %6197 = vmatpush2.bf16.msra.mxu0 %v5378
  %6198 = vmatprep.subr.bf16.mxu0 %v5354
  %6199 = vmatpush2.bf16.msra.mxu0 %v5353
  %6200 = vmatprep.subr.bf16.mxu0 %v5329
  %6201 = vmatpush2.bf16.msra.mxu0 %v5328
  %6202 = vmatprep.subr.bf16.mxu0 %v5304
  %6203 = vmatpush2.bf16.msra.mxu0 %v5303
  %6204 = vmatprep.mubr.bf16.mxu0 %v5720
  %6205 = vmatmul.mubr.bf16.gmra.mxu0 %v3810
  %v6206 = vpop.f32.mrf.mxu0
  %v6207 = vadd.f32 0.0, %v6206
  %v6208 = vpop.f32.mrf.mxu0
  %v6209 = vadd.f32 0.0, %v6208
  %v6210 = vpop.f32.mrf.mxu0
  %v6211 = vadd.f32 0.0, %v6210
  %v6212 = vpop.f32.mrf.mxu0
  %v6213 = vadd.f32 0.0, %v6212
  %6214 = vmatprep.mubr.bf16.mxu0 %v5723
  %6215 = vmatmul.mubr.bf16.gmra.mxu0 %v3812
  %v6216 = vpop.f32.mrf.mxu0
  %v6217 = vadd.f32 0.0, %v6216
  %v6218 = vpop.f32.mrf.mxu0
  %v6219 = vadd.f32 0.0, %v6218
  %v6220 = vpop.f32.mrf.mxu0
  %v6221 = vadd.f32 0.0, %v6220
  %v6222 = vpop.f32.mrf.mxu0
  %v6223 = vadd.f32 0.0, %v6222
  %6224 = vmatprep.mubr.bf16.mxu0 %v5726
  %6225 = vmatmul.mubr.bf16.gmra.mxu0 %v3814
  %v6226 = vpop.f32.mrf.mxu0
  %v6227 = vadd.f32 0.0, %v6226
  %v6228 = vpop.f32.mrf.mxu0
  %v6229 = vadd.f32 0.0, %v6228
  %v6230 = vpop.f32.mrf.mxu0
  %v6231 = vadd.f32 0.0, %v6230
  %v6232 = vpop.f32.mrf.mxu0
  %v6233 = vadd.f32 0.0, %v6232
  %6234 = vmatprep.mubr.bf16.mxu0 %v5729
  %6235 = vmatmul.mubr.bf16.gmra.mxu0 %v3816
  %v6236 = vpop.f32.mrf.mxu0
  %v6237 = vadd.f32 0.0, %v6236
  %v6238 = vpop.f32.mrf.mxu0
  %v6239 = vadd.f32 0.0, %v6238
  %v6240 = vpop.f32.mrf.mxu0
  %v6241 = vadd.f32 0.0, %v6240
  %v6242 = vpop.f32.mrf.mxu0
  %v6243 = vadd.f32 0.0, %v6242
  %6244 = vdwg.mxu0
  %6245 = vmatprep.subr.bf16.mxu0 %v5281
  %6246 = vmatpush1.bf16.msra.mxu0 %v5280
  %6247 = vmatprep.subr.bf16.mxu0 %v5256
  %6248 = vmatpush1.bf16.msra.mxu0 %v5255
  %6249 = vmatprep.subr.bf16.mxu0 %v5231
  %6250 = vmatpush1.bf16.msra.mxu0 %v5230
  %6251 = vmatprep.subr.bf16.mxu0 %v5206
  %6252 = vmatpush1.bf16.msra.mxu0 %v5205
  %6253 = vmatprep.subr.bf16.mxu0 %v5181
  %6254 = vmatpush1.bf16.msra.mxu0 %v5180
  %6255 = vmatprep.subr.bf16.mxu0 %v5156
  %6256 = vmatpush1.bf16.msra.mxu0 %v5155
  %6257 = vmatprep.subr.bf16.mxu0 %v5131
  %6258 = vmatpush1.bf16.msra.mxu0 %v5130
  %6259 = vmatprep.subr.bf16.mxu0 %v5106
  %6260 = vmatpush1.bf16.msra.mxu0 %v5105
  %6261 = vmatprep.subr.bf16.mxu0 0
  %6262 = vmatpush2.bf16.msra.mxu0 0
  %6263 = vmatprep.subr.bf16.mxu0 0
  %6264 = vmatpush2.bf16.msra.mxu0 0
  %6265 = vmatprep.subr.bf16.mxu0 0
  %6266 = vmatpush2.bf16.msra.mxu0 0
  %6267 = vmatprep.subr.bf16.mxu0 %v5772
  %6268 = vmatpush2.bf16.msra.mxu0 %v5769
  %6269 = vmatprep.subr.bf16.mxu0 %v5381
  %6270 = vmatpush2.bf16.msra.mxu0 %v5380
  %6271 = vmatprep.subr.bf16.mxu0 %v5356
  %6272 = vmatpush2.bf16.msra.mxu0 %v5355
  %6273 = vmatprep.subr.bf16.mxu0 %v5331
  %6274 = vmatpush2.bf16.msra.mxu0 %v5330
  %6275 = vmatprep.subr.bf16.mxu0 %v5306
  %6276 = vmatpush2.bf16.msra.mxu0 %v5305
  %6277 = vmatprep.mubr.bf16.mxu0 %v5720
  %6278 = vmatmul.mubr.bf16.gmra.mxu0 %v3810
  %v6279 = vpop.f32.mrf.mxu0
  %v6280 = vadd.f32 0.0, %v6279
  %v6281 = vpop.f32.mrf.mxu0
  %v6282 = vadd.f32 0.0, %v6281
  %v6283 = vpop.f32.mrf.mxu0
  %v6284 = vadd.f32 0.0, %v6283
  %v6285 = vpop.f32.mrf.mxu0
  %v6286 = vadd.f32 0.0, %v6285
  %6287 = vmatprep.mubr.bf16.mxu0 %v5723
  %6288 = vmatmul.mubr.bf16.gmra.mxu0 %v3812
  %v6289 = vpop.f32.mrf.mxu0
  %v6290 = vadd.f32 0.0, %v6289
  %v6291 = vpop.f32.mrf.mxu0
  %v6292 = vadd.f32 0.0, %v6291
  %v6293 = vpop.f32.mrf.mxu0
  %v6294 = vadd.f32 0.0, %v6293
  %v6295 = vpop.f32.mrf.mxu0
  %v6296 = vadd.f32 0.0, %v6295
  %6297 = vmatprep.mubr.bf16.mxu0 %v5726
  %6298 = vmatmul.mubr.bf16.gmra.mxu0 %v3814
  %v6299 = vpop.f32.mrf.mxu0
  %v6300 = vadd.f32 0.0, %v6299
  %v6301 = vpop.f32.mrf.mxu0
  %v6302 = vadd.f32 0.0, %v6301
  %v6303 = vpop.f32.mrf.mxu0
  %v6304 = vadd.f32 0.0, %v6303
  %v6305 = vpop.f32.mrf.mxu0
  %v6306 = vadd.f32 0.0, %v6305
  %6307 = vmatprep.mubr.bf16.mxu0 %v5729
  %6308 = vmatmul.mubr.bf16.gmra.mxu0 %v3816
  %v6309 = vpop.f32.mrf.mxu0
  %v6310 = vadd.f32 0.0, %v6309
  %v6311 = vpop.f32.mrf.mxu0
  %v6312 = vadd.f32 0.0, %v6311
  %v6313 = vpop.f32.mrf.mxu0
  %v6314 = vadd.f32 0.0, %v6313
  %v6315 = vpop.f32.mrf.mxu0
  %v6316 = vadd.f32 0.0, %v6315
  %6317 = vdwg.mxu0
  %6318 = vmatprep.subr.bf16.mxu0 %v5283
  %6319 = vmatpush1.bf16.msra.mxu0 %v5282
  %6320 = vmatprep.subr.bf16.mxu0 %v5258
  %6321 = vmatpush1.bf16.msra.mxu0 %v5257
  %6322 = vmatprep.subr.bf16.mxu0 %v5233
  %6323 = vmatpush1.bf16.msra.mxu0 %v5232
  %6324 = vmatprep.subr.bf16.mxu0 %v5208
  %6325 = vmatpush1.bf16.msra.mxu0 %v5207
  %6326 = vmatprep.subr.bf16.mxu0 %v5183
  %6327 = vmatpush1.bf16.msra.mxu0 %v5182
  %6328 = vmatprep.subr.bf16.mxu0 %v5158
  %6329 = vmatpush1.bf16.msra.mxu0 %v5157
  %6330 = vmatprep.subr.bf16.mxu0 %v5133
  %6331 = vmatpush1.bf16.msra.mxu0 %v5132
  %6332 = vmatprep.subr.bf16.mxu0 %v5108
  %6333 = vmatpush1.bf16.msra.mxu0 %v5107
  %6334 = vmatprep.subr.bf16.mxu0 0
  %6335 = vmatpush2.bf16.msra.mxu0 0
  %6336 = vmatprep.subr.bf16.mxu0 0
  %6337 = vmatpush2.bf16.msra.mxu0 0
  %6338 = vmatprep.subr.bf16.mxu0 0
  %6339 = vmatpush2.bf16.msra.mxu0 0
  %6340 = vmatprep.subr.bf16.mxu0 %v5778
  %6341 = vmatpush2.bf16.msra.mxu0 %v5775
  %6342 = vmatprep.subr.bf16.mxu0 %v5383
  %6343 = vmatpush2.bf16.msra.mxu0 %v5382
  %6344 = vmatprep.subr.bf16.mxu0 %v5358
  %6345 = vmatpush2.bf16.msra.mxu0 %v5357
  %6346 = vmatprep.subr.bf16.mxu0 %v5333
  %6347 = vmatpush2.bf16.msra.mxu0 %v5332
  %6348 = vmatprep.subr.bf16.mxu0 %v5308
  %6349 = vmatpush2.bf16.msra.mxu0 %v5307
  %6350 = vmatprep.mubr.bf16.mxu0 %v5720
  %6351 = vmatmul.mubr.bf16.gmra.mxu0 %v3810
  %v6352 = vpop.f32.mrf.mxu0
  %v6353 = vadd.f32 0.0, %v6352
  %v6354 = vpop.f32.mrf.mxu0
  %v6355 = vadd.f32 0.0, %v6354
  %v6356 = vpop.f32.mrf.mxu0
  %v6357 = vadd.f32 0.0, %v6356
  %v6358 = vpop.f32.mrf.mxu0
  %v6359 = vadd.f32 0.0, %v6358
  %6360 = vmatprep.mubr.bf16.mxu0 %v5723
  %6361 = vmatmul.mubr.bf16.gmra.mxu0 %v3812
  %v6362 = vpop.f32.mrf.mxu0
  %v6363 = vadd.f32 0.0, %v6362
  %v6364 = vpop.f32.mrf.mxu0
  %v6365 = vadd.f32 0.0, %v6364
  %v6366 = vpop.f32.mrf.mxu0
  %v6367 = vadd.f32 0.0, %v6366
  %v6368 = vpop.f32.mrf.mxu0
  %v6369 = vadd.f32 0.0, %v6368
  %6370 = vmatprep.mubr.bf16.mxu0 %v5726
  %6371 = vmatmul.mubr.bf16.gmra.mxu0 %v3814
  %v6372 = vpop.f32.mrf.mxu0
  %v6373 = vadd.f32 0.0, %v6372
  %v6374 = vpop.f32.mrf.mxu0
  %v6375 = vadd.f32 0.0, %v6374
  %v6376 = vpop.f32.mrf.mxu0
  %v6377 = vadd.f32 0.0, %v6376
  %v6378 = vpop.f32.mrf.mxu0
  %v6379 = vadd.f32 0.0, %v6378
  %6380 = vmatprep.mubr.bf16.mxu0 %v5729
  %6381 = vmatmul.mubr.bf16.gmra.mxu0 %v3816
  %v6382 = vpop.f32.mrf.mxu0
  %v6383 = vadd.f32 0.0, %v6382
  %v6384 = vpop.f32.mrf.mxu0
  %v6385 = vadd.f32 0.0, %v6384
  %v6386 = vpop.f32.mrf.mxu0
  %v6387 = vadd.f32 0.0, %v6386
  %v6388 = vpop.f32.mrf.mxu0
  %v6389 = vadd.f32 0.0, %v6388
  %6390 = vdwg.mxu0
  %6391 = vmatprep.subr.bf16.mxu0 %v5285
  %6392 = vmatpush1.bf16.msra.mxu0 %v5284
  %6393 = vmatprep.subr.bf16.mxu0 %v5260
  %6394 = vmatpush1.bf16.msra.mxu0 %v5259
  %6395 = vmatprep.subr.bf16.mxu0 %v5235
  %6396 = vmatpush1.bf16.msra.mxu0 %v5234
  %6397 = vmatprep.subr.bf16.mxu0 %v5210
  %6398 = vmatpush1.bf16.msra.mxu0 %v5209
  %6399 = vmatprep.subr.bf16.mxu0 %v5185
  %6400 = vmatpush1.bf16.msra.mxu0 %v5184
  %6401 = vmatprep.subr.bf16.mxu0 %v5160
  %6402 = vmatpush1.bf16.msra.mxu0 %v5159
  %6403 = vmatprep.subr.bf16.mxu0 %v5135
  %6404 = vmatpush1.bf16.msra.mxu0 %v5134
  %6405 = vmatprep.subr.bf16.mxu0 %v5110
  %6406 = vmatpush1.bf16.msra.mxu0 %v5109
  %6407 = vmatprep.subr.bf16.mxu0 0
  %6408 = vmatpush2.bf16.msra.mxu0 0
  %6409 = vmatprep.subr.bf16.mxu0 0
  %6410 = vmatpush2.bf16.msra.mxu0 0
  %6411 = vmatprep.subr.bf16.mxu0 0
  %6412 = vmatpush2.bf16.msra.mxu0 0
  %6413 = vmatprep.subr.bf16.mxu0 %v5784
  %6414 = vmatpush2.bf16.msra.mxu0 %v5781
  %6415 = vmatprep.subr.bf16.mxu0 %v5385
  %6416 = vmatpush2.bf16.msra.mxu0 %v5384
  %6417 = vmatprep.subr.bf16.mxu0 %v5360
  %6418 = vmatpush2.bf16.msra.mxu0 %v5359
  %6419 = vmatprep.subr.bf16.mxu0 %v5335
  %6420 = vmatpush2.bf16.msra.mxu0 %v5334
  %6421 = vmatprep.subr.bf16.mxu0 %v5310
  %6422 = vmatpush2.bf16.msra.mxu0 %v5309
  %6423 = vmatprep.mubr.bf16.mxu0 %v5720
  %6424 = vmatmul.mubr.bf16.gmra.mxu0 %v3810
  %v6425 = vpop.f32.mrf.mxu0
  %v6426 = vadd.f32 0.0, %v6425
  %v6427 = vpop.f32.mrf.mxu0
  %v6428 = vadd.f32 0.0, %v6427
  %v6429 = vpop.f32.mrf.mxu0
  %v6430 = vadd.f32 0.0, %v6429
  %v6431 = vpop.f32.mrf.mxu0
  %v6432 = vadd.f32 0.0, %v6431
  %6433 = vmatprep.mubr.bf16.mxu0 %v5723
  %6434 = vmatmul.mubr.bf16.gmra.mxu0 %v3812
  %v6435 = vpop.f32.mrf.mxu0
  %v6436 = vadd.f32 0.0, %v6435
  %v6437 = vpop.f32.mrf.mxu0
  %v6438 = vadd.f32 0.0, %v6437
  %v6439 = vpop.f32.mrf.mxu0
  %v6440 = vadd.f32 0.0, %v6439
  %v6441 = vpop.f32.mrf.mxu0
  %v6442 = vadd.f32 0.0, %v6441
  %6443 = vmatprep.mubr.bf16.mxu0 %v5726
  %6444 = vmatmul.mubr.bf16.gmra.mxu0 %v3814
  %v6445 = vpop.f32.mrf.mxu0
  %v6446 = vadd.f32 0.0, %v6445
  %v6447 = vpop.f32.mrf.mxu0
  %v6448 = vadd.f32 0.0, %v6447
  %v6449 = vpop.f32.mrf.mxu0
  %v6450 = vadd.f32 0.0, %v6449
  %v6451 = vpop.f32.mrf.mxu0
  %v6452 = vadd.f32 0.0, %v6451
  %6453 = vmatprep.mubr.bf16.mxu0 %v5729
  %6454 = vmatmul.mubr.bf16.gmra.mxu0 %v3816
  %v6455 = vpop.f32.mrf.mxu0
  %v6456 = vadd.f32 0.0, %v6455
  %v6457 = vpop.f32.mrf.mxu0
  %v6458 = vadd.f32 0.0, %v6457
  %v6459 = vpop.f32.mrf.mxu0
  %v6460 = vadd.f32 0.0, %v6459
  %v6461 = vpop.f32.mrf.mxu0
  %v6462 = vadd.f32 0.0, %v6461
  %6463 = vdwg.mxu0
  %6464 = vmatprep.subr.bf16.mxu0 %v5287
  %6465 = vmatpush1.bf16.msra.mxu0 %v5286
  %6466 = vmatprep.subr.bf16.mxu0 %v5262
  %6467 = vmatpush1.bf16.msra.mxu0 %v5261
  %6468 = vmatprep.subr.bf16.mxu0 %v5237
  %6469 = vmatpush1.bf16.msra.mxu0 %v5236
  %6470 = vmatprep.subr.bf16.mxu0 %v5212
  %6471 = vmatpush1.bf16.msra.mxu0 %v5211
  %6472 = vmatprep.subr.bf16.mxu0 %v5187
  %6473 = vmatpush1.bf16.msra.mxu0 %v5186
  %6474 = vmatprep.subr.bf16.mxu0 %v5162
  %6475 = vmatpush1.bf16.msra.mxu0 %v5161
  %6476 = vmatprep.subr.bf16.mxu0 %v5137
  %6477 = vmatpush1.bf16.msra.mxu0 %v5136
  %6478 = vmatprep.subr.bf16.mxu0 %v5112
  %6479 = vmatpush1.bf16.msra.mxu0 %v5111
  %6480 = vmatprep.subr.bf16.mxu0 0
  %6481 = vmatpush2.bf16.msra.mxu0 0
  %6482 = vmatprep.subr.bf16.mxu0 0
  %6483 = vmatpush2.bf16.msra.mxu0 0
  %6484 = vmatprep.subr.bf16.mxu0 0
  %6485 = vmatpush2.bf16.msra.mxu0 0
  %6486 = vmatprep.subr.bf16.mxu0 %v5790
  %6487 = vmatpush2.bf16.msra.mxu0 %v5787
  %6488 = vmatprep.subr.bf16.mxu0 %v5387
  %6489 = vmatpush2.bf16.msra.mxu0 %v5386
  %6490 = vmatprep.subr.bf16.mxu0 %v5362
  %6491 = vmatpush2.bf16.msra.mxu0 %v5361
  %6492 = vmatprep.subr.bf16.mxu0 %v5337
  %6493 = vmatpush2.bf16.msra.mxu0 %v5336
  %6494 = vmatprep.subr.bf16.mxu0 %v5312
  %6495 = vmatpush2.bf16.msra.mxu0 %v5311
  %6496 = vmatprep.mubr.bf16.mxu0 %v5720
  %6497 = vmatmul.mubr.bf16.gmra.mxu0 %v3810
  %v6498 = vpop.f32.mrf.mxu0
  %v6499 = vadd.f32 0.0, %v6498
  %v6500 = vpop.f32.mrf.mxu0
  %v6501 = vadd.f32 0.0, %v6500
  %v6502 = vpop.f32.mrf.mxu0
  %v6503 = vadd.f32 0.0, %v6502
  %v6504 = vpop.f32.mrf.mxu0
  %v6505 = vadd.f32 0.0, %v6504
  %6506 = vmatprep.mubr.bf16.mxu0 %v5723
  %6507 = vmatmul.mubr.bf16.gmra.mxu0 %v3812
  %v6508 = vpop.f32.mrf.mxu0
  %v6509 = vadd.f32 0.0, %v6508
  %v6510 = vpop.f32.mrf.mxu0
  %v6511 = vadd.f32 0.0, %v6510
  %v6512 = vpop.f32.mrf.mxu0
  %v6513 = vadd.f32 0.0, %v6512
  %v6514 = vpop.f32.mrf.mxu0
  %v6515 = vadd.f32 0.0, %v6514
  %6516 = vmatprep.mubr.bf16.mxu0 %v5726
  %6517 = vmatmul.mubr.bf16.gmra.mxu0 %v3814
  %v6518 = vpop.f32.mrf.mxu0
  %v6519 = vadd.f32 0.0, %v6518
  %v6520 = vpop.f32.mrf.mxu0
  %v6521 = vadd.f32 0.0, %v6520
  %v6522 = vpop.f32.mrf.mxu0
  %v6523 = vadd.f32 0.0, %v6522
  %v6524 = vpop.f32.mrf.mxu0
  %v6525 = vadd.f32 0.0, %v6524
  %6526 = vmatprep.mubr.bf16.mxu0 %v5729
  %6527 = vmatmul.mubr.bf16.gmra.mxu0 %v3816
  %v6528 = vpop.f32.mrf.mxu0
  %v6529 = vadd.f32 0.0, %v6528
  %v6530 = vpop.f32.mrf.mxu0
  %v6531 = vadd.f32 0.0, %v6530
  %v6532 = vpop.f32.mrf.mxu0
  %v6533 = vadd.f32 0.0, %v6532
  %v6534 = vpop.f32.mrf.mxu0
  %v6535 = vadd.f32 0.0, %v6534
  %6536 = vdwg.mxu0
  %6537 = vmatprep.subr.bf16.mxu0 %v5289
  %6538 = vmatpush1.bf16.msra.mxu0 %v5288
  %6539 = vmatprep.subr.bf16.mxu0 %v5264
  %6540 = vmatpush1.bf16.msra.mxu0 %v5263
  %6541 = vmatprep.subr.bf16.mxu0 %v5239
  %6542 = vmatpush1.bf16.msra.mxu0 %v5238
  %6543 = vmatprep.subr.bf16.mxu0 %v5214
  %6544 = vmatpush1.bf16.msra.mxu0 %v5213
  %6545 = vmatprep.subr.bf16.mxu0 %v5189
  %6546 = vmatpush1.bf16.msra.mxu0 %v5188
  %6547 = vmatprep.subr.bf16.mxu0 %v5164
  %6548 = vmatpush1.bf16.msra.mxu0 %v5163
  %6549 = vmatprep.subr.bf16.mxu0 %v5139
  %6550 = vmatpush1.bf16.msra.mxu0 %v5138
  %6551 = vmatprep.subr.bf16.mxu0 %v5114
  %6552 = vmatpush1.bf16.msra.mxu0 %v5113
  %6553 = vmatprep.subr.bf16.mxu0 0
  %6554 = vmatpush2.bf16.msra.mxu0 0
  %6555 = vmatprep.subr.bf16.mxu0 0
  %6556 = vmatpush2.bf16.msra.mxu0 0
  %6557 = vmatprep.subr.bf16.mxu0 0
  %6558 = vmatpush2.bf16.msra.mxu0 0
  %6559 = vmatprep.subr.bf16.mxu0 %v5796
  %6560 = vmatpush2.bf16.msra.mxu0 %v5793
  %6561 = vmatprep.subr.bf16.mxu0 %v5389
  %6562 = vmatpush2.bf16.msra.mxu0 %v5388
  %6563 = vmatprep.subr.bf16.mxu0 %v5364
  %6564 = vmatpush2.bf16.msra.mxu0 %v5363
  %6565 = vmatprep.subr.bf16.mxu0 %v5339
  %6566 = vmatpush2.bf16.msra.mxu0 %v5338
  %6567 = vmatprep.subr.bf16.mxu0 %v5314
  %6568 = vmatpush2.bf16.msra.mxu0 %v5313
  %6569 = vmatprep.mubr.bf16.mxu0 %v5720
  %6570 = vmatmul.mubr.bf16.gmra.mxu0 %v3810
  %v6571 = vpop.f32.mrf.mxu0
  %v6572 = vadd.f32 0.0, %v6571
  %v6573 = vpop.f32.mrf.mxu0
  %v6574 = vadd.f32 0.0, %v6573
  %v6575 = vpop.f32.mrf.mxu0
  %v6576 = vadd.f32 0.0, %v6575
  %v6577 = vpop.f32.mrf.mxu0
  %v6578 = vadd.f32 0.0, %v6577
  %6579 = vmatprep.mubr.bf16.mxu0 %v5723
  %6580 = vmatmul.mubr.bf16.gmra.mxu0 %v3812
  %v6581 = vpop.f32.mrf.mxu0
  %v6582 = vadd.f32 0.0, %v6581
  %v6583 = vpop.f32.mrf.mxu0
  %v6584 = vadd.f32 0.0, %v6583
  %v6585 = vpop.f32.mrf.mxu0
  %v6586 = vadd.f32 0.0, %v6585
  %v6587 = vpop.f32.mrf.mxu0
  %v6588 = vadd.f32 0.0, %v6587
  %6589 = vmatprep.mubr.bf16.mxu0 %v5726
  %6590 = vmatmul.mubr.bf16.gmra.mxu0 %v3814
  %v6591 = vpop.f32.mrf.mxu0
  %v6592 = vadd.f32 0.0, %v6591
  %v6593 = vpop.f32.mrf.mxu0
  %v6594 = vadd.f32 0.0, %v6593
  %v6595 = vpop.f32.mrf.mxu0
  %v6596 = vadd.f32 0.0, %v6595
  %v6597 = vpop.f32.mrf.mxu0
  %v6598 = vadd.f32 0.0, %v6597
  %6599 = vmatprep.mubr.bf16.mxu0 %v5729
  %6600 = vmatmul.mubr.bf16.gmra.mxu0 %v3816
  %v6601 = vpop.f32.mrf.mxu0
  %v6602 = vadd.f32 0.0, %v6601
  %v6603 = vpop.f32.mrf.mxu0
  %v6604 = vadd.f32 0.0, %v6603
  %v6605 = vpop.f32.mrf.mxu0
  %v6606 = vadd.f32 0.0, %v6605
  %v6607 = vpop.f32.mrf.mxu0
  %v6608 = vadd.f32 0.0, %v6607
  %6609 = vdwg.mxu0
  %6610 = vmatprep.subr.bf16.mxu0 %v5291
  %6611 = vmatpush1.bf16.msra.mxu0 %v5290
  %6612 = vmatprep.subr.bf16.mxu0 %v5266
  %6613 = vmatpush1.bf16.msra.mxu0 %v5265
  %6614 = vmatprep.subr.bf16.mxu0 %v5241
  %6615 = vmatpush1.bf16.msra.mxu0 %v5240
  %6616 = vmatprep.subr.bf16.mxu0 %v5216
  %6617 = vmatpush1.bf16.msra.mxu0 %v5215
  %6618 = vmatprep.subr.bf16.mxu0 %v5191
  %6619 = vmatpush1.bf16.msra.mxu0 %v5190
  %6620 = vmatprep.subr.bf16.mxu0 %v5166
  %6621 = vmatpush1.bf16.msra.mxu0 %v5165
  %6622 = vmatprep.subr.bf16.mxu0 %v5141
  %6623 = vmatpush1.bf16.msra.mxu0 %v5140
  %6624 = vmatprep.subr.bf16.mxu0 %v5116
  %6625 = vmatpush1.bf16.msra.mxu0 %v5115
  %6626 = vmatprep.subr.bf16.mxu0 0
  %6627 = vmatpush2.bf16.msra.mxu0 0
  %6628 = vmatprep.subr.bf16.mxu0 0
  %6629 = vmatpush2.bf16.msra.mxu0 0
  %6630 = vmatprep.subr.bf16.mxu0 0
  %6631 = vmatpush2.bf16.msra.mxu0 0
  %6632 = vmatprep.subr.bf16.mxu0 %v5802
  %6633 = vmatpush2.bf16.msra.mxu0 %v5799
  %6634 = vmatprep.subr.bf16.mxu0 %v5391
  %6635 = vmatpush2.bf16.msra.mxu0 %v5390
  %6636 = vmatprep.subr.bf16.mxu0 %v5366
  %6637 = vmatpush2.bf16.msra.mxu0 %v5365
  %6638 = vmatprep.subr.bf16.mxu0 %v5341
  %6639 = vmatpush2.bf16.msra.mxu0 %v5340
  %6640 = vmatprep.subr.bf16.mxu0 %v5316
  %6641 = vmatpush2.bf16.msra.mxu0 %v5315
  %6642 = vmatprep.mubr.bf16.mxu0 %v5720
  %6643 = vmatmul.mubr.bf16.gmra.mxu0 %v3810
  %v6644 = vpop.f32.mrf.mxu0
  %v6645 = vadd.f32 0.0, %v6644
  %v6646 = vpop.f32.mrf.mxu0
  %v6647 = vadd.f32 0.0, %v6646
  %v6648 = vpop.f32.mrf.mxu0
  %v6649 = vadd.f32 0.0, %v6648
  %v6650 = vpop.f32.mrf.mxu0
  %v6651 = vadd.f32 0.0, %v6650
  %6652 = vmatprep.mubr.bf16.mxu0 %v5723
  %6653 = vmatmul.mubr.bf16.gmra.mxu0 %v3812
  %v6654 = vpop.f32.mrf.mxu0
  %v6655 = vadd.f32 0.0, %v6654
  %v6656 = vpop.f32.mrf.mxu0
  %v6657 = vadd.f32 0.0, %v6656
  %v6658 = vpop.f32.mrf.mxu0
  %v6659 = vadd.f32 0.0, %v6658
  %v6660 = vpop.f32.mrf.mxu0
  %v6661 = vadd.f32 0.0, %v6660
  %6662 = vmatprep.mubr.bf16.mxu0 %v5726
  %6663 = vmatmul.mubr.bf16.gmra.mxu0 %v3814
  %v6664 = vpop.f32.mrf.mxu0
  %v6665 = vadd.f32 0.0, %v6664
  %v6666 = vpop.f32.mrf.mxu0
  %v6667 = vadd.f32 0.0, %v6666
  %v6668 = vpop.f32.mrf.mxu0
  %v6669 = vadd.f32 0.0, %v6668
  %v6670 = vpop.f32.mrf.mxu0
  %v6671 = vadd.f32 0.0, %v6670
  %6672 = vmatprep.mubr.bf16.mxu0 %v5729
  %6673 = vmatmul.mubr.bf16.gmra.mxu0 %v3816
  %v6674 = vpop.f32.mrf.mxu0
  %v6675 = vadd.f32 0.0, %v6674
  %v6676 = vpop.f32.mrf.mxu0
  %v6677 = vadd.f32 0.0, %v6676
  %v6678 = vpop.f32.mrf.mxu0
  %v6679 = vadd.f32 0.0, %v6678
  %v6680 = vpop.f32.mrf.mxu0
  %v6681 = vadd.f32 0.0, %v6680
  %6682 = vdwg.mxu0
  %6683 = vmatprep.subr.bf16.mxu0 0
  %6684 = vmatpush1.bf16.msra.mxu0 %v5292
  %6685 = vmatprep.subr.bf16.mxu0 0
  %6686 = vmatpush1.bf16.msra.mxu0 %v5267
  %6687 = vmatprep.subr.bf16.mxu0 0
  %6688 = vmatpush1.bf16.msra.mxu0 %v5242
  %6689 = vmatprep.subr.bf16.mxu0 0
  %6690 = vmatpush1.bf16.msra.mxu0 %v5217
  %6691 = vmatprep.subr.bf16.mxu0 0
  %6692 = vmatpush1.bf16.msra.mxu0 %v5192
  %6693 = vmatprep.subr.bf16.mxu0 0
  %6694 = vmatpush1.bf16.msra.mxu0 %v5167
  %6695 = vmatprep.subr.bf16.mxu0 0
  %6696 = vmatpush1.bf16.msra.mxu0 %v5142
  %6697 = vmatprep.subr.bf16.mxu0 0
  %6698 = vmatpush1.bf16.msra.mxu0 %v5117
  %6699 = vmatprep.subr.bf16.mxu0 0
  %6700 = vmatpush2.bf16.msra.mxu0 0
  %6701 = vmatprep.subr.bf16.mxu0 0
  %6702 = vmatpush2.bf16.msra.mxu0 0
  %6703 = vmatprep.subr.bf16.mxu0 0
  %6704 = vmatpush2.bf16.msra.mxu0 0
  %6705 = vmatprep.subr.bf16.mxu0 0
  %6706 = vmatpush2.bf16.msra.mxu0 %v5805
  %6707 = vmatprep.subr.bf16.mxu0 0
  %6708 = vmatpush2.bf16.msra.mxu0 %v5392
  %6709 = vmatprep.subr.bf16.mxu0 0
  %6710 = vmatpush2.bf16.msra.mxu0 %v5367
  %6711 = vmatprep.subr.bf16.mxu0 0
  %6712 = vmatpush2.bf16.msra.mxu0 %v5342
  %6713 = vmatprep.subr.bf16.mxu0 0
  %6714 = vmatpush2.bf16.msra.mxu0 %v5317
  %6715 = vmatprep.mubr.bf16.mxu0 %v5720
  %6716 = vmatmul.mubr.bf16.gmra.mxu0 %v3810
  %v6717 = vpop.f32.mrf.mxu0
  %v6718 = vadd.f32 0.0, %v6717
  %v6719 = vpop.f32.mrf.mxu0
  %v6720 = vpop.f32.mrf.mxu0
  %v6721 = vadd.f32 0.0, %v6720
  %v6722 = vpop.f32.mrf.mxu0
  %6723 = vmatprep.mubr.bf16.mxu0 %v5723
  %6724 = vmatmul.mubr.bf16.gmra.mxu0 %v3812
  %v6725 = vpop.f32.mrf.mxu0
  %v6726 = vadd.f32 0.0, %v6725
  %v6727 = vpop.f32.mrf.mxu0
  %v6728 = vpop.f32.mrf.mxu0
  %v6729 = vadd.f32 0.0, %v6728
  %v6730 = vpop.f32.mrf.mxu0
  %6731 = vmatprep.mubr.bf16.mxu0 %v5726
  %6732 = vmatmul.mubr.bf16.gmra.mxu0 %v3814
  %v6733 = vpop.f32.mrf.mxu0
  %v6734 = vadd.f32 0.0, %v6733
  %v6735 = vpop.f32.mrf.mxu0
  %v6736 = vpop.f32.mrf.mxu0
  %v6737 = vadd.f32 0.0, %v6736
  %v6738 = vpop.f32.mrf.mxu0
  %6739 = vmatprep.mubr.bf16.mxu0 %v5729
  %6740 = vmatmul.mubr.bf16.gmra.mxu0 %v3816
  %v6741 = vpop.f32.mrf.mxu0
  %v6742 = vadd.f32 0.0, %v6741
  %v6743 = vpop.f32.mrf.mxu0
  %v6744 = vpop.f32.mrf.mxu0
  %v6745 = vadd.f32 0.0, %v6744
  %v6746 = vpop.f32.mrf.mxu0
  %6747 = vdwg.mxu0
  %v6748 = vpack.c.bf16 %v5846, %v5842
  %v6749 = vpack.c.bf16 %v5848, %v5844
  %v6750 = vpack.c.bf16 %v5919, %v5915
  %v6751 = vpack.c.bf16 %v5921, %v5917
  %v6752 = vpack.c.bf16 %v5992, %v5988
  %v6753 = vpack.c.bf16 %v5994, %v5990
  %v6754 = vpack.c.bf16 %v6065, %v6061
  %v6755 = vpack.c.bf16 %v6067, %v6063
  %v6756 = vpack.c.bf16 %v6138, %v6134
  %v6757 = vpack.c.bf16 %v6140, %v6136
  %v6758 = vpack.c.bf16 %v6211, %v6207
  %v6759 = vpack.c.bf16 %v6213, %v6209
  %v6760 = vpack.c.bf16 %v6284, %v6280
  %v6761 = vpack.c.bf16 %v6286, %v6282
  %v6762 = vpack.c.bf16 %v6357, %v6353
  %v6763 = vpack.c.bf16 %v6359, %v6355
  %v6764 = vpack.c.bf16 %v6430, %v6426
  %v6765 = vpack.c.bf16 %v6432, %v6428
  %v6766 = vpack.c.bf16 %v6503, %v6499
  %v6767 = vpack.c.bf16 %v6505, %v6501
  %v6768 = vpack.c.bf16 %v6576, %v6572
  %v6769 = vpack.c.bf16 %v6578, %v6574
  %v6770 = vpack.c.bf16 %v6649, %v6645
  %v6771 = vpack.c.bf16 %v6651, %v6647
  %v6772 = vpack.c.bf16 %v6721, %v6718
  %v6773 = vpack.c.bf16 %v5856, %v5852
  %v6774 = vpack.c.bf16 %v5858, %v5854
  %v6775 = vpack.c.bf16 %v5929, %v5925
  %v6776 = vpack.c.bf16 %v5931, %v5927
  %v6777 = vpack.c.bf16 %v6002, %v5998
  %v6778 = vpack.c.bf16 %v6004, %v6000
  %v6779 = vpack.c.bf16 %v6075, %v6071
  %v6780 = vpack.c.bf16 %v6077, %v6073
  %v6781 = vpack.c.bf16 %v6148, %v6144
  %v6782 = vpack.c.bf16 %v6150, %v6146
  %v6783 = vpack.c.bf16 %v6221, %v6217
  %v6784 = vpack.c.bf16 %v6223, %v6219
  %v6785 = vpack.c.bf16 %v6294, %v6290
  %v6786 = vpack.c.bf16 %v6296, %v6292
  %v6787 = vpack.c.bf16 %v6367, %v6363
  %v6788 = vpack.c.bf16 %v6369, %v6365
  %v6789 = vpack.c.bf16 %v6440, %v6436
  %v6790 = vpack.c.bf16 %v6442, %v6438
  %v6791 = vpack.c.bf16 %v6513, %v6509
  %v6792 = vpack.c.bf16 %v6515, %v6511
  %v6793 = vpack.c.bf16 %v6586, %v6582
  %v6794 = vpack.c.bf16 %v6588, %v6584
  %v6795 = vpack.c.bf16 %v6659, %v6655
  %v6796 = vpack.c.bf16 %v6661, %v6657
  %v6797 = vpack.c.bf16 %v6729, %v6726
  %v6798 = vpack.c.bf16 %v5866, %v5862
  %v6799 = vpack.c.bf16 %v5868, %v5864
  %v6800 = vpack.c.bf16 %v5939, %v5935
  %v6801 = vpack.c.bf16 %v5941, %v5937
  %v6802 = vpack.c.bf16 %v6012, %v6008
  %v6803 = vpack.c.bf16 %v6014, %v6010
  %v6804 = vpack.c.bf16 %v6085, %v6081
  %v6805 = vpack.c.bf16 %v6087, %v6083
  %v6806 = vpack.c.bf16 %v6158, %v6154
  %v6807 = vpack.c.bf16 %v6160, %v6156
  %v6808 = vpack.c.bf16 %v6231, %v6227
  %v6809 = vpack.c.bf16 %v6233, %v6229
  %v6810 = vpack.c.bf16 %v6304, %v6300
  %v6811 = vpack.c.bf16 %v6306, %v6302
  %v6812 = vpack.c.bf16 %v6377, %v6373
  %v6813 = vpack.c.bf16 %v6379, %v6375
  %v6814 = vpack.c.bf16 %v6450, %v6446
  %v6815 = vpack.c.bf16 %v6452, %v6448
  %v6816 = vpack.c.bf16 %v6523, %v6519
  %v6817 = vpack.c.bf16 %v6525, %v6521
  %v6818 = vpack.c.bf16 %v6596, %v6592
  %v6819 = vpack.c.bf16 %v6598, %v6594
  %v6820 = vpack.c.bf16 %v6669, %v6665
  %v6821 = vpack.c.bf16 %v6671, %v6667
  %v6822 = vpack.c.bf16 %v6737, %v6734
  %v6823 = vpack.c.bf16 %v5876, %v5872
  %v6824 = vpack.c.bf16 %v5878, %v5874
  %v6825 = vpack.c.bf16 %v5949, %v5945
  %v6826 = vpack.c.bf16 %v5951, %v5947
  %v6827 = vpack.c.bf16 %v6022, %v6018
  %v6828 = vpack.c.bf16 %v6024, %v6020
  %v6829 = vpack.c.bf16 %v6095, %v6091
  %v6830 = vpack.c.bf16 %v6097, %v6093
  %v6831 = vpack.c.bf16 %v6168, %v6164
  %v6832 = vpack.c.bf16 %v6170, %v6166
  %v6833 = vpack.c.bf16 %v6241, %v6237
  %v6834 = vpack.c.bf16 %v6243, %v6239
  %v6835 = vpack.c.bf16 %v6314, %v6310
  %v6836 = vpack.c.bf16 %v6316, %v6312
  %v6837 = vpack.c.bf16 %v6387, %v6383
  %v6838 = vpack.c.bf16 %v6389, %v6385
  %v6839 = vpack.c.bf16 %v6460, %v6456
  %v6840 = vpack.c.bf16 %v6462, %v6458
  %v6841 = vpack.c.bf16 %v6533, %v6529
  %v6842 = vpack.c.bf16 %v6535, %v6531
  %v6843 = vpack.c.bf16 %v6606, %v6602
  %v6844 = vpack.c.bf16 %v6608, %v6604
  %v6845 = vpack.c.bf16 %v6679, %v6675
  %v6846 = vpack.c.bf16 %v6681, %v6677
  %v6847 = vpack.c.bf16 %v6745, %v6742
  %v6848 = vld [vmem:[%s5] sm:$0xf]
  %v6849 = vld [vmem:[%s5 + $0x4] sm:$0xf]
  %v6850 = vld [vmem:[%s5 + $0x8] sm:$0xf]
  %v6851 = vld [vmem:[%s5 + $0xc] sm:$0xf]
  %v6852 = vld [vmem:[%s5 + $0x10] sm:$0xf]
  %v6853 = vld [vmem:[%s5 + $0x14] sm:$0xf]
  %v6854 = vld [vmem:[%s5 + $0x18] sm:$0xf]
  %v6855 = vld [vmem:[%s5 + $0x1c] sm:$0xf]
  %v6856 = vld [vmem:[%s5 + $0x20] sm:$0xf]
  %v6857 = vld [vmem:[%s5 + $0x24] sm:$0xf]
  %v6858 = vld [vmem:[%s5 + $0x28] sm:$0xf]
  %v6859 = vld [vmem:[%s5 + $0x2c] sm:$0xf]
  %v6860 = vld [vmem:[%s5 + $0x30] sm:$0xf]
  %v6861 = vld [vmem:[%s5 + $0x34] sm:$0xf]
  %v6862 = vld [vmem:[%s5 + $0x38] sm:$0xf]
  %v6863 = vld [vmem:[%s5 + $0x3c] sm:$0xf]
  %s6864 = scalar_lea.vmem %s5, 64
  %v6865 = vld [vmem:[%s6864] sm:$0xf]
  %v6866 = vld [vmem:[%s6864 + $0x4] sm:$0xf]
  %v6867 = vld [vmem:[%s6864 + $0x8] sm:$0xf]
  %v6868 = vld [vmem:[%s6864 + $0xc] sm:$0xf]
  %v6869 = vld [vmem:[%s6864 + $0x10] sm:$0xf]
  %v6870 = vld [vmem:[%s6864 + $0x14] sm:$0xf]
  %v6871 = vld [vmem:[%s6864 + $0x18] sm:$0xf]
  %v6872 = vld [vmem:[%s6864 + $0x1c] sm:$0xf]
  %v6873 = vld [vmem:[%s6864 + $0x20] sm:$0xf]
  %v6874 = vld [vmem:[%s6864 + $0x24] sm:$0xf]
  %v6875 = vld [vmem:[%s6864 + $0x28] sm:$0xf]
  %v6876 = vld [vmem:[%s6864 + $0x2c] sm:$0xf]
  %v6877 = vld [vmem:[%s6864 + $0x30] sm:$0xf]
  %v6878 = vld [vmem:[%s6864 + $0x34] sm:$0xf]
  %v6879 = vld [vmem:[%s6864 + $0x38] sm:$0xf]
  %v6880 = vld [vmem:[%s6864 + $0x3c] sm:$0xf]
  %v6897 = vunpack.c.l.b16 %v6865
  %v6898 = vunpack.c.l.b16 %v6866
  %v6899 = vunpack.c.l.b16 %v6867
  %v6900 = vunpack.c.l.b16 %v6868
  %v6901 = vunpack.c.l.b16 %v6869
  %v6902 = vunpack.c.l.b16 %v6870
  %v6903 = vunpack.c.l.b16 %v6871
  %v6904 = vunpack.c.l.b16 %v6872
  %v6905 = vunpack.c.l.b16 %v6873
  %v6906 = vunpack.c.l.b16 %v6874
  %v6907 = vunpack.c.l.b16 %v6875
  %v6908 = vunpack.c.l.b16 %v6876
  %v6909 = vunpack.c.l.b16 %v6877
  %v6910 = vunpack.c.l.b16 %v6878
  %v6911 = vunpack.c.l.b16 %v6879
  %v6912 = vunpack.c.l.b16 %v6880
  %v6913 = vpack.c.b16 %v6898, %v6897
  %v6914 = vpack.c.b16 %v6900, %v6899
  %v6915 = vpack.c.b16 %v6902, %v6901
  %v6916 = vpack.c.b16 %v6904, %v6903
  %v6917 = vpack.c.b16 %v6906, %v6905
  %v6918 = vpack.c.b16 %v6908, %v6907
  %v6919 = vpack.c.b16 %v6910, %v6909
  %v6920 = vpack.c.b16 %v6912, %v6911
  %vm6921 = vcmask 523264
  %v6923 = vsel %vm6921, %v6913, 0
  %v6926 = vsel %vm6921, %v6914, 0
  %v6929 = vsel %vm6921, %v6915, 0
  %v6932 = vsel %vm6921, %v6916, 0
  %v6935 = vsel %vm6921, %v6917, 0
  %v6938 = vsel %vm6921, %v6918, 0
  %v6941 = vsel %vm6921, %v6919, 0
  %v6944 = vsel %vm6921, %v6920, 0
  %6946 = vmatprep.subr.bf16.mxu0 0
  %6947 = vmatpush1.bf16.msra.mxu0 0
  %6948 = vmatprep.subr.bf16.mxu0 0
  %6949 = vmatpush1.bf16.msra.mxu0 0
  %6950 = vmatprep.subr.bf16.mxu0 0
  %6951 = vmatpush1.bf16.msra.mxu0 0
  %6952 = vmatprep.subr.bf16.mxu0 0
  %6953 = vmatpush1.bf16.msra.mxu0 0
  %6954 = vmatprep.subr.bf16.mxu0 0
  %6955 = vmatpush1.bf16.msra.mxu0 %v6824
  %6956 = vmatprep.subr.bf16.mxu0 0
  %6957 = vmatpush1.bf16.msra.mxu0 %v6799
  %6958 = vmatprep.subr.bf16.mxu0 0
  %6959 = vmatpush1.bf16.msra.mxu0 %v6774
  %6960 = vmatprep.subr.bf16.mxu0 0
  %6961 = vmatpush1.bf16.msra.mxu0 %v6749
  %6962 = vmatprep.subr.bf16.mxu0 0
  %6963 = vmatpush2.bf16.msra.mxu0 0
  %6964 = vmatprep.subr.bf16.mxu0 0
  %6965 = vmatpush2.bf16.msra.mxu0 0
  %6966 = vmatprep.subr.bf16.mxu0 0
  %6967 = vmatpush2.bf16.msra.mxu0 0
  %6968 = vmatprep.subr.bf16.mxu0 0
  %6969 = vmatpush2.bf16.msra.mxu0 0
  %6970 = vmatprep.subr.bf16.mxu0 0
  %6971 = vmatpush2.bf16.msra.mxu0 0
  %6972 = vmatprep.subr.bf16.mxu0 0
  %6973 = vmatpush2.bf16.msra.mxu0 0
  %6974 = vmatprep.subr.bf16.mxu0 0
  %6975 = vmatpush2.bf16.msra.mxu0 0
  %6976 = vmatprep.subr.bf16.mxu0 0
  %6977 = vmatpush2.bf16.msra.mxu0 0
  %6978 = vmatprep.mubr.bf16.mxu0 0
  %6979 = vmatmul.mubr.bf16.gmra.mxu0 %v6923
  %v6980 = vpop.f32.mrf.mxu0
  %v6981 = vadd.f32 0.0, %v6980
  %v6982 = vpop.f32.mrf.mxu0
  %v6983 = vpop.f32.mrf.mxu0
  %v6984 = vadd.f32 0.0, %v6983
  %v6985 = vpop.f32.mrf.mxu0
  %6986 = vmatprep.mubr.bf16.mxu0 0
  %6987 = vmatmul.mubr.bf16.gmra.mxu0 %v6926
  %v6988 = vpop.f32.mrf.mxu0
  %v6989 = vadd.f32 0.0, %v6988
  %v6990 = vpop.f32.mrf.mxu0
  %v6991 = vpop.f32.mrf.mxu0
  %v6992 = vadd.f32 0.0, %v6991
  %v6993 = vpop.f32.mrf.mxu0
  %6994 = vmatprep.mubr.bf16.mxu0 0
  %6995 = vmatmul.mubr.bf16.gmra.mxu0 %v6929
  %v6996 = vpop.f32.mrf.mxu0
  %v6997 = vadd.f32 0.0, %v6996
  %v6998 = vpop.f32.mrf.mxu0
  %v6999 = vpop.f32.mrf.mxu0
  %v7000 = vadd.f32 0.0, %v6999
  %v7001 = vpop.f32.mrf.mxu0
  %7002 = vmatprep.mubr.bf16.mxu0 0
  %7003 = vmatmul.mubr.bf16.gmra.mxu0 %v6932
  %v7004 = vpop.f32.mrf.mxu0
  %v7005 = vadd.f32 0.0, %v7004
  %v7006 = vpop.f32.mrf.mxu0
  %v7007 = vpop.f32.mrf.mxu0
  %v7008 = vadd.f32 0.0, %v7007
  %v7009 = vpop.f32.mrf.mxu0
  %7010 = vmatprep.mubr.bf16.mxu0 0
  %7011 = vmatmul.mubr.bf16.gmra.mxu0 %v6935
  %v7012 = vpop.f32.mrf.mxu0
  %v7013 = vadd.f32 0.0, %v7012
  %v7014 = vpop.f32.mrf.mxu0
  %v7015 = vpop.f32.mrf.mxu0
  %v7016 = vadd.f32 0.0, %v7015
  %v7017 = vpop.f32.mrf.mxu0
  %7018 = vmatprep.mubr.bf16.mxu0 0
  %7019 = vmatmul.mubr.bf16.gmra.mxu0 %v6938
  %v7020 = vpop.f32.mrf.mxu0
  %v7021 = vadd.f32 0.0, %v7020
  %v7022 = vpop.f32.mrf.mxu0
  %v7023 = vpop.f32.mrf.mxu0
  %v7024 = vadd.f32 0.0, %v7023
  %v7025 = vpop.f32.mrf.mxu0
  %7026 = vmatprep.mubr.bf16.mxu0 0
  %7027 = vmatmul.mubr.bf16.gmra.mxu0 %v6941
  %v7028 = vpop.f32.mrf.mxu0
  %v7029 = vadd.f32 0.0, %v7028
  %v7030 = vpop.f32.mrf.mxu0
  %v7031 = vpop.f32.mrf.mxu0
  %v7032 = vadd.f32 0.0, %v7031
  %v7033 = vpop.f32.mrf.mxu0
  %7034 = vmatprep.mubr.bf16.mxu0 0
  %7035 = vmatmul.mubr.bf16.gmra.mxu0 %v6944
  %v7036 = vpop.f32.mrf.mxu0
  %v7037 = vadd.f32 0.0, %v7036
  %v7038 = vpop.f32.mrf.mxu0
  %v7039 = vpop.f32.mrf.mxu0
  %v7040 = vadd.f32 0.0, %v7039
  %v7041 = vpop.f32.mrf.mxu0
  %7042 = vdwg.mxu0
  %v7059 = vunpack.c.l.b16 %v6848
  %v7060 = vunpack.c.l.b16 %v6849
  %v7061 = vunpack.c.l.b16 %v6850
  %v7062 = vunpack.c.l.b16 %v6851
  %v7063 = vunpack.c.l.b16 %v6852
  %v7064 = vunpack.c.l.b16 %v6853
  %v7065 = vunpack.c.l.b16 %v6854
  %v7066 = vunpack.c.l.b16 %v6855
  %v7067 = vunpack.c.l.b16 %v6856
  %v7068 = vunpack.c.l.b16 %v6857
  %v7069 = vunpack.c.l.b16 %v6858
  %v7070 = vunpack.c.l.b16 %v6859
  %v7071 = vunpack.c.l.b16 %v6860
  %v7072 = vunpack.c.l.b16 %v6861
  %v7073 = vunpack.c.l.b16 %v6862
  %v7074 = vunpack.c.l.b16 %v6863
  %v7075 = vpack.c.b16 %v7060, %v7059
  %v7076 = vpack.c.b16 %v7062, %v7061
  %v7077 = vpack.c.b16 %v7064, %v7063
  %v7078 = vpack.c.b16 %v7066, %v7065
  %v7079 = vpack.c.b16 %v7068, %v7067
  %v7080 = vpack.c.b16 %v7070, %v7069
  %v7081 = vpack.c.b16 %v7072, %v7071
  %v7082 = vpack.c.b16 %v7074, %v7073
  %v7084 = vsel %vm6921, %v7075, 0
  %v7087 = vsel %vm6921, %v7076, 0
  %v7090 = vsel %vm6921, %v7077, 0
  %v7093 = vsel %vm6921, %v7078, 0
  %v7096 = vsel %vm6921, %v7079, 0
  %v7099 = vsel %vm6921, %v7080, 0
  %v7102 = vsel %vm6921, %v7081, 0
  %v7105 = vsel %vm6921, %v7082, 0
  %7107 = vmatprep.subr.bf16.mxu0 0
  %7108 = vmatpush1.bf16.msra.mxu0 0
  %7109 = vmatprep.subr.bf16.mxu0 0
  %7110 = vmatpush1.bf16.msra.mxu0 0
  %7111 = vmatprep.subr.bf16.mxu0 0
  %7112 = vmatpush1.bf16.msra.mxu0 0
  %7113 = vmatprep.subr.bf16.mxu0 0
  %7114 = vmatpush1.bf16.msra.mxu0 0
  %7115 = vmatprep.subr.bf16.mxu0 0
  %7116 = vmatpush1.bf16.msra.mxu0 %v6823
  %7117 = vmatprep.subr.bf16.mxu0 0
  %7118 = vmatpush1.bf16.msra.mxu0 %v6798
  %7119 = vmatprep.subr.bf16.mxu0 0
  %7120 = vmatpush1.bf16.msra.mxu0 %v6773
  %7121 = vmatprep.subr.bf16.mxu0 0
  %7122 = vmatpush1.bf16.msra.mxu0 %v6748
  %7123 = vmatprep.subr.bf16.mxu0 0
  %7124 = vmatpush2.bf16.msra.mxu0 0
  %7125 = vmatprep.subr.bf16.mxu0 0
  %7126 = vmatpush2.bf16.msra.mxu0 0
  %7127 = vmatprep.subr.bf16.mxu0 0
  %7128 = vmatpush2.bf16.msra.mxu0 0
  %7129 = vmatprep.subr.bf16.mxu0 0
  %7130 = vmatpush2.bf16.msra.mxu0 0
  %7131 = vmatprep.subr.bf16.mxu0 0
  %7132 = vmatpush2.bf16.msra.mxu0 0
  %7133 = vmatprep.subr.bf16.mxu0 0
  %7134 = vmatpush2.bf16.msra.mxu0 0
  %7135 = vmatprep.subr.bf16.mxu0 0
  %7136 = vmatpush2.bf16.msra.mxu0 0
  %7137 = vmatprep.subr.bf16.mxu0 0
  %7138 = vmatpush2.bf16.msra.mxu0 0
  %7139 = vmatprep.mubr.bf16.mxu0 0
  %7140 = vmatmul.mubr.bf16.gmra.mxu0 %v7084
  %v7141 = vpop.f32.mrf.mxu0
  %v7142 = vadd.f32 %v6981, %v7141
  %v7143 = vpop.f32.mrf.mxu0
  %v7144 = vpop.f32.mrf.mxu0
  %v7145 = vadd.f32 %v6984, %v7144
  %v7146 = vpop.f32.mrf.mxu0
  %7147 = vmatprep.mubr.bf16.mxu0 0
  %7148 = vmatmul.mubr.bf16.gmra.mxu0 %v7087
  %v7149 = vpop.f32.mrf.mxu0
  %v7150 = vadd.f32 %v6989, %v7149
  %v7151 = vpop.f32.mrf.mxu0
  %v7152 = vpop.f32.mrf.mxu0
  %v7153 = vadd.f32 %v6992, %v7152
  %v7154 = vpop.f32.mrf.mxu0
  %7155 = vmatprep.mubr.bf16.mxu0 0
  %7156 = vmatmul.mubr.bf16.gmra.mxu0 %v7090
  %v7157 = vpop.f32.mrf.mxu0
  %v7158 = vadd.f32 %v6997, %v7157
  %v7159 = vpop.f32.mrf.mxu0
  %v7160 = vpop.f32.mrf.mxu0
  %v7161 = vadd.f32 %v7000, %v7160
  %v7162 = vpop.f32.mrf.mxu0
  %7163 = vmatprep.mubr.bf16.mxu0 0
  %7164 = vmatmul.mubr.bf16.gmra.mxu0 %v7093
  %v7165 = vpop.f32.mrf.mxu0
  %v7166 = vadd.f32 %v7005, %v7165
  %v7167 = vpop.f32.mrf.mxu0
  %v7168 = vpop.f32.mrf.mxu0
  %v7169 = vadd.f32 %v7008, %v7168
  %v7170 = vpop.f32.mrf.mxu0
  %7171 = vmatprep.mubr.bf16.mxu0 0
  %7172 = vmatmul.mubr.bf16.gmra.mxu0 %v7096
  %v7173 = vpop.f32.mrf.mxu0
  %v7174 = vadd.f32 %v7013, %v7173
  %v7175 = vpop.f32.mrf.mxu0
  %v7176 = vpop.f32.mrf.mxu0
  %v7177 = vadd.f32 %v7016, %v7176
  %v7178 = vpop.f32.mrf.mxu0
  %7179 = vmatprep.mubr.bf16.mxu0 0
  %7180 = vmatmul.mubr.bf16.gmra.mxu0 %v7099
  %v7181 = vpop.f32.mrf.mxu0
  %v7182 = vadd.f32 %v7021, %v7181
  %v7183 = vpop.f32.mrf.mxu0
  %v7184 = vpop.f32.mrf.mxu0
  %v7185 = vadd.f32 %v7024, %v7184
  %v7186 = vpop.f32.mrf.mxu0
  %7187 = vmatprep.mubr.bf16.mxu0 0
  %7188 = vmatmul.mubr.bf16.gmra.mxu0 %v7102
  %v7189 = vpop.f32.mrf.mxu0
  %v7190 = vadd.f32 %v7029, %v7189
  %v7191 = vpop.f32.mrf.mxu0
  %v7192 = vpop.f32.mrf.mxu0
  %v7193 = vadd.f32 %v7032, %v7192
  %v7194 = vpop.f32.mrf.mxu0
  %7195 = vmatprep.mubr.bf16.mxu0 0
  %7196 = vmatmul.mubr.bf16.gmra.mxu0 %v7105
  %v7197 = vpop.f32.mrf.mxu0
  %v7198 = vadd.f32 %v7037, %v7197
  %v7199 = vpop.f32.mrf.mxu0
  %v7200 = vpop.f32.mrf.mxu0
  %v7201 = vadd.f32 %v7040, %v7200
  %v7202 = vpop.f32.mrf.mxu0
  %7203 = vdwg.mxu0
  %s7204 = scalar_lea.vmem %s5, 128
  %v7205 = vld [vmem:[%s7204] sm:$0xf]
  %v7206 = vld [vmem:[%s7204 + $0x4] sm:$0xf]
  %v7207 = vld [vmem:[%s7204 + $0x8] sm:$0xf]
  %v7208 = vld [vmem:[%s7204 + $0xc] sm:$0xf]
  %v7209 = vld [vmem:[%s7204 + $0x10] sm:$0xf]
  %v7210 = vld [vmem:[%s7204 + $0x14] sm:$0xf]
  %v7211 = vld [vmem:[%s7204 + $0x18] sm:$0xf]
  %v7212 = vld [vmem:[%s7204 + $0x1c] sm:$0xf]
  %v7213 = vld [vmem:[%s7204 + $0x20] sm:$0xf]
  %v7214 = vld [vmem:[%s7204 + $0x24] sm:$0xf]
  %v7215 = vld [vmem:[%s7204 + $0x28] sm:$0xf]
  %v7216 = vld [vmem:[%s7204 + $0x2c] sm:$0xf]
  %v7217 = vld [vmem:[%s7204 + $0x30] sm:$0xf]
  %v7218 = vld [vmem:[%s7204 + $0x34] sm:$0xf]
  %v7219 = vld [vmem:[%s7204 + $0x38] sm:$0xf]
  %v7220 = vld [vmem:[%s7204 + $0x3c] sm:$0xf]
  %v7237 = vunpack.c.l.b16 %v7205
  %v7238 = vunpack.c.l.b16 %v7206
  %v7239 = vunpack.c.l.b16 %v7207
  %v7240 = vunpack.c.l.b16 %v7208
  %v7241 = vunpack.c.l.b16 %v7209
  %v7242 = vunpack.c.l.b16 %v7210
  %v7243 = vunpack.c.l.b16 %v7211
  %v7244 = vunpack.c.l.b16 %v7212
  %v7245 = vunpack.c.l.b16 %v7213
  %v7246 = vunpack.c.l.b16 %v7214
  %v7247 = vunpack.c.l.b16 %v7215
  %v7248 = vunpack.c.l.b16 %v7216
  %v7249 = vunpack.c.l.b16 %v7217
  %v7250 = vunpack.c.l.b16 %v7218
  %v7251 = vunpack.c.l.b16 %v7219
  %v7252 = vunpack.c.l.b16 %v7220
  %v7253 = vpack.c.b16 %v7238, %v7237
  %v7254 = vpack.c.b16 %v7240, %v7239
  %v7255 = vpack.c.b16 %v7242, %v7241
  %v7256 = vpack.c.b16 %v7244, %v7243
  %v7257 = vpack.c.b16 %v7246, %v7245
  %v7258 = vpack.c.b16 %v7248, %v7247
  %v7259 = vpack.c.b16 %v7250, %v7249
  %v7260 = vpack.c.b16 %v7252, %v7251
  %v7262 = vsel %vm6921, %v7253, 0
  %v7265 = vsel %vm6921, %v7254, 0
  %v7268 = vsel %vm6921, %v7255, 0
  %v7271 = vsel %vm6921, %v7256, 0
  %v7274 = vsel %vm6921, %v7257, 0
  %v7277 = vsel %vm6921, %v7258, 0
  %v7280 = vsel %vm6921, %v7259, 0
  %v7283 = vsel %vm6921, %v7260, 0
  %7285 = vmatprep.subr.bf16.mxu0 0
  %7286 = vmatpush1.bf16.msra.mxu0 0
  %7287 = vmatprep.subr.bf16.mxu0 0
  %7288 = vmatpush1.bf16.msra.mxu0 0
  %7289 = vmatprep.subr.bf16.mxu0 0
  %7290 = vmatpush1.bf16.msra.mxu0 0
  %7291 = vmatprep.subr.bf16.mxu0 0
  %7292 = vmatpush1.bf16.msra.mxu0 0
  %7293 = vmatprep.subr.bf16.mxu0 0
  %7294 = vmatpush1.bf16.msra.mxu0 %v6825
  %7295 = vmatprep.subr.bf16.mxu0 0
  %7296 = vmatpush1.bf16.msra.mxu0 %v6800
  %7297 = vmatprep.subr.bf16.mxu0 0
  %7298 = vmatpush1.bf16.msra.mxu0 %v6775
  %7299 = vmatprep.subr.bf16.mxu0 0
  %7300 = vmatpush1.bf16.msra.mxu0 %v6750
  %7301 = vmatprep.subr.bf16.mxu0 0
  %7302 = vmatpush2.bf16.msra.mxu0 0
  %7303 = vmatprep.subr.bf16.mxu0 0
  %7304 = vmatpush2.bf16.msra.mxu0 0
  %7305 = vmatprep.subr.bf16.mxu0 0
  %7306 = vmatpush2.bf16.msra.mxu0 0
  %7307 = vmatprep.subr.bf16.mxu0 0
  %7308 = vmatpush2.bf16.msra.mxu0 0
  %7309 = vmatprep.subr.bf16.mxu0 0
  %7310 = vmatpush2.bf16.msra.mxu0 0
  %7311 = vmatprep.subr.bf16.mxu0 0
  %7312 = vmatpush2.bf16.msra.mxu0 0
  %7313 = vmatprep.subr.bf16.mxu0 0
  %7314 = vmatpush2.bf16.msra.mxu0 0
  %7315 = vmatprep.subr.bf16.mxu0 0
  %7316 = vmatpush2.bf16.msra.mxu0 0
  %7317 = vmatprep.mubr.bf16.mxu0 0
  %7318 = vmatmul.mubr.bf16.gmra.mxu0 %v7262
  %v7319 = vpop.f32.mrf.mxu0
  %v7320 = vadd.f32 0.0, %v7319
  %v7321 = vpop.f32.mrf.mxu0
  %v7322 = vpop.f32.mrf.mxu0
  %v7323 = vadd.f32 0.0, %v7322
  %v7324 = vpop.f32.mrf.mxu0
  %7325 = vmatprep.mubr.bf16.mxu0 0
  %7326 = vmatmul.mubr.bf16.gmra.mxu0 %v7265
  %v7327 = vpop.f32.mrf.mxu0
  %v7328 = vadd.f32 0.0, %v7327
  %v7329 = vpop.f32.mrf.mxu0
  %v7330 = vpop.f32.mrf.mxu0
  %v7331 = vadd.f32 0.0, %v7330
  %v7332 = vpop.f32.mrf.mxu0
  %7333 = vmatprep.mubr.bf16.mxu0 0
  %7334 = vmatmul.mubr.bf16.gmra.mxu0 %v7268
  %v7335 = vpop.f32.mrf.mxu0
  %v7336 = vadd.f32 0.0, %v7335
  %v7337 = vpop.f32.mrf.mxu0
  %v7338 = vpop.f32.mrf.mxu0
  %v7339 = vadd.f32 0.0, %v7338
  %v7340 = vpop.f32.mrf.mxu0
  %7341 = vmatprep.mubr.bf16.mxu0 0
  %7342 = vmatmul.mubr.bf16.gmra.mxu0 %v7271
  %v7343 = vpop.f32.mrf.mxu0
  %v7344 = vadd.f32 0.0, %v7343
  %v7345 = vpop.f32.mrf.mxu0
  %v7346 = vpop.f32.mrf.mxu0
  %v7347 = vadd.f32 0.0, %v7346
  %v7348 = vpop.f32.mrf.mxu0
  %7349 = vmatprep.mubr.bf16.mxu0 0
  %7350 = vmatmul.mubr.bf16.gmra.mxu0 %v7274
  %v7351 = vpop.f32.mrf.mxu0
  %v7352 = vadd.f32 0.0, %v7351
  %v7353 = vpop.f32.mrf.mxu0
  %v7354 = vpop.f32.mrf.mxu0
  %v7355 = vadd.f32 0.0, %v7354
  %v7356 = vpop.f32.mrf.mxu0
  %7357 = vmatprep.mubr.bf16.mxu0 0
  %7358 = vmatmul.mubr.bf16.gmra.mxu0 %v7277
  %v7359 = vpop.f32.mrf.mxu0
  %v7360 = vadd.f32 0.0, %v7359
  %v7361 = vpop.f32.mrf.mxu0
  %v7362 = vpop.f32.mrf.mxu0
  %v7363 = vadd.f32 0.0, %v7362
  %v7364 = vpop.f32.mrf.mxu0
  %7365 = vmatprep.mubr.bf16.mxu0 0
  %7366 = vmatmul.mubr.bf16.gmra.mxu0 %v7280
  %v7367 = vpop.f32.mrf.mxu0
  %v7368 = vadd.f32 0.0, %v7367
  %v7369 = vpop.f32.mrf.mxu0
  %v7370 = vpop.f32.mrf.mxu0
  %v7371 = vadd.f32 0.0, %v7370
  %v7372 = vpop.f32.mrf.mxu0
  %7373 = vmatprep.mubr.bf16.mxu0 0
  %7374 = vmatmul.mubr.bf16.gmra.mxu0 %v7283
  %v7375 = vpop.f32.mrf.mxu0
  %v7376 = vadd.f32 0.0, %v7375
  %v7377 = vpop.f32.mrf.mxu0
  %v7378 = vpop.f32.mrf.mxu0
  %v7379 = vadd.f32 0.0, %v7378
  %v7380 = vpop.f32.mrf.mxu0
  %7381 = vdwg.mxu0
  %v7382 = vadd.f32 %v7142, %v7320
  %v7383 = vadd.f32 %v7145, %v7323
  %v7384 = vadd.f32 %v7150, %v7328
  %v7385 = vadd.f32 %v7153, %v7331
  %v7386 = vadd.f32 %v7158, %v7336
  %v7387 = vadd.f32 %v7161, %v7339
  %v7388 = vadd.f32 %v7166, %v7344
  %v7389 = vadd.f32 %v7169, %v7347
  %v7390 = vadd.f32 %v7174, %v7352
  %v7391 = vadd.f32 %v7177, %v7355
  %v7392 = vadd.f32 %v7182, %v7360
  %v7393 = vadd.f32 %v7185, %v7363
  %v7394 = vadd.f32 %v7190, %v7368
  %v7395 = vadd.f32 %v7193, %v7371
  %v7396 = vadd.f32 %v7198, %v7376
  %v7397 = vadd.f32 %v7201, %v7379
  %s7398 = scalar_lea.vmem %s5, 192
  %v7399 = vld [vmem:[%s7398] sm:$0xf]
  %v7400 = vld [vmem:[%s7398 + $0x4] sm:$0xf]
  %v7401 = vld [vmem:[%s7398 + $0x8] sm:$0xf]
  %v7402 = vld [vmem:[%s7398 + $0xc] sm:$0xf]
  %v7403 = vld [vmem:[%s7398 + $0x10] sm:$0xf]
  %v7404 = vld [vmem:[%s7398 + $0x14] sm:$0xf]
  %v7405 = vld [vmem:[%s7398 + $0x18] sm:$0xf]
  %v7406 = vld [vmem:[%s7398 + $0x1c] sm:$0xf]
  %v7407 = vld [vmem:[%s7398 + $0x20] sm:$0xf]
  %v7408 = vld [vmem:[%s7398 + $0x24] sm:$0xf]
  %v7409 = vld [vmem:[%s7398 + $0x28] sm:$0xf]
  %v7410 = vld [vmem:[%s7398 + $0x2c] sm:$0xf]
  %v7411 = vld [vmem:[%s7398 + $0x30] sm:$0xf]
  %v7412 = vld [vmem:[%s7398 + $0x34] sm:$0xf]
  %v7413 = vld [vmem:[%s7398 + $0x38] sm:$0xf]
  %v7414 = vld [vmem:[%s7398 + $0x3c] sm:$0xf]
  %v7431 = vunpack.c.l.b16 %v7399
  %v7432 = vunpack.c.l.b16 %v7400
  %v7433 = vunpack.c.l.b16 %v7401
  %v7434 = vunpack.c.l.b16 %v7402
  %v7435 = vunpack.c.l.b16 %v7403
  %v7436 = vunpack.c.l.b16 %v7404
  %v7437 = vunpack.c.l.b16 %v7405
  %v7438 = vunpack.c.l.b16 %v7406
  %v7439 = vunpack.c.l.b16 %v7407
  %v7440 = vunpack.c.l.b16 %v7408
  %v7441 = vunpack.c.l.b16 %v7409
  %v7442 = vunpack.c.l.b16 %v7410
  %v7443 = vunpack.c.l.b16 %v7411
  %v7444 = vunpack.c.l.b16 %v7412
  %v7445 = vunpack.c.l.b16 %v7413
  %v7446 = vunpack.c.l.b16 %v7414
  %v7447 = vpack.c.b16 %v7432, %v7431
  %v7448 = vpack.c.b16 %v7434, %v7433
  %v7449 = vpack.c.b16 %v7436, %v7435
  %v7450 = vpack.c.b16 %v7438, %v7437
  %v7451 = vpack.c.b16 %v7440, %v7439
  %v7452 = vpack.c.b16 %v7442, %v7441
  %v7453 = vpack.c.b16 %v7444, %v7443
  %v7454 = vpack.c.b16 %v7446, %v7445
  %v7456 = vsel %vm6921, %v7447, 0
  %v7459 = vsel %vm6921, %v7448, 0
  %v7462 = vsel %vm6921, %v7449, 0
  %v7465 = vsel %vm6921, %v7450, 0
  %v7468 = vsel %vm6921, %v7451, 0
  %v7471 = vsel %vm6921, %v7452, 0
  %v7474 = vsel %vm6921, %v7453, 0
  %v7477 = vsel %vm6921, %v7454, 0
  %7479 = vmatprep.subr.bf16.mxu0 0
  %7480 = vmatpush1.bf16.msra.mxu0 0
  %7481 = vmatprep.subr.bf16.mxu0 0
  %7482 = vmatpush1.bf16.msra.mxu0 0
  %7483 = vmatprep.subr.bf16.mxu0 0
  %7484 = vmatpush1.bf16.msra.mxu0 0
  %7485 = vmatprep.subr.bf16.mxu0 0
  %7486 = vmatpush1.bf16.msra.mxu0 0
  %7487 = vmatprep.subr.bf16.mxu0 0
  %7488 = vmatpush1.bf16.msra.mxu0 %v6826
  %7489 = vmatprep.subr.bf16.mxu0 0
  %7490 = vmatpush1.bf16.msra.mxu0 %v6801
  %7491 = vmatprep.subr.bf16.mxu0 0
  %7492 = vmatpush1.bf16.msra.mxu0 %v6776
  %7493 = vmatprep.subr.bf16.mxu0 0
  %7494 = vmatpush1.bf16.msra.mxu0 %v6751
  %7495 = vmatprep.subr.bf16.mxu0 0
  %7496 = vmatpush2.bf16.msra.mxu0 0
  %7497 = vmatprep.subr.bf16.mxu0 0
  %7498 = vmatpush2.bf16.msra.mxu0 0
  %7499 = vmatprep.subr.bf16.mxu0 0
  %7500 = vmatpush2.bf16.msra.mxu0 0
  %7501 = vmatprep.subr.bf16.mxu0 0
  %7502 = vmatpush2.bf16.msra.mxu0 0
  %7503 = vmatprep.subr.bf16.mxu0 0
  %7504 = vmatpush2.bf16.msra.mxu0 0
  %7505 = vmatprep.subr.bf16.mxu0 0
  %7506 = vmatpush2.bf16.msra.mxu0 0
  %7507 = vmatprep.subr.bf16.mxu0 0
  %7508 = vmatpush2.bf16.msra.mxu0 0
  %7509 = vmatprep.subr.bf16.mxu0 0
  %7510 = vmatpush2.bf16.msra.mxu0 0
  %7511 = vmatprep.mubr.bf16.mxu0 0
  %7512 = vmatmul.mubr.bf16.gmra.mxu0 %v7456
  %v7513 = vpop.f32.mrf.mxu0
  %v7514 = vadd.f32 0.0, %v7513
  %v7515 = vpop.f32.mrf.mxu0
  %v7516 = vpop.f32.mrf.mxu0
  %v7517 = vadd.f32 0.0, %v7516
  %v7518 = vpop.f32.mrf.mxu0
  %7519 = vmatprep.mubr.bf16.mxu0 0
  %7520 = vmatmul.mubr.bf16.gmra.mxu0 %v7459
  %v7521 = vpop.f32.mrf.mxu0
  %v7522 = vadd.f32 0.0, %v7521
  %v7523 = vpop.f32.mrf.mxu0
  %v7524 = vpop.f32.mrf.mxu0
  %v7525 = vadd.f32 0.0, %v7524
  %v7526 = vpop.f32.mrf.mxu0
  %7527 = vmatprep.mubr.bf16.mxu0 0
  %7528 = vmatmul.mubr.bf16.gmra.mxu0 %v7462
  %v7529 = vpop.f32.mrf.mxu0
  %v7530 = vadd.f32 0.0, %v7529
  %v7531 = vpop.f32.mrf.mxu0
  %v7532 = vpop.f32.mrf.mxu0
  %v7533 = vadd.f32 0.0, %v7532
  %v7534 = vpop.f32.mrf.mxu0
  %7535 = vmatprep.mubr.bf16.mxu0 0
  %7536 = vmatmul.mubr.bf16.gmra.mxu0 %v7465
  %v7537 = vpop.f32.mrf.mxu0
  %v7538 = vadd.f32 0.0, %v7537
  %v7539 = vpop.f32.mrf.mxu0
  %v7540 = vpop.f32.mrf.mxu0
  %v7541 = vadd.f32 0.0, %v7540
  %v7542 = vpop.f32.mrf.mxu0
  %7543 = vmatprep.mubr.bf16.mxu0 0
  %7544 = vmatmul.mubr.bf16.gmra.mxu0 %v7468
  %v7545 = vpop.f32.mrf.mxu0
  %v7546 = vadd.f32 0.0, %v7545
  %v7547 = vpop.f32.mrf.mxu0
  %v7548 = vpop.f32.mrf.mxu0
  %v7549 = vadd.f32 0.0, %v7548
  %v7550 = vpop.f32.mrf.mxu0
  %7551 = vmatprep.mubr.bf16.mxu0 0
  %7552 = vmatmul.mubr.bf16.gmra.mxu0 %v7471
  %v7553 = vpop.f32.mrf.mxu0
  %v7554 = vadd.f32 0.0, %v7553
  %v7555 = vpop.f32.mrf.mxu0
  %v7556 = vpop.f32.mrf.mxu0
  %v7557 = vadd.f32 0.0, %v7556
  %v7558 = vpop.f32.mrf.mxu0
  %7559 = vmatprep.mubr.bf16.mxu0 0
  %7560 = vmatmul.mubr.bf16.gmra.mxu0 %v7474
  %v7561 = vpop.f32.mrf.mxu0
  %v7562 = vadd.f32 0.0, %v7561
  %v7563 = vpop.f32.mrf.mxu0
  %v7564 = vpop.f32.mrf.mxu0
  %v7565 = vadd.f32 0.0, %v7564
  %v7566 = vpop.f32.mrf.mxu0
  %7567 = vmatprep.mubr.bf16.mxu0 0
  %7568 = vmatmul.mubr.bf16.gmra.mxu0 %v7477
  %v7569 = vpop.f32.mrf.mxu0
  %v7570 = vadd.f32 0.0, %v7569
  %v7571 = vpop.f32.mrf.mxu0
  %v7572 = vpop.f32.mrf.mxu0
  %v7573 = vadd.f32 0.0, %v7572
  %v7574 = vpop.f32.mrf.mxu0
  %7575 = vdwg.mxu0
  %v7576 = vadd.f32 %v7382, %v7514
  %v7577 = vadd.f32 %v7383, %v7517
  %v7578 = vadd.f32 %v7384, %v7522
  %v7579 = vadd.f32 %v7385, %v7525
  %v7580 = vadd.f32 %v7386, %v7530
  %v7581 = vadd.f32 %v7387, %v7533
  %v7582 = vadd.f32 %v7388, %v7538
  %v7583 = vadd.f32 %v7389, %v7541
  %v7584 = vadd.f32 %v7390, %v7546
  %v7585 = vadd.f32 %v7391, %v7549
  %v7586 = vadd.f32 %v7392, %v7554
  %v7587 = vadd.f32 %v7393, %v7557
  %v7588 = vadd.f32 %v7394, %v7562
  %v7589 = vadd.f32 %v7395, %v7565
  %v7590 = vadd.f32 %v7396, %v7570
  %v7591 = vadd.f32 %v7397, %v7573
  %s7592 = scalar_lea.vmem %s5, 256
  %v7593 = vld [vmem:[%s7592] sm:$0xf]
  %v7594 = vld [vmem:[%s7592 + $0x4] sm:$0xf]
  %v7595 = vld [vmem:[%s7592 + $0x8] sm:$0xf]
  %v7596 = vld [vmem:[%s7592 + $0xc] sm:$0xf]
  %v7597 = vld [vmem:[%s7592 + $0x10] sm:$0xf]
  %v7598 = vld [vmem:[%s7592 + $0x14] sm:$0xf]
  %v7599 = vld [vmem:[%s7592 + $0x18] sm:$0xf]
  %v7600 = vld [vmem:[%s7592 + $0x1c] sm:$0xf]
  %v7601 = vld [vmem:[%s7592 + $0x20] sm:$0xf]
  %v7602 = vld [vmem:[%s7592 + $0x24] sm:$0xf]
  %v7603 = vld [vmem:[%s7592 + $0x28] sm:$0xf]
  %v7604 = vld [vmem:[%s7592 + $0x2c] sm:$0xf]
  %v7605 = vld [vmem:[%s7592 + $0x30] sm:$0xf]
  %v7606 = vld [vmem:[%s7592 + $0x34] sm:$0xf]
  %v7607 = vld [vmem:[%s7592 + $0x38] sm:$0xf]
  %v7608 = vld [vmem:[%s7592 + $0x3c] sm:$0xf]
  %v7625 = vunpack.c.l.b16 %v7593
  %v7626 = vunpack.c.l.b16 %v7594
  %v7627 = vunpack.c.l.b16 %v7595
  %v7628 = vunpack.c.l.b16 %v7596
  %v7629 = vunpack.c.l.b16 %v7597
  %v7630 = vunpack.c.l.b16 %v7598
  %v7631 = vunpack.c.l.b16 %v7599
  %v7632 = vunpack.c.l.b16 %v7600
  %v7633 = vunpack.c.l.b16 %v7601
  %v7634 = vunpack.c.l.b16 %v7602
  %v7635 = vunpack.c.l.b16 %v7603
  %v7636 = vunpack.c.l.b16 %v7604
  %v7637 = vunpack.c.l.b16 %v7605
  %v7638 = vunpack.c.l.b16 %v7606
  %v7639 = vunpack.c.l.b16 %v7607
  %v7640 = vunpack.c.l.b16 %v7608
  %v7641 = vpack.c.b16 %v7626, %v7625
  %v7642 = vpack.c.b16 %v7628, %v7627
  %v7643 = vpack.c.b16 %v7630, %v7629
  %v7644 = vpack.c.b16 %v7632, %v7631
  %v7645 = vpack.c.b16 %v7634, %v7633
  %v7646 = vpack.c.b16 %v7636, %v7635
  %v7647 = vpack.c.b16 %v7638, %v7637
  %v7648 = vpack.c.b16 %v7640, %v7639
  %v7650 = vsel %vm6921, %v7641, 0
  %v7653 = vsel %vm6921, %v7642, 0
  %v7656 = vsel %vm6921, %v7643, 0
  %v7659 = vsel %vm6921, %v7644, 0
  %v7662 = vsel %vm6921, %v7645, 0
  %v7665 = vsel %vm6921, %v7646, 0
  %v7668 = vsel %vm6921, %v7647, 0
  %v7671 = vsel %vm6921, %v7648, 0
  %7673 = vmatprep.subr.bf16.mxu0 0
  %7674 = vmatpush1.bf16.msra.mxu0 0
  %7675 = vmatprep.subr.bf16.mxu0 0
  %7676 = vmatpush1.bf16.msra.mxu0 0
  %7677 = vmatprep.subr.bf16.mxu0 0
  %7678 = vmatpush1.bf16.msra.mxu0 0
  %7679 = vmatprep.subr.bf16.mxu0 0
  %7680 = vmatpush1.bf16.msra.mxu0 0
  %7681 = vmatprep.subr.bf16.mxu0 0
  %7682 = vmatpush1.bf16.msra.mxu0 %v6827
  %7683 = vmatprep.subr.bf16.mxu0 0
  %7684 = vmatpush1.bf16.msra.mxu0 %v6802
  %7685 = vmatprep.subr.bf16.mxu0 0
  %7686 = vmatpush1.bf16.msra.mxu0 %v6777
  %7687 = vmatprep.subr.bf16.mxu0 0
  %7688 = vmatpush1.bf16.msra.mxu0 %v6752
  %7689 = vmatprep.subr.bf16.mxu0 0
  %7690 = vmatpush2.bf16.msra.mxu0 0
  %7691 = vmatprep.subr.bf16.mxu0 0
  %7692 = vmatpush2.bf16.msra.mxu0 0
  %7693 = vmatprep.subr.bf16.mxu0 0
  %7694 = vmatpush2.bf16.msra.mxu0 0
  %7695 = vmatprep.subr.bf16.mxu0 0
  %7696 = vmatpush2.bf16.msra.mxu0 0
  %7697 = vmatprep.subr.bf16.mxu0 0
  %7698 = vmatpush2.bf16.msra.mxu0 0
  %7699 = vmatprep.subr.bf16.mxu0 0
  %7700 = vmatpush2.bf16.msra.mxu0 0
  %7701 = vmatprep.subr.bf16.mxu0 0
  %7702 = vmatpush2.bf16.msra.mxu0 0
  %7703 = vmatprep.subr.bf16.mxu0 0
  %7704 = vmatpush2.bf16.msra.mxu0 0
  %7705 = vmatprep.mubr.bf16.mxu0 0
  %7706 = vmatmul.mubr.bf16.gmra.mxu0 %v7650
  %v7707 = vpop.f32.mrf.mxu0
  %v7708 = vadd.f32 0.0, %v7707
  %v7709 = vpop.f32.mrf.mxu0
  %v7710 = vpop.f32.mrf.mxu0
  %v7711 = vadd.f32 0.0, %v7710
  %v7712 = vpop.f32.mrf.mxu0
  %7713 = vmatprep.mubr.bf16.mxu0 0
  %7714 = vmatmul.mubr.bf16.gmra.mxu0 %v7653
  %v7715 = vpop.f32.mrf.mxu0
  %v7716 = vadd.f32 0.0, %v7715
  %v7717 = vpop.f32.mrf.mxu0
  %v7718 = vpop.f32.mrf.mxu0
  %v7719 = vadd.f32 0.0, %v7718
  %v7720 = vpop.f32.mrf.mxu0
  %7721 = vmatprep.mubr.bf16.mxu0 0
  %7722 = vmatmul.mubr.bf16.gmra.mxu0 %v7656
  %v7723 = vpop.f32.mrf.mxu0
  %v7724 = vadd.f32 0.0, %v7723
  %v7725 = vpop.f32.mrf.mxu0
  %v7726 = vpop.f32.mrf.mxu0
  %v7727 = vadd.f32 0.0, %v7726
  %v7728 = vpop.f32.mrf.mxu0
  %7729 = vmatprep.mubr.bf16.mxu0 0
  %7730 = vmatmul.mubr.bf16.gmra.mxu0 %v7659
  %v7731 = vpop.f32.mrf.mxu0
  %v7732 = vadd.f32 0.0, %v7731
  %v7733 = vpop.f32.mrf.mxu0
  %v7734 = vpop.f32.mrf.mxu0
  %v7735 = vadd.f32 0.0, %v7734
  %v7736 = vpop.f32.mrf.mxu0
  %7737 = vmatprep.mubr.bf16.mxu0 0
  %7738 = vmatmul.mubr.bf16.gmra.mxu0 %v7662
  %v7739 = vpop.f32.mrf.mxu0
  %v7740 = vadd.f32 0.0, %v7739
  %v7741 = vpop.f32.mrf.mxu0
  %v7742 = vpop.f32.mrf.mxu0
  %v7743 = vadd.f32 0.0, %v7742
  %v7744 = vpop.f32.mrf.mxu0
  %7745 = vmatprep.mubr.bf16.mxu0 0
  %7746 = vmatmul.mubr.bf16.gmra.mxu0 %v7665
  %v7747 = vpop.f32.mrf.mxu0
  %v7748 = vadd.f32 0.0, %v7747
  %v7749 = vpop.f32.mrf.mxu0
  %v7750 = vpop.f32.mrf.mxu0
  %v7751 = vadd.f32 0.0, %v7750
  %v7752 = vpop.f32.mrf.mxu0
  %7753 = vmatprep.mubr.bf16.mxu0 0
  %7754 = vmatmul.mubr.bf16.gmra.mxu0 %v7668
  %v7755 = vpop.f32.mrf.mxu0
  %v7756 = vadd.f32 0.0, %v7755
  %v7757 = vpop.f32.mrf.mxu0
  %v7758 = vpop.f32.mrf.mxu0
  %v7759 = vadd.f32 0.0, %v7758
  %v7760 = vpop.f32.mrf.mxu0
  %7761 = vmatprep.mubr.bf16.mxu0 0
  %7762 = vmatmul.mubr.bf16.gmra.mxu0 %v7671
  %v7763 = vpop.f32.mrf.mxu0
  %v7764 = vadd.f32 0.0, %v7763
  %v7765 = vpop.f32.mrf.mxu0
  %v7766 = vpop.f32.mrf.mxu0
  %v7767 = vadd.f32 0.0, %v7766
  %v7768 = vpop.f32.mrf.mxu0
  %7769 = vdwg.mxu0
  %v7770 = vadd.f32 %v7576, %v7708
  %v7771 = vadd.f32 %v7577, %v7711
  %v7772 = vadd.f32 %v7578, %v7716
  %v7773 = vadd.f32 %v7579, %v7719
  %v7774 = vadd.f32 %v7580, %v7724
  %v7775 = vadd.f32 %v7581, %v7727
  %v7776 = vadd.f32 %v7582, %v7732
  %v7777 = vadd.f32 %v7583, %v7735
  %v7778 = vadd.f32 %v7584, %v7740
  %v7779 = vadd.f32 %v7585, %v7743
  %v7780 = vadd.f32 %v7586, %v7748
  %v7781 = vadd.f32 %v7587, %v7751
  %v7782 = vadd.f32 %v7588, %v7756
  %v7783 = vadd.f32 %v7589, %v7759
  %v7784 = vadd.f32 %v7590, %v7764
  %v7785 = vadd.f32 %v7591, %v7767
  %s7786 = scalar_lea.vmem %s5, 320
  %v7787 = vld [vmem:[%s7786] sm:$0xf]
  %v7788 = vld [vmem:[%s7786 + $0x4] sm:$0xf]
  %v7789 = vld [vmem:[%s7786 + $0x8] sm:$0xf]
  %v7790 = vld [vmem:[%s7786 + $0xc] sm:$0xf]
  %v7791 = vld [vmem:[%s7786 + $0x10] sm:$0xf]
  %v7792 = vld [vmem:[%s7786 + $0x14] sm:$0xf]
  %v7793 = vld [vmem:[%s7786 + $0x18] sm:$0xf]
  %v7794 = vld [vmem:[%s7786 + $0x1c] sm:$0xf]
  %v7795 = vld [vmem:[%s7786 + $0x20] sm:$0xf]
  %v7796 = vld [vmem:[%s7786 + $0x24] sm:$0xf]
  %v7797 = vld [vmem:[%s7786 + $0x28] sm:$0xf]
  %v7798 = vld [vmem:[%s7786 + $0x2c] sm:$0xf]
  %v7799 = vld [vmem:[%s7786 + $0x30] sm:$0xf]
  %v7800 = vld [vmem:[%s7786 + $0x34] sm:$0xf]
  %v7801 = vld [vmem:[%s7786 + $0x38] sm:$0xf]
  %v7802 = vld [vmem:[%s7786 + $0x3c] sm:$0xf]
  %v7819 = vunpack.c.l.b16 %v7787
  %v7820 = vunpack.c.l.b16 %v7788
  %v7821 = vunpack.c.l.b16 %v7789
  %v7822 = vunpack.c.l.b16 %v7790
  %v7823 = vunpack.c.l.b16 %v7791
  %v7824 = vunpack.c.l.b16 %v7792
  %v7825 = vunpack.c.l.b16 %v7793
  %v7826 = vunpack.c.l.b16 %v7794
  %v7827 = vunpack.c.l.b16 %v7795
  %v7828 = vunpack.c.l.b16 %v7796
  %v7829 = vunpack.c.l.b16 %v7797
  %v7830 = vunpack.c.l.b16 %v7798
  %v7831 = vunpack.c.l.b16 %v7799
  %v7832 = vunpack.c.l.b16 %v7800
  %v7833 = vunpack.c.l.b16 %v7801
  %v7834 = vunpack.c.l.b16 %v7802
  %v7835 = vpack.c.b16 %v7820, %v7819
  %v7836 = vpack.c.b16 %v7822, %v7821
  %v7837 = vpack.c.b16 %v7824, %v7823
  %v7838 = vpack.c.b16 %v7826, %v7825
  %v7839 = vpack.c.b16 %v7828, %v7827
  %v7840 = vpack.c.b16 %v7830, %v7829
  %v7841 = vpack.c.b16 %v7832, %v7831
  %v7842 = vpack.c.b16 %v7834, %v7833
  %v7844 = vsel %vm6921, %v7835, 0
  %v7847 = vsel %vm6921, %v7836, 0
  %v7850 = vsel %vm6921, %v7837, 0
  %v7853 = vsel %vm6921, %v7838, 0
  %v7856 = vsel %vm6921, %v7839, 0
  %v7859 = vsel %vm6921, %v7840, 0
  %v7862 = vsel %vm6921, %v7841, 0
  %v7865 = vsel %vm6921, %v7842, 0
  %7867 = vmatprep.subr.bf16.mxu0 0
  %7868 = vmatpush1.bf16.msra.mxu0 0
  %7869 = vmatprep.subr.bf16.mxu0 0
  %7870 = vmatpush1.bf16.msra.mxu0 0
  %7871 = vmatprep.subr.bf16.mxu0 0
  %7872 = vmatpush1.bf16.msra.mxu0 0
  %7873 = vmatprep.subr.bf16.mxu0 0
  %7874 = vmatpush1.bf16.msra.mxu0 0
  %7875 = vmatprep.subr.bf16.mxu0 0
  %7876 = vmatpush1.bf16.msra.mxu0 %v6828
  %7877 = vmatprep.subr.bf16.mxu0 0
  %7878 = vmatpush1.bf16.msra.mxu0 %v6803
  %7879 = vmatprep.subr.bf16.mxu0 0
  %7880 = vmatpush1.bf16.msra.mxu0 %v6778
  %7881 = vmatprep.subr.bf16.mxu0 0
  %7882 = vmatpush1.bf16.msra.mxu0 %v6753
  %7883 = vmatprep.subr.bf16.mxu0 0
  %7884 = vmatpush2.bf16.msra.mxu0 0
  %7885 = vmatprep.subr.bf16.mxu0 0
  %7886 = vmatpush2.bf16.msra.mxu0 0
  %7887 = vmatprep.subr.bf16.mxu0 0
  %7888 = vmatpush2.bf16.msra.mxu0 0
  %7889 = vmatprep.subr.bf16.mxu0 0
  %7890 = vmatpush2.bf16.msra.mxu0 0
  %7891 = vmatprep.subr.bf16.mxu0 0
  %7892 = vmatpush2.bf16.msra.mxu0 0
  %7893 = vmatprep.subr.bf16.mxu0 0
  %7894 = vmatpush2.bf16.msra.mxu0 0
  %7895 = vmatprep.subr.bf16.mxu0 0
  %7896 = vmatpush2.bf16.msra.mxu0 0
  %7897 = vmatprep.subr.bf16.mxu0 0
  %7898 = vmatpush2.bf16.msra.mxu0 0
  %7899 = vmatprep.mubr.bf16.mxu0 0
  %7900 = vmatmul.mubr.bf16.gmra.mxu0 %v7844
  %v7901 = vpop.f32.mrf.mxu0
  %v7902 = vadd.f32 0.0, %v7901
  %v7903 = vpop.f32.mrf.mxu0
  %v7904 = vpop.f32.mrf.mxu0
  %v7905 = vadd.f32 0.0, %v7904
  %v7906 = vpop.f32.mrf.mxu0
  %7907 = vmatprep.mubr.bf16.mxu0 0
  %7908 = vmatmul.mubr.bf16.gmra.mxu0 %v7847
  %v7909 = vpop.f32.mrf.mxu0
  %v7910 = vadd.f32 0.0, %v7909
  %v7911 = vpop.f32.mrf.mxu0
  %v7912 = vpop.f32.mrf.mxu0
  %v7913 = vadd.f32 0.0, %v7912
  %v7914 = vpop.f32.mrf.mxu0
  %7915 = vmatprep.mubr.bf16.mxu0 0
  %7916 = vmatmul.mubr.bf16.gmra.mxu0 %v7850
  %v7917 = vpop.f32.mrf.mxu0
  %v7918 = vadd.f32 0.0, %v7917
  %v7919 = vpop.f32.mrf.mxu0
  %v7920 = vpop.f32.mrf.mxu0
  %v7921 = vadd.f32 0.0, %v7920
  %v7922 = vpop.f32.mrf.mxu0
  %7923 = vmatprep.mubr.bf16.mxu0 0
  %7924 = vmatmul.mubr.bf16.gmra.mxu0 %v7853
  %v7925 = vpop.f32.mrf.mxu0
  %v7926 = vadd.f32 0.0, %v7925
  %v7927 = vpop.f32.mrf.mxu0
  %v7928 = vpop.f32.mrf.mxu0
  %v7929 = vadd.f32 0.0, %v7928
  %v7930 = vpop.f32.mrf.mxu0
  %7931 = vmatprep.mubr.bf16.mxu0 0
  %7932 = vmatmul.mubr.bf16.gmra.mxu0 %v7856
  %v7933 = vpop.f32.mrf.mxu0
  %v7934 = vadd.f32 0.0, %v7933
  %v7935 = vpop.f32.mrf.mxu0
  %v7936 = vpop.f32.mrf.mxu0
  %v7937 = vadd.f32 0.0, %v7936
  %v7938 = vpop.f32.mrf.mxu0
  %7939 = vmatprep.mubr.bf16.mxu0 0
  %7940 = vmatmul.mubr.bf16.gmra.mxu0 %v7859
  %v7941 = vpop.f32.mrf.mxu0
  %v7942 = vadd.f32 0.0, %v7941
  %v7943 = vpop.f32.mrf.mxu0
  %v7944 = vpop.f32.mrf.mxu0
  %v7945 = vadd.f32 0.0, %v7944
  %v7946 = vpop.f32.mrf.mxu0
  %7947 = vmatprep.mubr.bf16.mxu0 0
  %7948 = vmatmul.mubr.bf16.gmra.mxu0 %v7862
  %v7949 = vpop.f32.mrf.mxu0
  %v7950 = vadd.f32 0.0, %v7949
  %v7951 = vpop.f32.mrf.mxu0
  %v7952 = vpop.f32.mrf.mxu0
  %v7953 = vadd.f32 0.0, %v7952
  %v7954 = vpop.f32.mrf.mxu0
  %7955 = vmatprep.mubr.bf16.mxu0 0
  %7956 = vmatmul.mubr.bf16.gmra.mxu0 %v7865
  %v7957 = vpop.f32.mrf.mxu0
  %v7958 = vadd.f32 0.0, %v7957
  %v7959 = vpop.f32.mrf.mxu0
  %v7960 = vpop.f32.mrf.mxu0
  %v7961 = vadd.f32 0.0, %v7960
  %v7962 = vpop.f32.mrf.mxu0
  %7963 = vdwg.mxu0
  %v7964 = vadd.f32 %v7770, %v7902
  %v7965 = vadd.f32 %v7771, %v7905
  %v7966 = vadd.f32 %v7772, %v7910
  %v7967 = vadd.f32 %v7773, %v7913
  %v7968 = vadd.f32 %v7774, %v7918
  %v7969 = vadd.f32 %v7775, %v7921
  %v7970 = vadd.f32 %v7776, %v7926
  %v7971 = vadd.f32 %v7777, %v7929
  %v7972 = vadd.f32 %v7778, %v7934
  %v7973 = vadd.f32 %v7779, %v7937
  %v7974 = vadd.f32 %v7780, %v7942
  %v7975 = vadd.f32 %v7781, %v7945
  %v7976 = vadd.f32 %v7782, %v7950
  %v7977 = vadd.f32 %v7783, %v7953
  %v7978 = vadd.f32 %v7784, %v7958
  %v7979 = vadd.f32 %v7785, %v7961
  %s7980 = scalar_lea.vmem %s5, 384
  %v7981 = vld [vmem:[%s7980] sm:$0xf]
  %v7982 = vld [vmem:[%s7980 + $0x4] sm:$0xf]
  %v7983 = vld [vmem:[%s7980 + $0x8] sm:$0xf]
  %v7984 = vld [vmem:[%s7980 + $0xc] sm:$0xf]
  %v7985 = vld [vmem:[%s7980 + $0x10] sm:$0xf]
  %v7986 = vld [vmem:[%s7980 + $0x14] sm:$0xf]
  %v7987 = vld [vmem:[%s7980 + $0x18] sm:$0xf]
  %v7988 = vld [vmem:[%s7980 + $0x1c] sm:$0xf]
  %v7989 = vld [vmem:[%s7980 + $0x20] sm:$0xf]
  %v7990 = vld [vmem:[%s7980 + $0x24] sm:$0xf]
  %v7991 = vld [vmem:[%s7980 + $0x28] sm:$0xf]
  %v7992 = vld [vmem:[%s7980 + $0x2c] sm:$0xf]
  %v7993 = vld [vmem:[%s7980 + $0x30] sm:$0xf]
  %v7994 = vld [vmem:[%s7980 + $0x34] sm:$0xf]
  %v7995 = vld [vmem:[%s7980 + $0x38] sm:$0xf]
  %v7996 = vld [vmem:[%s7980 + $0x3c] sm:$0xf]
  %v8013 = vunpack.c.l.b16 %v7981
  %v8014 = vunpack.c.l.b16 %v7982
  %v8015 = vunpack.c.l.b16 %v7983
  %v8016 = vunpack.c.l.b16 %v7984
  %v8017 = vunpack.c.l.b16 %v7985
  %v8018 = vunpack.c.l.b16 %v7986
  %v8019 = vunpack.c.l.b16 %v7987
  %v8020 = vunpack.c.l.b16 %v7988
  %v8021 = vunpack.c.l.b16 %v7989
  %v8022 = vunpack.c.l.b16 %v7990
  %v8023 = vunpack.c.l.b16 %v7991
  %v8024 = vunpack.c.l.b16 %v7992
  %v8025 = vunpack.c.l.b16 %v7993
  %v8026 = vunpack.c.l.b16 %v7994
  %v8027 = vunpack.c.l.b16 %v7995
  %v8028 = vunpack.c.l.b16 %v7996
  %v8029 = vpack.c.b16 %v8014, %v8013
  %v8030 = vpack.c.b16 %v8016, %v8015
  %v8031 = vpack.c.b16 %v8018, %v8017
  %v8032 = vpack.c.b16 %v8020, %v8019
  %v8033 = vpack.c.b16 %v8022, %v8021
  %v8034 = vpack.c.b16 %v8024, %v8023
  %v8035 = vpack.c.b16 %v8026, %v8025
  %v8036 = vpack.c.b16 %v8028, %v8027
  %v8038 = vsel %vm6921, %v8029, 0
  %v8041 = vsel %vm6921, %v8030, 0
  %v8044 = vsel %vm6921, %v8031, 0
  %v8047 = vsel %vm6921, %v8032, 0
  %v8050 = vsel %vm6921, %v8033, 0
  %v8053 = vsel %vm6921, %v8034, 0
  %v8056 = vsel %vm6921, %v8035, 0
  %v8059 = vsel %vm6921, %v8036, 0
  %8061 = vmatprep.subr.bf16.mxu0 0
  %8062 = vmatpush1.bf16.msra.mxu0 0
  %8063 = vmatprep.subr.bf16.mxu0 0
  %8064 = vmatpush1.bf16.msra.mxu0 0
  %8065 = vmatprep.subr.bf16.mxu0 0
  %8066 = vmatpush1.bf16.msra.mxu0 0
  %8067 = vmatprep.subr.bf16.mxu0 0
  %8068 = vmatpush1.bf16.msra.mxu0 0
  %8069 = vmatprep.subr.bf16.mxu0 0
  %8070 = vmatpush1.bf16.msra.mxu0 %v6829
  %8071 = vmatprep.subr.bf16.mxu0 0
  %8072 = vmatpush1.bf16.msra.mxu0 %v6804
  %8073 = vmatprep.subr.bf16.mxu0 0
  %8074 = vmatpush1.bf16.msra.mxu0 %v6779
  %8075 = vmatprep.subr.bf16.mxu0 0
  %8076 = vmatpush1.bf16.msra.mxu0 %v6754
  %8077 = vmatprep.subr.bf16.mxu0 0
  %8078 = vmatpush2.bf16.msra.mxu0 0
  %8079 = vmatprep.subr.bf16.mxu0 0
  %8080 = vmatpush2.bf16.msra.mxu0 0
  %8081 = vmatprep.subr.bf16.mxu0 0
  %8082 = vmatpush2.bf16.msra.mxu0 0
  %8083 = vmatprep.subr.bf16.mxu0 0
  %8084 = vmatpush2.bf16.msra.mxu0 0
  %8085 = vmatprep.subr.bf16.mxu0 0
  %8086 = vmatpush2.bf16.msra.mxu0 0
  %8087 = vmatprep.subr.bf16.mxu0 0
  %8088 = vmatpush2.bf16.msra.mxu0 0
  %8089 = vmatprep.subr.bf16.mxu0 0
  %8090 = vmatpush2.bf16.msra.mxu0 0
  %8091 = vmatprep.subr.bf16.mxu0 0
  %8092 = vmatpush2.bf16.msra.mxu0 0
  %8093 = vmatprep.mubr.bf16.mxu0 0
  %8094 = vmatmul.mubr.bf16.gmra.mxu0 %v8038
  %v8095 = vpop.f32.mrf.mxu0
  %v8096 = vadd.f32 0.0, %v8095
  %v8097 = vpop.f32.mrf.mxu0
  %v8098 = vpop.f32.mrf.mxu0
  %v8099 = vadd.f32 0.0, %v8098
  %v8100 = vpop.f32.mrf.mxu0
  %8101 = vmatprep.mubr.bf16.mxu0 0
  %8102 = vmatmul.mubr.bf16.gmra.mxu0 %v8041
  %v8103 = vpop.f32.mrf.mxu0
  %v8104 = vadd.f32 0.0, %v8103
  %v8105 = vpop.f32.mrf.mxu0
  %v8106 = vpop.f32.mrf.mxu0
  %v8107 = vadd.f32 0.0, %v8106
  %v8108 = vpop.f32.mrf.mxu0
  %8109 = vmatprep.mubr.bf16.mxu0 0
  %8110 = vmatmul.mubr.bf16.gmra.mxu0 %v8044
  %v8111 = vpop.f32.mrf.mxu0
  %v8112 = vadd.f32 0.0, %v8111
  %v8113 = vpop.f32.mrf.mxu0
  %v8114 = vpop.f32.mrf.mxu0
  %v8115 = vadd.f32 0.0, %v8114
  %v8116 = vpop.f32.mrf.mxu0
  %8117 = vmatprep.mubr.bf16.mxu0 0
  %8118 = vmatmul.mubr.bf16.gmra.mxu0 %v8047
  %v8119 = vpop.f32.mrf.mxu0
  %v8120 = vadd.f32 0.0, %v8119
  %v8121 = vpop.f32.mrf.mxu0
  %v8122 = vpop.f32.mrf.mxu0
  %v8123 = vadd.f32 0.0, %v8122
  %v8124 = vpop.f32.mrf.mxu0
  %8125 = vmatprep.mubr.bf16.mxu0 0
  %8126 = vmatmul.mubr.bf16.gmra.mxu0 %v8050
  %v8127 = vpop.f32.mrf.mxu0
  %v8128 = vadd.f32 0.0, %v8127
  %v8129 = vpop.f32.mrf.mxu0
  %v8130 = vpop.f32.mrf.mxu0
  %v8131 = vadd.f32 0.0, %v8130
  %v8132 = vpop.f32.mrf.mxu0
  %8133 = vmatprep.mubr.bf16.mxu0 0
  %8134 = vmatmul.mubr.bf16.gmra.mxu0 %v8053
  %v8135 = vpop.f32.mrf.mxu0
  %v8136 = vadd.f32 0.0, %v8135
  %v8137 = vpop.f32.mrf.mxu0
  %v8138 = vpop.f32.mrf.mxu0
  %v8139 = vadd.f32 0.0, %v8138
  %v8140 = vpop.f32.mrf.mxu0
  %8141 = vmatprep.mubr.bf16.mxu0 0
  %8142 = vmatmul.mubr.bf16.gmra.mxu0 %v8056
  %v8143 = vpop.f32.mrf.mxu0
  %v8144 = vadd.f32 0.0, %v8143
  %v8145 = vpop.f32.mrf.mxu0
  %v8146 = vpop.f32.mrf.mxu0
  %v8147 = vadd.f32 0.0, %v8146
  %v8148 = vpop.f32.mrf.mxu0
  %8149 = vmatprep.mubr.bf16.mxu0 0
  %8150 = vmatmul.mubr.bf16.gmra.mxu0 %v8059
  %v8151 = vpop.f32.mrf.mxu0
  %v8152 = vadd.f32 0.0, %v8151
  %v8153 = vpop.f32.mrf.mxu0
  %v8154 = vpop.f32.mrf.mxu0
  %v8155 = vadd.f32 0.0, %v8154
  %v8156 = vpop.f32.mrf.mxu0
  %8157 = vdwg.mxu0
  %v8158 = vadd.f32 %v7964, %v8096
  %v8159 = vadd.f32 %v7965, %v8099
  %v8160 = vadd.f32 %v7966, %v8104
  %v8161 = vadd.f32 %v7967, %v8107
  %v8162 = vadd.f32 %v7968, %v8112
  %v8163 = vadd.f32 %v7969, %v8115
  %v8164 = vadd.f32 %v7970, %v8120
  %v8165 = vadd.f32 %v7971, %v8123
  %v8166 = vadd.f32 %v7972, %v8128
  %v8167 = vadd.f32 %v7973, %v8131
  %v8168 = vadd.f32 %v7974, %v8136
  %v8169 = vadd.f32 %v7975, %v8139
  %v8170 = vadd.f32 %v7976, %v8144
  %v8171 = vadd.f32 %v7977, %v8147
  %v8172 = vadd.f32 %v7978, %v8152
  %v8173 = vadd.f32 %v7979, %v8155
  %s8174 = scalar_lea.vmem %s5, 448
  %v8175 = vld [vmem:[%s8174] sm:$0xf]
  %v8176 = vld [vmem:[%s8174 + $0x4] sm:$0xf]
  %v8177 = vld [vmem:[%s8174 + $0x8] sm:$0xf]
  %v8178 = vld [vmem:[%s8174 + $0xc] sm:$0xf]
  %v8179 = vld [vmem:[%s8174 + $0x10] sm:$0xf]
  %v8180 = vld [vmem:[%s8174 + $0x14] sm:$0xf]
  %v8181 = vld [vmem:[%s8174 + $0x18] sm:$0xf]
  %v8182 = vld [vmem:[%s8174 + $0x1c] sm:$0xf]
  %v8183 = vld [vmem:[%s8174 + $0x20] sm:$0xf]
  %v8184 = vld [vmem:[%s8174 + $0x24] sm:$0xf]
  %v8185 = vld [vmem:[%s8174 + $0x28] sm:$0xf]
  %v8186 = vld [vmem:[%s8174 + $0x2c] sm:$0xf]
  %v8187 = vld [vmem:[%s8174 + $0x30] sm:$0xf]
  %v8188 = vld [vmem:[%s8174 + $0x34] sm:$0xf]
  %v8189 = vld [vmem:[%s8174 + $0x38] sm:$0xf]
  %v8190 = vld [vmem:[%s8174 + $0x3c] sm:$0xf]
  %v8207 = vunpack.c.l.b16 %v8175
  %v8208 = vunpack.c.l.b16 %v8176
  %v8209 = vunpack.c.l.b16 %v8177
  %v8210 = vunpack.c.l.b16 %v8178
  %v8211 = vunpack.c.l.b16 %v8179
  %v8212 = vunpack.c.l.b16 %v8180
  %v8213 = vunpack.c.l.b16 %v8181
  %v8214 = vunpack.c.l.b16 %v8182
  %v8215 = vunpack.c.l.b16 %v8183
  %v8216 = vunpack.c.l.b16 %v8184
  %v8217 = vunpack.c.l.b16 %v8185
  %v8218 = vunpack.c.l.b16 %v8186
  %v8219 = vunpack.c.l.b16 %v8187
  %v8220 = vunpack.c.l.b16 %v8188
  %v8221 = vunpack.c.l.b16 %v8189
  %v8222 = vunpack.c.l.b16 %v8190
  %v8223 = vpack.c.b16 %v8208, %v8207
  %v8224 = vpack.c.b16 %v8210, %v8209
  %v8225 = vpack.c.b16 %v8212, %v8211
  %v8226 = vpack.c.b16 %v8214, %v8213
  %v8227 = vpack.c.b16 %v8216, %v8215
  %v8228 = vpack.c.b16 %v8218, %v8217
  %v8229 = vpack.c.b16 %v8220, %v8219
  %v8230 = vpack.c.b16 %v8222, %v8221
  %v8232 = vsel %vm6921, %v8223, 0
  %v8235 = vsel %vm6921, %v8224, 0
  %v8238 = vsel %vm6921, %v8225, 0
  %v8241 = vsel %vm6921, %v8226, 0
  %v8244 = vsel %vm6921, %v8227, 0
  %v8247 = vsel %vm6921, %v8228, 0
  %v8250 = vsel %vm6921, %v8229, 0
  %v8253 = vsel %vm6921, %v8230, 0
  %8255 = vmatprep.subr.bf16.mxu0 0
  %8256 = vmatpush1.bf16.msra.mxu0 0
  %8257 = vmatprep.subr.bf16.mxu0 0
  %8258 = vmatpush1.bf16.msra.mxu0 0
  %8259 = vmatprep.subr.bf16.mxu0 0
  %8260 = vmatpush1.bf16.msra.mxu0 0
  %8261 = vmatprep.subr.bf16.mxu0 0
  %8262 = vmatpush1.bf16.msra.mxu0 0
  %8263 = vmatprep.subr.bf16.mxu0 0
  %8264 = vmatpush1.bf16.msra.mxu0 %v6830
  %8265 = vmatprep.subr.bf16.mxu0 0
  %8266 = vmatpush1.bf16.msra.mxu0 %v6805
  %8267 = vmatprep.subr.bf16.mxu0 0
  %8268 = vmatpush1.bf16.msra.mxu0 %v6780
  %8269 = vmatprep.subr.bf16.mxu0 0
  %8270 = vmatpush1.bf16.msra.mxu0 %v6755
  %8271 = vmatprep.subr.bf16.mxu0 0
  %8272 = vmatpush2.bf16.msra.mxu0 0
  %8273 = vmatprep.subr.bf16.mxu0 0
  %8274 = vmatpush2.bf16.msra.mxu0 0
  %8275 = vmatprep.subr.bf16.mxu0 0
  %8276 = vmatpush2.bf16.msra.mxu0 0
  %8277 = vmatprep.subr.bf16.mxu0 0
  %8278 = vmatpush2.bf16.msra.mxu0 0
  %8279 = vmatprep.subr.bf16.mxu0 0
  %8280 = vmatpush2.bf16.msra.mxu0 0
  %8281 = vmatprep.subr.bf16.mxu0 0
  %8282 = vmatpush2.bf16.msra.mxu0 0
  %8283 = vmatprep.subr.bf16.mxu0 0
  %8284 = vmatpush2.bf16.msra.mxu0 0
  %8285 = vmatprep.subr.bf16.mxu0 0
  %8286 = vmatpush2.bf16.msra.mxu0 0
  %8287 = vmatprep.mubr.bf16.mxu0 0
  %8288 = vmatmul.mubr.bf16.gmra.mxu0 %v8232
  %v8289 = vpop.f32.mrf.mxu0
  %v8290 = vadd.f32 0.0, %v8289
  %v8291 = vpop.f32.mrf.mxu0
  %v8292 = vpop.f32.mrf.mxu0
  %v8293 = vadd.f32 0.0, %v8292
  %v8294 = vpop.f32.mrf.mxu0
  %8295 = vmatprep.mubr.bf16.mxu0 0
  %8296 = vmatmul.mubr.bf16.gmra.mxu0 %v8235
  %v8297 = vpop.f32.mrf.mxu0
  %v8298 = vadd.f32 0.0, %v8297
  %v8299 = vpop.f32.mrf.mxu0
  %v8300 = vpop.f32.mrf.mxu0
  %v8301 = vadd.f32 0.0, %v8300
  %v8302 = vpop.f32.mrf.mxu0
  %8303 = vmatprep.mubr.bf16.mxu0 0
  %8304 = vmatmul.mubr.bf16.gmra.mxu0 %v8238
  %v8305 = vpop.f32.mrf.mxu0
  %v8306 = vadd.f32 0.0, %v8305
  %v8307 = vpop.f32.mrf.mxu0
  %v8308 = vpop.f32.mrf.mxu0
  %v8309 = vadd.f32 0.0, %v8308
  %v8310 = vpop.f32.mrf.mxu0
  %8311 = vmatprep.mubr.bf16.mxu0 0
  %8312 = vmatmul.mubr.bf16.gmra.mxu0 %v8241
  %v8313 = vpop.f32.mrf.mxu0
  %v8314 = vadd.f32 0.0, %v8313
  %v8315 = vpop.f32.mrf.mxu0
  %v8316 = vpop.f32.mrf.mxu0
  %v8317 = vadd.f32 0.0, %v8316
  %v8318 = vpop.f32.mrf.mxu0
  %8319 = vmatprep.mubr.bf16.mxu0 0
  %8320 = vmatmul.mubr.bf16.gmra.mxu0 %v8244
  %v8321 = vpop.f32.mrf.mxu0
  %v8322 = vadd.f32 0.0, %v8321
  %v8323 = vpop.f32.mrf.mxu0
  %v8324 = vpop.f32.mrf.mxu0
  %v8325 = vadd.f32 0.0, %v8324
  %v8326 = vpop.f32.mrf.mxu0
  %8327 = vmatprep.mubr.bf16.mxu0 0
  %8328 = vmatmul.mubr.bf16.gmra.mxu0 %v8247
  %v8329 = vpop.f32.mrf.mxu0
  %v8330 = vadd.f32 0.0, %v8329
  %v8331 = vpop.f32.mrf.mxu0
  %v8332 = vpop.f32.mrf.mxu0
  %v8333 = vadd.f32 0.0, %v8332
  %v8334 = vpop.f32.mrf.mxu0
  %8335 = vmatprep.mubr.bf16.mxu0 0
  %8336 = vmatmul.mubr.bf16.gmra.mxu0 %v8250
  %v8337 = vpop.f32.mrf.mxu0
  %v8338 = vadd.f32 0.0, %v8337
  %v8339 = vpop.f32.mrf.mxu0
  %v8340 = vpop.f32.mrf.mxu0
  %v8341 = vadd.f32 0.0, %v8340
  %v8342 = vpop.f32.mrf.mxu0
  %8343 = vmatprep.mubr.bf16.mxu0 0
  %8344 = vmatmul.mubr.bf16.gmra.mxu0 %v8253
  %v8345 = vpop.f32.mrf.mxu0
  %v8346 = vadd.f32 0.0, %v8345
  %v8347 = vpop.f32.mrf.mxu0
  %v8348 = vpop.f32.mrf.mxu0
  %v8349 = vadd.f32 0.0, %v8348
  %v8350 = vpop.f32.mrf.mxu0
  %8351 = vdwg.mxu0
  %v8352 = vadd.f32 %v8158, %v8290
  %v8353 = vadd.f32 %v8159, %v8293
  %v8354 = vadd.f32 %v8160, %v8298
  %v8355 = vadd.f32 %v8161, %v8301
  %v8356 = vadd.f32 %v8162, %v8306
  %v8357 = vadd.f32 %v8163, %v8309
  %v8358 = vadd.f32 %v8164, %v8314
  %v8359 = vadd.f32 %v8165, %v8317
  %v8360 = vadd.f32 %v8166, %v8322
  %v8361 = vadd.f32 %v8167, %v8325
  %v8362 = vadd.f32 %v8168, %v8330
  %v8363 = vadd.f32 %v8169, %v8333
  %v8364 = vadd.f32 %v8170, %v8338
  %v8365 = vadd.f32 %v8171, %v8341
  %v8366 = vadd.f32 %v8172, %v8346
  %v8367 = vadd.f32 %v8173, %v8349
  %s8368 = scalar_lea.vmem %s5, 512
  %v8369 = vld [vmem:[%s8368] sm:$0xf]
  %v8370 = vld [vmem:[%s8368 + $0x4] sm:$0xf]
  %v8371 = vld [vmem:[%s8368 + $0x8] sm:$0xf]
  %v8372 = vld [vmem:[%s8368 + $0xc] sm:$0xf]
  %v8373 = vld [vmem:[%s8368 + $0x10] sm:$0xf]
  %v8374 = vld [vmem:[%s8368 + $0x14] sm:$0xf]
  %v8375 = vld [vmem:[%s8368 + $0x18] sm:$0xf]
  %v8376 = vld [vmem:[%s8368 + $0x1c] sm:$0xf]
  %v8377 = vld [vmem:[%s8368 + $0x20] sm:$0xf]
  %v8378 = vld [vmem:[%s8368 + $0x24] sm:$0xf]
  %v8379 = vld [vmem:[%s8368 + $0x28] sm:$0xf]
  %v8380 = vld [vmem:[%s8368 + $0x2c] sm:$0xf]
  %v8381 = vld [vmem:[%s8368 + $0x30] sm:$0xf]
  %v8382 = vld [vmem:[%s8368 + $0x34] sm:$0xf]
  %v8383 = vld [vmem:[%s8368 + $0x38] sm:$0xf]
  %v8384 = vld [vmem:[%s8368 + $0x3c] sm:$0xf]
  %v8401 = vunpack.c.l.b16 %v8369
  %v8402 = vunpack.c.l.b16 %v8370
  %v8403 = vunpack.c.l.b16 %v8371
  %v8404 = vunpack.c.l.b16 %v8372
  %v8405 = vunpack.c.l.b16 %v8373
  %v8406 = vunpack.c.l.b16 %v8374
  %v8407 = vunpack.c.l.b16 %v8375
  %v8408 = vunpack.c.l.b16 %v8376
  %v8409 = vunpack.c.l.b16 %v8377
  %v8410 = vunpack.c.l.b16 %v8378
  %v8411 = vunpack.c.l.b16 %v8379
  %v8412 = vunpack.c.l.b16 %v8380
  %v8413 = vunpack.c.l.b16 %v8381
  %v8414 = vunpack.c.l.b16 %v8382
  %v8415 = vunpack.c.l.b16 %v8383
  %v8416 = vunpack.c.l.b16 %v8384
  %v8417 = vpack.c.b16 %v8402, %v8401
  %v8418 = vpack.c.b16 %v8404, %v8403
  %v8419 = vpack.c.b16 %v8406, %v8405
  %v8420 = vpack.c.b16 %v8408, %v8407
  %v8421 = vpack.c.b16 %v8410, %v8409
  %v8422 = vpack.c.b16 %v8412, %v8411
  %v8423 = vpack.c.b16 %v8414, %v8413
  %v8424 = vpack.c.b16 %v8416, %v8415
  %v8426 = vsel %vm6921, %v8417, 0
  %v8429 = vsel %vm6921, %v8418, 0
  %v8432 = vsel %vm6921, %v8419, 0
  %v8435 = vsel %vm6921, %v8420, 0
  %v8438 = vsel %vm6921, %v8421, 0
  %v8441 = vsel %vm6921, %v8422, 0
  %v8444 = vsel %vm6921, %v8423, 0
  %v8447 = vsel %vm6921, %v8424, 0
  %8449 = vmatprep.subr.bf16.mxu0 0
  %8450 = vmatpush1.bf16.msra.mxu0 0
  %8451 = vmatprep.subr.bf16.mxu0 0
  %8452 = vmatpush1.bf16.msra.mxu0 0
  %8453 = vmatprep.subr.bf16.mxu0 0
  %8454 = vmatpush1.bf16.msra.mxu0 0
  %8455 = vmatprep.subr.bf16.mxu0 0
  %8456 = vmatpush1.bf16.msra.mxu0 0
  %8457 = vmatprep.subr.bf16.mxu0 0
  %8458 = vmatpush1.bf16.msra.mxu0 %v6831
  %8459 = vmatprep.subr.bf16.mxu0 0
  %8460 = vmatpush1.bf16.msra.mxu0 %v6806
  %8461 = vmatprep.subr.bf16.mxu0 0
  %8462 = vmatpush1.bf16.msra.mxu0 %v6781
  %8463 = vmatprep.subr.bf16.mxu0 0
  %8464 = vmatpush1.bf16.msra.mxu0 %v6756
  %8465 = vmatprep.subr.bf16.mxu0 0
  %8466 = vmatpush2.bf16.msra.mxu0 0
  %8467 = vmatprep.subr.bf16.mxu0 0
  %8468 = vmatpush2.bf16.msra.mxu0 0
  %8469 = vmatprep.subr.bf16.mxu0 0
  %8470 = vmatpush2.bf16.msra.mxu0 0
  %8471 = vmatprep.subr.bf16.mxu0 0
  %8472 = vmatpush2.bf16.msra.mxu0 0
  %8473 = vmatprep.subr.bf16.mxu0 0
  %8474 = vmatpush2.bf16.msra.mxu0 0
  %8475 = vmatprep.subr.bf16.mxu0 0
  %8476 = vmatpush2.bf16.msra.mxu0 0
  %8477 = vmatprep.subr.bf16.mxu0 0
  %8478 = vmatpush2.bf16.msra.mxu0 0
  %8479 = vmatprep.subr.bf16.mxu0 0
  %8480 = vmatpush2.bf16.msra.mxu0 0
  %8481 = vmatprep.mubr.bf16.mxu0 0
  %8482 = vmatmul.mubr.bf16.gmra.mxu0 %v8426
  %v8483 = vpop.f32.mrf.mxu0
  %v8484 = vadd.f32 0.0, %v8483
  %v8485 = vpop.f32.mrf.mxu0
  %v8486 = vpop.f32.mrf.mxu0
  %v8487 = vadd.f32 0.0, %v8486
  %v8488 = vpop.f32.mrf.mxu0
  %8489 = vmatprep.mubr.bf16.mxu0 0
  %8490 = vmatmul.mubr.bf16.gmra.mxu0 %v8429
  %v8491 = vpop.f32.mrf.mxu0
  %v8492 = vadd.f32 0.0, %v8491
  %v8493 = vpop.f32.mrf.mxu0
  %v8494 = vpop.f32.mrf.mxu0
  %v8495 = vadd.f32 0.0, %v8494
  %v8496 = vpop.f32.mrf.mxu0
  %8497 = vmatprep.mubr.bf16.mxu0 0
  %8498 = vmatmul.mubr.bf16.gmra.mxu0 %v8432
  %v8499 = vpop.f32.mrf.mxu0
  %v8500 = vadd.f32 0.0, %v8499
  %v8501 = vpop.f32.mrf.mxu0
  %v8502 = vpop.f32.mrf.mxu0
  %v8503 = vadd.f32 0.0, %v8502
  %v8504 = vpop.f32.mrf.mxu0
  %8505 = vmatprep.mubr.bf16.mxu0 0
  %8506 = vmatmul.mubr.bf16.gmra.mxu0 %v8435
  %v8507 = vpop.f32.mrf.mxu0
  %v8508 = vadd.f32 0.0, %v8507
  %v8509 = vpop.f32.mrf.mxu0
  %v8510 = vpop.f32.mrf.mxu0
  %v8511 = vadd.f32 0.0, %v8510
  %v8512 = vpop.f32.mrf.mxu0
  %8513 = vmatprep.mubr.bf16.mxu0 0
  %8514 = vmatmul.mubr.bf16.gmra.mxu0 %v8438
  %v8515 = vpop.f32.mrf.mxu0
  %v8516 = vadd.f32 0.0, %v8515
  %v8517 = vpop.f32.mrf.mxu0
  %v8518 = vpop.f32.mrf.mxu0
  %v8519 = vadd.f32 0.0, %v8518
  %v8520 = vpop.f32.mrf.mxu0
  %8521 = vmatprep.mubr.bf16.mxu0 0
  %8522 = vmatmul.mubr.bf16.gmra.mxu0 %v8441
  %v8523 = vpop.f32.mrf.mxu0
  %v8524 = vadd.f32 0.0, %v8523
  %v8525 = vpop.f32.mrf.mxu0
  %v8526 = vpop.f32.mrf.mxu0
  %v8527 = vadd.f32 0.0, %v8526
  %v8528 = vpop.f32.mrf.mxu0
  %8529 = vmatprep.mubr.bf16.mxu0 0
  %8530 = vmatmul.mubr.bf16.gmra.mxu0 %v8444
  %v8531 = vpop.f32.mrf.mxu0
  %v8532 = vadd.f32 0.0, %v8531
  %v8533 = vpop.f32.mrf.mxu0
  %v8534 = vpop.f32.mrf.mxu0
  %v8535 = vadd.f32 0.0, %v8534
  %v8536 = vpop.f32.mrf.mxu0
  %8537 = vmatprep.mubr.bf16.mxu0 0
  %8538 = vmatmul.mubr.bf16.gmra.mxu0 %v8447
  %v8539 = vpop.f32.mrf.mxu0
  %v8540 = vadd.f32 0.0, %v8539
  %v8541 = vpop.f32.mrf.mxu0
  %v8542 = vpop.f32.mrf.mxu0
  %v8543 = vadd.f32 0.0, %v8542
  %v8544 = vpop.f32.mrf.mxu0
  %8545 = vdwg.mxu0
  %v8546 = vadd.f32 %v8352, %v8484
  %v8547 = vadd.f32 %v8353, %v8487
  %v8548 = vadd.f32 %v8354, %v8492
  %v8549 = vadd.f32 %v8355, %v8495
  %v8550 = vadd.f32 %v8356, %v8500
  %v8551 = vadd.f32 %v8357, %v8503
  %v8552 = vadd.f32 %v8358, %v8508
  %v8553 = vadd.f32 %v8359, %v8511
  %v8554 = vadd.f32 %v8360, %v8516
  %v8555 = vadd.f32 %v8361, %v8519
  %v8556 = vadd.f32 %v8362, %v8524
  %v8557 = vadd.f32 %v8363, %v8527
  %v8558 = vadd.f32 %v8364, %v8532
  %v8559 = vadd.f32 %v8365, %v8535
  %v8560 = vadd.f32 %v8366, %v8540
  %v8561 = vadd.f32 %v8367, %v8543
  %s8562 = scalar_lea.vmem %s5, 576
  %v8563 = vld [vmem:[%s8562] sm:$0xf]
  %v8564 = vld [vmem:[%s8562 + $0x4] sm:$0xf]
  %v8565 = vld [vmem:[%s8562 + $0x8] sm:$0xf]
  %v8566 = vld [vmem:[%s8562 + $0xc] sm:$0xf]
  %v8567 = vld [vmem:[%s8562 + $0x10] sm:$0xf]
  %v8568 = vld [vmem:[%s8562 + $0x14] sm:$0xf]
  %v8569 = vld [vmem:[%s8562 + $0x18] sm:$0xf]
  %v8570 = vld [vmem:[%s8562 + $0x1c] sm:$0xf]
  %v8571 = vld [vmem:[%s8562 + $0x20] sm:$0xf]
  %v8572 = vld [vmem:[%s8562 + $0x24] sm:$0xf]
  %v8573 = vld [vmem:[%s8562 + $0x28] sm:$0xf]
  %v8574 = vld [vmem:[%s8562 + $0x2c] sm:$0xf]
  %v8575 = vld [vmem:[%s8562 + $0x30] sm:$0xf]
  %v8576 = vld [vmem:[%s8562 + $0x34] sm:$0xf]
  %v8577 = vld [vmem:[%s8562 + $0x38] sm:$0xf]
  %v8578 = vld [vmem:[%s8562 + $0x3c] sm:$0xf]
  %v8595 = vunpack.c.l.b16 %v8563
  %v8596 = vunpack.c.l.b16 %v8564
  %v8597 = vunpack.c.l.b16 %v8565
  %v8598 = vunpack.c.l.b16 %v8566
  %v8599 = vunpack.c.l.b16 %v8567
  %v8600 = vunpack.c.l.b16 %v8568
  %v8601 = vunpack.c.l.b16 %v8569
  %v8602 = vunpack.c.l.b16 %v8570
  %v8603 = vunpack.c.l.b16 %v8571
  %v8604 = vunpack.c.l.b16 %v8572
  %v8605 = vunpack.c.l.b16 %v8573
  %v8606 = vunpack.c.l.b16 %v8574
  %v8607 = vunpack.c.l.b16 %v8575
  %v8608 = vunpack.c.l.b16 %v8576
  %v8609 = vunpack.c.l.b16 %v8577
  %v8610 = vunpack.c.l.b16 %v8578
  %v8611 = vpack.c.b16 %v8596, %v8595
  %v8612 = vpack.c.b16 %v8598, %v8597
  %v8613 = vpack.c.b16 %v8600, %v8599
  %v8614 = vpack.c.b16 %v8602, %v8601
  %v8615 = vpack.c.b16 %v8604, %v8603
  %v8616 = vpack.c.b16 %v8606, %v8605
  %v8617 = vpack.c.b16 %v8608, %v8607
  %v8618 = vpack.c.b16 %v8610, %v8609
  %v8620 = vsel %vm6921, %v8611, 0
  %v8623 = vsel %vm6921, %v8612, 0
  %v8626 = vsel %vm6921, %v8613, 0
  %v8629 = vsel %vm6921, %v8614, 0
  %v8632 = vsel %vm6921, %v8615, 0
  %v8635 = vsel %vm6921, %v8616, 0
  %v8638 = vsel %vm6921, %v8617, 0
  %v8641 = vsel %vm6921, %v8618, 0
  %8643 = vmatprep.subr.bf16.mxu0 0
  %8644 = vmatpush1.bf16.msra.mxu0 0
  %8645 = vmatprep.subr.bf16.mxu0 0
  %8646 = vmatpush1.bf16.msra.mxu0 0
  %8647 = vmatprep.subr.bf16.mxu0 0
  %8648 = vmatpush1.bf16.msra.mxu0 0
  %8649 = vmatprep.subr.bf16.mxu0 0
  %8650 = vmatpush1.bf16.msra.mxu0 0
  %8651 = vmatprep.subr.bf16.mxu0 0
  %8652 = vmatpush1.bf16.msra.mxu0 %v6832
  %8653 = vmatprep.subr.bf16.mxu0 0
  %8654 = vmatpush1.bf16.msra.mxu0 %v6807
  %8655 = vmatprep.subr.bf16.mxu0 0
  %8656 = vmatpush1.bf16.msra.mxu0 %v6782
  %8657 = vmatprep.subr.bf16.mxu0 0
  %8658 = vmatpush1.bf16.msra.mxu0 %v6757
  %8659 = vmatprep.subr.bf16.mxu0 0
  %8660 = vmatpush2.bf16.msra.mxu0 0
  %8661 = vmatprep.subr.bf16.mxu0 0
  %8662 = vmatpush2.bf16.msra.mxu0 0
  %8663 = vmatprep.subr.bf16.mxu0 0
  %8664 = vmatpush2.bf16.msra.mxu0 0
  %8665 = vmatprep.subr.bf16.mxu0 0
  %8666 = vmatpush2.bf16.msra.mxu0 0
  %8667 = vmatprep.subr.bf16.mxu0 0
  %8668 = vmatpush2.bf16.msra.mxu0 0
  %8669 = vmatprep.subr.bf16.mxu0 0
  %8670 = vmatpush2.bf16.msra.mxu0 0
  %8671 = vmatprep.subr.bf16.mxu0 0
  %8672 = vmatpush2.bf16.msra.mxu0 0
  %8673 = vmatprep.subr.bf16.mxu0 0
  %8674 = vmatpush2.bf16.msra.mxu0 0
  %8675 = vmatprep.mubr.bf16.mxu0 0
  %8676 = vmatmul.mubr.bf16.gmra.mxu0 %v8620
  %v8677 = vpop.f32.mrf.mxu0
  %v8678 = vadd.f32 0.0, %v8677
  %v8679 = vpop.f32.mrf.mxu0
  %v8680 = vpop.f32.mrf.mxu0
  %v8681 = vadd.f32 0.0, %v8680
  %v8682 = vpop.f32.mrf.mxu0
  %8683 = vmatprep.mubr.bf16.mxu0 0
  %8684 = vmatmul.mubr.bf16.gmra.mxu0 %v8623
  %v8685 = vpop.f32.mrf.mxu0
  %v8686 = vadd.f32 0.0, %v8685
  %v8687 = vpop.f32.mrf.mxu0
  %v8688 = vpop.f32.mrf.mxu0
  %v8689 = vadd.f32 0.0, %v8688
  %v8690 = vpop.f32.mrf.mxu0
  %8691 = vmatprep.mubr.bf16.mxu0 0
  %8692 = vmatmul.mubr.bf16.gmra.mxu0 %v8626
  %v8693 = vpop.f32.mrf.mxu0
  %v8694 = vadd.f32 0.0, %v8693
  %v8695 = vpop.f32.mrf.mxu0
  %v8696 = vpop.f32.mrf.mxu0
  %v8697 = vadd.f32 0.0, %v8696
  %v8698 = vpop.f32.mrf.mxu0
  %8699 = vmatprep.mubr.bf16.mxu0 0
  %8700 = vmatmul.mubr.bf16.gmra.mxu0 %v8629
  %v8701 = vpop.f32.mrf.mxu0
  %v8702 = vadd.f32 0.0, %v8701
  %v8703 = vpop.f32.mrf.mxu0
  %v8704 = vpop.f32.mrf.mxu0
  %v8705 = vadd.f32 0.0, %v8704
  %v8706 = vpop.f32.mrf.mxu0
  %8707 = vmatprep.mubr.bf16.mxu0 0
  %8708 = vmatmul.mubr.bf16.gmra.mxu0 %v8632
  %v8709 = vpop.f32.mrf.mxu0
  %v8710 = vadd.f32 0.0, %v8709
  %v8711 = vpop.f32.mrf.mxu0
  %v8712 = vpop.f32.mrf.mxu0
  %v8713 = vadd.f32 0.0, %v8712
  %v8714 = vpop.f32.mrf.mxu0
  %8715 = vmatprep.mubr.bf16.mxu0 0
  %8716 = vmatmul.mubr.bf16.gmra.mxu0 %v8635
  %v8717 = vpop.f32.mrf.mxu0
  %v8718 = vadd.f32 0.0, %v8717
  %v8719 = vpop.f32.mrf.mxu0
  %v8720 = vpop.f32.mrf.mxu0
  %v8721 = vadd.f32 0.0, %v8720
  %v8722 = vpop.f32.mrf.mxu0
  %8723 = vmatprep.mubr.bf16.mxu0 0
  %8724 = vmatmul.mubr.bf16.gmra.mxu0 %v8638
  %v8725 = vpop.f32.mrf.mxu0
  %v8726 = vadd.f32 0.0, %v8725
  %v8727 = vpop.f32.mrf.mxu0
  %v8728 = vpop.f32.mrf.mxu0
  %v8729 = vadd.f32 0.0, %v8728
  %v8730 = vpop.f32.mrf.mxu0
  %8731 = vmatprep.mubr.bf16.mxu0 0
  %8732 = vmatmul.mubr.bf16.gmra.mxu0 %v8641
  %v8733 = vpop.f32.mrf.mxu0
  %v8734 = vadd.f32 0.0, %v8733
  %v8735 = vpop.f32.mrf.mxu0
  %v8736 = vpop.f32.mrf.mxu0
  %v8737 = vadd.f32 0.0, %v8736
  %v8738 = vpop.f32.mrf.mxu0
  %8739 = vdwg.mxu0
  %v8740 = vadd.f32 %v8546, %v8678
  %v8741 = vadd.f32 %v8547, %v8681
  %v8742 = vadd.f32 %v8548, %v8686
  %v8743 = vadd.f32 %v8549, %v8689
  %v8744 = vadd.f32 %v8550, %v8694
  %v8745 = vadd.f32 %v8551, %v8697
  %v8746 = vadd.f32 %v8552, %v8702
  %v8747 = vadd.f32 %v8553, %v8705
  %v8748 = vadd.f32 %v8554, %v8710
  %v8749 = vadd.f32 %v8555, %v8713
  %v8750 = vadd.f32 %v8556, %v8718
  %v8751 = vadd.f32 %v8557, %v8721
  %v8752 = vadd.f32 %v8558, %v8726
  %v8753 = vadd.f32 %v8559, %v8729
  %v8754 = vadd.f32 %v8560, %v8734
  %v8755 = vadd.f32 %v8561, %v8737
  %s8756 = scalar_lea.vmem %s5, 640
  %v8757 = vld [vmem:[%s8756] sm:$0xf]
  %v8758 = vld [vmem:[%s8756 + $0x4] sm:$0xf]
  %v8759 = vld [vmem:[%s8756 + $0x8] sm:$0xf]
  %v8760 = vld [vmem:[%s8756 + $0xc] sm:$0xf]
  %v8761 = vld [vmem:[%s8756 + $0x10] sm:$0xf]
  %v8762 = vld [vmem:[%s8756 + $0x14] sm:$0xf]
  %v8763 = vld [vmem:[%s8756 + $0x18] sm:$0xf]
  %v8764 = vld [vmem:[%s8756 + $0x1c] sm:$0xf]
  %v8765 = vld [vmem:[%s8756 + $0x20] sm:$0xf]
  %v8766 = vld [vmem:[%s8756 + $0x24] sm:$0xf]
  %v8767 = vld [vmem:[%s8756 + $0x28] sm:$0xf]
  %v8768 = vld [vmem:[%s8756 + $0x2c] sm:$0xf]
  %v8769 = vld [vmem:[%s8756 + $0x30] sm:$0xf]
  %v8770 = vld [vmem:[%s8756 + $0x34] sm:$0xf]
  %v8771 = vld [vmem:[%s8756 + $0x38] sm:$0xf]
  %v8772 = vld [vmem:[%s8756 + $0x3c] sm:$0xf]
  %v8789 = vunpack.c.l.b16 %v8757
  %v8790 = vunpack.c.l.b16 %v8758
  %v8791 = vunpack.c.l.b16 %v8759
  %v8792 = vunpack.c.l.b16 %v8760
  %v8793 = vunpack.c.l.b16 %v8761
  %v8794 = vunpack.c.l.b16 %v8762
  %v8795 = vunpack.c.l.b16 %v8763
  %v8796 = vunpack.c.l.b16 %v8764
  %v8797 = vunpack.c.l.b16 %v8765
  %v8798 = vunpack.c.l.b16 %v8766
  %v8799 = vunpack.c.l.b16 %v8767
  %v8800 = vunpack.c.l.b16 %v8768
  %v8801 = vunpack.c.l.b16 %v8769
  %v8802 = vunpack.c.l.b16 %v8770
  %v8803 = vunpack.c.l.b16 %v8771
  %v8804 = vunpack.c.l.b16 %v8772
  %v8805 = vpack.c.b16 %v8790, %v8789
  %v8806 = vpack.c.b16 %v8792, %v8791
  %v8807 = vpack.c.b16 %v8794, %v8793
  %v8808 = vpack.c.b16 %v8796, %v8795
  %v8809 = vpack.c.b16 %v8798, %v8797
  %v8810 = vpack.c.b16 %v8800, %v8799
  %v8811 = vpack.c.b16 %v8802, %v8801
  %v8812 = vpack.c.b16 %v8804, %v8803
  %v8814 = vsel %vm6921, %v8805, 0
  %v8817 = vsel %vm6921, %v8806, 0
  %v8820 = vsel %vm6921, %v8807, 0
  %v8823 = vsel %vm6921, %v8808, 0
  %v8826 = vsel %vm6921, %v8809, 0
  %v8829 = vsel %vm6921, %v8810, 0
  %v8832 = vsel %vm6921, %v8811, 0
  %v8835 = vsel %vm6921, %v8812, 0
  %8837 = vmatprep.subr.bf16.mxu0 0
  %8838 = vmatpush1.bf16.msra.mxu0 0
  %8839 = vmatprep.subr.bf16.mxu0 0
  %8840 = vmatpush1.bf16.msra.mxu0 0
  %8841 = vmatprep.subr.bf16.mxu0 0
  %8842 = vmatpush1.bf16.msra.mxu0 0
  %8843 = vmatprep.subr.bf16.mxu0 0
  %8844 = vmatpush1.bf16.msra.mxu0 0
  %8845 = vmatprep.subr.bf16.mxu0 0
  %8846 = vmatpush1.bf16.msra.mxu0 %v6833
  %8847 = vmatprep.subr.bf16.mxu0 0
  %8848 = vmatpush1.bf16.msra.mxu0 %v6808
  %8849 = vmatprep.subr.bf16.mxu0 0
  %8850 = vmatpush1.bf16.msra.mxu0 %v6783
  %8851 = vmatprep.subr.bf16.mxu0 0
  %8852 = vmatpush1.bf16.msra.mxu0 %v6758
  %8853 = vmatprep.subr.bf16.mxu0 0
  %8854 = vmatpush2.bf16.msra.mxu0 0
  %8855 = vmatprep.subr.bf16.mxu0 0
  %8856 = vmatpush2.bf16.msra.mxu0 0
  %8857 = vmatprep.subr.bf16.mxu0 0
  %8858 = vmatpush2.bf16.msra.mxu0 0
  %8859 = vmatprep.subr.bf16.mxu0 0
  %8860 = vmatpush2.bf16.msra.mxu0 0
  %8861 = vmatprep.subr.bf16.mxu0 0
  %8862 = vmatpush2.bf16.msra.mxu0 0
  %8863 = vmatprep.subr.bf16.mxu0 0
  %8864 = vmatpush2.bf16.msra.mxu0 0
  %8865 = vmatprep.subr.bf16.mxu0 0
  %8866 = vmatpush2.bf16.msra.mxu0 0
  %8867 = vmatprep.subr.bf16.mxu0 0
  %8868 = vmatpush2.bf16.msra.mxu0 0
  %8869 = vmatprep.mubr.bf16.mxu0 0
  %8870 = vmatmul.mubr.bf16.gmra.mxu0 %v8814
  %v8871 = vpop.f32.mrf.mxu0
  %v8872 = vadd.f32 0.0, %v8871
  %v8873 = vpop.f32.mrf.mxu0
  %v8874 = vpop.f32.mrf.mxu0
  %v8875 = vadd.f32 0.0, %v8874
  %v8876 = vpop.f32.mrf.mxu0
  %8877 = vmatprep.mubr.bf16.mxu0 0
  %8878 = vmatmul.mubr.bf16.gmra.mxu0 %v8817
  %v8879 = vpop.f32.mrf.mxu0
  %v8880 = vadd.f32 0.0, %v8879
  %v8881 = vpop.f32.mrf.mxu0
  %v8882 = vpop.f32.mrf.mxu0
  %v8883 = vadd.f32 0.0, %v8882
  %v8884 = vpop.f32.mrf.mxu0
  %8885 = vmatprep.mubr.bf16.mxu0 0
  %8886 = vmatmul.mubr.bf16.gmra.mxu0 %v8820
  %v8887 = vpop.f32.mrf.mxu0
  %v8888 = vadd.f32 0.0, %v8887
  %v8889 = vpop.f32.mrf.mxu0
  %v8890 = vpop.f32.mrf.mxu0
  %v8891 = vadd.f32 0.0, %v8890
  %v8892 = vpop.f32.mrf.mxu0
  %8893 = vmatprep.mubr.bf16.mxu0 0
  %8894 = vmatmul.mubr.bf16.gmra.mxu0 %v8823
  %v8895 = vpop.f32.mrf.mxu0
  %v8896 = vadd.f32 0.0, %v8895
  %v8897 = vpop.f32.mrf.mxu0
  %v8898 = vpop.f32.mrf.mxu0
  %v8899 = vadd.f32 0.0, %v8898
  %v8900 = vpop.f32.mrf.mxu0
  %8901 = vmatprep.mubr.bf16.mxu0 0
  %8902 = vmatmul.mubr.bf16.gmra.mxu0 %v8826
  %v8903 = vpop.f32.mrf.mxu0
  %v8904 = vadd.f32 0.0, %v8903
  %v8905 = vpop.f32.mrf.mxu0
  %v8906 = vpop.f32.mrf.mxu0
  %v8907 = vadd.f32 0.0, %v8906
  %v8908 = vpop.f32.mrf.mxu0
  %8909 = vmatprep.mubr.bf16.mxu0 0
  %8910 = vmatmul.mubr.bf16.gmra.mxu0 %v8829
  %v8911 = vpop.f32.mrf.mxu0
  %v8912 = vadd.f32 0.0, %v8911
  %v8913 = vpop.f32.mrf.mxu0
  %v8914 = vpop.f32.mrf.mxu0
  %v8915 = vadd.f32 0.0, %v8914
  %v8916 = vpop.f32.mrf.mxu0
  %8917 = vmatprep.mubr.bf16.mxu0 0
  %8918 = vmatmul.mubr.bf16.gmra.mxu0 %v8832
  %v8919 = vpop.f32.mrf.mxu0
  %v8920 = vadd.f32 0.0, %v8919
  %v8921 = vpop.f32.mrf.mxu0
  %v8922 = vpop.f32.mrf.mxu0
  %v8923 = vadd.f32 0.0, %v8922
  %v8924 = vpop.f32.mrf.mxu0
  %8925 = vmatprep.mubr.bf16.mxu0 0
  %8926 = vmatmul.mubr.bf16.gmra.mxu0 %v8835
  %v8927 = vpop.f32.mrf.mxu0
  %v8928 = vadd.f32 0.0, %v8927
  %v8929 = vpop.f32.mrf.mxu0
  %v8930 = vpop.f32.mrf.mxu0
  %v8931 = vadd.f32 0.0, %v8930
  %v8932 = vpop.f32.mrf.mxu0
  %8933 = vdwg.mxu0
  %v8934 = vadd.f32 %v8740, %v8872
  %v8935 = vadd.f32 %v8741, %v8875
  %v8936 = vadd.f32 %v8742, %v8880
  %v8937 = vadd.f32 %v8743, %v8883
  %v8938 = vadd.f32 %v8744, %v8888
  %v8939 = vadd.f32 %v8745, %v8891
  %v8940 = vadd.f32 %v8746, %v8896
  %v8941 = vadd.f32 %v8747, %v8899
  %v8942 = vadd.f32 %v8748, %v8904
  %v8943 = vadd.f32 %v8749, %v8907
  %v8944 = vadd.f32 %v8750, %v8912
  %v8945 = vadd.f32 %v8751, %v8915
  %v8946 = vadd.f32 %v8752, %v8920
  %v8947 = vadd.f32 %v8753, %v8923
  %v8948 = vadd.f32 %v8754, %v8928
  %v8949 = vadd.f32 %v8755, %v8931
  %s8950 = scalar_lea.vmem %s5, 704
  %v8951 = vld [vmem:[%s8950] sm:$0xf]
  %v8952 = vld [vmem:[%s8950 + $0x4] sm:$0xf]
  %v8953 = vld [vmem:[%s8950 + $0x8] sm:$0xf]
  %v8954 = vld [vmem:[%s8950 + $0xc] sm:$0xf]
  %v8955 = vld [vmem:[%s8950 + $0x10] sm:$0xf]
  %v8956 = vld [vmem:[%s8950 + $0x14] sm:$0xf]
  %v8957 = vld [vmem:[%s8950 + $0x18] sm:$0xf]
  %v8958 = vld [vmem:[%s8950 + $0x1c] sm:$0xf]
  %v8959 = vld [vmem:[%s8950 + $0x20] sm:$0xf]
  %v8960 = vld [vmem:[%s8950 + $0x24] sm:$0xf]
  %v8961 = vld [vmem:[%s8950 + $0x28] sm:$0xf]
  %v8962 = vld [vmem:[%s8950 + $0x2c] sm:$0xf]
  %v8963 = vld [vmem:[%s8950 + $0x30] sm:$0xf]
  %v8964 = vld [vmem:[%s8950 + $0x34] sm:$0xf]
  %v8965 = vld [vmem:[%s8950 + $0x38] sm:$0xf]
  %v8966 = vld [vmem:[%s8950 + $0x3c] sm:$0xf]
  %v8983 = vunpack.c.l.b16 %v8951
  %v8984 = vunpack.c.l.b16 %v8952
  %v8985 = vunpack.c.l.b16 %v8953
  %v8986 = vunpack.c.l.b16 %v8954
  %v8987 = vunpack.c.l.b16 %v8955
  %v8988 = vunpack.c.l.b16 %v8956
  %v8989 = vunpack.c.l.b16 %v8957
  %v8990 = vunpack.c.l.b16 %v8958
  %v8991 = vunpack.c.l.b16 %v8959
  %v8992 = vunpack.c.l.b16 %v8960
  %v8993 = vunpack.c.l.b16 %v8961
  %v8994 = vunpack.c.l.b16 %v8962
  %v8995 = vunpack.c.l.b16 %v8963
  %v8996 = vunpack.c.l.b16 %v8964
  %v8997 = vunpack.c.l.b16 %v8965
  %v8998 = vunpack.c.l.b16 %v8966
  %v8999 = vpack.c.b16 %v8984, %v8983
  %v9000 = vpack.c.b16 %v8986, %v8985
  %v9001 = vpack.c.b16 %v8988, %v8987
  %v9002 = vpack.c.b16 %v8990, %v8989
  %v9003 = vpack.c.b16 %v8992, %v8991
  %v9004 = vpack.c.b16 %v8994, %v8993
  %v9005 = vpack.c.b16 %v8996, %v8995
  %v9006 = vpack.c.b16 %v8998, %v8997
  %v9008 = vsel %vm6921, %v8999, 0
  %v9011 = vsel %vm6921, %v9000, 0
  %v9014 = vsel %vm6921, %v9001, 0
  %v9017 = vsel %vm6921, %v9002, 0
  %v9020 = vsel %vm6921, %v9003, 0
  %v9023 = vsel %vm6921, %v9004, 0
  %v9026 = vsel %vm6921, %v9005, 0
  %v9029 = vsel %vm6921, %v9006, 0
  %9031 = vmatprep.subr.bf16.mxu0 0
  %9032 = vmatpush1.bf16.msra.mxu0 0
  %9033 = vmatprep.subr.bf16.mxu0 0
  %9034 = vmatpush1.bf16.msra.mxu0 0
  %9035 = vmatprep.subr.bf16.mxu0 0
  %9036 = vmatpush1.bf16.msra.mxu0 0
  %9037 = vmatprep.subr.bf16.mxu0 0
  %9038 = vmatpush1.bf16.msra.mxu0 0
  %9039 = vmatprep.subr.bf16.mxu0 0
  %9040 = vmatpush1.bf16.msra.mxu0 %v6834
  %9041 = vmatprep.subr.bf16.mxu0 0
  %9042 = vmatpush1.bf16.msra.mxu0 %v6809
  %9043 = vmatprep.subr.bf16.mxu0 0
  %9044 = vmatpush1.bf16.msra.mxu0 %v6784
  %9045 = vmatprep.subr.bf16.mxu0 0
  %9046 = vmatpush1.bf16.msra.mxu0 %v6759
  %9047 = vmatprep.subr.bf16.mxu0 0
  %9048 = vmatpush2.bf16.msra.mxu0 0
  %9049 = vmatprep.subr.bf16.mxu0 0
  %9050 = vmatpush2.bf16.msra.mxu0 0
  %9051 = vmatprep.subr.bf16.mxu0 0
  %9052 = vmatpush2.bf16.msra.mxu0 0
  %9053 = vmatprep.subr.bf16.mxu0 0
  %9054 = vmatpush2.bf16.msra.mxu0 0
  %9055 = vmatprep.subr.bf16.mxu0 0
  %9056 = vmatpush2.bf16.msra.mxu0 0
  %9057 = vmatprep.subr.bf16.mxu0 0
  %9058 = vmatpush2.bf16.msra.mxu0 0
  %9059 = vmatprep.subr.bf16.mxu0 0
  %9060 = vmatpush2.bf16.msra.mxu0 0
  %9061 = vmatprep.subr.bf16.mxu0 0
  %9062 = vmatpush2.bf16.msra.mxu0 0
  %9063 = vmatprep.mubr.bf16.mxu0 0
  %9064 = vmatmul.mubr.bf16.gmra.mxu0 %v9008
  %v9065 = vpop.f32.mrf.mxu0
  %v9066 = vadd.f32 0.0, %v9065
  %v9067 = vpop.f32.mrf.mxu0
  %v9068 = vpop.f32.mrf.mxu0
  %v9069 = vadd.f32 0.0, %v9068
  %v9070 = vpop.f32.mrf.mxu0
  %9071 = vmatprep.mubr.bf16.mxu0 0
  %9072 = vmatmul.mubr.bf16.gmra.mxu0 %v9011
  %v9073 = vpop.f32.mrf.mxu0
  %v9074 = vadd.f32 0.0, %v9073
  %v9075 = vpop.f32.mrf.mxu0
  %v9076 = vpop.f32.mrf.mxu0
  %v9077 = vadd.f32 0.0, %v9076
  %v9078 = vpop.f32.mrf.mxu0
  %9079 = vmatprep.mubr.bf16.mxu0 0
  %9080 = vmatmul.mubr.bf16.gmra.mxu0 %v9014
  %v9081 = vpop.f32.mrf.mxu0
  %v9082 = vadd.f32 0.0, %v9081
  %v9083 = vpop.f32.mrf.mxu0
  %v9084 = vpop.f32.mrf.mxu0
  %v9085 = vadd.f32 0.0, %v9084
  %v9086 = vpop.f32.mrf.mxu0
  %9087 = vmatprep.mubr.bf16.mxu0 0
  %9088 = vmatmul.mubr.bf16.gmra.mxu0 %v9017
  %v9089 = vpop.f32.mrf.mxu0
  %v9090 = vadd.f32 0.0, %v9089
  %v9091 = vpop.f32.mrf.mxu0
  %v9092 = vpop.f32.mrf.mxu0
  %v9093 = vadd.f32 0.0, %v9092
  %v9094 = vpop.f32.mrf.mxu0
  %9095 = vmatprep.mubr.bf16.mxu0 0
  %9096 = vmatmul.mubr.bf16.gmra.mxu0 %v9020
  %v9097 = vpop.f32.mrf.mxu0
  %v9098 = vadd.f32 0.0, %v9097
  %v9099 = vpop.f32.mrf.mxu0
  %v9100 = vpop.f32.mrf.mxu0
  %v9101 = vadd.f32 0.0, %v9100
  %v9102 = vpop.f32.mrf.mxu0
  %9103 = vmatprep.mubr.bf16.mxu0 0
  %9104 = vmatmul.mubr.bf16.gmra.mxu0 %v9023
  %v9105 = vpop.f32.mrf.mxu0
  %v9106 = vadd.f32 0.0, %v9105
  %v9107 = vpop.f32.mrf.mxu0
  %v9108 = vpop.f32.mrf.mxu0
  %v9109 = vadd.f32 0.0, %v9108
  %v9110 = vpop.f32.mrf.mxu0
  %9111 = vmatprep.mubr.bf16.mxu0 0
  %9112 = vmatmul.mubr.bf16.gmra.mxu0 %v9026
  %v9113 = vpop.f32.mrf.mxu0
  %v9114 = vadd.f32 0.0, %v9113
  %v9115 = vpop.f32.mrf.mxu0
  %v9116 = vpop.f32.mrf.mxu0
  %v9117 = vadd.f32 0.0, %v9116
  %v9118 = vpop.f32.mrf.mxu0
  %9119 = vmatprep.mubr.bf16.mxu0 0
  %9120 = vmatmul.mubr.bf16.gmra.mxu0 %v9029
  %v9121 = vpop.f32.mrf.mxu0
  %v9122 = vadd.f32 0.0, %v9121
  %v9123 = vpop.f32.mrf.mxu0
  %v9124 = vpop.f32.mrf.mxu0
  %v9125 = vadd.f32 0.0, %v9124
  %v9126 = vpop.f32.mrf.mxu0
  %9127 = vdwg.mxu0
  %v9128 = vadd.f32 %v8934, %v9066
  %v9129 = vadd.f32 %v8935, %v9069
  %v9130 = vadd.f32 %v8936, %v9074
  %v9131 = vadd.f32 %v8937, %v9077
  %v9132 = vadd.f32 %v8938, %v9082
  %v9133 = vadd.f32 %v8939, %v9085
  %v9134 = vadd.f32 %v8940, %v9090
  %v9135 = vadd.f32 %v8941, %v9093
  %v9136 = vadd.f32 %v8942, %v9098
  %v9137 = vadd.f32 %v8943, %v9101
  %v9138 = vadd.f32 %v8944, %v9106
  %v9139 = vadd.f32 %v8945, %v9109
  %v9140 = vadd.f32 %v8946, %v9114
  %v9141 = vadd.f32 %v8947, %v9117
  %v9142 = vadd.f32 %v8948, %v9122
  %v9143 = vadd.f32 %v8949, %v9125
  %s9144 = scalar_lea.vmem %s5, 768
  %v9145 = vld [vmem:[%s9144] sm:$0xf]
  %v9146 = vld [vmem:[%s9144 + $0x4] sm:$0xf]
  %v9147 = vld [vmem:[%s9144 + $0x8] sm:$0xf]
  %v9148 = vld [vmem:[%s9144 + $0xc] sm:$0xf]
  %v9149 = vld [vmem:[%s9144 + $0x10] sm:$0xf]
  %v9150 = vld [vmem:[%s9144 + $0x14] sm:$0xf]
  %v9151 = vld [vmem:[%s9144 + $0x18] sm:$0xf]
  %v9152 = vld [vmem:[%s9144 + $0x1c] sm:$0xf]
  %v9153 = vld [vmem:[%s9144 + $0x20] sm:$0xf]
  %v9154 = vld [vmem:[%s9144 + $0x24] sm:$0xf]
  %v9155 = vld [vmem:[%s9144 + $0x28] sm:$0xf]
  %v9156 = vld [vmem:[%s9144 + $0x2c] sm:$0xf]
  %v9157 = vld [vmem:[%s9144 + $0x30] sm:$0xf]
  %v9158 = vld [vmem:[%s9144 + $0x34] sm:$0xf]
  %v9159 = vld [vmem:[%s9144 + $0x38] sm:$0xf]
  %v9160 = vld [vmem:[%s9144 + $0x3c] sm:$0xf]
  %v9177 = vunpack.c.l.b16 %v9145
  %v9178 = vunpack.c.l.b16 %v9146
  %v9179 = vunpack.c.l.b16 %v9147
  %v9180 = vunpack.c.l.b16 %v9148
  %v9181 = vunpack.c.l.b16 %v9149
  %v9182 = vunpack.c.l.b16 %v9150
  %v9183 = vunpack.c.l.b16 %v9151
  %v9184 = vunpack.c.l.b16 %v9152
  %v9185 = vunpack.c.l.b16 %v9153
  %v9186 = vunpack.c.l.b16 %v9154
  %v9187 = vunpack.c.l.b16 %v9155
  %v9188 = vunpack.c.l.b16 %v9156
  %v9189 = vunpack.c.l.b16 %v9157
  %v9190 = vunpack.c.l.b16 %v9158
  %v9191 = vunpack.c.l.b16 %v9159
  %v9192 = vunpack.c.l.b16 %v9160
  %v9193 = vpack.c.b16 %v9178, %v9177
  %v9194 = vpack.c.b16 %v9180, %v9179
  %v9195 = vpack.c.b16 %v9182, %v9181
  %v9196 = vpack.c.b16 %v9184, %v9183
  %v9197 = vpack.c.b16 %v9186, %v9185
  %v9198 = vpack.c.b16 %v9188, %v9187
  %v9199 = vpack.c.b16 %v9190, %v9189
  %v9200 = vpack.c.b16 %v9192, %v9191
  %v9202 = vsel %vm6921, %v9193, 0
  %v9205 = vsel %vm6921, %v9194, 0
  %v9208 = vsel %vm6921, %v9195, 0
  %v9211 = vsel %vm6921, %v9196, 0
  %v9214 = vsel %vm6921, %v9197, 0
  %v9217 = vsel %vm6921, %v9198, 0
  %v9220 = vsel %vm6921, %v9199, 0
  %v9223 = vsel %vm6921, %v9200, 0
  %9225 = vmatprep.subr.bf16.mxu0 0
  %9226 = vmatpush1.bf16.msra.mxu0 0
  %9227 = vmatprep.subr.bf16.mxu0 0
  %9228 = vmatpush1.bf16.msra.mxu0 0
  %9229 = vmatprep.subr.bf16.mxu0 0
  %9230 = vmatpush1.bf16.msra.mxu0 0
  %9231 = vmatprep.subr.bf16.mxu0 0
  %9232 = vmatpush1.bf16.msra.mxu0 0
  %9233 = vmatprep.subr.bf16.mxu0 0
  %9234 = vmatpush1.bf16.msra.mxu0 %v6835
  %9235 = vmatprep.subr.bf16.mxu0 0
  %9236 = vmatpush1.bf16.msra.mxu0 %v6810
  %9237 = vmatprep.subr.bf16.mxu0 0
  %9238 = vmatpush1.bf16.msra.mxu0 %v6785
  %9239 = vmatprep.subr.bf16.mxu0 0
  %9240 = vmatpush1.bf16.msra.mxu0 %v6760
  %9241 = vmatprep.subr.bf16.mxu0 0
  %9242 = vmatpush2.bf16.msra.mxu0 0
  %9243 = vmatprep.subr.bf16.mxu0 0
  %9244 = vmatpush2.bf16.msra.mxu0 0
  %9245 = vmatprep.subr.bf16.mxu0 0
  %9246 = vmatpush2.bf16.msra.mxu0 0
  %9247 = vmatprep.subr.bf16.mxu0 0
  %9248 = vmatpush2.bf16.msra.mxu0 0
  %9249 = vmatprep.subr.bf16.mxu0 0
  %9250 = vmatpush2.bf16.msra.mxu0 0
  %9251 = vmatprep.subr.bf16.mxu0 0
  %9252 = vmatpush2.bf16.msra.mxu0 0
  %9253 = vmatprep.subr.bf16.mxu0 0
  %9254 = vmatpush2.bf16.msra.mxu0 0
  %9255 = vmatprep.subr.bf16.mxu0 0
  %9256 = vmatpush2.bf16.msra.mxu0 0
  %9257 = vmatprep.mubr.bf16.mxu0 0
  %9258 = vmatmul.mubr.bf16.gmra.mxu0 %v9202
  %v9259 = vpop.f32.mrf.mxu0
  %v9260 = vadd.f32 0.0, %v9259
  %v9261 = vpop.f32.mrf.mxu0
  %v9262 = vpop.f32.mrf.mxu0
  %v9263 = vadd.f32 0.0, %v9262
  %v9264 = vpop.f32.mrf.mxu0
  %9265 = vmatprep.mubr.bf16.mxu0 0
  %9266 = vmatmul.mubr.bf16.gmra.mxu0 %v9205
  %v9267 = vpop.f32.mrf.mxu0
  %v9268 = vadd.f32 0.0, %v9267
  %v9269 = vpop.f32.mrf.mxu0
  %v9270 = vpop.f32.mrf.mxu0
  %v9271 = vadd.f32 0.0, %v9270
  %v9272 = vpop.f32.mrf.mxu0
  %9273 = vmatprep.mubr.bf16.mxu0 0
  %9274 = vmatmul.mubr.bf16.gmra.mxu0 %v9208
  %v9275 = vpop.f32.mrf.mxu0
  %v9276 = vadd.f32 0.0, %v9275
  %v9277 = vpop.f32.mrf.mxu0
  %v9278 = vpop.f32.mrf.mxu0
  %v9279 = vadd.f32 0.0, %v9278
  %v9280 = vpop.f32.mrf.mxu0
  %9281 = vmatprep.mubr.bf16.mxu0 0
  %9282 = vmatmul.mubr.bf16.gmra.mxu0 %v9211
  %v9283 = vpop.f32.mrf.mxu0
  %v9284 = vadd.f32 0.0, %v9283
  %v9285 = vpop.f32.mrf.mxu0
  %v9286 = vpop.f32.mrf.mxu0
  %v9287 = vadd.f32 0.0, %v9286
  %v9288 = vpop.f32.mrf.mxu0
  %9289 = vmatprep.mubr.bf16.mxu0 0
  %9290 = vmatmul.mubr.bf16.gmra.mxu0 %v9214
  %v9291 = vpop.f32.mrf.mxu0
  %v9292 = vadd.f32 0.0, %v9291
  %v9293 = vpop.f32.mrf.mxu0
  %v9294 = vpop.f32.mrf.mxu0
  %v9295 = vadd.f32 0.0, %v9294
  %v9296 = vpop.f32.mrf.mxu0
  %9297 = vmatprep.mubr.bf16.mxu0 0
  %9298 = vmatmul.mubr.bf16.gmra.mxu0 %v9217
  %v9299 = vpop.f32.mrf.mxu0
  %v9300 = vadd.f32 0.0, %v9299
  %v9301 = vpop.f32.mrf.mxu0
  %v9302 = vpop.f32.mrf.mxu0
  %v9303 = vadd.f32 0.0, %v9302
  %v9304 = vpop.f32.mrf.mxu0
  %9305 = vmatprep.mubr.bf16.mxu0 0
  %9306 = vmatmul.mubr.bf16.gmra.mxu0 %v9220
  %v9307 = vpop.f32.mrf.mxu0
  %v9308 = vadd.f32 0.0, %v9307
  %v9309 = vpop.f32.mrf.mxu0
  %v9310 = vpop.f32.mrf.mxu0
  %v9311 = vadd.f32 0.0, %v9310
  %v9312 = vpop.f32.mrf.mxu0
  %9313 = vmatprep.mubr.bf16.mxu0 0
  %9314 = vmatmul.mubr.bf16.gmra.mxu0 %v9223
  %v9315 = vpop.f32.mrf.mxu0
  %v9316 = vadd.f32 0.0, %v9315
  %v9317 = vpop.f32.mrf.mxu0
  %v9318 = vpop.f32.mrf.mxu0
  %v9319 = vadd.f32 0.0, %v9318
  %v9320 = vpop.f32.mrf.mxu0
  %9321 = vdwg.mxu0
  %v9322 = vadd.f32 %v9128, %v9260
  %v9323 = vadd.f32 %v9129, %v9263
  %v9324 = vadd.f32 %v9130, %v9268
  %v9325 = vadd.f32 %v9131, %v9271
  %v9326 = vadd.f32 %v9132, %v9276
  %v9327 = vadd.f32 %v9133, %v9279
  %v9328 = vadd.f32 %v9134, %v9284
  %v9329 = vadd.f32 %v9135, %v9287
  %v9330 = vadd.f32 %v9136, %v9292
  %v9331 = vadd.f32 %v9137, %v9295
  %v9332 = vadd.f32 %v9138, %v9300
  %v9333 = vadd.f32 %v9139, %v9303
  %v9334 = vadd.f32 %v9140, %v9308
  %v9335 = vadd.f32 %v9141, %v9311
  %v9336 = vadd.f32 %v9142, %v9316
  %v9337 = vadd.f32 %v9143, %v9319
  %s9338 = scalar_lea.vmem %s5, 832
  %v9339 = vld [vmem:[%s9338] sm:$0xf]
  %v9340 = vld [vmem:[%s9338 + $0x4] sm:$0xf]
  %v9341 = vld [vmem:[%s9338 + $0x8] sm:$0xf]
  %v9342 = vld [vmem:[%s9338 + $0xc] sm:$0xf]
  %v9343 = vld [vmem:[%s9338 + $0x10] sm:$0xf]
  %v9344 = vld [vmem:[%s9338 + $0x14] sm:$0xf]
  %v9345 = vld [vmem:[%s9338 + $0x18] sm:$0xf]
  %v9346 = vld [vmem:[%s9338 + $0x1c] sm:$0xf]
  %v9347 = vld [vmem:[%s9338 + $0x20] sm:$0xf]
  %v9348 = vld [vmem:[%s9338 + $0x24] sm:$0xf]
  %v9349 = vld [vmem:[%s9338 + $0x28] sm:$0xf]
  %v9350 = vld [vmem:[%s9338 + $0x2c] sm:$0xf]
  %v9351 = vld [vmem:[%s9338 + $0x30] sm:$0xf]
  %v9352 = vld [vmem:[%s9338 + $0x34] sm:$0xf]
  %v9353 = vld [vmem:[%s9338 + $0x38] sm:$0xf]
  %v9354 = vld [vmem:[%s9338 + $0x3c] sm:$0xf]
  %v9371 = vunpack.c.l.b16 %v9339
  %v9372 = vunpack.c.l.b16 %v9340
  %v9373 = vunpack.c.l.b16 %v9341
  %v9374 = vunpack.c.l.b16 %v9342
  %v9375 = vunpack.c.l.b16 %v9343
  %v9376 = vunpack.c.l.b16 %v9344
  %v9377 = vunpack.c.l.b16 %v9345
  %v9378 = vunpack.c.l.b16 %v9346
  %v9379 = vunpack.c.l.b16 %v9347
  %v9380 = vunpack.c.l.b16 %v9348
  %v9381 = vunpack.c.l.b16 %v9349
  %v9382 = vunpack.c.l.b16 %v9350
  %v9383 = vunpack.c.l.b16 %v9351
  %v9384 = vunpack.c.l.b16 %v9352
  %v9385 = vunpack.c.l.b16 %v9353
  %v9386 = vunpack.c.l.b16 %v9354
  %v9387 = vpack.c.b16 %v9372, %v9371
  %v9388 = vpack.c.b16 %v9374, %v9373
  %v9389 = vpack.c.b16 %v9376, %v9375
  %v9390 = vpack.c.b16 %v9378, %v9377
  %v9391 = vpack.c.b16 %v9380, %v9379
  %v9392 = vpack.c.b16 %v9382, %v9381
  %v9393 = vpack.c.b16 %v9384, %v9383
  %v9394 = vpack.c.b16 %v9386, %v9385
  %v9396 = vsel %vm6921, %v9387, 0
  %v9399 = vsel %vm6921, %v9388, 0
  %v9402 = vsel %vm6921, %v9389, 0
  %v9405 = vsel %vm6921, %v9390, 0
  %v9408 = vsel %vm6921, %v9391, 0
  %v9411 = vsel %vm6921, %v9392, 0
  %v9414 = vsel %vm6921, %v9393, 0
  %v9417 = vsel %vm6921, %v9394, 0
  %9419 = vmatprep.subr.bf16.mxu0 0
  %9420 = vmatpush1.bf16.msra.mxu0 0
  %9421 = vmatprep.subr.bf16.mxu0 0
  %9422 = vmatpush1.bf16.msra.mxu0 0
  %9423 = vmatprep.subr.bf16.mxu0 0
  %9424 = vmatpush1.bf16.msra.mxu0 0
  %9425 = vmatprep.subr.bf16.mxu0 0
  %9426 = vmatpush1.bf16.msra.mxu0 0
  %9427 = vmatprep.subr.bf16.mxu0 0
  %9428 = vmatpush1.bf16.msra.mxu0 %v6836
  %9429 = vmatprep.subr.bf16.mxu0 0
  %9430 = vmatpush1.bf16.msra.mxu0 %v6811
  %9431 = vmatprep.subr.bf16.mxu0 0
  %9432 = vmatpush1.bf16.msra.mxu0 %v6786
  %9433 = vmatprep.subr.bf16.mxu0 0
  %9434 = vmatpush1.bf16.msra.mxu0 %v6761
  %9435 = vmatprep.subr.bf16.mxu0 0
  %9436 = vmatpush2.bf16.msra.mxu0 0
  %9437 = vmatprep.subr.bf16.mxu0 0
  %9438 = vmatpush2.bf16.msra.mxu0 0
  %9439 = vmatprep.subr.bf16.mxu0 0
  %9440 = vmatpush2.bf16.msra.mxu0 0
  %9441 = vmatprep.subr.bf16.mxu0 0
  %9442 = vmatpush2.bf16.msra.mxu0 0
  %9443 = vmatprep.subr.bf16.mxu0 0
  %9444 = vmatpush2.bf16.msra.mxu0 0
  %9445 = vmatprep.subr.bf16.mxu0 0
  %9446 = vmatpush2.bf16.msra.mxu0 0
  %9447 = vmatprep.subr.bf16.mxu0 0
  %9448 = vmatpush2.bf16.msra.mxu0 0
  %9449 = vmatprep.subr.bf16.mxu0 0
  %9450 = vmatpush2.bf16.msra.mxu0 0
  %9451 = vmatprep.mubr.bf16.mxu0 0
  %9452 = vmatmul.mubr.bf16.gmra.mxu0 %v9396
  %v9453 = vpop.f32.mrf.mxu0
  %v9454 = vadd.f32 0.0, %v9453
  %v9455 = vpop.f32.mrf.mxu0
  %v9456 = vpop.f32.mrf.mxu0
  %v9457 = vadd.f32 0.0, %v9456
  %v9458 = vpop.f32.mrf.mxu0
  %9459 = vmatprep.mubr.bf16.mxu0 0
  %9460 = vmatmul.mubr.bf16.gmra.mxu0 %v9399
  %v9461 = vpop.f32.mrf.mxu0
  %v9462 = vadd.f32 0.0, %v9461
  %v9463 = vpop.f32.mrf.mxu0
  %v9464 = vpop.f32.mrf.mxu0
  %v9465 = vadd.f32 0.0, %v9464
  %v9466 = vpop.f32.mrf.mxu0
  %9467 = vmatprep.mubr.bf16.mxu0 0
  %9468 = vmatmul.mubr.bf16.gmra.mxu0 %v9402
  %v9469 = vpop.f32.mrf.mxu0
  %v9470 = vadd.f32 0.0, %v9469
  %v9471 = vpop.f32.mrf.mxu0
  %v9472 = vpop.f32.mrf.mxu0
  %v9473 = vadd.f32 0.0, %v9472
  %v9474 = vpop.f32.mrf.mxu0
  %9475 = vmatprep.mubr.bf16.mxu0 0
  %9476 = vmatmul.mubr.bf16.gmra.mxu0 %v9405
  %v9477 = vpop.f32.mrf.mxu0
  %v9478 = vadd.f32 0.0, %v9477
  %v9479 = vpop.f32.mrf.mxu0
  %v9480 = vpop.f32.mrf.mxu0
  %v9481 = vadd.f32 0.0, %v9480
  %v9482 = vpop.f32.mrf.mxu0
  %9483 = vmatprep.mubr.bf16.mxu0 0
  %9484 = vmatmul.mubr.bf16.gmra.mxu0 %v9408
  %v9485 = vpop.f32.mrf.mxu0
  %v9486 = vadd.f32 0.0, %v9485
  %v9487 = vpop.f32.mrf.mxu0
  %v9488 = vpop.f32.mrf.mxu0
  %v9489 = vadd.f32 0.0, %v9488
  %v9490 = vpop.f32.mrf.mxu0
  %9491 = vmatprep.mubr.bf16.mxu0 0
  %9492 = vmatmul.mubr.bf16.gmra.mxu0 %v9411
  %v9493 = vpop.f32.mrf.mxu0
  %v9494 = vadd.f32 0.0, %v9493
  %v9495 = vpop.f32.mrf.mxu0
  %v9496 = vpop.f32.mrf.mxu0
  %v9497 = vadd.f32 0.0, %v9496
  %v9498 = vpop.f32.mrf.mxu0
  %9499 = vmatprep.mubr.bf16.mxu0 0
  %9500 = vmatmul.mubr.bf16.gmra.mxu0 %v9414
  %v9501 = vpop.f32.mrf.mxu0
  %v9502 = vadd.f32 0.0, %v9501
  %v9503 = vpop.f32.mrf.mxu0
  %v9504 = vpop.f32.mrf.mxu0
  %v9505 = vadd.f32 0.0, %v9504
  %v9506 = vpop.f32.mrf.mxu0
  %9507 = vmatprep.mubr.bf16.mxu0 0
  %9508 = vmatmul.mubr.bf16.gmra.mxu0 %v9417
  %v9509 = vpop.f32.mrf.mxu0
  %v9510 = vadd.f32 0.0, %v9509
  %v9511 = vpop.f32.mrf.mxu0
  %v9512 = vpop.f32.mrf.mxu0
  %v9513 = vadd.f32 0.0, %v9512
  %v9514 = vpop.f32.mrf.mxu0
  %9515 = vdwg.mxu0
  %v9516 = vadd.f32 %v9322, %v9454
  %v9517 = vadd.f32 %v9323, %v9457
  %v9518 = vadd.f32 %v9324, %v9462
  %v9519 = vadd.f32 %v9325, %v9465
  %v9520 = vadd.f32 %v9326, %v9470
  %v9521 = vadd.f32 %v9327, %v9473
  %v9522 = vadd.f32 %v9328, %v9478
  %v9523 = vadd.f32 %v9329, %v9481
  %v9524 = vadd.f32 %v9330, %v9486
  %v9525 = vadd.f32 %v9331, %v9489
  %v9526 = vadd.f32 %v9332, %v9494
  %v9527 = vadd.f32 %v9333, %v9497
  %v9528 = vadd.f32 %v9334, %v9502
  %v9529 = vadd.f32 %v9335, %v9505
  %v9530 = vadd.f32 %v9336, %v9510
  %v9531 = vadd.f32 %v9337, %v9513
  %s9532 = scalar_lea.vmem %s5, 896
  %v9533 = vld [vmem:[%s9532] sm:$0xf]
  %v9534 = vld [vmem:[%s9532 + $0x4] sm:$0xf]
  %v9535 = vld [vmem:[%s9532 + $0x8] sm:$0xf]
  %v9536 = vld [vmem:[%s9532 + $0xc] sm:$0xf]
  %v9537 = vld [vmem:[%s9532 + $0x10] sm:$0xf]
  %v9538 = vld [vmem:[%s9532 + $0x14] sm:$0xf]
  %v9539 = vld [vmem:[%s9532 + $0x18] sm:$0xf]
  %v9540 = vld [vmem:[%s9532 + $0x1c] sm:$0xf]
  %v9541 = vld [vmem:[%s9532 + $0x20] sm:$0xf]
  %v9542 = vld [vmem:[%s9532 + $0x24] sm:$0xf]
  %v9543 = vld [vmem:[%s9532 + $0x28] sm:$0xf]
  %v9544 = vld [vmem:[%s9532 + $0x2c] sm:$0xf]
  %v9545 = vld [vmem:[%s9532 + $0x30] sm:$0xf]
  %v9546 = vld [vmem:[%s9532 + $0x34] sm:$0xf]
  %v9547 = vld [vmem:[%s9532 + $0x38] sm:$0xf]
  %v9548 = vld [vmem:[%s9532 + $0x3c] sm:$0xf]
  %v9565 = vunpack.c.l.b16 %v9533
  %v9566 = vunpack.c.l.b16 %v9534
  %v9567 = vunpack.c.l.b16 %v9535
  %v9568 = vunpack.c.l.b16 %v9536
  %v9569 = vunpack.c.l.b16 %v9537
  %v9570 = vunpack.c.l.b16 %v9538
  %v9571 = vunpack.c.l.b16 %v9539
  %v9572 = vunpack.c.l.b16 %v9540
  %v9573 = vunpack.c.l.b16 %v9541
  %v9574 = vunpack.c.l.b16 %v9542
  %v9575 = vunpack.c.l.b16 %v9543
  %v9576 = vunpack.c.l.b16 %v9544
  %v9577 = vunpack.c.l.b16 %v9545
  %v9578 = vunpack.c.l.b16 %v9546
  %v9579 = vunpack.c.l.b16 %v9547
  %v9580 = vunpack.c.l.b16 %v9548
  %v9581 = vpack.c.b16 %v9566, %v9565
  %v9582 = vpack.c.b16 %v9568, %v9567
  %v9583 = vpack.c.b16 %v9570, %v9569
  %v9584 = vpack.c.b16 %v9572, %v9571
  %v9585 = vpack.c.b16 %v9574, %v9573
  %v9586 = vpack.c.b16 %v9576, %v9575
  %v9587 = vpack.c.b16 %v9578, %v9577
  %v9588 = vpack.c.b16 %v9580, %v9579
  %v9590 = vsel %vm6921, %v9581, 0
  %v9593 = vsel %vm6921, %v9582, 0
  %v9596 = vsel %vm6921, %v9583, 0
  %v9599 = vsel %vm6921, %v9584, 0
  %v9602 = vsel %vm6921, %v9585, 0
  %v9605 = vsel %vm6921, %v9586, 0
  %v9608 = vsel %vm6921, %v9587, 0
  %v9611 = vsel %vm6921, %v9588, 0
  %9613 = vmatprep.subr.bf16.mxu0 0
  %9614 = vmatpush1.bf16.msra.mxu0 0
  %9615 = vmatprep.subr.bf16.mxu0 0
  %9616 = vmatpush1.bf16.msra.mxu0 0
  %9617 = vmatprep.subr.bf16.mxu0 0
  %9618 = vmatpush1.bf16.msra.mxu0 0
  %9619 = vmatprep.subr.bf16.mxu0 0
  %9620 = vmatpush1.bf16.msra.mxu0 0
  %9621 = vmatprep.subr.bf16.mxu0 0
  %9622 = vmatpush1.bf16.msra.mxu0 %v6837
  %9623 = vmatprep.subr.bf16.mxu0 0
  %9624 = vmatpush1.bf16.msra.mxu0 %v6812
  %9625 = vmatprep.subr.bf16.mxu0 0
  %9626 = vmatpush1.bf16.msra.mxu0 %v6787
  %9627 = vmatprep.subr.bf16.mxu0 0
  %9628 = vmatpush1.bf16.msra.mxu0 %v6762
  %9629 = vmatprep.subr.bf16.mxu0 0
  %9630 = vmatpush2.bf16.msra.mxu0 0
  %9631 = vmatprep.subr.bf16.mxu0 0
  %9632 = vmatpush2.bf16.msra.mxu0 0
  %9633 = vmatprep.subr.bf16.mxu0 0
  %9634 = vmatpush2.bf16.msra.mxu0 0
  %9635 = vmatprep.subr.bf16.mxu0 0
  %9636 = vmatpush2.bf16.msra.mxu0 0
  %9637 = vmatprep.subr.bf16.mxu0 0
  %9638 = vmatpush2.bf16.msra.mxu0 0
  %9639 = vmatprep.subr.bf16.mxu0 0
  %9640 = vmatpush2.bf16.msra.mxu0 0
  %9641 = vmatprep.subr.bf16.mxu0 0
  %9642 = vmatpush2.bf16.msra.mxu0 0
  %9643 = vmatprep.subr.bf16.mxu0 0
  %9644 = vmatpush2.bf16.msra.mxu0 0
  %9645 = vmatprep.mubr.bf16.mxu0 0
  %9646 = vmatmul.mubr.bf16.gmra.mxu0 %v9590
  %v9647 = vpop.f32.mrf.mxu0
  %v9648 = vadd.f32 0.0, %v9647
  %v9649 = vpop.f32.mrf.mxu0
  %v9650 = vpop.f32.mrf.mxu0
  %v9651 = vadd.f32 0.0, %v9650
  %v9652 = vpop.f32.mrf.mxu0
  %9653 = vmatprep.mubr.bf16.mxu0 0
  %9654 = vmatmul.mubr.bf16.gmra.mxu0 %v9593
  %v9655 = vpop.f32.mrf.mxu0
  %v9656 = vadd.f32 0.0, %v9655
  %v9657 = vpop.f32.mrf.mxu0
  %v9658 = vpop.f32.mrf.mxu0
  %v9659 = vadd.f32 0.0, %v9658
  %v9660 = vpop.f32.mrf.mxu0
  %9661 = vmatprep.mubr.bf16.mxu0 0
  %9662 = vmatmul.mubr.bf16.gmra.mxu0 %v9596
  %v9663 = vpop.f32.mrf.mxu0
  %v9664 = vadd.f32 0.0, %v9663
  %v9665 = vpop.f32.mrf.mxu0
  %v9666 = vpop.f32.mrf.mxu0
  %v9667 = vadd.f32 0.0, %v9666
  %v9668 = vpop.f32.mrf.mxu0
  %9669 = vmatprep.mubr.bf16.mxu0 0
  %9670 = vmatmul.mubr.bf16.gmra.mxu0 %v9599
  %v9671 = vpop.f32.mrf.mxu0
  %v9672 = vadd.f32 0.0, %v9671
  %v9673 = vpop.f32.mrf.mxu0
  %v9674 = vpop.f32.mrf.mxu0
  %v9675 = vadd.f32 0.0, %v9674
  %v9676 = vpop.f32.mrf.mxu0
  %9677 = vmatprep.mubr.bf16.mxu0 0
  %9678 = vmatmul.mubr.bf16.gmra.mxu0 %v9602
  %v9679 = vpop.f32.mrf.mxu0
  %v9680 = vadd.f32 0.0, %v9679
  %v9681 = vpop.f32.mrf.mxu0
  %v9682 = vpop.f32.mrf.mxu0
  %v9683 = vadd.f32 0.0, %v9682
  %v9684 = vpop.f32.mrf.mxu0
  %9685 = vmatprep.mubr.bf16.mxu0 0
  %9686 = vmatmul.mubr.bf16.gmra.mxu0 %v9605
  %v9687 = vpop.f32.mrf.mxu0
  %v9688 = vadd.f32 0.0, %v9687
  %v9689 = vpop.f32.mrf.mxu0
  %v9690 = vpop.f32.mrf.mxu0
  %v9691 = vadd.f32 0.0, %v9690
  %v9692 = vpop.f32.mrf.mxu0
  %9693 = vmatprep.mubr.bf16.mxu0 0
  %9694 = vmatmul.mubr.bf16.gmra.mxu0 %v9608
  %v9695 = vpop.f32.mrf.mxu0
  %v9696 = vadd.f32 0.0, %v9695
  %v9697 = vpop.f32.mrf.mxu0
  %v9698 = vpop.f32.mrf.mxu0
  %v9699 = vadd.f32 0.0, %v9698
  %v9700 = vpop.f32.mrf.mxu0
  %9701 = vmatprep.mubr.bf16.mxu0 0
  %9702 = vmatmul.mubr.bf16.gmra.mxu0 %v9611
  %v9703 = vpop.f32.mrf.mxu0
  %v9704 = vadd.f32 0.0, %v9703
  %v9705 = vpop.f32.mrf.mxu0
  %v9706 = vpop.f32.mrf.mxu0
  %v9707 = vadd.f32 0.0, %v9706
  %v9708 = vpop.f32.mrf.mxu0
  %9709 = vdwg.mxu0
  %v9710 = vadd.f32 %v9516, %v9648
  %v9711 = vadd.f32 %v9517, %v9651
  %v9712 = vadd.f32 %v9518, %v9656
  %v9713 = vadd.f32 %v9519, %v9659
  %v9714 = vadd.f32 %v9520, %v9664
  %v9715 = vadd.f32 %v9521, %v9667
  %v9716 = vadd.f32 %v9522, %v9672
  %v9717 = vadd.f32 %v9523, %v9675
  %v9718 = vadd.f32 %v9524, %v9680
  %v9719 = vadd.f32 %v9525, %v9683
  %v9720 = vadd.f32 %v9526, %v9688
  %v9721 = vadd.f32 %v9527, %v9691
  %v9722 = vadd.f32 %v9528, %v9696
  %v9723 = vadd.f32 %v9529, %v9699
  %v9724 = vadd.f32 %v9530, %v9704
  %v9725 = vadd.f32 %v9531, %v9707
  %s9726 = scalar_lea.vmem %s5, 960
  %v9727 = vld [vmem:[%s9726] sm:$0xf]
  %v9728 = vld [vmem:[%s9726 + $0x4] sm:$0xf]
  %v9729 = vld [vmem:[%s9726 + $0x8] sm:$0xf]
  %v9730 = vld [vmem:[%s9726 + $0xc] sm:$0xf]
  %v9731 = vld [vmem:[%s9726 + $0x10] sm:$0xf]
  %v9732 = vld [vmem:[%s9726 + $0x14] sm:$0xf]
  %v9733 = vld [vmem:[%s9726 + $0x18] sm:$0xf]
  %v9734 = vld [vmem:[%s9726 + $0x1c] sm:$0xf]
  %v9735 = vld [vmem:[%s9726 + $0x20] sm:$0xf]
  %v9736 = vld [vmem:[%s9726 + $0x24] sm:$0xf]
  %v9737 = vld [vmem:[%s9726 + $0x28] sm:$0xf]
  %v9738 = vld [vmem:[%s9726 + $0x2c] sm:$0xf]
  %v9739 = vld [vmem:[%s9726 + $0x30] sm:$0xf]
  %v9740 = vld [vmem:[%s9726 + $0x34] sm:$0xf]
  %v9741 = vld [vmem:[%s9726 + $0x38] sm:$0xf]
  %v9742 = vld [vmem:[%s9726 + $0x3c] sm:$0xf]
  %v9759 = vunpack.c.l.b16 %v9727
  %v9760 = vunpack.c.l.b16 %v9728
  %v9761 = vunpack.c.l.b16 %v9729
  %v9762 = vunpack.c.l.b16 %v9730
  %v9763 = vunpack.c.l.b16 %v9731
  %v9764 = vunpack.c.l.b16 %v9732
  %v9765 = vunpack.c.l.b16 %v9733
  %v9766 = vunpack.c.l.b16 %v9734
  %v9767 = vunpack.c.l.b16 %v9735
  %v9768 = vunpack.c.l.b16 %v9736
  %v9769 = vunpack.c.l.b16 %v9737
  %v9770 = vunpack.c.l.b16 %v9738
  %v9771 = vunpack.c.l.b16 %v9739
  %v9772 = vunpack.c.l.b16 %v9740
  %v9773 = vunpack.c.l.b16 %v9741
  %v9774 = vunpack.c.l.b16 %v9742
  %v9775 = vpack.c.b16 %v9760, %v9759
  %v9776 = vpack.c.b16 %v9762, %v9761
  %v9777 = vpack.c.b16 %v9764, %v9763
  %v9778 = vpack.c.b16 %v9766, %v9765
  %v9779 = vpack.c.b16 %v9768, %v9767
  %v9780 = vpack.c.b16 %v9770, %v9769
  %v9781 = vpack.c.b16 %v9772, %v9771
  %v9782 = vpack.c.b16 %v9774, %v9773
  %v9784 = vsel %vm6921, %v9775, 0
  %v9787 = vsel %vm6921, %v9776, 0
  %v9790 = vsel %vm6921, %v9777, 0
  %v9793 = vsel %vm6921, %v9778, 0
  %v9796 = vsel %vm6921, %v9779, 0
  %v9799 = vsel %vm6921, %v9780, 0
  %v9802 = vsel %vm6921, %v9781, 0
  %v9805 = vsel %vm6921, %v9782, 0
  %9807 = vmatprep.subr.bf16.mxu0 0
  %9808 = vmatpush1.bf16.msra.mxu0 0
  %9809 = vmatprep.subr.bf16.mxu0 0
  %9810 = vmatpush1.bf16.msra.mxu0 0
  %9811 = vmatprep.subr.bf16.mxu0 0
  %9812 = vmatpush1.bf16.msra.mxu0 0
  %9813 = vmatprep.subr.bf16.mxu0 0
  %9814 = vmatpush1.bf16.msra.mxu0 0
  %9815 = vmatprep.subr.bf16.mxu0 0
  %9816 = vmatpush1.bf16.msra.mxu0 %v6838
  %9817 = vmatprep.subr.bf16.mxu0 0
  %9818 = vmatpush1.bf16.msra.mxu0 %v6813
  %9819 = vmatprep.subr.bf16.mxu0 0
  %9820 = vmatpush1.bf16.msra.mxu0 %v6788
  %9821 = vmatprep.subr.bf16.mxu0 0
  %9822 = vmatpush1.bf16.msra.mxu0 %v6763
  %9823 = vmatprep.subr.bf16.mxu0 0
  %9824 = vmatpush2.bf16.msra.mxu0 0
  %9825 = vmatprep.subr.bf16.mxu0 0
  %9826 = vmatpush2.bf16.msra.mxu0 0
  %9827 = vmatprep.subr.bf16.mxu0 0
  %9828 = vmatpush2.bf16.msra.mxu0 0
  %9829 = vmatprep.subr.bf16.mxu0 0
  %9830 = vmatpush2.bf16.msra.mxu0 0
  %9831 = vmatprep.subr.bf16.mxu0 0
  %9832 = vmatpush2.bf16.msra.mxu0 0
  %9833 = vmatprep.subr.bf16.mxu0 0
  %9834 = vmatpush2.bf16.msra.mxu0 0
  %9835 = vmatprep.subr.bf16.mxu0 0
  %9836 = vmatpush2.bf16.msra.mxu0 0
  %9837 = vmatprep.subr.bf16.mxu0 0
  %9838 = vmatpush2.bf16.msra.mxu0 0
  %9839 = vmatprep.mubr.bf16.mxu0 0
  %9840 = vmatmul.mubr.bf16.gmra.mxu0 %v9784
  %v9841 = vpop.f32.mrf.mxu0
  %v9842 = vadd.f32 0.0, %v9841
  %v9843 = vpop.f32.mrf.mxu0
  %v9844 = vpop.f32.mrf.mxu0
  %v9845 = vadd.f32 0.0, %v9844
  %v9846 = vpop.f32.mrf.mxu0
  %9847 = vmatprep.mubr.bf16.mxu0 0
  %9848 = vmatmul.mubr.bf16.gmra.mxu0 %v9787
  %v9849 = vpop.f32.mrf.mxu0
  %v9850 = vadd.f32 0.0, %v9849
  %v9851 = vpop.f32.mrf.mxu0
  %v9852 = vpop.f32.mrf.mxu0
  %v9853 = vadd.f32 0.0, %v9852
  %v9854 = vpop.f32.mrf.mxu0
  %9855 = vmatprep.mubr.bf16.mxu0 0
  %9856 = vmatmul.mubr.bf16.gmra.mxu0 %v9790
  %v9857 = vpop.f32.mrf.mxu0
  %v9858 = vadd.f32 0.0, %v9857
  %v9859 = vpop.f32.mrf.mxu0
  %v9860 = vpop.f32.mrf.mxu0
  %v9861 = vadd.f32 0.0, %v9860
  %v9862 = vpop.f32.mrf.mxu0
  %9863 = vmatprep.mubr.bf16.mxu0 0
  %9864 = vmatmul.mubr.bf16.gmra.mxu0 %v9793
  %v9865 = vpop.f32.mrf.mxu0
  %v9866 = vadd.f32 0.0, %v9865
  %v9867 = vpop.f32.mrf.mxu0
  %v9868 = vpop.f32.mrf.mxu0
  %v9869 = vadd.f32 0.0, %v9868
  %v9870 = vpop.f32.mrf.mxu0
  %9871 = vmatprep.mubr.bf16.mxu0 0
  %9872 = vmatmul.mubr.bf16.gmra.mxu0 %v9796
  %v9873 = vpop.f32.mrf.mxu0
  %v9874 = vadd.f32 0.0, %v9873
  %v9875 = vpop.f32.mrf.mxu0
  %v9876 = vpop.f32.mrf.mxu0
  %v9877 = vadd.f32 0.0, %v9876
  %v9878 = vpop.f32.mrf.mxu0
  %9879 = vmatprep.mubr.bf16.mxu0 0
  %9880 = vmatmul.mubr.bf16.gmra.mxu0 %v9799
  %v9881 = vpop.f32.mrf.mxu0
  %v9882 = vadd.f32 0.0, %v9881
  %v9883 = vpop.f32.mrf.mxu0
  %v9884 = vpop.f32.mrf.mxu0
  %v9885 = vadd.f32 0.0, %v9884
  %v9886 = vpop.f32.mrf.mxu0
  %9887 = vmatprep.mubr.bf16.mxu0 0
  %9888 = vmatmul.mubr.bf16.gmra.mxu0 %v9802
  %v9889 = vpop.f32.mrf.mxu0
  %v9890 = vadd.f32 0.0, %v9889
  %v9891 = vpop.f32.mrf.mxu0
  %v9892 = vpop.f32.mrf.mxu0
  %v9893 = vadd.f32 0.0, %v9892
  %v9894 = vpop.f32.mrf.mxu0
  %9895 = vmatprep.mubr.bf16.mxu0 0
  %9896 = vmatmul.mubr.bf16.gmra.mxu0 %v9805
  %v9897 = vpop.f32.mrf.mxu0
  %v9898 = vadd.f32 0.0, %v9897
  %v9899 = vpop.f32.mrf.mxu0
  %v9900 = vpop.f32.mrf.mxu0
  %v9901 = vadd.f32 0.0, %v9900
  %v9902 = vpop.f32.mrf.mxu0
  %9903 = vdwg.mxu0
  %v9904 = vadd.f32 %v9710, %v9842
  %v9905 = vadd.f32 %v9711, %v9845
  %v9906 = vadd.f32 %v9712, %v9850
  %v9907 = vadd.f32 %v9713, %v9853
  %v9908 = vadd.f32 %v9714, %v9858
  %v9909 = vadd.f32 %v9715, %v9861
  %v9910 = vadd.f32 %v9716, %v9866
  %v9911 = vadd.f32 %v9717, %v9869
  %v9912 = vadd.f32 %v9718, %v9874
  %v9913 = vadd.f32 %v9719, %v9877
  %v9914 = vadd.f32 %v9720, %v9882
  %v9915 = vadd.f32 %v9721, %v9885
  %v9916 = vadd.f32 %v9722, %v9890
  %v9917 = vadd.f32 %v9723, %v9893
  %v9918 = vadd.f32 %v9724, %v9898
  %v9919 = vadd.f32 %v9725, %v9901
  %s9920 = scalar_lea.vmem %s5, 1024
  %v9921 = vld [vmem:[%s9920] sm:$0xf]
  %v9922 = vld [vmem:[%s9920 + $0x4] sm:$0xf]
  %v9923 = vld [vmem:[%s9920 + $0x8] sm:$0xf]
  %v9924 = vld [vmem:[%s9920 + $0xc] sm:$0xf]
  %v9925 = vld [vmem:[%s9920 + $0x10] sm:$0xf]
  %v9926 = vld [vmem:[%s9920 + $0x14] sm:$0xf]
  %v9927 = vld [vmem:[%s9920 + $0x18] sm:$0xf]
  %v9928 = vld [vmem:[%s9920 + $0x1c] sm:$0xf]
  %v9929 = vld [vmem:[%s9920 + $0x20] sm:$0xf]
  %v9930 = vld [vmem:[%s9920 + $0x24] sm:$0xf]
  %v9931 = vld [vmem:[%s9920 + $0x28] sm:$0xf]
  %v9932 = vld [vmem:[%s9920 + $0x2c] sm:$0xf]
  %v9933 = vld [vmem:[%s9920 + $0x30] sm:$0xf]
  %v9934 = vld [vmem:[%s9920 + $0x34] sm:$0xf]
  %v9935 = vld [vmem:[%s9920 + $0x38] sm:$0xf]
  %v9936 = vld [vmem:[%s9920 + $0x3c] sm:$0xf]
  %v9953 = vunpack.c.l.b16 %v9921
  %v9954 = vunpack.c.l.b16 %v9922
  %v9955 = vunpack.c.l.b16 %v9923
  %v9956 = vunpack.c.l.b16 %v9924
  %v9957 = vunpack.c.l.b16 %v9925
  %v9958 = vunpack.c.l.b16 %v9926
  %v9959 = vunpack.c.l.b16 %v9927
  %v9960 = vunpack.c.l.b16 %v9928
  %v9961 = vunpack.c.l.b16 %v9929
  %v9962 = vunpack.c.l.b16 %v9930
  %v9963 = vunpack.c.l.b16 %v9931
  %v9964 = vunpack.c.l.b16 %v9932
  %v9965 = vunpack.c.l.b16 %v9933
  %v9966 = vunpack.c.l.b16 %v9934
  %v9967 = vunpack.c.l.b16 %v9935
  %v9968 = vunpack.c.l.b16 %v9936
  %v9969 = vpack.c.b16 %v9954, %v9953
  %v9970 = vpack.c.b16 %v9956, %v9955
  %v9971 = vpack.c.b16 %v9958, %v9957
  %v9972 = vpack.c.b16 %v9960, %v9959
  %v9973 = vpack.c.b16 %v9962, %v9961
  %v9974 = vpack.c.b16 %v9964, %v9963
  %v9975 = vpack.c.b16 %v9966, %v9965
  %v9976 = vpack.c.b16 %v9968, %v9967
  %v9978 = vsel %vm6921, %v9969, 0
  %v9981 = vsel %vm6921, %v9970, 0
  %v9984 = vsel %vm6921, %v9971, 0
  %v9987 = vsel %vm6921, %v9972, 0
  %v9990 = vsel %vm6921, %v9973, 0
  %v9993 = vsel %vm6921, %v9974, 0
  %v9996 = vsel %vm6921, %v9975, 0
  %v9999 = vsel %vm6921, %v9976, 0
  %10001 = vmatprep.subr.bf16.mxu0 0
  %10002 = vmatpush1.bf16.msra.mxu0 0
  %10003 = vmatprep.subr.bf16.mxu0 0
  %10004 = vmatpush1.bf16.msra.mxu0 0
  %10005 = vmatprep.subr.bf16.mxu0 0
  %10006 = vmatpush1.bf16.msra.mxu0 0
  %10007 = vmatprep.subr.bf16.mxu0 0
  %10008 = vmatpush1.bf16.msra.mxu0 0
  %10009 = vmatprep.subr.bf16.mxu0 0
  %10010 = vmatpush1.bf16.msra.mxu0 %v6839
  %10011 = vmatprep.subr.bf16.mxu0 0
  %10012 = vmatpush1.bf16.msra.mxu0 %v6814
  %10013 = vmatprep.subr.bf16.mxu0 0
  %10014 = vmatpush1.bf16.msra.mxu0 %v6789
  %10015 = vmatprep.subr.bf16.mxu0 0
  %10016 = vmatpush1.bf16.msra.mxu0 %v6764
  %10017 = vmatprep.subr.bf16.mxu0 0
  %10018 = vmatpush2.bf16.msra.mxu0 0
  %10019 = vmatprep.subr.bf16.mxu0 0
  %10020 = vmatpush2.bf16.msra.mxu0 0
  %10021 = vmatprep.subr.bf16.mxu0 0
  %10022 = vmatpush2.bf16.msra.mxu0 0
  %10023 = vmatprep.subr.bf16.mxu0 0
  %10024 = vmatpush2.bf16.msra.mxu0 0
  %10025 = vmatprep.subr.bf16.mxu0 0
  %10026 = vmatpush2.bf16.msra.mxu0 0
  %10027 = vmatprep.subr.bf16.mxu0 0
  %10028 = vmatpush2.bf16.msra.mxu0 0
  %10029 = vmatprep.subr.bf16.mxu0 0
  %10030 = vmatpush2.bf16.msra.mxu0 0
  %10031 = vmatprep.subr.bf16.mxu0 0
  %10032 = vmatpush2.bf16.msra.mxu0 0
  %10033 = vmatprep.mubr.bf16.mxu0 0
  %10034 = vmatmul.mubr.bf16.gmra.mxu0 %v9978
  %v10035 = vpop.f32.mrf.mxu0
  %v10036 = vadd.f32 0.0, %v10035
  %v10037 = vpop.f32.mrf.mxu0
  %v10038 = vpop.f32.mrf.mxu0
  %v10039 = vadd.f32 0.0, %v10038
  %v10040 = vpop.f32.mrf.mxu0
  %10041 = vmatprep.mubr.bf16.mxu0 0
  %10042 = vmatmul.mubr.bf16.gmra.mxu0 %v9981
  %v10043 = vpop.f32.mrf.mxu0
  %v10044 = vadd.f32 0.0, %v10043
  %v10045 = vpop.f32.mrf.mxu0
  %v10046 = vpop.f32.mrf.mxu0
  %v10047 = vadd.f32 0.0, %v10046
  %v10048 = vpop.f32.mrf.mxu0
  %10049 = vmatprep.mubr.bf16.mxu0 0
  %10050 = vmatmul.mubr.bf16.gmra.mxu0 %v9984
  %v10051 = vpop.f32.mrf.mxu0
  %v10052 = vadd.f32 0.0, %v10051
  %v10053 = vpop.f32.mrf.mxu0
  %v10054 = vpop.f32.mrf.mxu0
  %v10055 = vadd.f32 0.0, %v10054
  %v10056 = vpop.f32.mrf.mxu0
  %10057 = vmatprep.mubr.bf16.mxu0 0
  %10058 = vmatmul.mubr.bf16.gmra.mxu0 %v9987
  %v10059 = vpop.f32.mrf.mxu0
  %v10060 = vadd.f32 0.0, %v10059
  %v10061 = vpop.f32.mrf.mxu0
  %v10062 = vpop.f32.mrf.mxu0
  %v10063 = vadd.f32 0.0, %v10062
  %v10064 = vpop.f32.mrf.mxu0
  %10065 = vmatprep.mubr.bf16.mxu0 0
  %10066 = vmatmul.mubr.bf16.gmra.mxu0 %v9990
  %v10067 = vpop.f32.mrf.mxu0
  %v10068 = vadd.f32 0.0, %v10067
  %v10069 = vpop.f32.mrf.mxu0
  %v10070 = vpop.f32.mrf.mxu0
  %v10071 = vadd.f32 0.0, %v10070
  %v10072 = vpop.f32.mrf.mxu0
  %10073 = vmatprep.mubr.bf16.mxu0 0
  %10074 = vmatmul.mubr.bf16.gmra.mxu0 %v9993
  %v10075 = vpop.f32.mrf.mxu0
  %v10076 = vadd.f32 0.0, %v10075
  %v10077 = vpop.f32.mrf.mxu0
  %v10078 = vpop.f32.mrf.mxu0
  %v10079 = vadd.f32 0.0, %v10078
  %v10080 = vpop.f32.mrf.mxu0
  %10081 = vmatprep.mubr.bf16.mxu0 0
  %10082 = vmatmul.mubr.bf16.gmra.mxu0 %v9996
  %v10083 = vpop.f32.mrf.mxu0
  %v10084 = vadd.f32 0.0, %v10083
  %v10085 = vpop.f32.mrf.mxu0
  %v10086 = vpop.f32.mrf.mxu0
  %v10087 = vadd.f32 0.0, %v10086
  %v10088 = vpop.f32.mrf.mxu0
  %10089 = vmatprep.mubr.bf16.mxu0 0
  %10090 = vmatmul.mubr.bf16.gmra.mxu0 %v9999
  %v10091 = vpop.f32.mrf.mxu0
  %v10092 = vadd.f32 0.0, %v10091
  %v10093 = vpop.f32.mrf.mxu0
  %v10094 = vpop.f32.mrf.mxu0
  %v10095 = vadd.f32 0.0, %v10094
  %v10096 = vpop.f32.mrf.mxu0
  %10097 = vdwg.mxu0
  %v10098 = vadd.f32 %v9904, %v10036
  %v10099 = vadd.f32 %v9905, %v10039
  %v10100 = vadd.f32 %v9906, %v10044
  %v10101 = vadd.f32 %v9907, %v10047
  %v10102 = vadd.f32 %v9908, %v10052
  %v10103 = vadd.f32 %v9909, %v10055
  %v10104 = vadd.f32 %v9910, %v10060
  %v10105 = vadd.f32 %v9911, %v10063
  %v10106 = vadd.f32 %v9912, %v10068
  %v10107 = vadd.f32 %v9913, %v10071
  %v10108 = vadd.f32 %v9914, %v10076
  %v10109 = vadd.f32 %v9915, %v10079
  %v10110 = vadd.f32 %v9916, %v10084
  %v10111 = vadd.f32 %v9917, %v10087
  %v10112 = vadd.f32 %v9918, %v10092
  %v10113 = vadd.f32 %v9919, %v10095
  %s10114 = scalar_lea.vmem %s5, 1088
  %v10115 = vld [vmem:[%s10114] sm:$0xf]
  %v10116 = vld [vmem:[%s10114 + $0x4] sm:$0xf]
  %v10117 = vld [vmem:[%s10114 + $0x8] sm:$0xf]
  %v10118 = vld [vmem:[%s10114 + $0xc] sm:$0xf]
  %v10119 = vld [vmem:[%s10114 + $0x10] sm:$0xf]
  %v10120 = vld [vmem:[%s10114 + $0x14] sm:$0xf]
  %v10121 = vld [vmem:[%s10114 + $0x18] sm:$0xf]
  %v10122 = vld [vmem:[%s10114 + $0x1c] sm:$0xf]
  %v10123 = vld [vmem:[%s10114 + $0x20] sm:$0xf]
  %v10124 = vld [vmem:[%s10114 + $0x24] sm:$0xf]
  %v10125 = vld [vmem:[%s10114 + $0x28] sm:$0xf]
  %v10126 = vld [vmem:[%s10114 + $0x2c] sm:$0xf]
  %v10127 = vld [vmem:[%s10114 + $0x30] sm:$0xf]
  %v10128 = vld [vmem:[%s10114 + $0x34] sm:$0xf]
  %v10129 = vld [vmem:[%s10114 + $0x38] sm:$0xf]
  %v10130 = vld [vmem:[%s10114 + $0x3c] sm:$0xf]
  %v10147 = vunpack.c.l.b16 %v10115
  %v10148 = vunpack.c.l.b16 %v10116
  %v10149 = vunpack.c.l.b16 %v10117
  %v10150 = vunpack.c.l.b16 %v10118
  %v10151 = vunpack.c.l.b16 %v10119
  %v10152 = vunpack.c.l.b16 %v10120
  %v10153 = vunpack.c.l.b16 %v10121
  %v10154 = vunpack.c.l.b16 %v10122
  %v10155 = vunpack.c.l.b16 %v10123
  %v10156 = vunpack.c.l.b16 %v10124
  %v10157 = vunpack.c.l.b16 %v10125
  %v10158 = vunpack.c.l.b16 %v10126
  %v10159 = vunpack.c.l.b16 %v10127
  %v10160 = vunpack.c.l.b16 %v10128
  %v10161 = vunpack.c.l.b16 %v10129
  %v10162 = vunpack.c.l.b16 %v10130
  %v10163 = vpack.c.b16 %v10148, %v10147
  %v10164 = vpack.c.b16 %v10150, %v10149
  %v10165 = vpack.c.b16 %v10152, %v10151
  %v10166 = vpack.c.b16 %v10154, %v10153
  %v10167 = vpack.c.b16 %v10156, %v10155
  %v10168 = vpack.c.b16 %v10158, %v10157
  %v10169 = vpack.c.b16 %v10160, %v10159
  %v10170 = vpack.c.b16 %v10162, %v10161
  %v10172 = vsel %vm6921, %v10163, 0
  %v10175 = vsel %vm6921, %v10164, 0
  %v10178 = vsel %vm6921, %v10165, 0
  %v10181 = vsel %vm6921, %v10166, 0
  %v10184 = vsel %vm6921, %v10167, 0
  %v10187 = vsel %vm6921, %v10168, 0
  %v10190 = vsel %vm6921, %v10169, 0
  %v10193 = vsel %vm6921, %v10170, 0
  %10195 = vmatprep.subr.bf16.mxu0 0
  %10196 = vmatpush1.bf16.msra.mxu0 0
  %10197 = vmatprep.subr.bf16.mxu0 0
  %10198 = vmatpush1.bf16.msra.mxu0 0
  %10199 = vmatprep.subr.bf16.mxu0 0
  %10200 = vmatpush1.bf16.msra.mxu0 0
  %10201 = vmatprep.subr.bf16.mxu0 0
  %10202 = vmatpush1.bf16.msra.mxu0 0
  %10203 = vmatprep.subr.bf16.mxu0 0
  %10204 = vmatpush1.bf16.msra.mxu0 %v6840
  %10205 = vmatprep.subr.bf16.mxu0 0
  %10206 = vmatpush1.bf16.msra.mxu0 %v6815
  %10207 = vmatprep.subr.bf16.mxu0 0
  %10208 = vmatpush1.bf16.msra.mxu0 %v6790
  %10209 = vmatprep.subr.bf16.mxu0 0
  %10210 = vmatpush1.bf16.msra.mxu0 %v6765
  %10211 = vmatprep.subr.bf16.mxu0 0
  %10212 = vmatpush2.bf16.msra.mxu0 0
  %10213 = vmatprep.subr.bf16.mxu0 0
  %10214 = vmatpush2.bf16.msra.mxu0 0
  %10215 = vmatprep.subr.bf16.mxu0 0
  %10216 = vmatpush2.bf16.msra.mxu0 0
  %10217 = vmatprep.subr.bf16.mxu0 0
  %10218 = vmatpush2.bf16.msra.mxu0 0
  %10219 = vmatprep.subr.bf16.mxu0 0
  %10220 = vmatpush2.bf16.msra.mxu0 0
  %10221 = vmatprep.subr.bf16.mxu0 0
  %10222 = vmatpush2.bf16.msra.mxu0 0
  %10223 = vmatprep.subr.bf16.mxu0 0
  %10224 = vmatpush2.bf16.msra.mxu0 0
  %10225 = vmatprep.subr.bf16.mxu0 0
  %10226 = vmatpush2.bf16.msra.mxu0 0
  %10227 = vmatprep.mubr.bf16.mxu0 0
  %10228 = vmatmul.mubr.bf16.gmra.mxu0 %v10172
  %v10229 = vpop.f32.mrf.mxu0
  %v10230 = vadd.f32 0.0, %v10229
  %v10231 = vpop.f32.mrf.mxu0
  %v10232 = vpop.f32.mrf.mxu0
  %v10233 = vadd.f32 0.0, %v10232
  %v10234 = vpop.f32.mrf.mxu0
  %10235 = vmatprep.mubr.bf16.mxu0 0
  %10236 = vmatmul.mubr.bf16.gmra.mxu0 %v10175
  %v10237 = vpop.f32.mrf.mxu0
  %v10238 = vadd.f32 0.0, %v10237
  %v10239 = vpop.f32.mrf.mxu0
  %v10240 = vpop.f32.mrf.mxu0
  %v10241 = vadd.f32 0.0, %v10240
  %v10242 = vpop.f32.mrf.mxu0
  %10243 = vmatprep.mubr.bf16.mxu0 0
  %10244 = vmatmul.mubr.bf16.gmra.mxu0 %v10178
  %v10245 = vpop.f32.mrf.mxu0
  %v10246 = vadd.f32 0.0, %v10245
  %v10247 = vpop.f32.mrf.mxu0
  %v10248 = vpop.f32.mrf.mxu0
  %v10249 = vadd.f32 0.0, %v10248
  %v10250 = vpop.f32.mrf.mxu0
  %10251 = vmatprep.mubr.bf16.mxu0 0
  %10252 = vmatmul.mubr.bf16.gmra.mxu0 %v10181
  %v10253 = vpop.f32.mrf.mxu0
  %v10254 = vadd.f32 0.0, %v10253
  %v10255 = vpop.f32.mrf.mxu0
  %v10256 = vpop.f32.mrf.mxu0
  %v10257 = vadd.f32 0.0, %v10256
  %v10258 = vpop.f32.mrf.mxu0
  %10259 = vmatprep.mubr.bf16.mxu0 0
  %10260 = vmatmul.mubr.bf16.gmra.mxu0 %v10184
  %v10261 = vpop.f32.mrf.mxu0
  %v10262 = vadd.f32 0.0, %v10261
  %v10263 = vpop.f32.mrf.mxu0
  %v10264 = vpop.f32.mrf.mxu0
  %v10265 = vadd.f32 0.0, %v10264
  %v10266 = vpop.f32.mrf.mxu0
  %10267 = vmatprep.mubr.bf16.mxu0 0
  %10268 = vmatmul.mubr.bf16.gmra.mxu0 %v10187
  %v10269 = vpop.f32.mrf.mxu0
  %v10270 = vadd.f32 0.0, %v10269
  %v10271 = vpop.f32.mrf.mxu0
  %v10272 = vpop.f32.mrf.mxu0
  %v10273 = vadd.f32 0.0, %v10272
  %v10274 = vpop.f32.mrf.mxu0
  %10275 = vmatprep.mubr.bf16.mxu0 0
  %10276 = vmatmul.mubr.bf16.gmra.mxu0 %v10190
  %v10277 = vpop.f32.mrf.mxu0
  %v10278 = vadd.f32 0.0, %v10277
  %v10279 = vpop.f32.mrf.mxu0
  %v10280 = vpop.f32.mrf.mxu0
  %v10281 = vadd.f32 0.0, %v10280
  %v10282 = vpop.f32.mrf.mxu0
  %10283 = vmatprep.mubr.bf16.mxu0 0
  %10284 = vmatmul.mubr.bf16.gmra.mxu0 %v10193
  %v10285 = vpop.f32.mrf.mxu0
  %v10286 = vadd.f32 0.0, %v10285
  %v10287 = vpop.f32.mrf.mxu0
  %v10288 = vpop.f32.mrf.mxu0
  %v10289 = vadd.f32 0.0, %v10288
  %v10290 = vpop.f32.mrf.mxu0
  %10291 = vdwg.mxu0
  %v10292 = vadd.f32 %v10098, %v10230
  %v10293 = vadd.f32 %v10099, %v10233
  %v10294 = vadd.f32 %v10100, %v10238
  %v10295 = vadd.f32 %v10101, %v10241
  %v10296 = vadd.f32 %v10102, %v10246
  %v10297 = vadd.f32 %v10103, %v10249
  %v10298 = vadd.f32 %v10104, %v10254
  %v10299 = vadd.f32 %v10105, %v10257
  %v10300 = vadd.f32 %v10106, %v10262
  %v10301 = vadd.f32 %v10107, %v10265
  %v10302 = vadd.f32 %v10108, %v10270
  %v10303 = vadd.f32 %v10109, %v10273
  %v10304 = vadd.f32 %v10110, %v10278
  %v10305 = vadd.f32 %v10111, %v10281
  %v10306 = vadd.f32 %v10112, %v10286
  %v10307 = vadd.f32 %v10113, %v10289
  %s10308 = scalar_lea.vmem %s5, 1152
  %v10309 = vld [vmem:[%s10308] sm:$0xf]
  %v10310 = vld [vmem:[%s10308 + $0x4] sm:$0xf]
  %v10311 = vld [vmem:[%s10308 + $0x8] sm:$0xf]
  %v10312 = vld [vmem:[%s10308 + $0xc] sm:$0xf]
  %v10313 = vld [vmem:[%s10308 + $0x10] sm:$0xf]
  %v10314 = vld [vmem:[%s10308 + $0x14] sm:$0xf]
  %v10315 = vld [vmem:[%s10308 + $0x18] sm:$0xf]
  %v10316 = vld [vmem:[%s10308 + $0x1c] sm:$0xf]
  %v10317 = vld [vmem:[%s10308 + $0x20] sm:$0xf]
  %v10318 = vld [vmem:[%s10308 + $0x24] sm:$0xf]
  %v10319 = vld [vmem:[%s10308 + $0x28] sm:$0xf]
  %v10320 = vld [vmem:[%s10308 + $0x2c] sm:$0xf]
  %v10321 = vld [vmem:[%s10308 + $0x30] sm:$0xf]
  %v10322 = vld [vmem:[%s10308 + $0x34] sm:$0xf]
  %v10323 = vld [vmem:[%s10308 + $0x38] sm:$0xf]
  %v10324 = vld [vmem:[%s10308 + $0x3c] sm:$0xf]
  %v10341 = vunpack.c.l.b16 %v10309
  %v10342 = vunpack.c.l.b16 %v10310
  %v10343 = vunpack.c.l.b16 %v10311
  %v10344 = vunpack.c.l.b16 %v10312
  %v10345 = vunpack.c.l.b16 %v10313
  %v10346 = vunpack.c.l.b16 %v10314
  %v10347 = vunpack.c.l.b16 %v10315
  %v10348 = vunpack.c.l.b16 %v10316
  %v10349 = vunpack.c.l.b16 %v10317
  %v10350 = vunpack.c.l.b16 %v10318
  %v10351 = vunpack.c.l.b16 %v10319
  %v10352 = vunpack.c.l.b16 %v10320
  %v10353 = vunpack.c.l.b16 %v10321
  %v10354 = vunpack.c.l.b16 %v10322
  %v10355 = vunpack.c.l.b16 %v10323
  %v10356 = vunpack.c.l.b16 %v10324
  %v10357 = vpack.c.b16 %v10342, %v10341
  %v10358 = vpack.c.b16 %v10344, %v10343
  %v10359 = vpack.c.b16 %v10346, %v10345
  %v10360 = vpack.c.b16 %v10348, %v10347
  %v10361 = vpack.c.b16 %v10350, %v10349
  %v10362 = vpack.c.b16 %v10352, %v10351
  %v10363 = vpack.c.b16 %v10354, %v10353
  %v10364 = vpack.c.b16 %v10356, %v10355
  %v10366 = vsel %vm6921, %v10357, 0
  %v10369 = vsel %vm6921, %v10358, 0
  %v10372 = vsel %vm6921, %v10359, 0
  %v10375 = vsel %vm6921, %v10360, 0
  %v10378 = vsel %vm6921, %v10361, 0
  %v10381 = vsel %vm6921, %v10362, 0
  %v10384 = vsel %vm6921, %v10363, 0
  %v10387 = vsel %vm6921, %v10364, 0
  %10389 = vmatprep.subr.bf16.mxu0 0
  %10390 = vmatpush1.bf16.msra.mxu0 0
  %10391 = vmatprep.subr.bf16.mxu0 0
  %10392 = vmatpush1.bf16.msra.mxu0 0
  %10393 = vmatprep.subr.bf16.mxu0 0
  %10394 = vmatpush1.bf16.msra.mxu0 0
  %10395 = vmatprep.subr.bf16.mxu0 0
  %10396 = vmatpush1.bf16.msra.mxu0 0
  %10397 = vmatprep.subr.bf16.mxu0 0
  %10398 = vmatpush1.bf16.msra.mxu0 %v6841
  %10399 = vmatprep.subr.bf16.mxu0 0
  %10400 = vmatpush1.bf16.msra.mxu0 %v6816
  %10401 = vmatprep.subr.bf16.mxu0 0
  %10402 = vmatpush1.bf16.msra.mxu0 %v6791
  %10403 = vmatprep.subr.bf16.mxu0 0
  %10404 = vmatpush1.bf16.msra.mxu0 %v6766
  %10405 = vmatprep.subr.bf16.mxu0 0
  %10406 = vmatpush2.bf16.msra.mxu0 0
  %10407 = vmatprep.subr.bf16.mxu0 0
  %10408 = vmatpush2.bf16.msra.mxu0 0
  %10409 = vmatprep.subr.bf16.mxu0 0
  %10410 = vmatpush2.bf16.msra.mxu0 0
  %10411 = vmatprep.subr.bf16.mxu0 0
  %10412 = vmatpush2.bf16.msra.mxu0 0
  %10413 = vmatprep.subr.bf16.mxu0 0
  %10414 = vmatpush2.bf16.msra.mxu0 0
  %10415 = vmatprep.subr.bf16.mxu0 0
  %10416 = vmatpush2.bf16.msra.mxu0 0
  %10417 = vmatprep.subr.bf16.mxu0 0
  %10418 = vmatpush2.bf16.msra.mxu0 0
  %10419 = vmatprep.subr.bf16.mxu0 0
  %10420 = vmatpush2.bf16.msra.mxu0 0
  %10421 = vmatprep.mubr.bf16.mxu0 0
  %10422 = vmatmul.mubr.bf16.gmra.mxu0 %v10366
  %v10423 = vpop.f32.mrf.mxu0
  %v10424 = vadd.f32 0.0, %v10423
  %v10425 = vpop.f32.mrf.mxu0
  %v10426 = vpop.f32.mrf.mxu0
  %v10427 = vadd.f32 0.0, %v10426
  %v10428 = vpop.f32.mrf.mxu0
  %10429 = vmatprep.mubr.bf16.mxu0 0
  %10430 = vmatmul.mubr.bf16.gmra.mxu0 %v10369
  %v10431 = vpop.f32.mrf.mxu0
  %v10432 = vadd.f32 0.0, %v10431
  %v10433 = vpop.f32.mrf.mxu0
  %v10434 = vpop.f32.mrf.mxu0
  %v10435 = vadd.f32 0.0, %v10434
  %v10436 = vpop.f32.mrf.mxu0
  %10437 = vmatprep.mubr.bf16.mxu0 0
  %10438 = vmatmul.mubr.bf16.gmra.mxu0 %v10372
  %v10439 = vpop.f32.mrf.mxu0
  %v10440 = vadd.f32 0.0, %v10439
  %v10441 = vpop.f32.mrf.mxu0
  %v10442 = vpop.f32.mrf.mxu0
  %v10443 = vadd.f32 0.0, %v10442
  %v10444 = vpop.f32.mrf.mxu0
  %10445 = vmatprep.mubr.bf16.mxu0 0
  %10446 = vmatmul.mubr.bf16.gmra.mxu0 %v10375
  %v10447 = vpop.f32.mrf.mxu0
  %v10448 = vadd.f32 0.0, %v10447
  %v10449 = vpop.f32.mrf.mxu0
  %v10450 = vpop.f32.mrf.mxu0
  %v10451 = vadd.f32 0.0, %v10450
  %v10452 = vpop.f32.mrf.mxu0
  %10453 = vmatprep.mubr.bf16.mxu0 0
  %10454 = vmatmul.mubr.bf16.gmra.mxu0 %v10378
  %v10455 = vpop.f32.mrf.mxu0
  %v10456 = vadd.f32 0.0, %v10455
  %v10457 = vpop.f32.mrf.mxu0
  %v10458 = vpop.f32.mrf.mxu0
  %v10459 = vadd.f32 0.0, %v10458
  %v10460 = vpop.f32.mrf.mxu0
  %10461 = vmatprep.mubr.bf16.mxu0 0
  %10462 = vmatmul.mubr.bf16.gmra.mxu0 %v10381
  %v10463 = vpop.f32.mrf.mxu0
  %v10464 = vadd.f32 0.0, %v10463
  %v10465 = vpop.f32.mrf.mxu0
  %v10466 = vpop.f32.mrf.mxu0
  %v10467 = vadd.f32 0.0, %v10466
  %v10468 = vpop.f32.mrf.mxu0
  %10469 = vmatprep.mubr.bf16.mxu0 0
  %10470 = vmatmul.mubr.bf16.gmra.mxu0 %v10384
  %v10471 = vpop.f32.mrf.mxu0
  %v10472 = vadd.f32 0.0, %v10471
  %v10473 = vpop.f32.mrf.mxu0
  %v10474 = vpop.f32.mrf.mxu0
  %v10475 = vadd.f32 0.0, %v10474
  %v10476 = vpop.f32.mrf.mxu0
  %10477 = vmatprep.mubr.bf16.mxu0 0
  %10478 = vmatmul.mubr.bf16.gmra.mxu0 %v10387
  %v10479 = vpop.f32.mrf.mxu0
  %v10480 = vadd.f32 0.0, %v10479
  %v10481 = vpop.f32.mrf.mxu0
  %v10482 = vpop.f32.mrf.mxu0
  %v10483 = vadd.f32 0.0, %v10482
  %v10484 = vpop.f32.mrf.mxu0
  %10485 = vdwg.mxu0
  %v10486 = vadd.f32 %v10292, %v10424
  %v10487 = vadd.f32 %v10293, %v10427
  %v10488 = vadd.f32 %v10294, %v10432
  %v10489 = vadd.f32 %v10295, %v10435
  %v10490 = vadd.f32 %v10296, %v10440
  %v10491 = vadd.f32 %v10297, %v10443
  %v10492 = vadd.f32 %v10298, %v10448
  %v10493 = vadd.f32 %v10299, %v10451
  %v10494 = vadd.f32 %v10300, %v10456
  %v10495 = vadd.f32 %v10301, %v10459
  %v10496 = vadd.f32 %v10302, %v10464
  %v10497 = vadd.f32 %v10303, %v10467
  %v10498 = vadd.f32 %v10304, %v10472
  %v10499 = vadd.f32 %v10305, %v10475
  %v10500 = vadd.f32 %v10306, %v10480
  %v10501 = vadd.f32 %v10307, %v10483
  %s10502 = scalar_lea.vmem %s5, 1216
  %v10503 = vld [vmem:[%s10502] sm:$0xf]
  %v10504 = vld [vmem:[%s10502 + $0x4] sm:$0xf]
  %v10505 = vld [vmem:[%s10502 + $0x8] sm:$0xf]
  %v10506 = vld [vmem:[%s10502 + $0xc] sm:$0xf]
  %v10507 = vld [vmem:[%s10502 + $0x10] sm:$0xf]
  %v10508 = vld [vmem:[%s10502 + $0x14] sm:$0xf]
  %v10509 = vld [vmem:[%s10502 + $0x18] sm:$0xf]
  %v10510 = vld [vmem:[%s10502 + $0x1c] sm:$0xf]
  %v10511 = vld [vmem:[%s10502 + $0x20] sm:$0xf]
  %v10512 = vld [vmem:[%s10502 + $0x24] sm:$0xf]
  %v10513 = vld [vmem:[%s10502 + $0x28] sm:$0xf]
  %v10514 = vld [vmem:[%s10502 + $0x2c] sm:$0xf]
  %v10515 = vld [vmem:[%s10502 + $0x30] sm:$0xf]
  %v10516 = vld [vmem:[%s10502 + $0x34] sm:$0xf]
  %v10517 = vld [vmem:[%s10502 + $0x38] sm:$0xf]
  %v10518 = vld [vmem:[%s10502 + $0x3c] sm:$0xf]
  %v10535 = vunpack.c.l.b16 %v10503
  %v10536 = vunpack.c.l.b16 %v10504
  %v10537 = vunpack.c.l.b16 %v10505
  %v10538 = vunpack.c.l.b16 %v10506
  %v10539 = vunpack.c.l.b16 %v10507
  %v10540 = vunpack.c.l.b16 %v10508
  %v10541 = vunpack.c.l.b16 %v10509
  %v10542 = vunpack.c.l.b16 %v10510
  %v10543 = vunpack.c.l.b16 %v10511
  %v10544 = vunpack.c.l.b16 %v10512
  %v10545 = vunpack.c.l.b16 %v10513
  %v10546 = vunpack.c.l.b16 %v10514
  %v10547 = vunpack.c.l.b16 %v10515
  %v10548 = vunpack.c.l.b16 %v10516
  %v10549 = vunpack.c.l.b16 %v10517
  %v10550 = vunpack.c.l.b16 %v10518
  %v10551 = vpack.c.b16 %v10536, %v10535
  %v10552 = vpack.c.b16 %v10538, %v10537
  %v10553 = vpack.c.b16 %v10540, %v10539
  %v10554 = vpack.c.b16 %v10542, %v10541
  %v10555 = vpack.c.b16 %v10544, %v10543
  %v10556 = vpack.c.b16 %v10546, %v10545
  %v10557 = vpack.c.b16 %v10548, %v10547
  %v10558 = vpack.c.b16 %v10550, %v10549
  %v10560 = vsel %vm6921, %v10551, 0
  %v10563 = vsel %vm6921, %v10552, 0
  %v10566 = vsel %vm6921, %v10553, 0
  %v10569 = vsel %vm6921, %v10554, 0
  %v10572 = vsel %vm6921, %v10555, 0
  %v10575 = vsel %vm6921, %v10556, 0
  %v10578 = vsel %vm6921, %v10557, 0
  %v10581 = vsel %vm6921, %v10558, 0
  %10583 = vmatprep.subr.bf16.mxu0 0
  %10584 = vmatpush1.bf16.msra.mxu0 0
  %10585 = vmatprep.subr.bf16.mxu0 0
  %10586 = vmatpush1.bf16.msra.mxu0 0
  %10587 = vmatprep.subr.bf16.mxu0 0
  %10588 = vmatpush1.bf16.msra.mxu0 0
  %10589 = vmatprep.subr.bf16.mxu0 0
  %10590 = vmatpush1.bf16.msra.mxu0 0
  %10591 = vmatprep.subr.bf16.mxu0 0
  %10592 = vmatpush1.bf16.msra.mxu0 %v6842
  %10593 = vmatprep.subr.bf16.mxu0 0
  %10594 = vmatpush1.bf16.msra.mxu0 %v6817
  %10595 = vmatprep.subr.bf16.mxu0 0
  %10596 = vmatpush1.bf16.msra.mxu0 %v6792
  %10597 = vmatprep.subr.bf16.mxu0 0
  %10598 = vmatpush1.bf16.msra.mxu0 %v6767
  %10599 = vmatprep.subr.bf16.mxu0 0
  %10600 = vmatpush2.bf16.msra.mxu0 0
  %10601 = vmatprep.subr.bf16.mxu0 0
  %10602 = vmatpush2.bf16.msra.mxu0 0
  %10603 = vmatprep.subr.bf16.mxu0 0
  %10604 = vmatpush2.bf16.msra.mxu0 0
  %10605 = vmatprep.subr.bf16.mxu0 0
  %10606 = vmatpush2.bf16.msra.mxu0 0
  %10607 = vmatprep.subr.bf16.mxu0 0
  %10608 = vmatpush2.bf16.msra.mxu0 0
  %10609 = vmatprep.subr.bf16.mxu0 0
  %10610 = vmatpush2.bf16.msra.mxu0 0
  %10611 = vmatprep.subr.bf16.mxu0 0
  %10612 = vmatpush2.bf16.msra.mxu0 0
  %10613 = vmatprep.subr.bf16.mxu0 0
  %10614 = vmatpush2.bf16.msra.mxu0 0
  %10615 = vmatprep.mubr.bf16.mxu0 0
  %10616 = vmatmul.mubr.bf16.gmra.mxu0 %v10560
  %v10617 = vpop.f32.mrf.mxu0
  %v10618 = vadd.f32 0.0, %v10617
  %v10619 = vpop.f32.mrf.mxu0
  %v10620 = vpop.f32.mrf.mxu0
  %v10621 = vadd.f32 0.0, %v10620
  %v10622 = vpop.f32.mrf.mxu0
  %10623 = vmatprep.mubr.bf16.mxu0 0
  %10624 = vmatmul.mubr.bf16.gmra.mxu0 %v10563
  %v10625 = vpop.f32.mrf.mxu0
  %v10626 = vadd.f32 0.0, %v10625
  %v10627 = vpop.f32.mrf.mxu0
  %v10628 = vpop.f32.mrf.mxu0
  %v10629 = vadd.f32 0.0, %v10628
  %v10630 = vpop.f32.mrf.mxu0
  %10631 = vmatprep.mubr.bf16.mxu0 0
  %10632 = vmatmul.mubr.bf16.gmra.mxu0 %v10566
  %v10633 = vpop.f32.mrf.mxu0
  %v10634 = vadd.f32 0.0, %v10633
  %v10635 = vpop.f32.mrf.mxu0
  %v10636 = vpop.f32.mrf.mxu0
  %v10637 = vadd.f32 0.0, %v10636
  %v10638 = vpop.f32.mrf.mxu0
  %10639 = vmatprep.mubr.bf16.mxu0 0
  %10640 = vmatmul.mubr.bf16.gmra.mxu0 %v10569
  %v10641 = vpop.f32.mrf.mxu0
  %v10642 = vadd.f32 0.0, %v10641
  %v10643 = vpop.f32.mrf.mxu0
  %v10644 = vpop.f32.mrf.mxu0
  %v10645 = vadd.f32 0.0, %v10644
  %v10646 = vpop.f32.mrf.mxu0
  %10647 = vmatprep.mubr.bf16.mxu0 0
  %10648 = vmatmul.mubr.bf16.gmra.mxu0 %v10572
  %v10649 = vpop.f32.mrf.mxu0
  %v10650 = vadd.f32 0.0, %v10649
  %v10651 = vpop.f32.mrf.mxu0
  %v10652 = vpop.f32.mrf.mxu0
  %v10653 = vadd.f32 0.0, %v10652
  %v10654 = vpop.f32.mrf.mxu0
  %10655 = vmatprep.mubr.bf16.mxu0 0
  %10656 = vmatmul.mubr.bf16.gmra.mxu0 %v10575
  %v10657 = vpop.f32.mrf.mxu0
  %v10658 = vadd.f32 0.0, %v10657
  %v10659 = vpop.f32.mrf.mxu0
  %v10660 = vpop.f32.mrf.mxu0
  %v10661 = vadd.f32 0.0, %v10660
  %v10662 = vpop.f32.mrf.mxu0
  %10663 = vmatprep.mubr.bf16.mxu0 0
  %10664 = vmatmul.mubr.bf16.gmra.mxu0 %v10578
  %v10665 = vpop.f32.mrf.mxu0
  %v10666 = vadd.f32 0.0, %v10665
  %v10667 = vpop.f32.mrf.mxu0
  %v10668 = vpop.f32.mrf.mxu0
  %v10669 = vadd.f32 0.0, %v10668
  %v10670 = vpop.f32.mrf.mxu0
  %10671 = vmatprep.mubr.bf16.mxu0 0
  %10672 = vmatmul.mubr.bf16.gmra.mxu0 %v10581
  %v10673 = vpop.f32.mrf.mxu0
  %v10674 = vadd.f32 0.0, %v10673
  %v10675 = vpop.f32.mrf.mxu0
  %v10676 = vpop.f32.mrf.mxu0
  %v10677 = vadd.f32 0.0, %v10676
  %v10678 = vpop.f32.mrf.mxu0
  %10679 = vdwg.mxu0
  %v10680 = vadd.f32 %v10486, %v10618
  %v10681 = vadd.f32 %v10487, %v10621
  %v10682 = vadd.f32 %v10488, %v10626
  %v10683 = vadd.f32 %v10489, %v10629
  %v10684 = vadd.f32 %v10490, %v10634
  %v10685 = vadd.f32 %v10491, %v10637
  %v10686 = vadd.f32 %v10492, %v10642
  %v10687 = vadd.f32 %v10493, %v10645
  %v10688 = vadd.f32 %v10494, %v10650
  %v10689 = vadd.f32 %v10495, %v10653
  %v10690 = vadd.f32 %v10496, %v10658
  %v10691 = vadd.f32 %v10497, %v10661
  %v10692 = vadd.f32 %v10498, %v10666
  %v10693 = vadd.f32 %v10499, %v10669
  %v10694 = vadd.f32 %v10500, %v10674
  %v10695 = vadd.f32 %v10501, %v10677
  %s10696 = scalar_lea.vmem %s5, 1280
  %v10697 = vld [vmem:[%s10696] sm:$0xf]
  %v10698 = vld [vmem:[%s10696 + $0x4] sm:$0xf]
  %v10699 = vld [vmem:[%s10696 + $0x8] sm:$0xf]
  %v10700 = vld [vmem:[%s10696 + $0xc] sm:$0xf]
  %v10701 = vld [vmem:[%s10696 + $0x10] sm:$0xf]
  %v10702 = vld [vmem:[%s10696 + $0x14] sm:$0xf]
  %v10703 = vld [vmem:[%s10696 + $0x18] sm:$0xf]
  %v10704 = vld [vmem:[%s10696 + $0x1c] sm:$0xf]
  %v10705 = vld [vmem:[%s10696 + $0x20] sm:$0xf]
  %v10706 = vld [vmem:[%s10696 + $0x24] sm:$0xf]
  %v10707 = vld [vmem:[%s10696 + $0x28] sm:$0xf]
  %v10708 = vld [vmem:[%s10696 + $0x2c] sm:$0xf]
  %v10709 = vld [vmem:[%s10696 + $0x30] sm:$0xf]
  %v10710 = vld [vmem:[%s10696 + $0x34] sm:$0xf]
  %v10711 = vld [vmem:[%s10696 + $0x38] sm:$0xf]
  %v10712 = vld [vmem:[%s10696 + $0x3c] sm:$0xf]
  %v10729 = vunpack.c.l.b16 %v10697
  %v10730 = vunpack.c.l.b16 %v10698
  %v10731 = vunpack.c.l.b16 %v10699
  %v10732 = vunpack.c.l.b16 %v10700
  %v10733 = vunpack.c.l.b16 %v10701
  %v10734 = vunpack.c.l.b16 %v10702
  %v10735 = vunpack.c.l.b16 %v10703
  %v10736 = vunpack.c.l.b16 %v10704
  %v10737 = vunpack.c.l.b16 %v10705
  %v10738 = vunpack.c.l.b16 %v10706
  %v10739 = vunpack.c.l.b16 %v10707
  %v10740 = vunpack.c.l.b16 %v10708
  %v10741 = vunpack.c.l.b16 %v10709
  %v10742 = vunpack.c.l.b16 %v10710
  %v10743 = vunpack.c.l.b16 %v10711
  %v10744 = vunpack.c.l.b16 %v10712
  %v10745 = vpack.c.b16 %v10730, %v10729
  %v10746 = vpack.c.b16 %v10732, %v10731
  %v10747 = vpack.c.b16 %v10734, %v10733
  %v10748 = vpack.c.b16 %v10736, %v10735
  %v10749 = vpack.c.b16 %v10738, %v10737
  %v10750 = vpack.c.b16 %v10740, %v10739
  %v10751 = vpack.c.b16 %v10742, %v10741
  %v10752 = vpack.c.b16 %v10744, %v10743
  %v10754 = vsel %vm6921, %v10745, 0
  %v10757 = vsel %vm6921, %v10746, 0
  %v10760 = vsel %vm6921, %v10747, 0
  %v10763 = vsel %vm6921, %v10748, 0
  %v10766 = vsel %vm6921, %v10749, 0
  %v10769 = vsel %vm6921, %v10750, 0
  %v10772 = vsel %vm6921, %v10751, 0
  %v10775 = vsel %vm6921, %v10752, 0
  %10777 = vmatprep.subr.bf16.mxu0 0
  %10778 = vmatpush1.bf16.msra.mxu0 0
  %10779 = vmatprep.subr.bf16.mxu0 0
  %10780 = vmatpush1.bf16.msra.mxu0 0
  %10781 = vmatprep.subr.bf16.mxu0 0
  %10782 = vmatpush1.bf16.msra.mxu0 0
  %10783 = vmatprep.subr.bf16.mxu0 0
  %10784 = vmatpush1.bf16.msra.mxu0 0
  %10785 = vmatprep.subr.bf16.mxu0 0
  %10786 = vmatpush1.bf16.msra.mxu0 %v6843
  %10787 = vmatprep.subr.bf16.mxu0 0
  %10788 = vmatpush1.bf16.msra.mxu0 %v6818
  %10789 = vmatprep.subr.bf16.mxu0 0
  %10790 = vmatpush1.bf16.msra.mxu0 %v6793
  %10791 = vmatprep.subr.bf16.mxu0 0
  %10792 = vmatpush1.bf16.msra.mxu0 %v6768
  %10793 = vmatprep.subr.bf16.mxu0 0
  %10794 = vmatpush2.bf16.msra.mxu0 0
  %10795 = vmatprep.subr.bf16.mxu0 0
  %10796 = vmatpush2.bf16.msra.mxu0 0
  %10797 = vmatprep.subr.bf16.mxu0 0
  %10798 = vmatpush2.bf16.msra.mxu0 0
  %10799 = vmatprep.subr.bf16.mxu0 0
  %10800 = vmatpush2.bf16.msra.mxu0 0
  %10801 = vmatprep.subr.bf16.mxu0 0
  %10802 = vmatpush2.bf16.msra.mxu0 0
  %10803 = vmatprep.subr.bf16.mxu0 0
  %10804 = vmatpush2.bf16.msra.mxu0 0
  %10805 = vmatprep.subr.bf16.mxu0 0
  %10806 = vmatpush2.bf16.msra.mxu0 0
  %10807 = vmatprep.subr.bf16.mxu0 0
  %10808 = vmatpush2.bf16.msra.mxu0 0
  %10809 = vmatprep.mubr.bf16.mxu0 0
  %10810 = vmatmul.mubr.bf16.gmra.mxu0 %v10754
  %v10811 = vpop.f32.mrf.mxu0
  %v10812 = vadd.f32 0.0, %v10811
  %v10813 = vpop.f32.mrf.mxu0
  %v10814 = vpop.f32.mrf.mxu0
  %v10815 = vadd.f32 0.0, %v10814
  %v10816 = vpop.f32.mrf.mxu0
  %10817 = vmatprep.mubr.bf16.mxu0 0
  %10818 = vmatmul.mubr.bf16.gmra.mxu0 %v10757
  %v10819 = vpop.f32.mrf.mxu0
  %v10820 = vadd.f32 0.0, %v10819
  %v10821 = vpop.f32.mrf.mxu0
  %v10822 = vpop.f32.mrf.mxu0
  %v10823 = vadd.f32 0.0, %v10822
  %v10824 = vpop.f32.mrf.mxu0
  %10825 = vmatprep.mubr.bf16.mxu0 0
  %10826 = vmatmul.mubr.bf16.gmra.mxu0 %v10760
  %v10827 = vpop.f32.mrf.mxu0
  %v10828 = vadd.f32 0.0, %v10827
  %v10829 = vpop.f32.mrf.mxu0
  %v10830 = vpop.f32.mrf.mxu0
  %v10831 = vadd.f32 0.0, %v10830
  %v10832 = vpop.f32.mrf.mxu0
  %10833 = vmatprep.mubr.bf16.mxu0 0
  %10834 = vmatmul.mubr.bf16.gmra.mxu0 %v10763
  %v10835 = vpop.f32.mrf.mxu0
  %v10836 = vadd.f32 0.0, %v10835
  %v10837 = vpop.f32.mrf.mxu0
  %v10838 = vpop.f32.mrf.mxu0
  %v10839 = vadd.f32 0.0, %v10838
  %v10840 = vpop.f32.mrf.mxu0
  %10841 = vmatprep.mubr.bf16.mxu0 0
  %10842 = vmatmul.mubr.bf16.gmra.mxu0 %v10766
  %v10843 = vpop.f32.mrf.mxu0
  %v10844 = vadd.f32 0.0, %v10843
  %v10845 = vpop.f32.mrf.mxu0
  %v10846 = vpop.f32.mrf.mxu0
  %v10847 = vadd.f32 0.0, %v10846
  %v10848 = vpop.f32.mrf.mxu0
  %10849 = vmatprep.mubr.bf16.mxu0 0
  %10850 = vmatmul.mubr.bf16.gmra.mxu0 %v10769
  %v10851 = vpop.f32.mrf.mxu0
  %v10852 = vadd.f32 0.0, %v10851
  %v10853 = vpop.f32.mrf.mxu0
  %v10854 = vpop.f32.mrf.mxu0
  %v10855 = vadd.f32 0.0, %v10854
  %v10856 = vpop.f32.mrf.mxu0
  %10857 = vmatprep.mubr.bf16.mxu0 0
  %10858 = vmatmul.mubr.bf16.gmra.mxu0 %v10772
  %v10859 = vpop.f32.mrf.mxu0
  %v10860 = vadd.f32 0.0, %v10859
  %v10861 = vpop.f32.mrf.mxu0
  %v10862 = vpop.f32.mrf.mxu0
  %v10863 = vadd.f32 0.0, %v10862
  %v10864 = vpop.f32.mrf.mxu0
  %10865 = vmatprep.mubr.bf16.mxu0 0
  %10866 = vmatmul.mubr.bf16.gmra.mxu0 %v10775
  %v10867 = vpop.f32.mrf.mxu0
  %v10868 = vadd.f32 0.0, %v10867
  %v10869 = vpop.f32.mrf.mxu0
  %v10870 = vpop.f32.mrf.mxu0
  %v10871 = vadd.f32 0.0, %v10870
  %v10872 = vpop.f32.mrf.mxu0
  %10873 = vdwg.mxu0
  %v10874 = vadd.f32 %v10680, %v10812
  %v10875 = vadd.f32 %v10681, %v10815
  %v10876 = vadd.f32 %v10682, %v10820
  %v10877 = vadd.f32 %v10683, %v10823
  %v10878 = vadd.f32 %v10684, %v10828
  %v10879 = vadd.f32 %v10685, %v10831
  %v10880 = vadd.f32 %v10686, %v10836
  %v10881 = vadd.f32 %v10687, %v10839
  %v10882 = vadd.f32 %v10688, %v10844
  %v10883 = vadd.f32 %v10689, %v10847
  %v10884 = vadd.f32 %v10690, %v10852
  %v10885 = vadd.f32 %v10691, %v10855
  %v10886 = vadd.f32 %v10692, %v10860
  %v10887 = vadd.f32 %v10693, %v10863
  %v10888 = vadd.f32 %v10694, %v10868
  %v10889 = vadd.f32 %v10695, %v10871
  %s10890 = scalar_lea.vmem %s5, 1344
  %v10891 = vld [vmem:[%s10890] sm:$0xf]
  %v10892 = vld [vmem:[%s10890 + $0x4] sm:$0xf]
  %v10893 = vld [vmem:[%s10890 + $0x8] sm:$0xf]
  %v10894 = vld [vmem:[%s10890 + $0xc] sm:$0xf]
  %v10895 = vld [vmem:[%s10890 + $0x10] sm:$0xf]
  %v10896 = vld [vmem:[%s10890 + $0x14] sm:$0xf]
  %v10897 = vld [vmem:[%s10890 + $0x18] sm:$0xf]
  %v10898 = vld [vmem:[%s10890 + $0x1c] sm:$0xf]
  %v10899 = vld [vmem:[%s10890 + $0x20] sm:$0xf]
  %v10900 = vld [vmem:[%s10890 + $0x24] sm:$0xf]
  %v10901 = vld [vmem:[%s10890 + $0x28] sm:$0xf]
  %v10902 = vld [vmem:[%s10890 + $0x2c] sm:$0xf]
  %v10903 = vld [vmem:[%s10890 + $0x30] sm:$0xf]
  %v10904 = vld [vmem:[%s10890 + $0x34] sm:$0xf]
  %v10905 = vld [vmem:[%s10890 + $0x38] sm:$0xf]
  %v10906 = vld [vmem:[%s10890 + $0x3c] sm:$0xf]
  %v10923 = vunpack.c.l.b16 %v10891
  %v10924 = vunpack.c.l.b16 %v10892
  %v10925 = vunpack.c.l.b16 %v10893
  %v10926 = vunpack.c.l.b16 %v10894
  %v10927 = vunpack.c.l.b16 %v10895
  %v10928 = vunpack.c.l.b16 %v10896
  %v10929 = vunpack.c.l.b16 %v10897
  %v10930 = vunpack.c.l.b16 %v10898
  %v10931 = vunpack.c.l.b16 %v10899
  %v10932 = vunpack.c.l.b16 %v10900
  %v10933 = vunpack.c.l.b16 %v10901
  %v10934 = vunpack.c.l.b16 %v10902
  %v10935 = vunpack.c.l.b16 %v10903
  %v10936 = vunpack.c.l.b16 %v10904
  %v10937 = vunpack.c.l.b16 %v10905
  %v10938 = vunpack.c.l.b16 %v10906
  %v10939 = vpack.c.b16 %v10924, %v10923
  %v10940 = vpack.c.b16 %v10926, %v10925
  %v10941 = vpack.c.b16 %v10928, %v10927
  %v10942 = vpack.c.b16 %v10930, %v10929
  %v10943 = vpack.c.b16 %v10932, %v10931
  %v10944 = vpack.c.b16 %v10934, %v10933
  %v10945 = vpack.c.b16 %v10936, %v10935
  %v10946 = vpack.c.b16 %v10938, %v10937
  %v10948 = vsel %vm6921, %v10939, 0
  %v10951 = vsel %vm6921, %v10940, 0
  %v10954 = vsel %vm6921, %v10941, 0
  %v10957 = vsel %vm6921, %v10942, 0
  %v10960 = vsel %vm6921, %v10943, 0
  %v10963 = vsel %vm6921, %v10944, 0
  %v10966 = vsel %vm6921, %v10945, 0
  %v10969 = vsel %vm6921, %v10946, 0
  %10971 = vmatprep.subr.bf16.mxu0 0
  %10972 = vmatpush1.bf16.msra.mxu0 0
  %10973 = vmatprep.subr.bf16.mxu0 0
  %10974 = vmatpush1.bf16.msra.mxu0 0
  %10975 = vmatprep.subr.bf16.mxu0 0
  %10976 = vmatpush1.bf16.msra.mxu0 0
  %10977 = vmatprep.subr.bf16.mxu0 0
  %10978 = vmatpush1.bf16.msra.mxu0 0
  %10979 = vmatprep.subr.bf16.mxu0 0
  %10980 = vmatpush1.bf16.msra.mxu0 %v6844
  %10981 = vmatprep.subr.bf16.mxu0 0
  %10982 = vmatpush1.bf16.msra.mxu0 %v6819
  %10983 = vmatprep.subr.bf16.mxu0 0
  %10984 = vmatpush1.bf16.msra.mxu0 %v6794
  %10985 = vmatprep.subr.bf16.mxu0 0
  %10986 = vmatpush1.bf16.msra.mxu0 %v6769
  %10987 = vmatprep.subr.bf16.mxu0 0
  %10988 = vmatpush2.bf16.msra.mxu0 0
  %10989 = vmatprep.subr.bf16.mxu0 0
  %10990 = vmatpush2.bf16.msra.mxu0 0
  %10991 = vmatprep.subr.bf16.mxu0 0
  %10992 = vmatpush2.bf16.msra.mxu0 0
  %10993 = vmatprep.subr.bf16.mxu0 0
  %10994 = vmatpush2.bf16.msra.mxu0 0
  %10995 = vmatprep.subr.bf16.mxu0 0
  %10996 = vmatpush2.bf16.msra.mxu0 0
  %10997 = vmatprep.subr.bf16.mxu0 0
  %10998 = vmatpush2.bf16.msra.mxu0 0
  %10999 = vmatprep.subr.bf16.mxu0 0
  %11000 = vmatpush2.bf16.msra.mxu0 0
  %11001 = vmatprep.subr.bf16.mxu0 0
  %11002 = vmatpush2.bf16.msra.mxu0 0
  %11003 = vmatprep.mubr.bf16.mxu0 0
  %11004 = vmatmul.mubr.bf16.gmra.mxu0 %v10948
  %v11005 = vpop.f32.mrf.mxu0
  %v11006 = vadd.f32 0.0, %v11005
  %v11007 = vpop.f32.mrf.mxu0
  %v11008 = vpop.f32.mrf.mxu0
  %v11009 = vadd.f32 0.0, %v11008
  %v11010 = vpop.f32.mrf.mxu0
  %11011 = vmatprep.mubr.bf16.mxu0 0
  %11012 = vmatmul.mubr.bf16.gmra.mxu0 %v10951
  %v11013 = vpop.f32.mrf.mxu0
  %v11014 = vadd.f32 0.0, %v11013
  %v11015 = vpop.f32.mrf.mxu0
  %v11016 = vpop.f32.mrf.mxu0
  %v11017 = vadd.f32 0.0, %v11016
  %v11018 = vpop.f32.mrf.mxu0
  %11019 = vmatprep.mubr.bf16.mxu0 0
  %11020 = vmatmul.mubr.bf16.gmra.mxu0 %v10954
  %v11021 = vpop.f32.mrf.mxu0
  %v11022 = vadd.f32 0.0, %v11021
  %v11023 = vpop.f32.mrf.mxu0
  %v11024 = vpop.f32.mrf.mxu0
  %v11025 = vadd.f32 0.0, %v11024
  %v11026 = vpop.f32.mrf.mxu0
  %11027 = vmatprep.mubr.bf16.mxu0 0
  %11028 = vmatmul.mubr.bf16.gmra.mxu0 %v10957
  %v11029 = vpop.f32.mrf.mxu0
  %v11030 = vadd.f32 0.0, %v11029
  %v11031 = vpop.f32.mrf.mxu0
  %v11032 = vpop.f32.mrf.mxu0
  %v11033 = vadd.f32 0.0, %v11032
  %v11034 = vpop.f32.mrf.mxu0
  %11035 = vmatprep.mubr.bf16.mxu0 0
  %11036 = vmatmul.mubr.bf16.gmra.mxu0 %v10960
  %v11037 = vpop.f32.mrf.mxu0
  %v11038 = vadd.f32 0.0, %v11037
  %v11039 = vpop.f32.mrf.mxu0
  %v11040 = vpop.f32.mrf.mxu0
  %v11041 = vadd.f32 0.0, %v11040
  %v11042 = vpop.f32.mrf.mxu0
  %11043 = vmatprep.mubr.bf16.mxu0 0
  %11044 = vmatmul.mubr.bf16.gmra.mxu0 %v10963
  %v11045 = vpop.f32.mrf.mxu0
  %v11046 = vadd.f32 0.0, %v11045
  %v11047 = vpop.f32.mrf.mxu0
  %v11048 = vpop.f32.mrf.mxu0
  %v11049 = vadd.f32 0.0, %v11048
  %v11050 = vpop.f32.mrf.mxu0
  %11051 = vmatprep.mubr.bf16.mxu0 0
  %11052 = vmatmul.mubr.bf16.gmra.mxu0 %v10966
  %v11053 = vpop.f32.mrf.mxu0
  %v11054 = vadd.f32 0.0, %v11053
  %v11055 = vpop.f32.mrf.mxu0
  %v11056 = vpop.f32.mrf.mxu0
  %v11057 = vadd.f32 0.0, %v11056
  %v11058 = vpop.f32.mrf.mxu0
  %11059 = vmatprep.mubr.bf16.mxu0 0
  %11060 = vmatmul.mubr.bf16.gmra.mxu0 %v10969
  %v11061 = vpop.f32.mrf.mxu0
  %v11062 = vadd.f32 0.0, %v11061
  %v11063 = vpop.f32.mrf.mxu0
  %v11064 = vpop.f32.mrf.mxu0
  %v11065 = vadd.f32 0.0, %v11064
  %v11066 = vpop.f32.mrf.mxu0
  %11067 = vdwg.mxu0
  %v11068 = vadd.f32 %v10874, %v11006
  %v11069 = vadd.f32 %v10875, %v11009
  %v11070 = vadd.f32 %v10876, %v11014
  %v11071 = vadd.f32 %v10877, %v11017
  %v11072 = vadd.f32 %v10878, %v11022
  %v11073 = vadd.f32 %v10879, %v11025
  %v11074 = vadd.f32 %v10880, %v11030
  %v11075 = vadd.f32 %v10881, %v11033
  %v11076 = vadd.f32 %v10882, %v11038
  %v11077 = vadd.f32 %v10883, %v11041
  %v11078 = vadd.f32 %v10884, %v11046
  %v11079 = vadd.f32 %v10885, %v11049
  %v11080 = vadd.f32 %v10886, %v11054
  %v11081 = vadd.f32 %v10887, %v11057
  %v11082 = vadd.f32 %v10888, %v11062
  %v11083 = vadd.f32 %v10889, %v11065
  %s11084 = scalar_lea.vmem %s5, 1408
  %v11085 = vld [vmem:[%s11084] sm:$0xf]
  %v11086 = vld [vmem:[%s11084 + $0x4] sm:$0xf]
  %v11087 = vld [vmem:[%s11084 + $0x8] sm:$0xf]
  %v11088 = vld [vmem:[%s11084 + $0xc] sm:$0xf]
  %v11089 = vld [vmem:[%s11084 + $0x10] sm:$0xf]
  %v11090 = vld [vmem:[%s11084 + $0x14] sm:$0xf]
  %v11091 = vld [vmem:[%s11084 + $0x18] sm:$0xf]
  %v11092 = vld [vmem:[%s11084 + $0x1c] sm:$0xf]
  %v11093 = vld [vmem:[%s11084 + $0x20] sm:$0xf]
  %v11094 = vld [vmem:[%s11084 + $0x24] sm:$0xf]
  %v11095 = vld [vmem:[%s11084 + $0x28] sm:$0xf]
  %v11096 = vld [vmem:[%s11084 + $0x2c] sm:$0xf]
  %v11097 = vld [vmem:[%s11084 + $0x30] sm:$0xf]
  %v11098 = vld [vmem:[%s11084 + $0x34] sm:$0xf]
  %v11099 = vld [vmem:[%s11084 + $0x38] sm:$0xf]
  %v11100 = vld [vmem:[%s11084 + $0x3c] sm:$0xf]
  %v11117 = vunpack.c.l.b16 %v11085
  %v11118 = vunpack.c.l.b16 %v11086
  %v11119 = vunpack.c.l.b16 %v11087
  %v11120 = vunpack.c.l.b16 %v11088
  %v11121 = vunpack.c.l.b16 %v11089
  %v11122 = vunpack.c.l.b16 %v11090
  %v11123 = vunpack.c.l.b16 %v11091
  %v11124 = vunpack.c.l.b16 %v11092
  %v11125 = vunpack.c.l.b16 %v11093
  %v11126 = vunpack.c.l.b16 %v11094
  %v11127 = vunpack.c.l.b16 %v11095
  %v11128 = vunpack.c.l.b16 %v11096
  %v11129 = vunpack.c.l.b16 %v11097
  %v11130 = vunpack.c.l.b16 %v11098
  %v11131 = vunpack.c.l.b16 %v11099
  %v11132 = vunpack.c.l.b16 %v11100
  %v11133 = vpack.c.b16 %v11118, %v11117
  %v11134 = vpack.c.b16 %v11120, %v11119
  %v11135 = vpack.c.b16 %v11122, %v11121
  %v11136 = vpack.c.b16 %v11124, %v11123
  %v11137 = vpack.c.b16 %v11126, %v11125
  %v11138 = vpack.c.b16 %v11128, %v11127
  %v11139 = vpack.c.b16 %v11130, %v11129
  %v11140 = vpack.c.b16 %v11132, %v11131
  %v11142 = vsel %vm6921, %v11133, 0
  %v11145 = vsel %vm6921, %v11134, 0
  %v11148 = vsel %vm6921, %v11135, 0
  %v11151 = vsel %vm6921, %v11136, 0
  %v11154 = vsel %vm6921, %v11137, 0
  %v11157 = vsel %vm6921, %v11138, 0
  %v11160 = vsel %vm6921, %v11139, 0
  %v11163 = vsel %vm6921, %v11140, 0
  %11165 = vmatprep.subr.bf16.mxu0 0
  %11166 = vmatpush1.bf16.msra.mxu0 0
  %11167 = vmatprep.subr.bf16.mxu0 0
  %11168 = vmatpush1.bf16.msra.mxu0 0
  %11169 = vmatprep.subr.bf16.mxu0 0
  %11170 = vmatpush1.bf16.msra.mxu0 0
  %11171 = vmatprep.subr.bf16.mxu0 0
  %11172 = vmatpush1.bf16.msra.mxu0 0
  %11173 = vmatprep.subr.bf16.mxu0 0
  %11174 = vmatpush1.bf16.msra.mxu0 %v6845
  %11175 = vmatprep.subr.bf16.mxu0 0
  %11176 = vmatpush1.bf16.msra.mxu0 %v6820
  %11177 = vmatprep.subr.bf16.mxu0 0
  %11178 = vmatpush1.bf16.msra.mxu0 %v6795
  %11179 = vmatprep.subr.bf16.mxu0 0
  %11180 = vmatpush1.bf16.msra.mxu0 %v6770
  %11181 = vmatprep.subr.bf16.mxu0 0
  %11182 = vmatpush2.bf16.msra.mxu0 0
  %11183 = vmatprep.subr.bf16.mxu0 0
  %11184 = vmatpush2.bf16.msra.mxu0 0
  %11185 = vmatprep.subr.bf16.mxu0 0
  %11186 = vmatpush2.bf16.msra.mxu0 0
  %11187 = vmatprep.subr.bf16.mxu0 0
  %11188 = vmatpush2.bf16.msra.mxu0 0
  %11189 = vmatprep.subr.bf16.mxu0 0
  %11190 = vmatpush2.bf16.msra.mxu0 0
  %11191 = vmatprep.subr.bf16.mxu0 0
  %11192 = vmatpush2.bf16.msra.mxu0 0
  %11193 = vmatprep.subr.bf16.mxu0 0
  %11194 = vmatpush2.bf16.msra.mxu0 0
  %11195 = vmatprep.subr.bf16.mxu0 0
  %11196 = vmatpush2.bf16.msra.mxu0 0
  %11197 = vmatprep.mubr.bf16.mxu0 0
  %11198 = vmatmul.mubr.bf16.gmra.mxu0 %v11142
  %v11199 = vpop.f32.mrf.mxu0
  %v11200 = vadd.f32 0.0, %v11199
  %v11201 = vpop.f32.mrf.mxu0
  %v11202 = vpop.f32.mrf.mxu0
  %v11203 = vadd.f32 0.0, %v11202
  %v11204 = vpop.f32.mrf.mxu0
  %11205 = vmatprep.mubr.bf16.mxu0 0
  %11206 = vmatmul.mubr.bf16.gmra.mxu0 %v11145
  %v11207 = vpop.f32.mrf.mxu0
  %v11208 = vadd.f32 0.0, %v11207
  %v11209 = vpop.f32.mrf.mxu0
  %v11210 = vpop.f32.mrf.mxu0
  %v11211 = vadd.f32 0.0, %v11210
  %v11212 = vpop.f32.mrf.mxu0
  %11213 = vmatprep.mubr.bf16.mxu0 0
  %11214 = vmatmul.mubr.bf16.gmra.mxu0 %v11148
  %v11215 = vpop.f32.mrf.mxu0
  %v11216 = vadd.f32 0.0, %v11215
  %v11217 = vpop.f32.mrf.mxu0
  %v11218 = vpop.f32.mrf.mxu0
  %v11219 = vadd.f32 0.0, %v11218
  %v11220 = vpop.f32.mrf.mxu0
  %11221 = vmatprep.mubr.bf16.mxu0 0
  %11222 = vmatmul.mubr.bf16.gmra.mxu0 %v11151
  %v11223 = vpop.f32.mrf.mxu0
  %v11224 = vadd.f32 0.0, %v11223
  %v11225 = vpop.f32.mrf.mxu0
  %v11226 = vpop.f32.mrf.mxu0
  %v11227 = vadd.f32 0.0, %v11226
  %v11228 = vpop.f32.mrf.mxu0
  %11229 = vmatprep.mubr.bf16.mxu0 0
  %11230 = vmatmul.mubr.bf16.gmra.mxu0 %v11154
  %v11231 = vpop.f32.mrf.mxu0
  %v11232 = vadd.f32 0.0, %v11231
  %v11233 = vpop.f32.mrf.mxu0
  %v11234 = vpop.f32.mrf.mxu0
  %v11235 = vadd.f32 0.0, %v11234
  %v11236 = vpop.f32.mrf.mxu0
  %11237 = vmatprep.mubr.bf16.mxu0 0
  %11238 = vmatmul.mubr.bf16.gmra.mxu0 %v11157
  %v11239 = vpop.f32.mrf.mxu0
  %v11240 = vadd.f32 0.0, %v11239
  %v11241 = vpop.f32.mrf.mxu0
  %v11242 = vpop.f32.mrf.mxu0
  %v11243 = vadd.f32 0.0, %v11242
  %v11244 = vpop.f32.mrf.mxu0
  %11245 = vmatprep.mubr.bf16.mxu0 0
  %11246 = vmatmul.mubr.bf16.gmra.mxu0 %v11160
  %v11247 = vpop.f32.mrf.mxu0
  %v11248 = vadd.f32 0.0, %v11247
  %v11249 = vpop.f32.mrf.mxu0
  %v11250 = vpop.f32.mrf.mxu0
  %v11251 = vadd.f32 0.0, %v11250
  %v11252 = vpop.f32.mrf.mxu0
  %11253 = vmatprep.mubr.bf16.mxu0 0
  %11254 = vmatmul.mubr.bf16.gmra.mxu0 %v11163
  %v11255 = vpop.f32.mrf.mxu0
  %v11256 = vadd.f32 0.0, %v11255
  %v11257 = vpop.f32.mrf.mxu0
  %v11258 = vpop.f32.mrf.mxu0
  %v11259 = vadd.f32 0.0, %v11258
  %v11260 = vpop.f32.mrf.mxu0
  %11261 = vdwg.mxu0
  %v11262 = vadd.f32 %v11068, %v11200
  %v11263 = vadd.f32 %v11069, %v11203
  %v11264 = vadd.f32 %v11070, %v11208
  %v11265 = vadd.f32 %v11071, %v11211
  %v11266 = vadd.f32 %v11072, %v11216
  %v11267 = vadd.f32 %v11073, %v11219
  %v11268 = vadd.f32 %v11074, %v11224
  %v11269 = vadd.f32 %v11075, %v11227
  %v11270 = vadd.f32 %v11076, %v11232
  %v11271 = vadd.f32 %v11077, %v11235
  %v11272 = vadd.f32 %v11078, %v11240
  %v11273 = vadd.f32 %v11079, %v11243
  %v11274 = vadd.f32 %v11080, %v11248
  %v11275 = vadd.f32 %v11081, %v11251
  %v11276 = vadd.f32 %v11082, %v11256
  %v11277 = vadd.f32 %v11083, %v11259
  %s11278 = scalar_lea.vmem %s5, 1472
  %v11279 = vld [vmem:[%s11278] sm:$0xf]
  %v11280 = vld [vmem:[%s11278 + $0x4] sm:$0xf]
  %v11281 = vld [vmem:[%s11278 + $0x8] sm:$0xf]
  %v11282 = vld [vmem:[%s11278 + $0xc] sm:$0xf]
  %v11283 = vld [vmem:[%s11278 + $0x10] sm:$0xf]
  %v11284 = vld [vmem:[%s11278 + $0x14] sm:$0xf]
  %v11285 = vld [vmem:[%s11278 + $0x18] sm:$0xf]
  %v11286 = vld [vmem:[%s11278 + $0x1c] sm:$0xf]
  %v11287 = vld [vmem:[%s11278 + $0x20] sm:$0xf]
  %v11288 = vld [vmem:[%s11278 + $0x24] sm:$0xf]
  %v11289 = vld [vmem:[%s11278 + $0x28] sm:$0xf]
  %v11290 = vld [vmem:[%s11278 + $0x2c] sm:$0xf]
  %v11291 = vld [vmem:[%s11278 + $0x30] sm:$0xf]
  %v11292 = vld [vmem:[%s11278 + $0x34] sm:$0xf]
  %v11293 = vld [vmem:[%s11278 + $0x38] sm:$0xf]
  %v11294 = vld [vmem:[%s11278 + $0x3c] sm:$0xf]
  %v11311 = vunpack.c.l.b16 %v11279
  %v11312 = vunpack.c.l.b16 %v11280
  %v11313 = vunpack.c.l.b16 %v11281
  %v11314 = vunpack.c.l.b16 %v11282
  %v11315 = vunpack.c.l.b16 %v11283
  %v11316 = vunpack.c.l.b16 %v11284
  %v11317 = vunpack.c.l.b16 %v11285
  %v11318 = vunpack.c.l.b16 %v11286
  %v11319 = vunpack.c.l.b16 %v11287
  %v11320 = vunpack.c.l.b16 %v11288
  %v11321 = vunpack.c.l.b16 %v11289
  %v11322 = vunpack.c.l.b16 %v11290
  %v11323 = vunpack.c.l.b16 %v11291
  %v11324 = vunpack.c.l.b16 %v11292
  %v11325 = vunpack.c.l.b16 %v11293
  %v11326 = vunpack.c.l.b16 %v11294
  %v11327 = vpack.c.b16 %v11312, %v11311
  %v11328 = vpack.c.b16 %v11314, %v11313
  %v11329 = vpack.c.b16 %v11316, %v11315
  %v11330 = vpack.c.b16 %v11318, %v11317
  %v11331 = vpack.c.b16 %v11320, %v11319
  %v11332 = vpack.c.b16 %v11322, %v11321
  %v11333 = vpack.c.b16 %v11324, %v11323
  %v11334 = vpack.c.b16 %v11326, %v11325
  %v11336 = vsel %vm6921, %v11327, 0
  %v11339 = vsel %vm6921, %v11328, 0
  %v11342 = vsel %vm6921, %v11329, 0
  %v11345 = vsel %vm6921, %v11330, 0
  %v11348 = vsel %vm6921, %v11331, 0
  %v11351 = vsel %vm6921, %v11332, 0
  %v11354 = vsel %vm6921, %v11333, 0
  %v11357 = vsel %vm6921, %v11334, 0
  %11359 = vmatprep.subr.bf16.mxu0 0
  %11360 = vmatpush1.bf16.msra.mxu0 0
  %11361 = vmatprep.subr.bf16.mxu0 0
  %11362 = vmatpush1.bf16.msra.mxu0 0
  %11363 = vmatprep.subr.bf16.mxu0 0
  %11364 = vmatpush1.bf16.msra.mxu0 0
  %11365 = vmatprep.subr.bf16.mxu0 0
  %11366 = vmatpush1.bf16.msra.mxu0 0
  %11367 = vmatprep.subr.bf16.mxu0 0
  %11368 = vmatpush1.bf16.msra.mxu0 %v6846
  %11369 = vmatprep.subr.bf16.mxu0 0
  %11370 = vmatpush1.bf16.msra.mxu0 %v6821
  %11371 = vmatprep.subr.bf16.mxu0 0
  %11372 = vmatpush1.bf16.msra.mxu0 %v6796
  %11373 = vmatprep.subr.bf16.mxu0 0
  %11374 = vmatpush1.bf16.msra.mxu0 %v6771
  %11375 = vmatprep.subr.bf16.mxu0 0
  %11376 = vmatpush2.bf16.msra.mxu0 0
  %11377 = vmatprep.subr.bf16.mxu0 0
  %11378 = vmatpush2.bf16.msra.mxu0 0
  %11379 = vmatprep.subr.bf16.mxu0 0
  %11380 = vmatpush2.bf16.msra.mxu0 0
  %11381 = vmatprep.subr.bf16.mxu0 0
  %11382 = vmatpush2.bf16.msra.mxu0 0
  %11383 = vmatprep.subr.bf16.mxu0 0
  %11384 = vmatpush2.bf16.msra.mxu0 0
  %11385 = vmatprep.subr.bf16.mxu0 0
  %11386 = vmatpush2.bf16.msra.mxu0 0
  %11387 = vmatprep.subr.bf16.mxu0 0
  %11388 = vmatpush2.bf16.msra.mxu0 0
  %11389 = vmatprep.subr.bf16.mxu0 0
  %11390 = vmatpush2.bf16.msra.mxu0 0
  %11391 = vmatprep.mubr.bf16.mxu0 0
  %11392 = vmatmul.mubr.bf16.gmra.mxu0 %v11336
  %v11393 = vpop.f32.mrf.mxu0
  %v11394 = vadd.f32 0.0, %v11393
  %v11395 = vpop.f32.mrf.mxu0
  %v11396 = vpop.f32.mrf.mxu0
  %v11397 = vadd.f32 0.0, %v11396
  %v11398 = vpop.f32.mrf.mxu0
  %11399 = vmatprep.mubr.bf16.mxu0 0
  %11400 = vmatmul.mubr.bf16.gmra.mxu0 %v11339
  %v11401 = vpop.f32.mrf.mxu0
  %v11402 = vadd.f32 0.0, %v11401
  %v11403 = vpop.f32.mrf.mxu0
  %v11404 = vpop.f32.mrf.mxu0
  %v11405 = vadd.f32 0.0, %v11404
  %v11406 = vpop.f32.mrf.mxu0
  %11407 = vmatprep.mubr.bf16.mxu0 0
  %11408 = vmatmul.mubr.bf16.gmra.mxu0 %v11342
  %v11409 = vpop.f32.mrf.mxu0
  %v11410 = vadd.f32 0.0, %v11409
  %v11411 = vpop.f32.mrf.mxu0
  %v11412 = vpop.f32.mrf.mxu0
  %v11413 = vadd.f32 0.0, %v11412
  %v11414 = vpop.f32.mrf.mxu0
  %11415 = vmatprep.mubr.bf16.mxu0 0
  %11416 = vmatmul.mubr.bf16.gmra.mxu0 %v11345
  %v11417 = vpop.f32.mrf.mxu0
  %v11418 = vadd.f32 0.0, %v11417
  %v11419 = vpop.f32.mrf.mxu0
  %v11420 = vpop.f32.mrf.mxu0
  %v11421 = vadd.f32 0.0, %v11420
  %v11422 = vpop.f32.mrf.mxu0
  %11423 = vmatprep.mubr.bf16.mxu0 0
  %11424 = vmatmul.mubr.bf16.gmra.mxu0 %v11348
  %v11425 = vpop.f32.mrf.mxu0
  %v11426 = vadd.f32 0.0, %v11425
  %v11427 = vpop.f32.mrf.mxu0
  %v11428 = vpop.f32.mrf.mxu0
  %v11429 = vadd.f32 0.0, %v11428
  %v11430 = vpop.f32.mrf.mxu0
  %11431 = vmatprep.mubr.bf16.mxu0 0
  %11432 = vmatmul.mubr.bf16.gmra.mxu0 %v11351
  %v11433 = vpop.f32.mrf.mxu0
  %v11434 = vadd.f32 0.0, %v11433
  %v11435 = vpop.f32.mrf.mxu0
  %v11436 = vpop.f32.mrf.mxu0
  %v11437 = vadd.f32 0.0, %v11436
  %v11438 = vpop.f32.mrf.mxu0
  %11439 = vmatprep.mubr.bf16.mxu0 0
  %11440 = vmatmul.mubr.bf16.gmra.mxu0 %v11354
  %v11441 = vpop.f32.mrf.mxu0
  %v11442 = vadd.f32 0.0, %v11441
  %v11443 = vpop.f32.mrf.mxu0
  %v11444 = vpop.f32.mrf.mxu0
  %v11445 = vadd.f32 0.0, %v11444
  %v11446 = vpop.f32.mrf.mxu0
  %11447 = vmatprep.mubr.bf16.mxu0 0
  %11448 = vmatmul.mubr.bf16.gmra.mxu0 %v11357
  %v11449 = vpop.f32.mrf.mxu0
  %v11450 = vadd.f32 0.0, %v11449
  %v11451 = vpop.f32.mrf.mxu0
  %v11452 = vpop.f32.mrf.mxu0
  %v11453 = vadd.f32 0.0, %v11452
  %v11454 = vpop.f32.mrf.mxu0
  %11455 = vdwg.mxu0
  %v11456 = vadd.f32 %v11262, %v11394
  %v11457 = vadd.f32 %v11263, %v11397
  %v11458 = vadd.f32 %v11264, %v11402
  %v11459 = vadd.f32 %v11265, %v11405
  %v11460 = vadd.f32 %v11266, %v11410
  %v11461 = vadd.f32 %v11267, %v11413
  %v11462 = vadd.f32 %v11268, %v11418
  %v11463 = vadd.f32 %v11269, %v11421
  %v11464 = vadd.f32 %v11270, %v11426
  %v11465 = vadd.f32 %v11271, %v11429
  %v11466 = vadd.f32 %v11272, %v11434
  %v11467 = vadd.f32 %v11273, %v11437
  %v11468 = vadd.f32 %v11274, %v11442
  %v11469 = vadd.f32 %v11275, %v11445
  %v11470 = vadd.f32 %v11276, %v11450
  %v11471 = vadd.f32 %v11277, %v11453
  %s11472 = scalar_lea.vmem %s5, 1536
  %v11473 = vld [vmem:[%s11472] sm:$0xf]
  %v11474 = vld [vmem:[%s11472 + $0x4] sm:$0xf]
  %v11475 = vld [vmem:[%s11472 + $0x8] sm:$0xf]
  %v11476 = vld [vmem:[%s11472 + $0xc] sm:$0xf]
  %v11477 = vld [vmem:[%s11472 + $0x10] sm:$0xf]
  %v11478 = vld [vmem:[%s11472 + $0x14] sm:$0xf]
  %v11479 = vld [vmem:[%s11472 + $0x18] sm:$0xf]
  %v11480 = vld [vmem:[%s11472 + $0x1c] sm:$0xf]
  %v11481 = vld [vmem:[%s11472 + $0x20] sm:$0xf]
  %v11482 = vld [vmem:[%s11472 + $0x24] sm:$0xf]
  %v11483 = vld [vmem:[%s11472 + $0x28] sm:$0xf]
  %v11484 = vld [vmem:[%s11472 + $0x2c] sm:$0xf]
  %v11485 = vld [vmem:[%s11472 + $0x30] sm:$0xf]
  %v11486 = vld [vmem:[%s11472 + $0x34] sm:$0xf]
  %v11487 = vld [vmem:[%s11472 + $0x38] sm:$0xf]
  %v11488 = vld [vmem:[%s11472 + $0x3c] sm:$0xf]
  %v11505 = vunpack.c.l.b16 %v11473
  %v11506 = vunpack.c.l.b16 %v11474
  %v11507 = vunpack.c.l.b16 %v11475
  %v11508 = vunpack.c.l.b16 %v11476
  %v11509 = vunpack.c.l.b16 %v11477
  %v11510 = vunpack.c.l.b16 %v11478
  %v11511 = vunpack.c.l.b16 %v11479
  %v11512 = vunpack.c.l.b16 %v11480
  %v11513 = vunpack.c.l.b16 %v11481
  %v11514 = vunpack.c.l.b16 %v11482
  %v11515 = vunpack.c.l.b16 %v11483
  %v11516 = vunpack.c.l.b16 %v11484
  %v11517 = vunpack.c.l.b16 %v11485
  %v11518 = vunpack.c.l.b16 %v11486
  %v11519 = vunpack.c.l.b16 %v11487
  %v11520 = vunpack.c.l.b16 %v11488
  %v11521 = vpack.c.b16 %v11506, %v11505
  %v11522 = vpack.c.b16 %v11508, %v11507
  %v11523 = vpack.c.b16 %v11510, %v11509
  %v11524 = vpack.c.b16 %v11512, %v11511
  %v11525 = vpack.c.b16 %v11514, %v11513
  %v11526 = vpack.c.b16 %v11516, %v11515
  %v11527 = vpack.c.b16 %v11518, %v11517
  %v11528 = vpack.c.b16 %v11520, %v11519
  %v11530 = vsel %vm6921, %v11521, 0
  %v11533 = vsel %vm6921, %v11522, 0
  %v11536 = vsel %vm6921, %v11523, 0
  %v11539 = vsel %vm6921, %v11524, 0
  %v11542 = vsel %vm6921, %v11525, 0
  %v11545 = vsel %vm6921, %v11526, 0
  %v11548 = vsel %vm6921, %v11527, 0
  %v11551 = vsel %vm6921, %v11528, 0
  %11553 = vmatprep.subr.bf16.mxu0 0
  %11554 = vmatpush1.bf16.msra.mxu0 0
  %11555 = vmatprep.subr.bf16.mxu0 0
  %11556 = vmatpush1.bf16.msra.mxu0 0
  %11557 = vmatprep.subr.bf16.mxu0 0
  %11558 = vmatpush1.bf16.msra.mxu0 0
  %11559 = vmatprep.subr.bf16.mxu0 0
  %11560 = vmatpush1.bf16.msra.mxu0 0
  %11561 = vmatprep.subr.bf16.mxu0 0
  %11562 = vmatpush1.bf16.msra.mxu0 %v6847
  %11563 = vmatprep.subr.bf16.mxu0 0
  %11564 = vmatpush1.bf16.msra.mxu0 %v6822
  %11565 = vmatprep.subr.bf16.mxu0 0
  %11566 = vmatpush1.bf16.msra.mxu0 %v6797
  %11567 = vmatprep.subr.bf16.mxu0 0
  %11568 = vmatpush1.bf16.msra.mxu0 %v6772
  %11569 = vmatprep.subr.bf16.mxu0 0
  %11570 = vmatpush2.bf16.msra.mxu0 0
  %11571 = vmatprep.subr.bf16.mxu0 0
  %11572 = vmatpush2.bf16.msra.mxu0 0
  %11573 = vmatprep.subr.bf16.mxu0 0
  %11574 = vmatpush2.bf16.msra.mxu0 0
  %11575 = vmatprep.subr.bf16.mxu0 0
  %11576 = vmatpush2.bf16.msra.mxu0 0
  %11577 = vmatprep.subr.bf16.mxu0 0
  %11578 = vmatpush2.bf16.msra.mxu0 0
  %11579 = vmatprep.subr.bf16.mxu0 0
  %11580 = vmatpush2.bf16.msra.mxu0 0
  %11581 = vmatprep.subr.bf16.mxu0 0
  %11582 = vmatpush2.bf16.msra.mxu0 0
  %11583 = vmatprep.subr.bf16.mxu0 0
  %11584 = vmatpush2.bf16.msra.mxu0 0
  %11585 = vmatprep.mubr.bf16.mxu0 0
  %11586 = vmatmul.mubr.bf16.gmra.mxu0 %v11530
  %v11587 = vpop.f32.mrf.mxu0
  %v11588 = vadd.f32 0.0, %v11587
  %v11589 = vpop.f32.mrf.mxu0
  %v11590 = vpop.f32.mrf.mxu0
  %v11591 = vadd.f32 0.0, %v11590
  %v11592 = vpop.f32.mrf.mxu0
  %11593 = vmatprep.mubr.bf16.mxu0 0
  %11594 = vmatmul.mubr.bf16.gmra.mxu0 %v11533
  %v11595 = vpop.f32.mrf.mxu0
  %v11596 = vadd.f32 0.0, %v11595
  %v11597 = vpop.f32.mrf.mxu0
  %v11598 = vpop.f32.mrf.mxu0
  %v11599 = vadd.f32 0.0, %v11598
  %v11600 = vpop.f32.mrf.mxu0
  %11601 = vmatprep.mubr.bf16.mxu0 0
  %11602 = vmatmul.mubr.bf16.gmra.mxu0 %v11536
  %v11603 = vpop.f32.mrf.mxu0
  %v11604 = vadd.f32 0.0, %v11603
  %v11605 = vpop.f32.mrf.mxu0
  %v11606 = vpop.f32.mrf.mxu0
  %v11607 = vadd.f32 0.0, %v11606
  %v11608 = vpop.f32.mrf.mxu0
  %11609 = vmatprep.mubr.bf16.mxu0 0
  %11610 = vmatmul.mubr.bf16.gmra.mxu0 %v11539
  %v11611 = vpop.f32.mrf.mxu0
  %v11612 = vadd.f32 0.0, %v11611
  %v11613 = vpop.f32.mrf.mxu0
  %v11614 = vpop.f32.mrf.mxu0
  %v11615 = vadd.f32 0.0, %v11614
  %v11616 = vpop.f32.mrf.mxu0
  %11617 = vmatprep.mubr.bf16.mxu0 0
  %11618 = vmatmul.mubr.bf16.gmra.mxu0 %v11542
  %v11619 = vpop.f32.mrf.mxu0
  %v11620 = vadd.f32 0.0, %v11619
  %v11621 = vpop.f32.mrf.mxu0
  %v11622 = vpop.f32.mrf.mxu0
  %v11623 = vadd.f32 0.0, %v11622
  %v11624 = vpop.f32.mrf.mxu0
  %11625 = vmatprep.mubr.bf16.mxu0 0
  %11626 = vmatmul.mubr.bf16.gmra.mxu0 %v11545
  %v11627 = vpop.f32.mrf.mxu0
  %v11628 = vadd.f32 0.0, %v11627
  %v11629 = vpop.f32.mrf.mxu0
  %v11630 = vpop.f32.mrf.mxu0
  %v11631 = vadd.f32 0.0, %v11630
  %v11632 = vpop.f32.mrf.mxu0
  %11633 = vmatprep.mubr.bf16.mxu0 0
  %11634 = vmatmul.mubr.bf16.gmra.mxu0 %v11548
  %v11635 = vpop.f32.mrf.mxu0
  %v11636 = vadd.f32 0.0, %v11635
  %v11637 = vpop.f32.mrf.mxu0
  %v11638 = vpop.f32.mrf.mxu0
  %v11639 = vadd.f32 0.0, %v11638
  %v11640 = vpop.f32.mrf.mxu0
  %11641 = vmatprep.mubr.bf16.mxu0 0
  %11642 = vmatmul.mubr.bf16.gmra.mxu0 %v11551
  %v11643 = vpop.f32.mrf.mxu0
  %v11644 = vadd.f32 0.0, %v11643
  %v11645 = vpop.f32.mrf.mxu0
  %v11646 = vpop.f32.mrf.mxu0
  %v11647 = vadd.f32 0.0, %v11646
  %v11648 = vpop.f32.mrf.mxu0
  %11649 = vdwg.mxu0
  %v11650 = vadd.f32 %v11456, %v11588
  %v11651 = vadd.f32 %v11457, %v11591
  %v11652 = vadd.f32 %v11458, %v11596
  %v11653 = vadd.f32 %v11459, %v11599
  %v11654 = vadd.f32 %v11460, %v11604
  %v11655 = vadd.f32 %v11461, %v11607
  %v11656 = vadd.f32 %v11462, %v11612
  %v11657 = vadd.f32 %v11463, %v11615
  %v11658 = vadd.f32 %v11464, %v11620
  %v11659 = vadd.f32 %v11465, %v11623
  %v11660 = vadd.f32 %v11466, %v11628
  %v11661 = vadd.f32 %v11467, %v11631
  %v11662 = vadd.f32 %v11468, %v11636
  %v11663 = vadd.f32 %v11469, %v11639
  %v11664 = vadd.f32 %v11470, %v11644
  %v11665 = vadd.f32 %v11471, %v11647
  %v11666 = vld [vmem:[%s6] sm:$0xff]
  %v11667 = vld [vmem:[%s6 + $0x8] sm:$0xff]
  %v11668 = vld [vmem:[%s6 + $0x10] sm:$0xff]
  %v11669 = vld [vmem:[%s6 + $0x18] sm:$0xff]
  %v11670 = vld [vmem:[%s6 + $0x20] sm:$0xff]
  %v11671 = vld [vmem:[%s6 + $0x28] sm:$0xff]
  %v11672 = vld [vmem:[%s6 + $0x30] sm:$0xff]
  %v11673 = vld [vmem:[%s6 + $0x38] sm:$0xff]
  %v11674 = vld [vmem:[%s6 + $0x40] sm:$0xff]
  %v11675 = vld [vmem:[%s6 + $0x48] sm:$0xff]
  %v11676 = vld [vmem:[%s6 + $0x50] sm:$0xff]
  %v11677 = vld [vmem:[%s6 + $0x58] sm:$0xff]
  %v11678 = vld [vmem:[%s6 + $0x60] sm:$0xff]
  %v11679 = vld [vmem:[%s6 + $0x68] sm:$0xff]
  %v11680 = vld [vmem:[%s6 + $0x70] sm:$0xff]
  %v11681 = vld [vmem:[%s6 + $0x78] sm:$0xff]
  %11683 = vset.pattern.permute.xlu0 0
  %11684 = vperm.xlu0 %11683, %v11666
  %v11685 = vpop.permute.xlu0 %11684
  %11688 = vset.pattern.permute.xlu0 0
  %11689 = vperm.xlu0 %11688, %v11667
  %v11690 = vpop.permute.xlu0 %11689
  %11693 = vset.pattern.permute.xlu0 0
  %11694 = vperm.xlu0 %11693, %v11668
  %v11695 = vpop.permute.xlu0 %11694
  %11698 = vset.pattern.permute.xlu0 0
  %11699 = vperm.xlu0 %11698, %v11669
  %v11700 = vpop.permute.xlu0 %11699
  %11703 = vset.pattern.permute.xlu0 0
  %11704 = vperm.xlu0 %11703, %v11670
  %v11705 = vpop.permute.xlu0 %11704
  %11708 = vset.pattern.permute.xlu0 0
  %11709 = vperm.xlu0 %11708, %v11671
  %v11710 = vpop.permute.xlu0 %11709
  %11713 = vset.pattern.permute.xlu0 0
  %11714 = vperm.xlu0 %11713, %v11672
  %v11715 = vpop.permute.xlu0 %11714
  %11718 = vset.pattern.permute.xlu0 0
  %11719 = vperm.xlu0 %11718, %v11673
  %v11720 = vpop.permute.xlu0 %11719
  %11723 = vset.pattern.permute.xlu0 0
  %11724 = vperm.xlu0 %11723, %v11674
  %v11725 = vpop.permute.xlu0 %11724
  %11728 = vset.pattern.permute.xlu0 0
  %11729 = vperm.xlu0 %11728, %v11675
  %v11730 = vpop.permute.xlu0 %11729
  %11733 = vset.pattern.permute.xlu0 0
  %11734 = vperm.xlu0 %11733, %v11676
  %v11735 = vpop.permute.xlu0 %11734
  %11738 = vset.pattern.permute.xlu0 0
  %11739 = vperm.xlu0 %11738, %v11677
  %v11740 = vpop.permute.xlu0 %11739
  %11743 = vset.pattern.permute.xlu0 0
  %11744 = vperm.xlu0 %11743, %v11678
  %v11745 = vpop.permute.xlu0 %11744
  %11748 = vset.pattern.permute.xlu0 0
  %11749 = vperm.xlu0 %11748, %v11679
  %v11750 = vpop.permute.xlu0 %11749
  %11753 = vset.pattern.permute.xlu0 0
  %11754 = vperm.xlu0 %11753, %v11680
  %v11755 = vpop.permute.xlu0 %11754
  %11758 = vset.pattern.permute.xlu0 0
  %11759 = vperm.xlu0 %11758, %v11681
  %v11760 = vpop.permute.xlu0 %11759
  %v11762 = vadd.f32 %v11650, %v11685
  %v11763 = vadd.f32 %v11651, %v11690
  %v11764 = vadd.f32 %v11652, %v11695
  %v11765 = vadd.f32 %v11653, %v11700
  %v11766 = vadd.f32 %v11654, %v11705
  %v11767 = vadd.f32 %v11655, %v11710
  %v11768 = vadd.f32 %v11656, %v11715
  %v11769 = vadd.f32 %v11657, %v11720
  %v11770 = vadd.f32 %v11658, %v11725
  %v11771 = vadd.f32 %v11659, %v11730
  %v11772 = vadd.f32 %v11660, %v11735
  %v11773 = vadd.f32 %v11661, %v11740
  %v11774 = vadd.f32 %v11662, %v11745
  %v11775 = vadd.f32 %v11663, %v11750
  %v11776 = vadd.f32 %v11664, %v11755
  %v11777 = vadd.f32 %v11665, %v11760
  %v11778 = vmax.f32 %v11762, 0.0
  %v11779 = vmax.f32 %v11763, 0.0
  %v11780 = vmax.f32 %v11764, 0.0
  %v11781 = vmax.f32 %v11765, 0.0
  %v11782 = vmax.f32 %v11766, 0.0
  %v11783 = vmax.f32 %v11767, 0.0
  %v11784 = vmax.f32 %v11768, 0.0
  %v11785 = vmax.f32 %v11769, 0.0
  %v11786 = vmax.f32 %v11770, 0.0
  %v11787 = vmax.f32 %v11771, 0.0
  %v11788 = vmax.f32 %v11772, 0.0
  %v11789 = vmax.f32 %v11773, 0.0
  %v11790 = vmax.f32 %v11774, 0.0
  %v11791 = vmax.f32 %v11775, 0.0
  %v11792 = vmax.f32 %v11776, 0.0
  %v11793 = vmax.f32 %v11777, 0.0
  %v11794 = vld [vmem:[%s7] sm:$0xff]
  %v11795 = vld [vmem:[%s7 + $0x8] sm:$0xff]
  %v11796 = vld [vmem:[%s7 + $0x10] sm:$0xff]
  %v11797 = vld [vmem:[%s7 + $0x18] sm:$0xff]
  %v11798 = vld [vmem:[%s7 + $0x20] sm:$0xff]
  %v11799 = vld [vmem:[%s7 + $0x28] sm:$0xff]
  %v11800 = vld [vmem:[%s7 + $0x30] sm:$0xff]
  %v11801 = vld [vmem:[%s7 + $0x38] sm:$0xff]
  %v11802 = vld [vmem:[%s7 + $0x40] sm:$0xff]
  %v11803 = vld [vmem:[%s7 + $0x48] sm:$0xff]
  %v11804 = vld [vmem:[%s7 + $0x50] sm:$0xff]
  %v11805 = vld [vmem:[%s7 + $0x58] sm:$0xff]
  %v11806 = vld [vmem:[%s7 + $0x60] sm:$0xff]
  %v11807 = vld [vmem:[%s7 + $0x68] sm:$0xff]
  %v11808 = vld [vmem:[%s7 + $0x70] sm:$0xff]
  %v11809 = vld [vmem:[%s7 + $0x78] sm:$0xff]
  %s11810 = scalar_lea.vmem %s7, 128
  %v11811 = vld [vmem:[%s11810] sm:$0xff]
  %v11812 = vld [vmem:[%s11810 + $0x8] sm:$0xff]
  %v11813 = vld [vmem:[%s11810 + $0x10] sm:$0xff]
  %v11814 = vld [vmem:[%s11810 + $0x18] sm:$0xff]
  %v11815 = vld [vmem:[%s11810 + $0x20] sm:$0xff]
  %v11816 = vld [vmem:[%s11810 + $0x28] sm:$0xff]
  %v11817 = vld [vmem:[%s11810 + $0x30] sm:$0xff]
  %v11818 = vld [vmem:[%s11810 + $0x38] sm:$0xff]
  %v11819 = vld [vmem:[%s11810 + $0x40] sm:$0xff]
  %v11820 = vld [vmem:[%s11810 + $0x48] sm:$0xff]
  %v11821 = vld [vmem:[%s11810 + $0x50] sm:$0xff]
  %v11822 = vld [vmem:[%s11810 + $0x58] sm:$0xff]
  %v11823 = vld [vmem:[%s11810 + $0x60] sm:$0xff]
  %v11824 = vld [vmem:[%s11810 + $0x68] sm:$0xff]
  %v11825 = vld [vmem:[%s11810 + $0x70] sm:$0xff]
  %v11826 = vld [vmem:[%s11810 + $0x78] sm:$0xff]
  %11827 = vmatprep.subr.mxu0 0.0
  %11828 = vmatpush1.msra.mxu0 %v11826
  %11829 = vmatprep.subr.mxu0 0.0
  %11830 = vmatpush1.msra.mxu0 %v11825
  %11831 = vmatprep.subr.mxu0 0.0
  %11832 = vmatpush1.msra.mxu0 %v11824
  %11833 = vmatprep.subr.mxu0 0.0
  %11834 = vmatpush1.msra.mxu0 %v11823
  %11835 = vmatprep.subr.mxu0 0.0
  %11836 = vmatpush1.msra.mxu0 %v11822
  %11837 = vmatprep.subr.mxu0 0.0
  %11838 = vmatpush1.msra.mxu0 %v11821
  %11839 = vmatprep.subr.mxu0 0.0
  %11840 = vmatpush1.msra.mxu0 %v11820
  %11841 = vmatprep.subr.mxu0 0.0
  %11842 = vmatpush1.msra.mxu0 %v11819
  %11843 = vmatprep.subr.mxu0 0.0
  %11844 = vmatpush1.msra.mxu0 %v11818
  %11845 = vmatprep.subr.mxu0 0.0
  %11846 = vmatpush1.msra.mxu0 %v11817
  %11847 = vmatprep.subr.mxu0 0.0
  %11848 = vmatpush1.msra.mxu0 %v11816
  %11849 = vmatprep.subr.mxu0 0.0
  %11850 = vmatpush1.msra.mxu0 %v11815
  %11851 = vmatprep.subr.mxu0 0.0
  %11852 = vmatpush1.msra.mxu0 %v11814
  %11853 = vmatprep.subr.mxu0 0.0
  %11854 = vmatpush1.msra.mxu0 %v11813
  %11855 = vmatprep.subr.mxu0 0.0
  %11856 = vmatpush1.msra.mxu0 %v11812
  %11857 = vmatprep.subr.mxu0 0.0
  %11858 = vmatpush1.msra.mxu0 %v11811
  %11859 = vmatprep.subr.mxu0 0.0
  %11860 = vmatpush2.msra.mxu0 0.0
  %11861 = vmatprep.subr.mxu0 0.0
  %11862 = vmatpush2.msra.mxu0 0.0
  %11863 = vmatprep.subr.mxu0 0.0
  %11864 = vmatpush2.msra.mxu0 0.0
  %11865 = vmatprep.subr.mxu0 0.0
  %11866 = vmatpush2.msra.mxu0 0.0
  %11867 = vmatprep.subr.mxu0 0.0
  %11868 = vmatpush2.msra.mxu0 0.0
  %11869 = vmatprep.subr.mxu0 0.0
  %11870 = vmatpush2.msra.mxu0 0.0
  %11871 = vmatprep.subr.mxu0 0.0
  %11872 = vmatpush2.msra.mxu0 0.0
  %11873 = vmatprep.subr.mxu0 0.0
  %11874 = vmatpush2.msra.mxu0 0.0
  %11875 = vmatprep.subr.mxu0 0.0
  %11876 = vmatpush2.msra.mxu0 0.0
  %11877 = vmatprep.subr.mxu0 0.0
  %11878 = vmatpush2.msra.mxu0 0.0
  %11879 = vmatprep.subr.mxu0 0.0
  %11880 = vmatpush2.msra.mxu0 0.0
  %11881 = vmatprep.subr.mxu0 0.0
  %11882 = vmatpush2.msra.mxu0 0.0
  %11883 = vmatprep.subr.mxu0 0.0
  %11884 = vmatpush2.msra.mxu0 0.0
  %11885 = vmatprep.subr.mxu0 0.0
  %11886 = vmatpush2.msra.mxu0 0.0
  %11887 = vmatprep.subr.mxu0 0.0
  %11888 = vmatpush2.msra.mxu0 0.0
  %11889 = vmatprep.subr.mxu0 0.0
  %11890 = vmatpush2.msra.mxu0 0.0
  %11891 = vmatprep.mubr.f32.mxu0 0.0
  %11892 = vmatmul.mubr.f32.gmra.mxu0 %v11779
  %v11893 = vpop.f32.mrf.mxu0
  %v11894 = vadd.f32 0.0, %v11893
  %v11895 = vpop.f32.mrf.mxu0
  %11896 = vdwg.mxu0
  %11897 = vmatprep.subr.mxu0 0.0
  %11898 = vmatpush1.msra.mxu0 %v11809
  %11899 = vmatprep.subr.mxu0 0.0
  %11900 = vmatpush1.msra.mxu0 %v11808
  %11901 = vmatprep.subr.mxu0 0.0
  %11902 = vmatpush1.msra.mxu0 %v11807
  %11903 = vmatprep.subr.mxu0 0.0
  %11904 = vmatpush1.msra.mxu0 %v11806
  %11905 = vmatprep.subr.mxu0 0.0
  %11906 = vmatpush1.msra.mxu0 %v11805
  %11907 = vmatprep.subr.mxu0 0.0
  %11908 = vmatpush1.msra.mxu0 %v11804
  %11909 = vmatprep.subr.mxu0 0.0
  %11910 = vmatpush1.msra.mxu0 %v11803
  %11911 = vmatprep.subr.mxu0 0.0
  %11912 = vmatpush1.msra.mxu0 %v11802
  %11913 = vmatprep.subr.mxu0 0.0
  %11914 = vmatpush1.msra.mxu0 %v11801
  %11915 = vmatprep.subr.mxu0 0.0
  %11916 = vmatpush1.msra.mxu0 %v11800
  %11917 = vmatprep.subr.mxu0 0.0
  %11918 = vmatpush1.msra.mxu0 %v11799
  %11919 = vmatprep.subr.mxu0 0.0
  %11920 = vmatpush1.msra.mxu0 %v11798
  %11921 = vmatprep.subr.mxu0 0.0
  %11922 = vmatpush1.msra.mxu0 %v11797
  %11923 = vmatprep.subr.mxu0 0.0
  %11924 = vmatpush1.msra.mxu0 %v11796
  %11925 = vmatprep.subr.mxu0 0.0
  %11926 = vmatpush1.msra.mxu0 %v11795
  %11927 = vmatprep.subr.mxu0 0.0
  %11928 = vmatpush1.msra.mxu0 %v11794
  %11929 = vmatprep.subr.mxu0 0.0
  %11930 = vmatpush2.msra.mxu0 0.0
  %11931 = vmatprep.subr.mxu0 0.0
  %11932 = vmatpush2.msra.mxu0 0.0
  %11933 = vmatprep.subr.mxu0 0.0
  %11934 = vmatpush2.msra.mxu0 0.0
  %11935 = vmatprep.subr.mxu0 0.0
  %11936 = vmatpush2.msra.mxu0 0.0
  %11937 = vmatprep.subr.mxu0 0.0
  %11938 = vmatpush2.msra.mxu0 0.0
  %11939 = vmatprep.subr.mxu0 0.0
  %11940 = vmatpush2.msra.mxu0 0.0
  %11941 = vmatprep.subr.mxu0 0.0
  %11942 = vmatpush2.msra.mxu0 0.0
  %11943 = vmatprep.subr.mxu0 0.0
  %11944 = vmatpush2.msra.mxu0 0.0
  %11945 = vmatprep.subr.mxu0 0.0
  %11946 = vmatpush2.msra.mxu0 0.0
  %11947 = vmatprep.subr.mxu0 0.0
  %11948 = vmatpush2.msra.mxu0 0.0
  %11949 = vmatprep.subr.mxu0 0.0
  %11950 = vmatpush2.msra.mxu0 0.0
  %11951 = vmatprep.subr.mxu0 0.0
  %11952 = vmatpush2.msra.mxu0 0.0
  %11953 = vmatprep.subr.mxu0 0.0
  %11954 = vmatpush2.msra.mxu0 0.0
  %11955 = vmatprep.subr.mxu0 0.0
  %11956 = vmatpush2.msra.mxu0 0.0
  %11957 = vmatprep.subr.mxu0 0.0
  %11958 = vmatpush2.msra.mxu0 0.0
  %11959 = vmatprep.subr.mxu0 0.0
  %11960 = vmatpush2.msra.mxu0 0.0
  %11961 = vmatprep.mubr.f32.mxu0 0.0
  %11962 = vmatmul.mubr.f32.gmra.mxu0 %v11778
  %v11963 = vpop.f32.mrf.mxu0
  %v11964 = vadd.f32 %v11894, %v11963
  %v11965 = vpop.f32.mrf.mxu0
  %11966 = vdwg.mxu0
  %s11967 = scalar_lea.vmem %s7, 256
  %v11968 = vld [vmem:[%s11967] sm:$0xff]
  %v11969 = vld [vmem:[%s11967 + $0x8] sm:$0xff]
  %v11970 = vld [vmem:[%s11967 + $0x10] sm:$0xff]
  %v11971 = vld [vmem:[%s11967 + $0x18] sm:$0xff]
  %v11972 = vld [vmem:[%s11967 + $0x20] sm:$0xff]
  %v11973 = vld [vmem:[%s11967 + $0x28] sm:$0xff]
  %v11974 = vld [vmem:[%s11967 + $0x30] sm:$0xff]
  %v11975 = vld [vmem:[%s11967 + $0x38] sm:$0xff]
  %v11976 = vld [vmem:[%s11967 + $0x40] sm:$0xff]
  %v11977 = vld [vmem:[%s11967 + $0x48] sm:$0xff]
  %v11978 = vld [vmem:[%s11967 + $0x50] sm:$0xff]
  %v11979 = vld [vmem:[%s11967 + $0x58] sm:$0xff]
  %v11980 = vld [vmem:[%s11967 + $0x60] sm:$0xff]
  %v11981 = vld [vmem:[%s11967 + $0x68] sm:$0xff]
  %v11982 = vld [vmem:[%s11967 + $0x70] sm:$0xff]
  %v11983 = vld [vmem:[%s11967 + $0x78] sm:$0xff]
  %11984 = vmatprep.subr.mxu0 0.0
  %11985 = vmatpush1.msra.mxu0 %v11983
  %11986 = vmatprep.subr.mxu0 0.0
  %11987 = vmatpush1.msra.mxu0 %v11982
  %11988 = vmatprep.subr.mxu0 0.0
  %11989 = vmatpush1.msra.mxu0 %v11981
  %11990 = vmatprep.subr.mxu0 0.0
  %11991 = vmatpush1.msra.mxu0 %v11980
  %11992 = vmatprep.subr.mxu0 0.0
  %11993 = vmatpush1.msra.mxu0 %v11979
  %11994 = vmatprep.subr.mxu0 0.0
  %11995 = vmatpush1.msra.mxu0 %v11978
  %11996 = vmatprep.subr.mxu0 0.0
  %11997 = vmatpush1.msra.mxu0 %v11977
  %11998 = vmatprep.subr.mxu0 0.0
  %11999 = vmatpush1.msra.mxu0 %v11976
  %12000 = vmatprep.subr.mxu0 0.0
  %12001 = vmatpush1.msra.mxu0 %v11975
  %12002 = vmatprep.subr.mxu0 0.0
  %12003 = vmatpush1.msra.mxu0 %v11974
  %12004 = vmatprep.subr.mxu0 0.0
  %12005 = vmatpush1.msra.mxu0 %v11973
  %12006 = vmatprep.subr.mxu0 0.0
  %12007 = vmatpush1.msra.mxu0 %v11972
  %12008 = vmatprep.subr.mxu0 0.0
  %12009 = vmatpush1.msra.mxu0 %v11971
  %12010 = vmatprep.subr.mxu0 0.0
  %12011 = vmatpush1.msra.mxu0 %v11970
  %12012 = vmatprep.subr.mxu0 0.0
  %12013 = vmatpush1.msra.mxu0 %v11969
  %12014 = vmatprep.subr.mxu0 0.0
  %12015 = vmatpush1.msra.mxu0 %v11968
  %12016 = vmatprep.subr.mxu0 0.0
  %12017 = vmatpush2.msra.mxu0 0.0
  %12018 = vmatprep.subr.mxu0 0.0
  %12019 = vmatpush2.msra.mxu0 0.0
  %12020 = vmatprep.subr.mxu0 0.0
  %12021 = vmatpush2.msra.mxu0 0.0
  %12022 = vmatprep.subr.mxu0 0.0
  %12023 = vmatpush2.msra.mxu0 0.0
  %12024 = vmatprep.subr.mxu0 0.0
  %12025 = vmatpush2.msra.mxu0 0.0
  %12026 = vmatprep.subr.mxu0 0.0
  %12027 = vmatpush2.msra.mxu0 0.0
  %12028 = vmatprep.subr.mxu0 0.0
  %12029 = vmatpush2.msra.mxu0 0.0
  %12030 = vmatprep.subr.mxu0 0.0
  %12031 = vmatpush2.msra.mxu0 0.0
  %12032 = vmatprep.subr.mxu0 0.0
  %12033 = vmatpush2.msra.mxu0 0.0
  %12034 = vmatprep.subr.mxu0 0.0
  %12035 = vmatpush2.msra.mxu0 0.0
  %12036 = vmatprep.subr.mxu0 0.0
  %12037 = vmatpush2.msra.mxu0 0.0
  %12038 = vmatprep.subr.mxu0 0.0
  %12039 = vmatpush2.msra.mxu0 0.0
  %12040 = vmatprep.subr.mxu0 0.0
  %12041 = vmatpush2.msra.mxu0 0.0
  %12042 = vmatprep.subr.mxu0 0.0
  %12043 = vmatpush2.msra.mxu0 0.0
  %12044 = vmatprep.subr.mxu0 0.0
  %12045 = vmatpush2.msra.mxu0 0.0
  %12046 = vmatprep.subr.mxu0 0.0
  %12047 = vmatpush2.msra.mxu0 0.0
  %12048 = vmatprep.mubr.f32.mxu0 0.0
  %12049 = vmatmul.mubr.f32.gmra.mxu0 %v11780
  %v12050 = vpop.f32.mrf.mxu0
  %v12051 = vadd.f32 0.0, %v12050
  %v12052 = vpop.f32.mrf.mxu0
  %12053 = vdwg.mxu0
  %v12054 = vadd.f32 %v11964, %v12051
  %s12055 = scalar_lea.vmem %s7, 384
  %v12056 = vld [vmem:[%s12055] sm:$0xff]
  %v12057 = vld [vmem:[%s12055 + $0x8] sm:$0xff]
  %v12058 = vld [vmem:[%s12055 + $0x10] sm:$0xff]
  %v12059 = vld [vmem:[%s12055 + $0x18] sm:$0xff]
  %v12060 = vld [vmem:[%s12055 + $0x20] sm:$0xff]
  %v12061 = vld [vmem:[%s12055 + $0x28] sm:$0xff]
  %v12062 = vld [vmem:[%s12055 + $0x30] sm:$0xff]
  %v12063 = vld [vmem:[%s12055 + $0x38] sm:$0xff]
  %v12064 = vld [vmem:[%s12055 + $0x40] sm:$0xff]
  %v12065 = vld [vmem:[%s12055 + $0x48] sm:$0xff]
  %v12066 = vld [vmem:[%s12055 + $0x50] sm:$0xff]
  %v12067 = vld [vmem:[%s12055 + $0x58] sm:$0xff]
  %v12068 = vld [vmem:[%s12055 + $0x60] sm:$0xff]
  %v12069 = vld [vmem:[%s12055 + $0x68] sm:$0xff]
  %v12070 = vld [vmem:[%s12055 + $0x70] sm:$0xff]
  %v12071 = vld [vmem:[%s12055 + $0x78] sm:$0xff]
  %12072 = vmatprep.subr.mxu0 0.0
  %12073 = vmatpush1.msra.mxu0 %v12071
  %12074 = vmatprep.subr.mxu0 0.0
  %12075 = vmatpush1.msra.mxu0 %v12070
  %12076 = vmatprep.subr.mxu0 0.0
  %12077 = vmatpush1.msra.mxu0 %v12069
  %12078 = vmatprep.subr.mxu0 0.0
  %12079 = vmatpush1.msra.mxu0 %v12068
  %12080 = vmatprep.subr.mxu0 0.0
  %12081 = vmatpush1.msra.mxu0 %v12067
  %12082 = vmatprep.subr.mxu0 0.0
  %12083 = vmatpush1.msra.mxu0 %v12066
  %12084 = vmatprep.subr.mxu0 0.0
  %12085 = vmatpush1.msra.mxu0 %v12065
  %12086 = vmatprep.subr.mxu0 0.0
  %12087 = vmatpush1.msra.mxu0 %v12064
  %12088 = vmatprep.subr.mxu0 0.0
  %12089 = vmatpush1.msra.mxu0 %v12063
  %12090 = vmatprep.subr.mxu0 0.0
  %12091 = vmatpush1.msra.mxu0 %v12062
  %12092 = vmatprep.subr.mxu0 0.0
  %12093 = vmatpush1.msra.mxu0 %v12061
  %12094 = vmatprep.subr.mxu0 0.0
  %12095 = vmatpush1.msra.mxu0 %v12060
  %12096 = vmatprep.subr.mxu0 0.0
  %12097 = vmatpush1.msra.mxu0 %v12059
  %12098 = vmatprep.subr.mxu0 0.0
  %12099 = vmatpush1.msra.mxu0 %v12058
  %12100 = vmatprep.subr.mxu0 0.0
  %12101 = vmatpush1.msra.mxu0 %v12057
  %12102 = vmatprep.subr.mxu0 0.0
  %12103 = vmatpush1.msra.mxu0 %v12056
  %12104 = vmatprep.subr.mxu0 0.0
  %12105 = vmatpush2.msra.mxu0 0.0
  %12106 = vmatprep.subr.mxu0 0.0
  %12107 = vmatpush2.msra.mxu0 0.0
  %12108 = vmatprep.subr.mxu0 0.0
  %12109 = vmatpush2.msra.mxu0 0.0
  %12110 = vmatprep.subr.mxu0 0.0
  %12111 = vmatpush2.msra.mxu0 0.0
  %12112 = vmatprep.subr.mxu0 0.0
  %12113 = vmatpush2.msra.mxu0 0.0
  %12114 = vmatprep.subr.mxu0 0.0
  %12115 = vmatpush2.msra.mxu0 0.0
  %12116 = vmatprep.subr.mxu0 0.0
  %12117 = vmatpush2.msra.mxu0 0.0
  %12118 = vmatprep.subr.mxu0 0.0
  %12119 = vmatpush2.msra.mxu0 0.0
  %12120 = vmatprep.subr.mxu0 0.0
  %12121 = vmatpush2.msra.mxu0 0.0
  %12122 = vmatprep.subr.mxu0 0.0
  %12123 = vmatpush2.msra.mxu0 0.0
  %12124 = vmatprep.subr.mxu0 0.0
  %12125 = vmatpush2.msra.mxu0 0.0
  %12126 = vmatprep.subr.mxu0 0.0
  %12127 = vmatpush2.msra.mxu0 0.0
  %12128 = vmatprep.subr.mxu0 0.0
  %12129 = vmatpush2.msra.mxu0 0.0
  %12130 = vmatprep.subr.mxu0 0.0
  %12131 = vmatpush2.msra.mxu0 0.0
  %12132 = vmatprep.subr.mxu0 0.0
  %12133 = vmatpush2.msra.mxu0 0.0
  %12134 = vmatprep.subr.mxu0 0.0
  %12135 = vmatpush2.msra.mxu0 0.0
  %12136 = vmatprep.mubr.f32.mxu0 0.0
  %12137 = vmatmul.mubr.f32.gmra.mxu0 %v11781
  %v12138 = vpop.f32.mrf.mxu0
  %v12139 = vadd.f32 0.0, %v12138
  %v12140 = vpop.f32.mrf.mxu0
  %12141 = vdwg.mxu0
  %v12142 = vadd.f32 %v12054, %v12139
  %s12143 = scalar_lea.vmem %s7, 512
  %v12144 = vld [vmem:[%s12143] sm:$0xff]
  %v12145 = vld [vmem:[%s12143 + $0x8] sm:$0xff]
  %v12146 = vld [vmem:[%s12143 + $0x10] sm:$0xff]
  %v12147 = vld [vmem:[%s12143 + $0x18] sm:$0xff]
  %v12148 = vld [vmem:[%s12143 + $0x20] sm:$0xff]
  %v12149 = vld [vmem:[%s12143 + $0x28] sm:$0xff]
  %v12150 = vld [vmem:[%s12143 + $0x30] sm:$0xff]
  %v12151 = vld [vmem:[%s12143 + $0x38] sm:$0xff]
  %v12152 = vld [vmem:[%s12143 + $0x40] sm:$0xff]
  %v12153 = vld [vmem:[%s12143 + $0x48] sm:$0xff]
  %v12154 = vld [vmem:[%s12143 + $0x50] sm:$0xff]
  %v12155 = vld [vmem:[%s12143 + $0x58] sm:$0xff]
  %v12156 = vld [vmem:[%s12143 + $0x60] sm:$0xff]
  %v12157 = vld [vmem:[%s12143 + $0x68] sm:$0xff]
  %v12158 = vld [vmem:[%s12143 + $0x70] sm:$0xff]
  %v12159 = vld [vmem:[%s12143 + $0x78] sm:$0xff]
  %12160 = vmatprep.subr.mxu0 0.0
  %12161 = vmatpush1.msra.mxu0 %v12159
  %12162 = vmatprep.subr.mxu0 0.0
  %12163 = vmatpush1.msra.mxu0 %v12158
  %12164 = vmatprep.subr.mxu0 0.0
  %12165 = vmatpush1.msra.mxu0 %v12157
  %12166 = vmatprep.subr.mxu0 0.0
  %12167 = vmatpush1.msra.mxu0 %v12156
  %12168 = vmatprep.subr.mxu0 0.0
  %12169 = vmatpush1.msra.mxu0 %v12155
  %12170 = vmatprep.subr.mxu0 0.0
  %12171 = vmatpush1.msra.mxu0 %v12154
  %12172 = vmatprep.subr.mxu0 0.0
  %12173 = vmatpush1.msra.mxu0 %v12153
  %12174 = vmatprep.subr.mxu0 0.0
  %12175 = vmatpush1.msra.mxu0 %v12152
  %12176 = vmatprep.subr.mxu0 0.0
  %12177 = vmatpush1.msra.mxu0 %v12151
  %12178 = vmatprep.subr.mxu0 0.0
  %12179 = vmatpush1.msra.mxu0 %v12150
  %12180 = vmatprep.subr.mxu0 0.0
  %12181 = vmatpush1.msra.mxu0 %v12149
  %12182 = vmatprep.subr.mxu0 0.0
  %12183 = vmatpush1.msra.mxu0 %v12148
  %12184 = vmatprep.subr.mxu0 0.0
  %12185 = vmatpush1.msra.mxu0 %v12147
  %12186 = vmatprep.subr.mxu0 0.0
  %12187 = vmatpush1.msra.mxu0 %v12146
  %12188 = vmatprep.subr.mxu0 0.0
  %12189 = vmatpush1.msra.mxu0 %v12145
  %12190 = vmatprep.subr.mxu0 0.0
  %12191 = vmatpush1.msra.mxu0 %v12144
  %12192 = vmatprep.subr.mxu0 0.0
  %12193 = vmatpush2.msra.mxu0 0.0
  %12194 = vmatprep.subr.mxu0 0.0
  %12195 = vmatpush2.msra.mxu0 0.0
  %12196 = vmatprep.subr.mxu0 0.0
  %12197 = vmatpush2.msra.mxu0 0.0
  %12198 = vmatprep.subr.mxu0 0.0
  %12199 = vmatpush2.msra.mxu0 0.0
  %12200 = vmatprep.subr.mxu0 0.0
  %12201 = vmatpush2.msra.mxu0 0.0
  %12202 = vmatprep.subr.mxu0 0.0
  %12203 = vmatpush2.msra.mxu0 0.0
  %12204 = vmatprep.subr.mxu0 0.0
  %12205 = vmatpush2.msra.mxu0 0.0
  %12206 = vmatprep.subr.mxu0 0.0
  %12207 = vmatpush2.msra.mxu0 0.0
  %12208 = vmatprep.subr.mxu0 0.0
  %12209 = vmatpush2.msra.mxu0 0.0
  %12210 = vmatprep.subr.mxu0 0.0
  %12211 = vmatpush2.msra.mxu0 0.0
  %12212 = vmatprep.subr.mxu0 0.0
  %12213 = vmatpush2.msra.mxu0 0.0
  %12214 = vmatprep.subr.mxu0 0.0
  %12215 = vmatpush2.msra.mxu0 0.0
  %12216 = vmatprep.subr.mxu0 0.0
  %12217 = vmatpush2.msra.mxu0 0.0
  %12218 = vmatprep.subr.mxu0 0.0
  %12219 = vmatpush2.msra.mxu0 0.0
  %12220 = vmatprep.subr.mxu0 0.0
  %12221 = vmatpush2.msra.mxu0 0.0
  %12222 = vmatprep.subr.mxu0 0.0
  %12223 = vmatpush2.msra.mxu0 0.0
  %12224 = vmatprep.mubr.f32.mxu0 0.0
  %12225 = vmatmul.mubr.f32.gmra.mxu0 %v11782
  %v12226 = vpop.f32.mrf.mxu0
  %v12227 = vadd.f32 0.0, %v12226
  %v12228 = vpop.f32.mrf.mxu0
  %12229 = vdwg.mxu0
  %v12230 = vadd.f32 %v12142, %v12227
  %s12231 = scalar_lea.vmem %s7, 640
  %v12232 = vld [vmem:[%s12231] sm:$0xff]
  %v12233 = vld [vmem:[%s12231 + $0x8] sm:$0xff]
  %v12234 = vld [vmem:[%s12231 + $0x10] sm:$0xff]
  %v12235 = vld [vmem:[%s12231 + $0x18] sm:$0xff]
  %v12236 = vld [vmem:[%s12231 + $0x20] sm:$0xff]
  %v12237 = vld [vmem:[%s12231 + $0x28] sm:$0xff]
  %v12238 = vld [vmem:[%s12231 + $0x30] sm:$0xff]
  %v12239 = vld [vmem:[%s12231 + $0x38] sm:$0xff]
  %v12240 = vld [vmem:[%s12231 + $0x40] sm:$0xff]
  %v12241 = vld [vmem:[%s12231 + $0x48] sm:$0xff]
  %v12242 = vld [vmem:[%s12231 + $0x50] sm:$0xff]
  %v12243 = vld [vmem:[%s12231 + $0x58] sm:$0xff]
  %v12244 = vld [vmem:[%s12231 + $0x60] sm:$0xff]
  %v12245 = vld [vmem:[%s12231 + $0x68] sm:$0xff]
  %v12246 = vld [vmem:[%s12231 + $0x70] sm:$0xff]
  %v12247 = vld [vmem:[%s12231 + $0x78] sm:$0xff]
  %12248 = vmatprep.subr.mxu0 0.0
  %12249 = vmatpush1.msra.mxu0 %v12247
  %12250 = vmatprep.subr.mxu0 0.0
  %12251 = vmatpush1.msra.mxu0 %v12246
  %12252 = vmatprep.subr.mxu0 0.0
  %12253 = vmatpush1.msra.mxu0 %v12245
  %12254 = vmatprep.subr.mxu0 0.0
  %12255 = vmatpush1.msra.mxu0 %v12244
  %12256 = vmatprep.subr.mxu0 0.0
  %12257 = vmatpush1.msra.mxu0 %v12243
  %12258 = vmatprep.subr.mxu0 0.0
  %12259 = vmatpush1.msra.mxu0 %v12242
  %12260 = vmatprep.subr.mxu0 0.0
  %12261 = vmatpush1.msra.mxu0 %v12241
  %12262 = vmatprep.subr.mxu0 0.0
  %12263 = vmatpush1.msra.mxu0 %v12240
  %12264 = vmatprep.subr.mxu0 0.0
  %12265 = vmatpush1.msra.mxu0 %v12239
  %12266 = vmatprep.subr.mxu0 0.0
  %12267 = vmatpush1.msra.mxu0 %v12238
  %12268 = vmatprep.subr.mxu0 0.0
  %12269 = vmatpush1.msra.mxu0 %v12237
  %12270 = vmatprep.subr.mxu0 0.0
  %12271 = vmatpush1.msra.mxu0 %v12236
  %12272 = vmatprep.subr.mxu0 0.0
  %12273 = vmatpush1.msra.mxu0 %v12235
  %12274 = vmatprep.subr.mxu0 0.0
  %12275 = vmatpush1.msra.mxu0 %v12234
  %12276 = vmatprep.subr.mxu0 0.0
  %12277 = vmatpush1.msra.mxu0 %v12233
  %12278 = vmatprep.subr.mxu0 0.0
  %12279 = vmatpush1.msra.mxu0 %v12232
  %12280 = vmatprep.subr.mxu0 0.0
  %12281 = vmatpush2.msra.mxu0 0.0
  %12282 = vmatprep.subr.mxu0 0.0
  %12283 = vmatpush2.msra.mxu0 0.0
  %12284 = vmatprep.subr.mxu0 0.0
  %12285 = vmatpush2.msra.mxu0 0.0
  %12286 = vmatprep.subr.mxu0 0.0
  %12287 = vmatpush2.msra.mxu0 0.0
  %12288 = vmatprep.subr.mxu0 0.0
  %12289 = vmatpush2.msra.mxu0 0.0
  %12290 = vmatprep.subr.mxu0 0.0
  %12291 = vmatpush2.msra.mxu0 0.0
  %12292 = vmatprep.subr.mxu0 0.0
  %12293 = vmatpush2.msra.mxu0 0.0
  %12294 = vmatprep.subr.mxu0 0.0
  %12295 = vmatpush2.msra.mxu0 0.0
  %12296 = vmatprep.subr.mxu0 0.0
  %12297 = vmatpush2.msra.mxu0 0.0
  %12298 = vmatprep.subr.mxu0 0.0
  %12299 = vmatpush2.msra.mxu0 0.0
  %12300 = vmatprep.subr.mxu0 0.0
  %12301 = vmatpush2.msra.mxu0 0.0
  %12302 = vmatprep.subr.mxu0 0.0
  %12303 = vmatpush2.msra.mxu0 0.0
  %12304 = vmatprep.subr.mxu0 0.0
  %12305 = vmatpush2.msra.mxu0 0.0
  %12306 = vmatprep.subr.mxu0 0.0
  %12307 = vmatpush2.msra.mxu0 0.0
  %12308 = vmatprep.subr.mxu0 0.0
  %12309 = vmatpush2.msra.mxu0 0.0
  %12310 = vmatprep.subr.mxu0 0.0
  %12311 = vmatpush2.msra.mxu0 0.0
  %12312 = vmatprep.mubr.f32.mxu0 0.0
  %12313 = vmatmul.mubr.f32.gmra.mxu0 %v11783
  %v12314 = vpop.f32.mrf.mxu0
  %v12315 = vadd.f32 0.0, %v12314
  %v12316 = vpop.f32.mrf.mxu0
  %12317 = vdwg.mxu0
  %v12318 = vadd.f32 %v12230, %v12315
  %s12319 = scalar_lea.vmem %s7, 768
  %v12320 = vld [vmem:[%s12319] sm:$0xff]
  %v12321 = vld [vmem:[%s12319 + $0x8] sm:$0xff]
  %v12322 = vld [vmem:[%s12319 + $0x10] sm:$0xff]
  %v12323 = vld [vmem:[%s12319 + $0x18] sm:$0xff]
  %v12324 = vld [vmem:[%s12319 + $0x20] sm:$0xff]
  %v12325 = vld [vmem:[%s12319 + $0x28] sm:$0xff]
  %v12326 = vld [vmem:[%s12319 + $0x30] sm:$0xff]
  %v12327 = vld [vmem:[%s12319 + $0x38] sm:$0xff]
  %v12328 = vld [vmem:[%s12319 + $0x40] sm:$0xff]
  %v12329 = vld [vmem:[%s12319 + $0x48] sm:$0xff]
  %v12330 = vld [vmem:[%s12319 + $0x50] sm:$0xff]
  %v12331 = vld [vmem:[%s12319 + $0x58] sm:$0xff]
  %v12332 = vld [vmem:[%s12319 + $0x60] sm:$0xff]
  %v12333 = vld [vmem:[%s12319 + $0x68] sm:$0xff]
  %v12334 = vld [vmem:[%s12319 + $0x70] sm:$0xff]
  %v12335 = vld [vmem:[%s12319 + $0x78] sm:$0xff]
  %12336 = vmatprep.subr.mxu0 0.0
  %12337 = vmatpush1.msra.mxu0 %v12335
  %12338 = vmatprep.subr.mxu0 0.0
  %12339 = vmatpush1.msra.mxu0 %v12334
  %12340 = vmatprep.subr.mxu0 0.0
  %12341 = vmatpush1.msra.mxu0 %v12333
  %12342 = vmatprep.subr.mxu0 0.0
  %12343 = vmatpush1.msra.mxu0 %v12332
  %12344 = vmatprep.subr.mxu0 0.0
  %12345 = vmatpush1.msra.mxu0 %v12331
  %12346 = vmatprep.subr.mxu0 0.0
  %12347 = vmatpush1.msra.mxu0 %v12330
  %12348 = vmatprep.subr.mxu0 0.0
  %12349 = vmatpush1.msra.mxu0 %v12329
  %12350 = vmatprep.subr.mxu0 0.0
  %12351 = vmatpush1.msra.mxu0 %v12328
  %12352 = vmatprep.subr.mxu0 0.0
  %12353 = vmatpush1.msra.mxu0 %v12327
  %12354 = vmatprep.subr.mxu0 0.0
  %12355 = vmatpush1.msra.mxu0 %v12326
  %12356 = vmatprep.subr.mxu0 0.0
  %12357 = vmatpush1.msra.mxu0 %v12325
  %12358 = vmatprep.subr.mxu0 0.0
  %12359 = vmatpush1.msra.mxu0 %v12324
  %12360 = vmatprep.subr.mxu0 0.0
  %12361 = vmatpush1.msra.mxu0 %v12323
  %12362 = vmatprep.subr.mxu0 0.0
  %12363 = vmatpush1.msra.mxu0 %v12322
  %12364 = vmatprep.subr.mxu0 0.0
  %12365 = vmatpush1.msra.mxu0 %v12321
  %12366 = vmatprep.subr.mxu0 0.0
  %12367 = vmatpush1.msra.mxu0 %v12320
  %12368 = vmatprep.subr.mxu0 0.0
  %12369 = vmatpush2.msra.mxu0 0.0
  %12370 = vmatprep.subr.mxu0 0.0
  %12371 = vmatpush2.msra.mxu0 0.0
  %12372 = vmatprep.subr.mxu0 0.0
  %12373 = vmatpush2.msra.mxu0 0.0
  %12374 = vmatprep.subr.mxu0 0.0
  %12375 = vmatpush2.msra.mxu0 0.0
  %12376 = vmatprep.subr.mxu0 0.0
  %12377 = vmatpush2.msra.mxu0 0.0
  %12378 = vmatprep.subr.mxu0 0.0
  %12379 = vmatpush2.msra.mxu0 0.0
  %12380 = vmatprep.subr.mxu0 0.0
  %12381 = vmatpush2.msra.mxu0 0.0
  %12382 = vmatprep.subr.mxu0 0.0
  %12383 = vmatpush2.msra.mxu0 0.0
  %12384 = vmatprep.subr.mxu0 0.0
  %12385 = vmatpush2.msra.mxu0 0.0
  %12386 = vmatprep.subr.mxu0 0.0
  %12387 = vmatpush2.msra.mxu0 0.0
  %12388 = vmatprep.subr.mxu0 0.0
  %12389 = vmatpush2.msra.mxu0 0.0
  %12390 = vmatprep.subr.mxu0 0.0
  %12391 = vmatpush2.msra.mxu0 0.0
  %12392 = vmatprep.subr.mxu0 0.0
  %12393 = vmatpush2.msra.mxu0 0.0
  %12394 = vmatprep.subr.mxu0 0.0
  %12395 = vmatpush2.msra.mxu0 0.0
  %12396 = vmatprep.subr.mxu0 0.0
  %12397 = vmatpush2.msra.mxu0 0.0
  %12398 = vmatprep.subr.mxu0 0.0
  %12399 = vmatpush2.msra.mxu0 0.0
  %12400 = vmatprep.mubr.f32.mxu0 0.0
  %12401 = vmatmul.mubr.f32.gmra.mxu0 %v11784
  %v12402 = vpop.f32.mrf.mxu0
  %v12403 = vadd.f32 0.0, %v12402
  %v12404 = vpop.f32.mrf.mxu0
  %12405 = vdwg.mxu0
  %v12406 = vadd.f32 %v12318, %v12403
  %s12407 = scalar_lea.vmem %s7, 896
  %v12408 = vld [vmem:[%s12407] sm:$0xff]
  %v12409 = vld [vmem:[%s12407 + $0x8] sm:$0xff]
  %v12410 = vld [vmem:[%s12407 + $0x10] sm:$0xff]
  %v12411 = vld [vmem:[%s12407 + $0x18] sm:$0xff]
  %v12412 = vld [vmem:[%s12407 + $0x20] sm:$0xff]
  %v12413 = vld [vmem:[%s12407 + $0x28] sm:$0xff]
  %v12414 = vld [vmem:[%s12407 + $0x30] sm:$0xff]
  %v12415 = vld [vmem:[%s12407 + $0x38] sm:$0xff]
  %v12416 = vld [vmem:[%s12407 + $0x40] sm:$0xff]
  %v12417 = vld [vmem:[%s12407 + $0x48] sm:$0xff]
  %v12418 = vld [vmem:[%s12407 + $0x50] sm:$0xff]
  %v12419 = vld [vmem:[%s12407 + $0x58] sm:$0xff]
  %v12420 = vld [vmem:[%s12407 + $0x60] sm:$0xff]
  %v12421 = vld [vmem:[%s12407 + $0x68] sm:$0xff]
  %v12422 = vld [vmem:[%s12407 + $0x70] sm:$0xff]
  %v12423 = vld [vmem:[%s12407 + $0x78] sm:$0xff]
  %12424 = vmatprep.subr.mxu0 0.0
  %12425 = vmatpush1.msra.mxu0 %v12423
  %12426 = vmatprep.subr.mxu0 0.0
  %12427 = vmatpush1.msra.mxu0 %v12422
  %12428 = vmatprep.subr.mxu0 0.0
  %12429 = vmatpush1.msra.mxu0 %v12421
  %12430 = vmatprep.subr.mxu0 0.0
  %12431 = vmatpush1.msra.mxu0 %v12420
  %12432 = vmatprep.subr.mxu0 0.0
  %12433 = vmatpush1.msra.mxu0 %v12419
  %12434 = vmatprep.subr.mxu0 0.0
  %12435 = vmatpush1.msra.mxu0 %v12418
  %12436 = vmatprep.subr.mxu0 0.0
  %12437 = vmatpush1.msra.mxu0 %v12417
  %12438 = vmatprep.subr.mxu0 0.0
  %12439 = vmatpush1.msra.mxu0 %v12416
  %12440 = vmatprep.subr.mxu0 0.0
  %12441 = vmatpush1.msra.mxu0 %v12415
  %12442 = vmatprep.subr.mxu0 0.0
  %12443 = vmatpush1.msra.mxu0 %v12414
  %12444 = vmatprep.subr.mxu0 0.0
  %12445 = vmatpush1.msra.mxu0 %v12413
  %12446 = vmatprep.subr.mxu0 0.0
  %12447 = vmatpush1.msra.mxu0 %v12412
  %12448 = vmatprep.subr.mxu0 0.0
  %12449 = vmatpush1.msra.mxu0 %v12411
  %12450 = vmatprep.subr.mxu0 0.0
  %12451 = vmatpush1.msra.mxu0 %v12410
  %12452 = vmatprep.subr.mxu0 0.0
  %12453 = vmatpush1.msra.mxu0 %v12409
  %12454 = vmatprep.subr.mxu0 0.0
  %12455 = vmatpush1.msra.mxu0 %v12408
  %12456 = vmatprep.subr.mxu0 0.0
  %12457 = vmatpush2.msra.mxu0 0.0
  %12458 = vmatprep.subr.mxu0 0.0
  %12459 = vmatpush2.msra.mxu0 0.0
  %12460 = vmatprep.subr.mxu0 0.0
  %12461 = vmatpush2.msra.mxu0 0.0
  %12462 = vmatprep.subr.mxu0 0.0
  %12463 = vmatpush2.msra.mxu0 0.0
  %12464 = vmatprep.subr.mxu0 0.0
  %12465 = vmatpush2.msra.mxu0 0.0
  %12466 = vmatprep.subr.mxu0 0.0
  %12467 = vmatpush2.msra.mxu0 0.0
  %12468 = vmatprep.subr.mxu0 0.0
  %12469 = vmatpush2.msra.mxu0 0.0
  %12470 = vmatprep.subr.mxu0 0.0
  %12471 = vmatpush2.msra.mxu0 0.0
  %12472 = vmatprep.subr.mxu0 0.0
  %12473 = vmatpush2.msra.mxu0 0.0
  %12474 = vmatprep.subr.mxu0 0.0
  %12475 = vmatpush2.msra.mxu0 0.0
  %12476 = vmatprep.subr.mxu0 0.0
  %12477 = vmatpush2.msra.mxu0 0.0
  %12478 = vmatprep.subr.mxu0 0.0
  %12479 = vmatpush2.msra.mxu0 0.0
  %12480 = vmatprep.subr.mxu0 0.0
  %12481 = vmatpush2.msra.mxu0 0.0
  %12482 = vmatprep.subr.mxu0 0.0
  %12483 = vmatpush2.msra.mxu0 0.0
  %12484 = vmatprep.subr.mxu0 0.0
  %12485 = vmatpush2.msra.mxu0 0.0
  %12486 = vmatprep.subr.mxu0 0.0
  %12487 = vmatpush2.msra.mxu0 0.0
  %12488 = vmatprep.mubr.f32.mxu0 0.0
  %12489 = vmatmul.mubr.f32.gmra.mxu0 %v11785
  %v12490 = vpop.f32.mrf.mxu0
  %v12491 = vadd.f32 0.0, %v12490
  %v12492 = vpop.f32.mrf.mxu0
  %12493 = vdwg.mxu0
  %v12494 = vadd.f32 %v12406, %v12491
  %s12495 = scalar_lea.vmem %s7, 1024
  %v12496 = vld [vmem:[%s12495] sm:$0xff]
  %v12497 = vld [vmem:[%s12495 + $0x8] sm:$0xff]
  %v12498 = vld [vmem:[%s12495 + $0x10] sm:$0xff]
  %v12499 = vld [vmem:[%s12495 + $0x18] sm:$0xff]
  %v12500 = vld [vmem:[%s12495 + $0x20] sm:$0xff]
  %v12501 = vld [vmem:[%s12495 + $0x28] sm:$0xff]
  %v12502 = vld [vmem:[%s12495 + $0x30] sm:$0xff]
  %v12503 = vld [vmem:[%s12495 + $0x38] sm:$0xff]
  %v12504 = vld [vmem:[%s12495 + $0x40] sm:$0xff]
  %v12505 = vld [vmem:[%s12495 + $0x48] sm:$0xff]
  %v12506 = vld [vmem:[%s12495 + $0x50] sm:$0xff]
  %v12507 = vld [vmem:[%s12495 + $0x58] sm:$0xff]
  %v12508 = vld [vmem:[%s12495 + $0x60] sm:$0xff]
  %v12509 = vld [vmem:[%s12495 + $0x68] sm:$0xff]
  %v12510 = vld [vmem:[%s12495 + $0x70] sm:$0xff]
  %v12511 = vld [vmem:[%s12495 + $0x78] sm:$0xff]
  %12512 = vmatprep.subr.mxu0 0.0
  %12513 = vmatpush1.msra.mxu0 %v12511
  %12514 = vmatprep.subr.mxu0 0.0
  %12515 = vmatpush1.msra.mxu0 %v12510
  %12516 = vmatprep.subr.mxu0 0.0
  %12517 = vmatpush1.msra.mxu0 %v12509
  %12518 = vmatprep.subr.mxu0 0.0
  %12519 = vmatpush1.msra.mxu0 %v12508
  %12520 = vmatprep.subr.mxu0 0.0
  %12521 = vmatpush1.msra.mxu0 %v12507
  %12522 = vmatprep.subr.mxu0 0.0
  %12523 = vmatpush1.msra.mxu0 %v12506
  %12524 = vmatprep.subr.mxu0 0.0
  %12525 = vmatpush1.msra.mxu0 %v12505
  %12526 = vmatprep.subr.mxu0 0.0
  %12527 = vmatpush1.msra.mxu0 %v12504
  %12528 = vmatprep.subr.mxu0 0.0
  %12529 = vmatpush1.msra.mxu0 %v12503
  %12530 = vmatprep.subr.mxu0 0.0
  %12531 = vmatpush1.msra.mxu0 %v12502
  %12532 = vmatprep.subr.mxu0 0.0
  %12533 = vmatpush1.msra.mxu0 %v12501
  %12534 = vmatprep.subr.mxu0 0.0
  %12535 = vmatpush1.msra.mxu0 %v12500
  %12536 = vmatprep.subr.mxu0 0.0
  %12537 = vmatpush1.msra.mxu0 %v12499
  %12538 = vmatprep.subr.mxu0 0.0
  %12539 = vmatpush1.msra.mxu0 %v12498
  %12540 = vmatprep.subr.mxu0 0.0
  %12541 = vmatpush1.msra.mxu0 %v12497
  %12542 = vmatprep.subr.mxu0 0.0
  %12543 = vmatpush1.msra.mxu0 %v12496
  %12544 = vmatprep.subr.mxu0 0.0
  %12545 = vmatpush2.msra.mxu0 0.0
  %12546 = vmatprep.subr.mxu0 0.0
  %12547 = vmatpush2.msra.mxu0 0.0
  %12548 = vmatprep.subr.mxu0 0.0
  %12549 = vmatpush2.msra.mxu0 0.0
  %12550 = vmatprep.subr.mxu0 0.0
  %12551 = vmatpush2.msra.mxu0 0.0
  %12552 = vmatprep.subr.mxu0 0.0
  %12553 = vmatpush2.msra.mxu0 0.0
  %12554 = vmatprep.subr.mxu0 0.0
  %12555 = vmatpush2.msra.mxu0 0.0
  %12556 = vmatprep.subr.mxu0 0.0
  %12557 = vmatpush2.msra.mxu0 0.0
  %12558 = vmatprep.subr.mxu0 0.0
  %12559 = vmatpush2.msra.mxu0 0.0
  %12560 = vmatprep.subr.mxu0 0.0
  %12561 = vmatpush2.msra.mxu0 0.0
  %12562 = vmatprep.subr.mxu0 0.0
  %12563 = vmatpush2.msra.mxu0 0.0
  %12564 = vmatprep.subr.mxu0 0.0
  %12565 = vmatpush2.msra.mxu0 0.0
  %12566 = vmatprep.subr.mxu0 0.0
  %12567 = vmatpush2.msra.mxu0 0.0
  %12568 = vmatprep.subr.mxu0 0.0
  %12569 = vmatpush2.msra.mxu0 0.0
  %12570 = vmatprep.subr.mxu0 0.0
  %12571 = vmatpush2.msra.mxu0 0.0
  %12572 = vmatprep.subr.mxu0 0.0
  %12573 = vmatpush2.msra.mxu0 0.0
  %12574 = vmatprep.subr.mxu0 0.0
  %12575 = vmatpush2.msra.mxu0 0.0
  %12576 = vmatprep.mubr.f32.mxu0 0.0
  %12577 = vmatmul.mubr.f32.gmra.mxu0 %v11786
  %v12578 = vpop.f32.mrf.mxu0
  %v12579 = vadd.f32 0.0, %v12578
  %v12580 = vpop.f32.mrf.mxu0
  %12581 = vdwg.mxu0
  %v12582 = vadd.f32 %v12494, %v12579
  %s12583 = scalar_lea.vmem %s7, 1152
  %v12584 = vld [vmem:[%s12583] sm:$0xff]
  %v12585 = vld [vmem:[%s12583 + $0x8] sm:$0xff]
  %v12586 = vld [vmem:[%s12583 + $0x10] sm:$0xff]
  %v12587 = vld [vmem:[%s12583 + $0x18] sm:$0xff]
  %v12588 = vld [vmem:[%s12583 + $0x20] sm:$0xff]
  %v12589 = vld [vmem:[%s12583 + $0x28] sm:$0xff]
  %v12590 = vld [vmem:[%s12583 + $0x30] sm:$0xff]
  %v12591 = vld [vmem:[%s12583 + $0x38] sm:$0xff]
  %v12592 = vld [vmem:[%s12583 + $0x40] sm:$0xff]
  %v12593 = vld [vmem:[%s12583 + $0x48] sm:$0xff]
  %v12594 = vld [vmem:[%s12583 + $0x50] sm:$0xff]
  %v12595 = vld [vmem:[%s12583 + $0x58] sm:$0xff]
  %v12596 = vld [vmem:[%s12583 + $0x60] sm:$0xff]
  %v12597 = vld [vmem:[%s12583 + $0x68] sm:$0xff]
  %v12598 = vld [vmem:[%s12583 + $0x70] sm:$0xff]
  %v12599 = vld [vmem:[%s12583 + $0x78] sm:$0xff]
  %12600 = vmatprep.subr.mxu0 0.0
  %12601 = vmatpush1.msra.mxu0 %v12599
  %12602 = vmatprep.subr.mxu0 0.0
  %12603 = vmatpush1.msra.mxu0 %v12598
  %12604 = vmatprep.subr.mxu0 0.0
  %12605 = vmatpush1.msra.mxu0 %v12597
  %12606 = vmatprep.subr.mxu0 0.0
  %12607 = vmatpush1.msra.mxu0 %v12596
  %12608 = vmatprep.subr.mxu0 0.0
  %12609 = vmatpush1.msra.mxu0 %v12595
  %12610 = vmatprep.subr.mxu0 0.0
  %12611 = vmatpush1.msra.mxu0 %v12594
  %12612 = vmatprep.subr.mxu0 0.0
  %12613 = vmatpush1.msra.mxu0 %v12593
  %12614 = vmatprep.subr.mxu0 0.0
  %12615 = vmatpush1.msra.mxu0 %v12592
  %12616 = vmatprep.subr.mxu0 0.0
  %12617 = vmatpush1.msra.mxu0 %v12591
  %12618 = vmatprep.subr.mxu0 0.0
  %12619 = vmatpush1.msra.mxu0 %v12590
  %12620 = vmatprep.subr.mxu0 0.0
  %12621 = vmatpush1.msra.mxu0 %v12589
  %12622 = vmatprep.subr.mxu0 0.0
  %12623 = vmatpush1.msra.mxu0 %v12588
  %12624 = vmatprep.subr.mxu0 0.0
  %12625 = vmatpush1.msra.mxu0 %v12587
  %12626 = vmatprep.subr.mxu0 0.0
  %12627 = vmatpush1.msra.mxu0 %v12586
  %12628 = vmatprep.subr.mxu0 0.0
  %12629 = vmatpush1.msra.mxu0 %v12585
  %12630 = vmatprep.subr.mxu0 0.0
  %12631 = vmatpush1.msra.mxu0 %v12584
  %12632 = vmatprep.subr.mxu0 0.0
  %12633 = vmatpush2.msra.mxu0 0.0
  %12634 = vmatprep.subr.mxu0 0.0
  %12635 = vmatpush2.msra.mxu0 0.0
  %12636 = vmatprep.subr.mxu0 0.0
  %12637 = vmatpush2.msra.mxu0 0.0
  %12638 = vmatprep.subr.mxu0 0.0
  %12639 = vmatpush2.msra.mxu0 0.0
  %12640 = vmatprep.subr.mxu0 0.0
  %12641 = vmatpush2.msra.mxu0 0.0
  %12642 = vmatprep.subr.mxu0 0.0
  %12643 = vmatpush2.msra.mxu0 0.0
  %12644 = vmatprep.subr.mxu0 0.0
  %12645 = vmatpush2.msra.mxu0 0.0
  %12646 = vmatprep.subr.mxu0 0.0
  %12647 = vmatpush2.msra.mxu0 0.0
  %12648 = vmatprep.subr.mxu0 0.0
  %12649 = vmatpush2.msra.mxu0 0.0
  %12650 = vmatprep.subr.mxu0 0.0
  %12651 = vmatpush2.msra.mxu0 0.0
  %12652 = vmatprep.subr.mxu0 0.0
  %12653 = vmatpush2.msra.mxu0 0.0
  %12654 = vmatprep.subr.mxu0 0.0
  %12655 = vmatpush2.msra.mxu0 0.0
  %12656 = vmatprep.subr.mxu0 0.0
  %12657 = vmatpush2.msra.mxu0 0.0
  %12658 = vmatprep.subr.mxu0 0.0
  %12659 = vmatpush2.msra.mxu0 0.0
  %12660 = vmatprep.subr.mxu0 0.0
  %12661 = vmatpush2.msra.mxu0 0.0
  %12662 = vmatprep.subr.mxu0 0.0
  %12663 = vmatpush2.msra.mxu0 0.0
  %12664 = vmatprep.mubr.f32.mxu0 0.0
  %12665 = vmatmul.mubr.f32.gmra.mxu0 %v11787
  %v12666 = vpop.f32.mrf.mxu0
  %v12667 = vadd.f32 0.0, %v12666
  %v12668 = vpop.f32.mrf.mxu0
  %12669 = vdwg.mxu0
  %v12670 = vadd.f32 %v12582, %v12667
  %s12671 = scalar_lea.vmem %s7, 1280
  %v12672 = vld [vmem:[%s12671] sm:$0xff]
  %v12673 = vld [vmem:[%s12671 + $0x8] sm:$0xff]
  %v12674 = vld [vmem:[%s12671 + $0x10] sm:$0xff]
  %v12675 = vld [vmem:[%s12671 + $0x18] sm:$0xff]
  %v12676 = vld [vmem:[%s12671 + $0x20] sm:$0xff]
  %v12677 = vld [vmem:[%s12671 + $0x28] sm:$0xff]
  %v12678 = vld [vmem:[%s12671 + $0x30] sm:$0xff]
  %v12679 = vld [vmem:[%s12671 + $0x38] sm:$0xff]
  %v12680 = vld [vmem:[%s12671 + $0x40] sm:$0xff]
  %v12681 = vld [vmem:[%s12671 + $0x48] sm:$0xff]
  %v12682 = vld [vmem:[%s12671 + $0x50] sm:$0xff]
  %v12683 = vld [vmem:[%s12671 + $0x58] sm:$0xff]
  %v12684 = vld [vmem:[%s12671 + $0x60] sm:$0xff]
  %v12685 = vld [vmem:[%s12671 + $0x68] sm:$0xff]
  %v12686 = vld [vmem:[%s12671 + $0x70] sm:$0xff]
  %v12687 = vld [vmem:[%s12671 + $0x78] sm:$0xff]
  %12688 = vmatprep.subr.mxu0 0.0
  %12689 = vmatpush1.msra.mxu0 %v12687
  %12690 = vmatprep.subr.mxu0 0.0
  %12691 = vmatpush1.msra.mxu0 %v12686
  %12692 = vmatprep.subr.mxu0 0.0
  %12693 = vmatpush1.msra.mxu0 %v12685
  %12694 = vmatprep.subr.mxu0 0.0
  %12695 = vmatpush1.msra.mxu0 %v12684
  %12696 = vmatprep.subr.mxu0 0.0
  %12697 = vmatpush1.msra.mxu0 %v12683
  %12698 = vmatprep.subr.mxu0 0.0
  %12699 = vmatpush1.msra.mxu0 %v12682
  %12700 = vmatprep.subr.mxu0 0.0
  %12701 = vmatpush1.msra.mxu0 %v12681
  %12702 = vmatprep.subr.mxu0 0.0
  %12703 = vmatpush1.msra.mxu0 %v12680
  %12704 = vmatprep.subr.mxu0 0.0
  %12705 = vmatpush1.msra.mxu0 %v12679
  %12706 = vmatprep.subr.mxu0 0.0
  %12707 = vmatpush1.msra.mxu0 %v12678
  %12708 = vmatprep.subr.mxu0 0.0
  %12709 = vmatpush1.msra.mxu0 %v12677
  %12710 = vmatprep.subr.mxu0 0.0
  %12711 = vmatpush1.msra.mxu0 %v12676
  %12712 = vmatprep.subr.mxu0 0.0
  %12713 = vmatpush1.msra.mxu0 %v12675
  %12714 = vmatprep.subr.mxu0 0.0
  %12715 = vmatpush1.msra.mxu0 %v12674
  %12716 = vmatprep.subr.mxu0 0.0
  %12717 = vmatpush1.msra.mxu0 %v12673
  %12718 = vmatprep.subr.mxu0 0.0
  %12719 = vmatpush1.msra.mxu0 %v12672
  %12720 = vmatprep.subr.mxu0 0.0
  %12721 = vmatpush2.msra.mxu0 0.0
  %12722 = vmatprep.subr.mxu0 0.0
  %12723 = vmatpush2.msra.mxu0 0.0
  %12724 = vmatprep.subr.mxu0 0.0
  %12725 = vmatpush2.msra.mxu0 0.0
  %12726 = vmatprep.subr.mxu0 0.0
  %12727 = vmatpush2.msra.mxu0 0.0
  %12728 = vmatprep.subr.mxu0 0.0
  %12729 = vmatpush2.msra.mxu0 0.0
  %12730 = vmatprep.subr.mxu0 0.0
  %12731 = vmatpush2.msra.mxu0 0.0
  %12732 = vmatprep.subr.mxu0 0.0
  %12733 = vmatpush2.msra.mxu0 0.0
  %12734 = vmatprep.subr.mxu0 0.0
  %12735 = vmatpush2.msra.mxu0 0.0
  %12736 = vmatprep.subr.mxu0 0.0
  %12737 = vmatpush2.msra.mxu0 0.0
  %12738 = vmatprep.subr.mxu0 0.0
  %12739 = vmatpush2.msra.mxu0 0.0
  %12740 = vmatprep.subr.mxu0 0.0
  %12741 = vmatpush2.msra.mxu0 0.0
  %12742 = vmatprep.subr.mxu0 0.0
  %12743 = vmatpush2.msra.mxu0 0.0
  %12744 = vmatprep.subr.mxu0 0.0
  %12745 = vmatpush2.msra.mxu0 0.0
  %12746 = vmatprep.subr.mxu0 0.0
  %12747 = vmatpush2.msra.mxu0 0.0
  %12748 = vmatprep.subr.mxu0 0.0
  %12749 = vmatpush2.msra.mxu0 0.0
  %12750 = vmatprep.subr.mxu0 0.0
  %12751 = vmatpush2.msra.mxu0 0.0
  %12752 = vmatprep.mubr.f32.mxu0 0.0
  %12753 = vmatmul.mubr.f32.gmra.mxu0 %v11788
  %v12754 = vpop.f32.mrf.mxu0
  %v12755 = vadd.f32 0.0, %v12754
  %v12756 = vpop.f32.mrf.mxu0
  %12757 = vdwg.mxu0
  %v12758 = vadd.f32 %v12670, %v12755
  %s12759 = scalar_lea.vmem %s7, 1408
  %v12760 = vld [vmem:[%s12759] sm:$0xff]
  %v12761 = vld [vmem:[%s12759 + $0x8] sm:$0xff]
  %v12762 = vld [vmem:[%s12759 + $0x10] sm:$0xff]
  %v12763 = vld [vmem:[%s12759 + $0x18] sm:$0xff]
  %v12764 = vld [vmem:[%s12759 + $0x20] sm:$0xff]
  %v12765 = vld [vmem:[%s12759 + $0x28] sm:$0xff]
  %v12766 = vld [vmem:[%s12759 + $0x30] sm:$0xff]
  %v12767 = vld [vmem:[%s12759 + $0x38] sm:$0xff]
  %v12768 = vld [vmem:[%s12759 + $0x40] sm:$0xff]
  %v12769 = vld [vmem:[%s12759 + $0x48] sm:$0xff]
  %v12770 = vld [vmem:[%s12759 + $0x50] sm:$0xff]
  %v12771 = vld [vmem:[%s12759 + $0x58] sm:$0xff]
  %v12772 = vld [vmem:[%s12759 + $0x60] sm:$0xff]
  %v12773 = vld [vmem:[%s12759 + $0x68] sm:$0xff]
  %v12774 = vld [vmem:[%s12759 + $0x70] sm:$0xff]
  %v12775 = vld [vmem:[%s12759 + $0x78] sm:$0xff]
  %12776 = vmatprep.subr.mxu0 0.0
  %12777 = vmatpush1.msra.mxu0 %v12775
  %12778 = vmatprep.subr.mxu0 0.0
  %12779 = vmatpush1.msra.mxu0 %v12774
  %12780 = vmatprep.subr.mxu0 0.0
  %12781 = vmatpush1.msra.mxu0 %v12773
  %12782 = vmatprep.subr.mxu0 0.0
  %12783 = vmatpush1.msra.mxu0 %v12772
  %12784 = vmatprep.subr.mxu0 0.0
  %12785 = vmatpush1.msra.mxu0 %v12771
  %12786 = vmatprep.subr.mxu0 0.0
  %12787 = vmatpush1.msra.mxu0 %v12770
  %12788 = vmatprep.subr.mxu0 0.0
  %12789 = vmatpush1.msra.mxu0 %v12769
  %12790 = vmatprep.subr.mxu0 0.0
  %12791 = vmatpush1.msra.mxu0 %v12768
  %12792 = vmatprep.subr.mxu0 0.0
  %12793 = vmatpush1.msra.mxu0 %v12767
  %12794 = vmatprep.subr.mxu0 0.0
  %12795 = vmatpush1.msra.mxu0 %v12766
  %12796 = vmatprep.subr.mxu0 0.0
  %12797 = vmatpush1.msra.mxu0 %v12765
  %12798 = vmatprep.subr.mxu0 0.0
  %12799 = vmatpush1.msra.mxu0 %v12764
  %12800 = vmatprep.subr.mxu0 0.0
  %12801 = vmatpush1.msra.mxu0 %v12763
  %12802 = vmatprep.subr.mxu0 0.0
  %12803 = vmatpush1.msra.mxu0 %v12762
  %12804 = vmatprep.subr.mxu0 0.0
  %12805 = vmatpush1.msra.mxu0 %v12761
  %12806 = vmatprep.subr.mxu0 0.0
  %12807 = vmatpush1.msra.mxu0 %v12760
  %12808 = vmatprep.subr.mxu0 0.0
  %12809 = vmatpush2.msra.mxu0 0.0
  %12810 = vmatprep.subr.mxu0 0.0
  %12811 = vmatpush2.msra.mxu0 0.0
  %12812 = vmatprep.subr.mxu0 0.0
  %12813 = vmatpush2.msra.mxu0 0.0
  %12814 = vmatprep.subr.mxu0 0.0
  %12815 = vmatpush2.msra.mxu0 0.0
  %12816 = vmatprep.subr.mxu0 0.0
  %12817 = vmatpush2.msra.mxu0 0.0
  %12818 = vmatprep.subr.mxu0 0.0
  %12819 = vmatpush2.msra.mxu0 0.0
  %12820 = vmatprep.subr.mxu0 0.0
  %12821 = vmatpush2.msra.mxu0 0.0
  %12822 = vmatprep.subr.mxu0 0.0
  %12823 = vmatpush2.msra.mxu0 0.0
  %12824 = vmatprep.subr.mxu0 0.0
  %12825 = vmatpush2.msra.mxu0 0.0
  %12826 = vmatprep.subr.mxu0 0.0
  %12827 = vmatpush2.msra.mxu0 0.0
  %12828 = vmatprep.subr.mxu0 0.0
  %12829 = vmatpush2.msra.mxu0 0.0
  %12830 = vmatprep.subr.mxu0 0.0
  %12831 = vmatpush2.msra.mxu0 0.0
  %12832 = vmatprep.subr.mxu0 0.0
  %12833 = vmatpush2.msra.mxu0 0.0
  %12834 = vmatprep.subr.mxu0 0.0
  %12835 = vmatpush2.msra.mxu0 0.0
  %12836 = vmatprep.subr.mxu0 0.0
  %12837 = vmatpush2.msra.mxu0 0.0
  %12838 = vmatprep.subr.mxu0 0.0
  %12839 = vmatpush2.msra.mxu0 0.0
  %12840 = vmatprep.mubr.f32.mxu0 0.0
  %12841 = vmatmul.mubr.f32.gmra.mxu0 %v11789
  %v12842 = vpop.f32.mrf.mxu0
  %v12843 = vadd.f32 0.0, %v12842
  %v12844 = vpop.f32.mrf.mxu0
  %12845 = vdwg.mxu0
  %v12846 = vadd.f32 %v12758, %v12843
  %s12847 = scalar_lea.vmem %s7, 1536
  %v12848 = vld [vmem:[%s12847] sm:$0xff]
  %v12849 = vld [vmem:[%s12847 + $0x8] sm:$0xff]
  %v12850 = vld [vmem:[%s12847 + $0x10] sm:$0xff]
  %v12851 = vld [vmem:[%s12847 + $0x18] sm:$0xff]
  %v12852 = vld [vmem:[%s12847 + $0x20] sm:$0xff]
  %v12853 = vld [vmem:[%s12847 + $0x28] sm:$0xff]
  %v12854 = vld [vmem:[%s12847 + $0x30] sm:$0xff]
  %v12855 = vld [vmem:[%s12847 + $0x38] sm:$0xff]
  %v12856 = vld [vmem:[%s12847 + $0x40] sm:$0xff]
  %v12857 = vld [vmem:[%s12847 + $0x48] sm:$0xff]
  %v12858 = vld [vmem:[%s12847 + $0x50] sm:$0xff]
  %v12859 = vld [vmem:[%s12847 + $0x58] sm:$0xff]
  %v12860 = vld [vmem:[%s12847 + $0x60] sm:$0xff]
  %v12861 = vld [vmem:[%s12847 + $0x68] sm:$0xff]
  %v12862 = vld [vmem:[%s12847 + $0x70] sm:$0xff]
  %v12863 = vld [vmem:[%s12847 + $0x78] sm:$0xff]
  %12864 = vmatprep.subr.mxu0 0.0
  %12865 = vmatpush1.msra.mxu0 %v12863
  %12866 = vmatprep.subr.mxu0 0.0
  %12867 = vmatpush1.msra.mxu0 %v12862
  %12868 = vmatprep.subr.mxu0 0.0
  %12869 = vmatpush1.msra.mxu0 %v12861
  %12870 = vmatprep.subr.mxu0 0.0
  %12871 = vmatpush1.msra.mxu0 %v12860
  %12872 = vmatprep.subr.mxu0 0.0
  %12873 = vmatpush1.msra.mxu0 %v12859
  %12874 = vmatprep.subr.mxu0 0.0
  %12875 = vmatpush1.msra.mxu0 %v12858
  %12876 = vmatprep.subr.mxu0 0.0
  %12877 = vmatpush1.msra.mxu0 %v12857
  %12878 = vmatprep.subr.mxu0 0.0
  %12879 = vmatpush1.msra.mxu0 %v12856
  %12880 = vmatprep.subr.mxu0 0.0
  %12881 = vmatpush1.msra.mxu0 %v12855
  %12882 = vmatprep.subr.mxu0 0.0
  %12883 = vmatpush1.msra.mxu0 %v12854
  %12884 = vmatprep.subr.mxu0 0.0
  %12885 = vmatpush1.msra.mxu0 %v12853
  %12886 = vmatprep.subr.mxu0 0.0
  %12887 = vmatpush1.msra.mxu0 %v12852
  %12888 = vmatprep.subr.mxu0 0.0
  %12889 = vmatpush1.msra.mxu0 %v12851
  %12890 = vmatprep.subr.mxu0 0.0
  %12891 = vmatpush1.msra.mxu0 %v12850
  %12892 = vmatprep.subr.mxu0 0.0
  %12893 = vmatpush1.msra.mxu0 %v12849
  %12894 = vmatprep.subr.mxu0 0.0
  %12895 = vmatpush1.msra.mxu0 %v12848
  %12896 = vmatprep.subr.mxu0 0.0
  %12897 = vmatpush2.msra.mxu0 0.0
  %12898 = vmatprep.subr.mxu0 0.0
  %12899 = vmatpush2.msra.mxu0 0.0
  %12900 = vmatprep.subr.mxu0 0.0
  %12901 = vmatpush2.msra.mxu0 0.0
  %12902 = vmatprep.subr.mxu0 0.0
  %12903 = vmatpush2.msra.mxu0 0.0
  %12904 = vmatprep.subr.mxu0 0.0
  %12905 = vmatpush2.msra.mxu0 0.0
  %12906 = vmatprep.subr.mxu0 0.0
  %12907 = vmatpush2.msra.mxu0 0.0
  %12908 = vmatprep.subr.mxu0 0.0
  %12909 = vmatpush2.msra.mxu0 0.0
  %12910 = vmatprep.subr.mxu0 0.0
  %12911 = vmatpush2.msra.mxu0 0.0
  %12912 = vmatprep.subr.mxu0 0.0
  %12913 = vmatpush2.msra.mxu0 0.0
  %12914 = vmatprep.subr.mxu0 0.0
  %12915 = vmatpush2.msra.mxu0 0.0
  %12916 = vmatprep.subr.mxu0 0.0
  %12917 = vmatpush2.msra.mxu0 0.0
  %12918 = vmatprep.subr.mxu0 0.0
  %12919 = vmatpush2.msra.mxu0 0.0
  %12920 = vmatprep.subr.mxu0 0.0
  %12921 = vmatpush2.msra.mxu0 0.0
  %12922 = vmatprep.subr.mxu0 0.0
  %12923 = vmatpush2.msra.mxu0 0.0
  %12924 = vmatprep.subr.mxu0 0.0
  %12925 = vmatpush2.msra.mxu0 0.0
  %12926 = vmatprep.subr.mxu0 0.0
  %12927 = vmatpush2.msra.mxu0 0.0
  %12928 = vmatprep.mubr.f32.mxu0 0.0
  %12929 = vmatmul.mubr.f32.gmra.mxu0 %v11790
  %v12930 = vpop.f32.mrf.mxu0
  %v12931 = vadd.f32 0.0, %v12930
  %v12932 = vpop.f32.mrf.mxu0
  %12933 = vdwg.mxu0
  %v12934 = vadd.f32 %v12846, %v12931
  %s12935 = scalar_lea.vmem %s7, 1664
  %v12936 = vld [vmem:[%s12935] sm:$0xff]
  %v12937 = vld [vmem:[%s12935 + $0x8] sm:$0xff]
  %v12938 = vld [vmem:[%s12935 + $0x10] sm:$0xff]
  %v12939 = vld [vmem:[%s12935 + $0x18] sm:$0xff]
  %v12940 = vld [vmem:[%s12935 + $0x20] sm:$0xff]
  %v12941 = vld [vmem:[%s12935 + $0x28] sm:$0xff]
  %v12942 = vld [vmem:[%s12935 + $0x30] sm:$0xff]
  %v12943 = vld [vmem:[%s12935 + $0x38] sm:$0xff]
  %v12944 = vld [vmem:[%s12935 + $0x40] sm:$0xff]
  %v12945 = vld [vmem:[%s12935 + $0x48] sm:$0xff]
  %v12946 = vld [vmem:[%s12935 + $0x50] sm:$0xff]
  %v12947 = vld [vmem:[%s12935 + $0x58] sm:$0xff]
  %v12948 = vld [vmem:[%s12935 + $0x60] sm:$0xff]
  %v12949 = vld [vmem:[%s12935 + $0x68] sm:$0xff]
  %v12950 = vld [vmem:[%s12935 + $0x70] sm:$0xff]
  %v12951 = vld [vmem:[%s12935 + $0x78] sm:$0xff]
  %12952 = vmatprep.subr.mxu0 0.0
  %12953 = vmatpush1.msra.mxu0 %v12951
  %12954 = vmatprep.subr.mxu0 0.0
  %12955 = vmatpush1.msra.mxu0 %v12950
  %12956 = vmatprep.subr.mxu0 0.0
  %12957 = vmatpush1.msra.mxu0 %v12949
  %12958 = vmatprep.subr.mxu0 0.0
  %12959 = vmatpush1.msra.mxu0 %v12948
  %12960 = vmatprep.subr.mxu0 0.0
  %12961 = vmatpush1.msra.mxu0 %v12947
  %12962 = vmatprep.subr.mxu0 0.0
  %12963 = vmatpush1.msra.mxu0 %v12946
  %12964 = vmatprep.subr.mxu0 0.0
  %12965 = vmatpush1.msra.mxu0 %v12945
  %12966 = vmatprep.subr.mxu0 0.0
  %12967 = vmatpush1.msra.mxu0 %v12944
  %12968 = vmatprep.subr.mxu0 0.0
  %12969 = vmatpush1.msra.mxu0 %v12943
  %12970 = vmatprep.subr.mxu0 0.0
  %12971 = vmatpush1.msra.mxu0 %v12942
  %12972 = vmatprep.subr.mxu0 0.0
  %12973 = vmatpush1.msra.mxu0 %v12941
  %12974 = vmatprep.subr.mxu0 0.0
  %12975 = vmatpush1.msra.mxu0 %v12940
  %12976 = vmatprep.subr.mxu0 0.0
  %12977 = vmatpush1.msra.mxu0 %v12939
  %12978 = vmatprep.subr.mxu0 0.0
  %12979 = vmatpush1.msra.mxu0 %v12938
  %12980 = vmatprep.subr.mxu0 0.0
  %12981 = vmatpush1.msra.mxu0 %v12937
  %12982 = vmatprep.subr.mxu0 0.0
  %12983 = vmatpush1.msra.mxu0 %v12936
  %12984 = vmatprep.subr.mxu0 0.0
  %12985 = vmatpush2.msra.mxu0 0.0
  %12986 = vmatprep.subr.mxu0 0.0
  %12987 = vmatpush2.msra.mxu0 0.0
  %12988 = vmatprep.subr.mxu0 0.0
  %12989 = vmatpush2.msra.mxu0 0.0
  %12990 = vmatprep.subr.mxu0 0.0
  %12991 = vmatpush2.msra.mxu0 0.0
  %12992 = vmatprep.subr.mxu0 0.0
  %12993 = vmatpush2.msra.mxu0 0.0
  %12994 = vmatprep.subr.mxu0 0.0
  %12995 = vmatpush2.msra.mxu0 0.0
  %12996 = vmatprep.subr.mxu0 0.0
  %12997 = vmatpush2.msra.mxu0 0.0
  %12998 = vmatprep.subr.mxu0 0.0
  %12999 = vmatpush2.msra.mxu0 0.0
  %13000 = vmatprep.subr.mxu0 0.0
  %13001 = vmatpush2.msra.mxu0 0.0
  %13002 = vmatprep.subr.mxu0 0.0
  %13003 = vmatpush2.msra.mxu0 0.0
  %13004 = vmatprep.subr.mxu0 0.0
  %13005 = vmatpush2.msra.mxu0 0.0
  %13006 = vmatprep.subr.mxu0 0.0
  %13007 = vmatpush2.msra.mxu0 0.0
  %13008 = vmatprep.subr.mxu0 0.0
  %13009 = vmatpush2.msra.mxu0 0.0
  %13010 = vmatprep.subr.mxu0 0.0
  %13011 = vmatpush2.msra.mxu0 0.0
  %13012 = vmatprep.subr.mxu0 0.0
  %13013 = vmatpush2.msra.mxu0 0.0
  %13014 = vmatprep.subr.mxu0 0.0
  %13015 = vmatpush2.msra.mxu0 0.0
  %13016 = vmatprep.mubr.f32.mxu0 0.0
  %13017 = vmatmul.mubr.f32.gmra.mxu0 %v11791
  %v13018 = vpop.f32.mrf.mxu0
  %v13019 = vadd.f32 0.0, %v13018
  %v13020 = vpop.f32.mrf.mxu0
  %13021 = vdwg.mxu0
  %v13022 = vadd.f32 %v12934, %v13019
  %s13023 = scalar_lea.vmem %s7, 1792
  %v13024 = vld [vmem:[%s13023] sm:$0xff]
  %v13025 = vld [vmem:[%s13023 + $0x8] sm:$0xff]
  %v13026 = vld [vmem:[%s13023 + $0x10] sm:$0xff]
  %v13027 = vld [vmem:[%s13023 + $0x18] sm:$0xff]
  %v13028 = vld [vmem:[%s13023 + $0x20] sm:$0xff]
  %v13029 = vld [vmem:[%s13023 + $0x28] sm:$0xff]
  %v13030 = vld [vmem:[%s13023 + $0x30] sm:$0xff]
  %v13031 = vld [vmem:[%s13023 + $0x38] sm:$0xff]
  %v13032 = vld [vmem:[%s13023 + $0x40] sm:$0xff]
  %v13033 = vld [vmem:[%s13023 + $0x48] sm:$0xff]
  %v13034 = vld [vmem:[%s13023 + $0x50] sm:$0xff]
  %v13035 = vld [vmem:[%s13023 + $0x58] sm:$0xff]
  %v13036 = vld [vmem:[%s13023 + $0x60] sm:$0xff]
  %v13037 = vld [vmem:[%s13023 + $0x68] sm:$0xff]
  %v13038 = vld [vmem:[%s13023 + $0x70] sm:$0xff]
  %v13039 = vld [vmem:[%s13023 + $0x78] sm:$0xff]
  %13040 = vmatprep.subr.mxu0 0.0
  %13041 = vmatpush1.msra.mxu0 %v13039
  %13042 = vmatprep.subr.mxu0 0.0
  %13043 = vmatpush1.msra.mxu0 %v13038
  %13044 = vmatprep.subr.mxu0 0.0
  %13045 = vmatpush1.msra.mxu0 %v13037
  %13046 = vmatprep.subr.mxu0 0.0
  %13047 = vmatpush1.msra.mxu0 %v13036
  %13048 = vmatprep.subr.mxu0 0.0
  %13049 = vmatpush1.msra.mxu0 %v13035
  %13050 = vmatprep.subr.mxu0 0.0
  %13051 = vmatpush1.msra.mxu0 %v13034
  %13052 = vmatprep.subr.mxu0 0.0
  %13053 = vmatpush1.msra.mxu0 %v13033
  %13054 = vmatprep.subr.mxu0 0.0
  %13055 = vmatpush1.msra.mxu0 %v13032
  %13056 = vmatprep.subr.mxu0 0.0
  %13057 = vmatpush1.msra.mxu0 %v13031
  %13058 = vmatprep.subr.mxu0 0.0
  %13059 = vmatpush1.msra.mxu0 %v13030
  %13060 = vmatprep.subr.mxu0 0.0
  %13061 = vmatpush1.msra.mxu0 %v13029
  %13062 = vmatprep.subr.mxu0 0.0
  %13063 = vmatpush1.msra.mxu0 %v13028
  %13064 = vmatprep.subr.mxu0 0.0
  %13065 = vmatpush1.msra.mxu0 %v13027
  %13066 = vmatprep.subr.mxu0 0.0
  %13067 = vmatpush1.msra.mxu0 %v13026
  %13068 = vmatprep.subr.mxu0 0.0
  %13069 = vmatpush1.msra.mxu0 %v13025
  %13070 = vmatprep.subr.mxu0 0.0
  %13071 = vmatpush1.msra.mxu0 %v13024
  %13072 = vmatprep.subr.mxu0 0.0
  %13073 = vmatpush2.msra.mxu0 0.0
  %13074 = vmatprep.subr.mxu0 0.0
  %13075 = vmatpush2.msra.mxu0 0.0
  %13076 = vmatprep.subr.mxu0 0.0
  %13077 = vmatpush2.msra.mxu0 0.0
  %13078 = vmatprep.subr.mxu0 0.0
  %13079 = vmatpush2.msra.mxu0 0.0
  %13080 = vmatprep.subr.mxu0 0.0
  %13081 = vmatpush2.msra.mxu0 0.0
  %13082 = vmatprep.subr.mxu0 0.0
  %13083 = vmatpush2.msra.mxu0 0.0
  %13084 = vmatprep.subr.mxu0 0.0
  %13085 = vmatpush2.msra.mxu0 0.0
  %13086 = vmatprep.subr.mxu0 0.0
  %13087 = vmatpush2.msra.mxu0 0.0
  %13088 = vmatprep.subr.mxu0 0.0
  %13089 = vmatpush2.msra.mxu0 0.0
  %13090 = vmatprep.subr.mxu0 0.0
  %13091 = vmatpush2.msra.mxu0 0.0
  %13092 = vmatprep.subr.mxu0 0.0
  %13093 = vmatpush2.msra.mxu0 0.0
  %13094 = vmatprep.subr.mxu0 0.0
  %13095 = vmatpush2.msra.mxu0 0.0
  %13096 = vmatprep.subr.mxu0 0.0
  %13097 = vmatpush2.msra.mxu0 0.0
  %13098 = vmatprep.subr.mxu0 0.0
  %13099 = vmatpush2.msra.mxu0 0.0
  %13100 = vmatprep.subr.mxu0 0.0
  %13101 = vmatpush2.msra.mxu0 0.0
  %13102 = vmatprep.subr.mxu0 0.0
  %13103 = vmatpush2.msra.mxu0 0.0
  %13104 = vmatprep.mubr.f32.mxu0 0.0
  %13105 = vmatmul.mubr.f32.gmra.mxu0 %v11792
  %v13106 = vpop.f32.mrf.mxu0
  %v13107 = vadd.f32 0.0, %v13106
  %v13108 = vpop.f32.mrf.mxu0
  %13109 = vdwg.mxu0
  %v13110 = vadd.f32 %v13022, %v13107
  %s13111 = scalar_lea.vmem %s7, 1920
  %v13112 = vld [vmem:[%s13111] sm:$0xff]
  %v13113 = vld [vmem:[%s13111 + $0x8] sm:$0xff]
  %v13114 = vld [vmem:[%s13111 + $0x10] sm:$0xff]
  %v13115 = vld [vmem:[%s13111 + $0x18] sm:$0xff]
  %v13116 = vld [vmem:[%s13111 + $0x20] sm:$0xff]
  %v13117 = vld [vmem:[%s13111 + $0x28] sm:$0xff]
  %v13118 = vld [vmem:[%s13111 + $0x30] sm:$0xff]
  %v13119 = vld [vmem:[%s13111 + $0x38] sm:$0xff]
  %v13120 = vld [vmem:[%s13111 + $0x40] sm:$0xff]
  %v13121 = vld [vmem:[%s13111 + $0x48] sm:$0xff]
  %v13122 = vld [vmem:[%s13111 + $0x50] sm:$0xff]
  %v13123 = vld [vmem:[%s13111 + $0x58] sm:$0xff]
  %v13124 = vld [vmem:[%s13111 + $0x60] sm:$0xff]
  %v13125 = vld [vmem:[%s13111 + $0x68] sm:$0xff]
  %v13126 = vld [vmem:[%s13111 + $0x70] sm:$0xff]
  %v13127 = vld [vmem:[%s13111 + $0x78] sm:$0xff]
  %13128 = vmatprep.subr.mxu0 0.0
  %13129 = vmatpush1.msra.mxu0 %v13127
  %13130 = vmatprep.subr.mxu0 0.0
  %13131 = vmatpush1.msra.mxu0 %v13126
  %13132 = vmatprep.subr.mxu0 0.0
  %13133 = vmatpush1.msra.mxu0 %v13125
  %13134 = vmatprep.subr.mxu0 0.0
  %13135 = vmatpush1.msra.mxu0 %v13124
  %13136 = vmatprep.subr.mxu0 0.0
  %13137 = vmatpush1.msra.mxu0 %v13123
  %13138 = vmatprep.subr.mxu0 0.0
  %13139 = vmatpush1.msra.mxu0 %v13122
  %13140 = vmatprep.subr.mxu0 0.0
  %13141 = vmatpush1.msra.mxu0 %v13121
  %13142 = vmatprep.subr.mxu0 0.0
  %13143 = vmatpush1.msra.mxu0 %v13120
  %13144 = vmatprep.subr.mxu0 0.0
  %13145 = vmatpush1.msra.mxu0 %v13119
  %13146 = vmatprep.subr.mxu0 0.0
  %13147 = vmatpush1.msra.mxu0 %v13118
  %13148 = vmatprep.subr.mxu0 0.0
  %13149 = vmatpush1.msra.mxu0 %v13117
  %13150 = vmatprep.subr.mxu0 0.0
  %13151 = vmatpush1.msra.mxu0 %v13116
  %13152 = vmatprep.subr.mxu0 0.0
  %13153 = vmatpush1.msra.mxu0 %v13115
  %13154 = vmatprep.subr.mxu0 0.0
  %13155 = vmatpush1.msra.mxu0 %v13114
  %13156 = vmatprep.subr.mxu0 0.0
  %13157 = vmatpush1.msra.mxu0 %v13113
  %13158 = vmatprep.subr.mxu0 0.0
  %13159 = vmatpush1.msra.mxu0 %v13112
  %13160 = vmatprep.subr.mxu0 0.0
  %13161 = vmatpush2.msra.mxu0 0.0
  %13162 = vmatprep.subr.mxu0 0.0
  %13163 = vmatpush2.msra.mxu0 0.0
  %13164 = vmatprep.subr.mxu0 0.0
  %13165 = vmatpush2.msra.mxu0 0.0
  %13166 = vmatprep.subr.mxu0 0.0
  %13167 = vmatpush2.msra.mxu0 0.0
  %13168 = vmatprep.subr.mxu0 0.0
  %13169 = vmatpush2.msra.mxu0 0.0
  %13170 = vmatprep.subr.mxu0 0.0
  %13171 = vmatpush2.msra.mxu0 0.0
  %13172 = vmatprep.subr.mxu0 0.0
  %13173 = vmatpush2.msra.mxu0 0.0
  %13174 = vmatprep.subr.mxu0 0.0
  %13175 = vmatpush2.msra.mxu0 0.0
  %13176 = vmatprep.subr.mxu0 0.0
  %13177 = vmatpush2.msra.mxu0 0.0
  %13178 = vmatprep.subr.mxu0 0.0
  %13179 = vmatpush2.msra.mxu0 0.0
  %13180 = vmatprep.subr.mxu0 0.0
  %13181 = vmatpush2.msra.mxu0 0.0
  %13182 = vmatprep.subr.mxu0 0.0
  %13183 = vmatpush2.msra.mxu0 0.0
  %13184 = vmatprep.subr.mxu0 0.0
  %13185 = vmatpush2.msra.mxu0 0.0
  %13186 = vmatprep.subr.mxu0 0.0
  %13187 = vmatpush2.msra.mxu0 0.0
  %13188 = vmatprep.subr.mxu0 0.0
  %13189 = vmatpush2.msra.mxu0 0.0
  %13190 = vmatprep.subr.mxu0 0.0
  %13191 = vmatpush2.msra.mxu0 0.0
  %13192 = vmatprep.mubr.f32.mxu0 0.0
  %13193 = vmatmul.mubr.f32.gmra.mxu0 %v11793
  %v13194 = vpop.f32.mrf.mxu0
  %v13195 = vadd.f32 0.0, %v13194
  %v13196 = vpop.f32.mrf.mxu0
  %13197 = vdwg.mxu0
  %v13198 = vadd.f32 %v13110, %v13195
  %v13199 = vld [vmem:[%s8] sm:$0x1]
  %v13201 = vlaneseq
  %v13202 = vshrl.u32 %v13201, 7
  %v13203 = vsub.s32 0, %v13202
  %v13204 = vrot.slane %v13199, %v13203
  %v13206 = vadd.f32 %v13198, %v13204
  %v13207 = vmax.f32 %v13206, 0.0
  %v13208 = vld [vmem:[%s9] sm:$0xff]
  %v13209 = vld [vmem:[%s9 + $0x8] sm:$0xff]
  %v13210 = vld [vmem:[%s9 + $0x10] sm:$0xff]
  %v13211 = vld [vmem:[%s9 + $0x18] sm:$0xff]
  %v13212 = vld [vmem:[%s9 + $0x20] sm:$0xff]
  %v13213 = vld [vmem:[%s9 + $0x28] sm:$0xff]
  %v13214 = vld [vmem:[%s9 + $0x30] sm:$0xff]
  %v13215 = vld [vmem:[%s9 + $0x38] sm:$0xff]
  %v13216 = vld [vmem:[%s9 + $0x40] sm:$0xff]
  %v13217 = vld [vmem:[%s9 + $0x48] sm:$0xff]
  %v13218 = vld [vmem:[%s9 + $0x50] sm:$0xff]
  %v13219 = vld [vmem:[%s9 + $0x58] sm:$0xff]
  %v13220 = vld [vmem:[%s9 + $0x60] sm:$0xff]
  %v13221 = vld [vmem:[%s9 + $0x68] sm:$0xff]
  %v13222 = vld [vmem:[%s9 + $0x70] sm:$0xff]
  %v13223 = vld [vmem:[%s9 + $0x78] sm:$0xff]
  %v13224 = vld [vmem:[%s10] sm:$0x1]
  %v13226 = vlaneseq
  %v13227 = vshrl.u32 %v13226, 7
  %v13228 = vsub.s32 0, %v13227
  %v13229 = vrot.slane %v13224, %v13228
  %13231 = vmatprep.subr.mxu0 0.0
  %13232 = vmatpush1.msra.mxu0 %v13223
  %13233 = vmatprep.subr.mxu0 0.0
  %13234 = vmatpush1.msra.mxu0 %v13222
  %13235 = vmatprep.subr.mxu0 0.0
  %13236 = vmatpush1.msra.mxu0 %v13221
  %13237 = vmatprep.subr.mxu0 0.0
  %13238 = vmatpush1.msra.mxu0 %v13220
  %13239 = vmatprep.subr.mxu0 0.0
  %13240 = vmatpush1.msra.mxu0 %v13219
  %13241 = vmatprep.subr.mxu0 0.0
  %13242 = vmatpush1.msra.mxu0 %v13218
  %13243 = vmatprep.subr.mxu0 0.0
  %13244 = vmatpush1.msra.mxu0 %v13217
  %13245 = vmatprep.subr.mxu0 0.0
  %13246 = vmatpush1.msra.mxu0 %v13216
  %13247 = vmatprep.subr.mxu0 0.0
  %13248 = vmatpush1.msra.mxu0 %v13215
  %13249 = vmatprep.subr.mxu0 0.0
  %13250 = vmatpush1.msra.mxu0 %v13214
  %13251 = vmatprep.subr.mxu0 0.0
  %13252 = vmatpush1.msra.mxu0 %v13213
  %13253 = vmatprep.subr.mxu0 0.0
  %13254 = vmatpush1.msra.mxu0 %v13212
  %13255 = vmatprep.subr.mxu0 0.0
  %13256 = vmatpush1.msra.mxu0 %v13211
  %13257 = vmatprep.subr.mxu0 0.0
  %13258 = vmatpush1.msra.mxu0 %v13210
  %13259 = vmatprep.subr.mxu0 0.0
  %13260 = vmatpush1.msra.mxu0 %v13209
  %13261 = vmatprep.subr.mxu0 0.0
  %13262 = vmatpush1.msra.mxu0 %v13208
  %13263 = vmatprep.subr.mxu0 0.0
  %13264 = vmatpush2.msra.mxu0 0.0
  %13265 = vmatprep.subr.mxu0 0.0
  %13266 = vmatpush2.msra.mxu0 0.0
  %13267 = vmatprep.subr.mxu0 0.0
  %13268 = vmatpush2.msra.mxu0 0.0
  %13269 = vmatprep.subr.mxu0 0.0
  %13270 = vmatpush2.msra.mxu0 0.0
  %13271 = vmatprep.subr.mxu0 0.0
  %13272 = vmatpush2.msra.mxu0 0.0
  %13273 = vmatprep.subr.mxu0 0.0
  %13274 = vmatpush2.msra.mxu0 0.0
  %13275 = vmatprep.subr.mxu0 0.0
  %13276 = vmatpush2.msra.mxu0 0.0
  %13277 = vmatprep.subr.mxu0 0.0
  %13278 = vmatpush2.msra.mxu0 0.0
  %13279 = vmatprep.subr.mxu0 0.0
  %13280 = vmatpush2.msra.mxu0 0.0
  %13281 = vmatprep.subr.mxu0 0.0
  %13282 = vmatpush2.msra.mxu0 0.0
  %13283 = vmatprep.subr.mxu0 0.0
  %13284 = vmatpush2.msra.mxu0 0.0
  %13285 = vmatprep.subr.mxu0 0.0
  %13286 = vmatpush2.msra.mxu0 0.0
  %13287 = vmatprep.subr.mxu0 0.0
  %13288 = vmatpush2.msra.mxu0 0.0
  %13289 = vmatprep.subr.mxu0 0.0
  %13290 = vmatpush2.msra.mxu0 0.0
  %13291 = vmatprep.subr.mxu0 0.0
  %13292 = vmatpush2.msra.mxu0 0.0
  %13293 = vmatprep.subr.mxu0 0.0
  %13294 = vmatpush2.msra.mxu0 0.0
  %13295 = vmatprep.mubr.f32.mxu0 0.0
  %13296 = vmatmul.mubr.f32.gmra.mxu0 %v13207
  %v13297 = vpop.f32.mrf.mxu0
  %v13298 = vadd.f32 %v13229, %v13297
  %v13299 = vpop.f32.mrf.mxu0
  %13300 = vdwg.mxu0
  %v13301 = vmax.f32 %v13298, 0.0
  %v13302 = vld [vmem:[%s11] sm:$0xff]
  %v13303 = vld [vmem:[%s11 + $0x8] sm:$0xff]
  %v13304 = vld [vmem:[%s11 + $0x10] sm:$0xff]
  %v13305 = vld [vmem:[%s11 + $0x18] sm:$0xff]
  %v13306 = vld [vmem:[%s11 + $0x20] sm:$0xff]
  %v13307 = vld [vmem:[%s11 + $0x28] sm:$0xff]
  %v13308 = vld [vmem:[%s11 + $0x30] sm:$0xff]
  %v13309 = vld [vmem:[%s11 + $0x38] sm:$0xff]
  %v13310 = vld [vmem:[%s11 + $0x40] sm:$0xff]
  %v13311 = vld [vmem:[%s11 + $0x48] sm:$0xff]
  %v13312 = vld [vmem:[%s11 + $0x50] sm:$0xff]
  %v13313 = vld [vmem:[%s11 + $0x58] sm:$0xff]
  %v13314 = vld [vmem:[%s11 + $0x60] sm:$0xff]
  %v13315 = vld [vmem:[%s11 + $0x68] sm:$0xff]
  %v13316 = vld [vmem:[%s11 + $0x70] sm:$0xff]
  %v13317 = vld [vmem:[%s11 + $0x78] sm:$0xff]
  %v13318 = vld [vmem:[%s12] sm:$0x1]
  %v13320 = vlaneseq
  %v13321 = vshrl.u32 %v13320, 7
  %v13322 = vsub.s32 0, %v13321
  %v13323 = vrot.slane %v13318, %v13322
  %13325 = vmatprep.subr.mxu0 0.0
  %13326 = vmatpush1.msra.mxu0 %v13317
  %13327 = vmatprep.subr.mxu0 0.0
  %13328 = vmatpush1.msra.mxu0 %v13316
  %13329 = vmatprep.subr.mxu0 0.0
  %13330 = vmatpush1.msra.mxu0 %v13315
  %13331 = vmatprep.subr.mxu0 0.0
  %13332 = vmatpush1.msra.mxu0 %v13314
  %13333 = vmatprep.subr.mxu0 0.0
  %13334 = vmatpush1.msra.mxu0 %v13313
  %13335 = vmatprep.subr.mxu0 0.0
  %13336 = vmatpush1.msra.mxu0 %v13312
  %13337 = vmatprep.subr.mxu0 0.0
  %13338 = vmatpush1.msra.mxu0 %v13311
  %13339 = vmatprep.subr.mxu0 0.0
  %13340 = vmatpush1.msra.mxu0 %v13310
  %13341 = vmatprep.subr.mxu0 0.0
  %13342 = vmatpush1.msra.mxu0 %v13309
  %13343 = vmatprep.subr.mxu0 0.0
  %13344 = vmatpush1.msra.mxu0 %v13308
  %13345 = vmatprep.subr.mxu0 0.0
  %13346 = vmatpush1.msra.mxu0 %v13307
  %13347 = vmatprep.subr.mxu0 0.0
  %13348 = vmatpush1.msra.mxu0 %v13306
  %13349 = vmatprep.subr.mxu0 0.0
  %13350 = vmatpush1.msra.mxu0 %v13305
  %13351 = vmatprep.subr.mxu0 0.0
  %13352 = vmatpush1.msra.mxu0 %v13304
  %13353 = vmatprep.subr.mxu0 0.0
  %13354 = vmatpush1.msra.mxu0 %v13303
  %13355 = vmatprep.subr.mxu0 0.0
  %13356 = vmatpush1.msra.mxu0 %v13302
  %13357 = vmatprep.subr.mxu0 0.0
  %13358 = vmatpush2.msra.mxu0 0.0
  %13359 = vmatprep.subr.mxu0 0.0
  %13360 = vmatpush2.msra.mxu0 0.0
  %13361 = vmatprep.subr.mxu0 0.0
  %13362 = vmatpush2.msra.mxu0 0.0
  %13363 = vmatprep.subr.mxu0 0.0
  %13364 = vmatpush2.msra.mxu0 0.0
  %13365 = vmatprep.subr.mxu0 0.0
  %13366 = vmatpush2.msra.mxu0 0.0
  %13367 = vmatprep.subr.mxu0 0.0
  %13368 = vmatpush2.msra.mxu0 0.0
  %13369 = vmatprep.subr.mxu0 0.0
  %13370 = vmatpush2.msra.mxu0 0.0
  %13371 = vmatprep.subr.mxu0 0.0
  %13372 = vmatpush2.msra.mxu0 0.0
  %13373 = vmatprep.subr.mxu0 0.0
  %13374 = vmatpush2.msra.mxu0 0.0
  %13375 = vmatprep.subr.mxu0 0.0
  %13376 = vmatpush2.msra.mxu0 0.0
  %13377 = vmatprep.subr.mxu0 0.0
  %13378 = vmatpush2.msra.mxu0 0.0
  %13379 = vmatprep.subr.mxu0 0.0
  %13380 = vmatpush2.msra.mxu0 0.0
  %13381 = vmatprep.subr.mxu0 0.0
  %13382 = vmatpush2.msra.mxu0 0.0
  %13383 = vmatprep.subr.mxu0 0.0
  %13384 = vmatpush2.msra.mxu0 0.0
  %13385 = vmatprep.subr.mxu0 0.0
  %13386 = vmatpush2.msra.mxu0 0.0
  %13387 = vmatprep.subr.mxu0 0.0
  %13388 = vmatpush2.msra.mxu0 0.0
  %13389 = vmatprep.mubr.f32.mxu0 0.0
  %13390 = vmatmul.mubr.f32.gmra.mxu0 %v13301
  %v13391 = vpop.f32.mrf.mxu0
  %v13392 = vadd.f32 %v13323, %v13391
  %v13393 = vpop.f32.mrf.mxu0
  %13394 = vdwg.mxu0
  %13395 = vst [vmem:[%s13] sm:$0xff] %v13392
  // Predicated region
  $region54: #{lenet5c_forward.1} parent=0 // pred_check
    _
  $region55: #{lenet5c_forward.1} parent=0 // pred_check_branch
    %13397 = sbr.rel (0) target = $region57
  $region56: #{lenet5c_forward.1} parent=0 // pred_region
    _
  $region57: #{lenet5c_forward.1} parent=0 // pred_fallthru
    _
  // Predicated region
  $region58: #{lenet5c_forward.1} parent=0 // pred_check
    _
  $region59: #{lenet5c_forward.1} parent=0 // pred_check_branch
    %13399 = sbr.rel (0) target = $region61
  $region60: #{lenet5c_forward.1} parent=0 // pred_region
    _
  $region61: #{lenet5c_forward.1} parent=0 // pred_fallthru
    _

</llo_original>
